<compile_context>
chip_gen: v7x
topology: tpu7x:2x2x1
jax: 0.10.0
libtpu: 0.0.40
codegen_flags: <defaults>
</compile_context>

<pallas_src>
import jax
import jax.numpy as jnp
import numpy as np
from jax import lax
from jax.experimental import pallas as pl
from jax.experimental.pallas import tpu as pltpu

HIDDEN_SIZE = 256
INPUT_SIZE = 4
GRID_SIZE = (5, 5)
OUTPUT_SIZE = GRID_SIZE[0] * GRID_SIZE[1]  # 25
FC_PAD = 128                               # fc output padded to a full lane group


def _make_kernel(T, bt, small):
    """Builds the kernel body for a (T, bt) block. `small` selects the
    register-carried, fully-unrolled recurrence (latency-bound regime)."""
    H = HIDDEN_SIZE

    def kernel(tok_ref,    # (T, bt, 1)    int32 tokens, time-major
               xtab_ref,   # (4, 4H)       f32   W_ih^T rows + (b_ih + b_hh)
               whh_ref,    # (H, 4H)       bf16  W_hh^T
               h0_ref,     # (1, H)        f32
               c0_ref,     # (1, H)        f32
               wfc_ref,    # (H, 128)      bf16  fc.weight^T zero-padded
               bfc_ref,    # (1, 128)      f32   fc.bias zero-padded
               out_ref,    # (T, bt, 128)  f32   padded logits
               *scratch):
        if small:
            gx_scr, hs_scr = scratch          # (T,bt,4H) f32, (T*bt,H) bf16
        else:
            h_scr, c_scr, hs_scr = scratch    # (bt,H) f32 x2, (T*bt,H) bf16

        r0 = xtab_ref[0:1, :]
        r1 = xtab_ref[1:2, :]
        r2 = xtab_ref[2:3, :]
        r3 = xtab_ref[3:4, :]

        def select_row(tok_col):              # (bt, 1) int32 -> (bt, 4H) f32
            # Input projection == row select (bias already folded in).
            return jnp.where(tok_col == 0, r0,
                   jnp.where(tok_col == 1, r1,
                   jnp.where(tok_col == 2, r2, r3)))

        def cell(gates, c):
            # PyTorch gate order i, f, g, o; all math in f32.
            i_g = jax.nn.sigmoid(gates[:, 0:H])
            f_g = jax.nn.sigmoid(gates[:, H:2 * H])
            g_g = jnp.tanh(gates[:, 2 * H:3 * H])
            o_g = jax.nn.sigmoid(gates[:, 3 * H:4 * H])
            c_new = f_g * c + i_g * g_g
            h_new = o_g * jnp.tanh(c_new)
            return h_new, c_new

        if small:
            # Prologue: input projections for ALL timesteps (no h dependency),
            # kept entirely off the recurrent critical chain.
            for t in range(T):
                gx_scr[t] = select_row(tok_ref[t])

            # h / c carried as register values (no VMEM round trip per step).
            h = jnp.broadcast_to(h0_ref[...], (bt, H))
            c = jnp.broadcast_to(c0_ref[...], (bt, H))
            for t in range(T):
                gates = gx_scr[t] + jnp.dot(
                    h.astype(jnp.bfloat16), whh_ref[...],
                    preferred_element_type=jnp.float32)
                h, c = cell(gates, c)
                hs_scr[t * bt:(t + 1) * bt, :] = h.astype(hs_scr.dtype)
        else:
            # Large tiles: state stays in VMEM scratch; bounded live ranges via
            # fori_loop. The token select is hidden under the per-step matmul.
            h_scr[...] = jnp.broadcast_to(h0_ref[...], (bt, H))
            c_scr[...] = jnp.broadcast_to(c0_ref[...], (bt, H))

            def body(t, carry):
                gates = select_row(tok_ref[t]) + jnp.dot(
                    h_scr[...].astype(jnp.bfloat16), whh_ref[...],
                    preferred_element_type=jnp.float32)
                h_new, c_new = cell(gates, c_scr[...])
                h_scr[...] = h_new
                c_scr[...] = c_new
                row = pl.multiple_of(t * bt, bt)
                hs_scr[pl.ds(row, bt), :] = h_new.astype(hs_scr.dtype)
                return carry

            lax.fori_loop(0, T, body, 0, unroll=2)

        # Dropout is identity (eval). Batched FC: one bf16 MXU call over all
        # T*bt rows, f32 accumulation, single lane-dense 128-wide store.
        logits = (jnp.dot(hs_scr[...], wfc_ref[...],
                          preferred_element_type=jnp.float32) + bfc_ref[...])
        out_ref[...] = logits.reshape(T, bt, FC_PAD).astype(out_ref.dtype)

    return kernel


def _batch_tile(b_pad):
    if b_pad <= 8:
        return b_pad
    # Prefer >= 2 grid steps so the "parallel" batch axis can feed both
    # TensorCores on v7x; cap the tile at 256 rows (v6e/v7x MXU height).
    for bt in (256, 128, 64, 32, 16, 8):
        if bt <= b_pad // 2 and b_pad % bt == 0:
            return bt
    return b_pad


def nback_lstm_forward(x_tokens, params):
    """x_tokens: (B, T) int32 with values in [0, 4). Returns logits (B, T, 25)."""
    B, T = x_tokens.shape
    H = HIDDEN_SIZE

    # Pad batch to a sublane multiple; padded rows (token 0) are sliced away.
    B_pad = ((B + 7) // 8) * 8
    bt = _batch_tile(B_pad)
    small = (T <= 16) and (bt <= 32)

    tokens = jnp.zeros((B_pad, T), jnp.int32).at[:B].set(x_tokens.astype(jnp.int32))
    tokens_tb = jnp.transpose(tokens, (1, 0))[:, :, None]            # (T, B_pad, 1)

    # Token -> (W_ih^T row + b_ih + b_hh) table: removes the one-hot matmul and
    # folds the bias add out of the per-step loop.
    xtab = (params["w_ih"].T
            + (params["b_ih"] + params["b_hh"])[None, :]).astype(jnp.float32)  # (4, 4H)

    whh_t = params["w_hh"].T.astype(jnp.bfloat16)                    # (H, 4H) bf16
    h0 = params["h0"].reshape(1, H).astype(jnp.float32)
    c0 = params["c0"].reshape(1, H).astype(jnp.float32)

    # Zero-pad the FC to 128 output lanes (unmasked stores); bf16 weights for MXU.
    wfc_pad = jnp.zeros((H, FC_PAD), jnp.float32).at[:, :OUTPUT_SIZE].set(
        params["fc_w"].T.astype(jnp.float32)).astype(jnp.bfloat16)
    bfc_pad = jnp.zeros((1, FC_PAD), jnp.float32).at[:, :OUTPUT_SIZE].set(
        params["fc_b"].astype(jnp.float32)[None, :])

    if small:
        scratch_shapes = [
            pltpu.VMEM((T, bt, 4 * H), jnp.float32),   # per-step input projections
            pltpu.VMEM((T * bt, H), jnp.bfloat16),     # hidden states for the FC
        ]
    else:
        scratch_shapes = [
            pltpu.VMEM((bt, H), jnp.float32),          # h state
            pltpu.VMEM((bt, H), jnp.float32),          # c state
            pltpu.VMEM((T * bt, H), jnp.bfloat16),     # hidden states for the FC
        ]

    out_tbo = pl.pallas_call(
        _make_kernel(T, bt, small),
        out_shape=jax.ShapeDtypeStruct((T, B_pad, FC_PAD), jnp.float32),
        grid_spec=pltpu.PrefetchScalarGridSpec(
            num_scalar_prefetch=0,
            grid=(B_pad // bt,),
            in_specs=[
                pl.BlockSpec((T, bt, 1), lambda b: (0, b, 0)),       # tokens
                pl.BlockSpec((4, 4 * H), lambda b: (0, 0)),          # xtab
                pl.BlockSpec((H, 4 * H), lambda b: (0, 0)),          # W_hh^T (bf16)
                pl.BlockSpec((1, H), lambda b: (0, 0)),              # h0
                pl.BlockSpec((1, H), lambda b: (0, 0)),              # c0
                pl.BlockSpec((H, FC_PAD), lambda b: (0, 0)),         # fc weight (bf16)
                pl.BlockSpec((1, FC_PAD), lambda b: (0, 0)),         # fc bias
            ],
            out_specs=pl.BlockSpec((T, bt, FC_PAD), lambda b: (0, b, 0)),
            scratch_shapes=scratch_shapes),
        compiler_params=pltpu.CompilerParams(
            dimension_semantics=("parallel",),        # 2 TCs on v7x when grid > 1
            vmem_limit_bytes=64 * 1024 * 1024),
    )(tokens_tb, xtab, whh_t, h0, c0, wfc_pad, bfc_pad)

    # (T, B_pad, 128) -> (B, T, 25)
    return jnp.transpose(out_tbo, (1, 0, 2))[:B, :, :OUTPUT_SIZE]


def init_params(key):
    """Deterministic param init matching PyTorch shapes (uniform +/- 1/sqrt(H))."""
    H = HIDDEN_SIZE
    k_lstm = 1.0 / np.sqrt(H)
    k_fc = 1.0 / np.sqrt(H)
    ks = jax.random.split(key, 9)
    u = lambda k, shape, s: jax.random.uniform(k, shape, jnp.float32, -s, s)
    return {
        "w_ih": u(ks[0], (4 * H, INPUT_SIZE), k_lstm),
        "w_hh": u(ks[1], (4 * H, H), k_lstm),
        "b_ih": u(ks[2], (4 * H,), k_lstm),
        "b_hh": u(ks[3], (4 * H,), k_lstm),
        "fc_w": u(ks[4], (OUTPUT_SIZE, H), k_fc),
        "fc_b": u(ks[5], (OUTPUT_SIZE,), k_fc),
        "h0": jax.random.normal(ks[6], (1, 1, H), jnp.float32) * 0.05,
        "c0": jax.random.normal(ks[7], (1, 1, H), jnp.float32) * 0.05,
    }


def nback_lstm_reference(x_tokens, params):
    """Pure-JAX f32 reference (lax.scan) mirroring torch.nn.LSTM + Linear semantics."""
    B, T = x_tokens.shape
    H = HIDDEN_SIZE
    x_oh = jax.nn.one_hot(x_tokens, INPUT_SIZE, dtype=jnp.float32)   # (B, T, 4)
    h = jnp.broadcast_to(params["h0"].reshape(1, H), (B, H))
    c = jnp.broadcast_to(params["c0"].reshape(1, H), (B, H))
    b = params["b_ih"] + params["b_hh"]

    def step(carry, x_t):
        h, c = carry
        gates = x_t @ params["w_ih"].T + h @ params["w_hh"].T + b
        i_g = jax.nn.sigmoid(gates[:, 0 * H:1 * H])
        f_g = jax.nn.sigmoid(gates[:, 1 * H:2 * H])
        g_g = jnp.tanh(gates[:, 2 * H:3 * H])
        o_g = jax.nn.sigmoid(gates[:, 3 * H:4 * H])
        c_new = f_g * c + i_g * g_g
        h_new = o_g * jnp.tanh(c_new)
        return (h_new, c_new), h_new

    _, hs = lax.scan(step, (h, c), jnp.transpose(x_oh, (1, 0, 2)))   # (T, B, H)
    lstm_out = jnp.transpose(hs, (1, 0, 2))                          # (B, T, H)
    return lstm_out @ params["fc_w"].T + params["fc_b"]              # (B, T, 25)


if __name__ == "__main__":
    key = jax.random.PRNGKey(0)
    pkey, xkey = jax.random.split(key)
    params = init_params(pkey)

    B, T = 2, 8
    x_tokens = jax.random.randint(xkey, (B, T), 0, INPUT_SIZE, dtype=jnp.int32)

    logits = jax.block_until_ready(nback_lstm_forward(x_tokens, params))
    ref = jax.block_until_ready(nback_lstm_reference(x_tokens, params))

    assert logits.shape == (B, T, OUTPUT_SIZE), logits.shape
    # Tolerance loosened vs an all-f32 kernel because W_hh / hs / fc run in bf16.
    np.testing.assert_allclose(np.asarray(logits), np.asarray(ref),
                               rtol=2e-2, atol=2e-2)
    print("KERNEL_OK")
</pallas_src>

<mosaic_0001>
module attributes {stable_mosaic.version = 11 : i64} {
  func.func @kernel(%arg0: i32, %arg1: memref<8x8x1xi32, #tpu.memory_space<vmem>>, %arg2: memref<4x1024xf32, #tpu.memory_space<vmem>>, %arg3: memref<256x1024xbf16, #tpu.memory_space<vmem>>, %arg4: memref<1x256xf32, #tpu.memory_space<vmem>>, %arg5: memref<1x256xf32, #tpu.memory_space<vmem>>, %arg6: memref<256x128xbf16, #tpu.memory_space<vmem>>, %arg7: memref<1x128xf32, #tpu.memory_space<vmem>>, %arg8: memref<8x8x128xf32, #tpu.memory_space<vmem>>, %arg9: memref<8x8x1024xf32, #tpu.memory_space<vmem>>, %arg10: memref<64x256xbf16, #tpu.memory_space<vmem>>) attributes {dimension_semantics = [#tpu.dimension_semantics<parallel>], iteration_bounds = array<i64: 1>, scalar_prefetch = 0 : i64, scratch_operands = 2 : i64, tpu.core_type = #tpu.core_type<tc>, window_params = [{transform_indices = @transform_0, window_bounds = array<i64: 8, 8, 1>}, {pipeline_mode = #tpu.pipeline_mode<synchronous>, transform_indices = @transform_1, window_bounds = array<i64: 4, 1024>}, {pipeline_mode = #tpu.pipeline_mode<synchronous>, transform_indices = @transform_2, window_bounds = array<i64: 256, 1024>}, {pipeline_mode = #tpu.pipeline_mode<synchronous>, transform_indices = @transform_3, window_bounds = array<i64: 1, 256>}, {pipeline_mode = #tpu.pipeline_mode<synchronous>, transform_indices = @transform_4, window_bounds = array<i64: 1, 256>}, {pipeline_mode = #tpu.pipeline_mode<synchronous>, transform_indices = @transform_5, window_bounds = array<i64: 256, 128>}, {pipeline_mode = #tpu.pipeline_mode<synchronous>, transform_indices = @transform_6, window_bounds = array<i64: 1, 128>}, {transform_indices = @transform_7, window_bounds = array<i64: 8, 8, 128>}]} {
    %c0 = arith.constant 0 : index
    %c0_0 = arith.constant 0 : index
    %0 = vector.load %arg2[%c0, %c0_0] : memref<4x1024xf32, #tpu.memory_space<vmem>>, vector<1x1024xf32>
    %c1 = arith.constant 1 : index
    %c0_1 = arith.constant 0 : index
    %1 = vector.load %arg2[%c1, %c0_1] : memref<4x1024xf32, #tpu.memory_space<vmem>>, vector<1x1024xf32>
    %c2 = arith.constant 2 : index
    %c0_2 = arith.constant 0 : index
    %2 = vector.load %arg2[%c2, %c0_2] : memref<4x1024xf32, #tpu.memory_space<vmem>>, vector<1x1024xf32>
    %c3 = arith.constant 3 : index
    %c0_3 = arith.constant 0 : index
    %3 = vector.load %arg2[%c3, %c0_3] : memref<4x1024xf32, #tpu.memory_space<vmem>>, vector<1x1024xf32>
    %c0_4 = arith.constant 0 : index
    %c0_5 = arith.constant 0 : index
    %c0_6 = arith.constant 0 : index
    %4 = vector.load %arg1[%c0_4, %c0_5, %c0_6] : memref<8x8x1xi32, #tpu.memory_space<vmem>>, vector<1x8x1xi32>
    %5 = vector.shape_cast %4 : vector<1x8x1xi32> to vector<8x1xi32>
    %c0_i32 = arith.constant 0 : i32
    %6 = vector.broadcast %c0_i32 : i32 to vector<8x1xi32>
    %7 = arith.cmpi eq, %5, %6 : vector<8x1xi32>
    %c1_i32 = arith.constant 1 : i32
    %8 = vector.broadcast %c1_i32 : i32 to vector<8x1xi32>
    %9 = arith.cmpi eq, %5, %8 : vector<8x1xi32>
    %c2_i32 = arith.constant 2 : i32
    %10 = vector.broadcast %c2_i32 : i32 to vector<8x1xi32>
    %11 = arith.cmpi eq, %5, %10 : vector<8x1xi32>
    %12 = vector.shape_cast %11 : vector<8x1xi1> to vector<8x1xi1>
    %13 = vector.broadcast %12 : vector<8x1xi1> to vector<8x1024xi1>
    %14 = vector.shape_cast %2 : vector<1x1024xf32> to vector<1x1024xf32>
    %15 = vector.broadcast %14 : vector<1x1024xf32> to vector<8x1024xf32>
    %16 = vector.shape_cast %3 : vector<1x1024xf32> to vector<1x1024xf32>
    %17 = vector.broadcast %16 : vector<1x1024xf32> to vector<8x1024xf32>
    %18 = arith.select %13, %15, %17 : vector<8x1024xi1>, vector<8x1024xf32>
    %19 = vector.shape_cast %9 : vector<8x1xi1> to vector<8x1xi1>
    %20 = vector.broadcast %19 : vector<8x1xi1> to vector<8x1024xi1>
    %21 = vector.shape_cast %1 : vector<1x1024xf32> to vector<1x1024xf32>
    %22 = vector.broadcast %21 : vector<1x1024xf32> to vector<8x1024xf32>
    %23 = arith.select %20, %22, %18 : vector<8x1024xi1>, vector<8x1024xf32>
    %24 = vector.shape_cast %7 : vector<8x1xi1> to vector<8x1xi1>
    %25 = vector.broadcast %24 : vector<8x1xi1> to vector<8x1024xi1>
    %26 = vector.shape_cast %0 : vector<1x1024xf32> to vector<1x1024xf32>
    %27 = vector.broadcast %26 : vector<1x1024xf32> to vector<8x1024xf32>
    %28 = arith.select %25, %27, %23 : vector<8x1024xi1>, vector<8x1024xf32>
    %c0_7 = arith.constant 0 : index
    %c0_8 = arith.constant 0 : index
    %c0_9 = arith.constant 0 : index
    %29 = vector.load %arg9[%c0_7, %c0_8, %c0_9] : memref<8x8x1024xf32, #tpu.memory_space<vmem>>, vector<1x8x1024xf32>
    %30 = vector.shape_cast %29 : vector<1x8x1024xf32> to vector<8x1024xf32>
    %31 = vector.shape_cast %28 : vector<8x1024xf32> to vector<1x8x1024xf32>
    tpu.vector_store %arg9[%c0_7, %c0_8, %c0_9], %31 {strides = array<i32>} : memref<8x8x1024xf32, #tpu.memory_space<vmem>>, vector<1x8x1024xf32>,
    %c1_10 = arith.constant 1 : index
    %c0_11 = arith.constant 0 : index
    %c0_12 = arith.constant 0 : index
    %32 = vector.load %arg1[%c1_10, %c0_11, %c0_12] : memref<8x8x1xi32, #tpu.memory_space<vmem>>, vector<1x8x1xi32>
    %33 = vector.shape_cast %32 : vector<1x8x1xi32> to vector<8x1xi32>
    %c0_i32_13 = arith.constant 0 : i32
    %34 = vector.broadcast %c0_i32_13 : i32 to vector<8x1xi32>
    %35 = arith.cmpi eq, %33, %34 : vector<8x1xi32>
    %c1_i32_14 = arith.constant 1 : i32
    %36 = vector.broadcast %c1_i32_14 : i32 to vector<8x1xi32>
    %37 = arith.cmpi eq, %33, %36 : vector<8x1xi32>
    %c2_i32_15 = arith.constant 2 : i32
    %38 = vector.broadcast %c2_i32_15 : i32 to vector<8x1xi32>
    %39 = arith.cmpi eq, %33, %38 : vector<8x1xi32>
    %40 = vector.shape_cast %39 : vector<8x1xi1> to vector<8x1xi1>
    %41 = vector.broadcast %40 : vector<8x1xi1> to vector<8x1024xi1>
    %42 = vector.shape_cast %2 : vector<1x1024xf32> to vector<1x1024xf32>
    %43 = vector.broadcast %42 : vector<1x1024xf32> to vector<8x1024xf32>
    %44 = vector.shape_cast %3 : vector<1x1024xf32> to vector<1x1024xf32>
    %45 = vector.broadcast %44 : vector<1x1024xf32> to vector<8x1024xf32>
    %46 = arith.select %41, %43, %45 : vector<8x1024xi1>, vector<8x1024xf32>
    %47 = vector.shape_cast %37 : vector<8x1xi1> to vector<8x1xi1>
    %48 = vector.broadcast %47 : vector<8x1xi1> to vector<8x1024xi1>
    %49 = vector.shape_cast %1 : vector<1x1024xf32> to vector<1x1024xf32>
    %50 = vector.broadcast %49 : vector<1x1024xf32> to vector<8x1024xf32>
    %51 = arith.select %48, %50, %46 : vector<8x1024xi1>, vector<8x1024xf32>
    %52 = vector.shape_cast %35 : vector<8x1xi1> to vector<8x1xi1>
    %53 = vector.broadcast %52 : vector<8x1xi1> to vector<8x1024xi1>
    %54 = vector.shape_cast %0 : vector<1x1024xf32> to vector<1x1024xf32>
    %55 = vector.broadcast %54 : vector<1x1024xf32> to vector<8x1024xf32>
    %56 = arith.select %53, %55, %51 : vector<8x1024xi1>, vector<8x1024xf32>
    %c1_16 = arith.constant 1 : index
    %c0_17 = arith.constant 0 : index
    %c0_18 = arith.constant 0 : index
    %57 = vector.load %arg9[%c1_16, %c0_17, %c0_18] : memref<8x8x1024xf32, #tpu.memory_space<vmem>>, vector<1x8x1024xf32>
    %58 = vector.shape_cast %57 : vector<1x8x1024xf32> to vector<8x1024xf32>
    %59 = vector.shape_cast %56 : vector<8x1024xf32> to vector<1x8x1024xf32>
    tpu.vector_store %arg9[%c1_16, %c0_17, %c0_18], %59 {strides = array<i32>} : memref<8x8x1024xf32, #tpu.memory_space<vmem>>, vector<1x8x1024xf32>,
    %c2_19 = arith.constant 2 : index
    %c0_20 = arith.constant 0 : index
    %c0_21 = arith.constant 0 : index
    %60 = vector.load %arg1[%c2_19, %c0_20, %c0_21] : memref<8x8x1xi32, #tpu.memory_space<vmem>>, vector<1x8x1xi32>
    %61 = vector.shape_cast %60 : vector<1x8x1xi32> to vector<8x1xi32>
    %c0_i32_22 = arith.constant 0 : i32
    %62 = vector.broadcast %c0_i32_22 : i32 to vector<8x1xi32>
    %63 = arith.cmpi eq, %61, %62 : vector<8x1xi32>
    %c1_i32_23 = arith.constant 1 : i32
    %64 = vector.broadcast %c1_i32_23 : i32 to vector<8x1xi32>
    %65 = arith.cmpi eq, %61, %64 : vector<8x1xi32>
    %c2_i32_24 = arith.constant 2 : i32
    %66 = vector.broadcast %c2_i32_24 : i32 to vector<8x1xi32>
    %67 = arith.cmpi eq, %61, %66 : vector<8x1xi32>
    %68 = vector.shape_cast %67 : vector<8x1xi1> to vector<8x1xi1>
    %69 = vector.broadcast %68 : vector<8x1xi1> to vector<8x1024xi1>
    %70 = vector.shape_cast %2 : vector<1x1024xf32> to vector<1x1024xf32>
    %71 = vector.broadcast %70 : vector<1x1024xf32> to vector<8x1024xf32>
    %72 = vector.shape_cast %3 : vector<1x1024xf32> to vector<1x1024xf32>
    %73 = vector.broadcast %72 : vector<1x1024xf32> to vector<8x1024xf32>
    %74 = arith.select %69, %71, %73 : vector<8x1024xi1>, vector<8x1024xf32>
    %75 = vector.shape_cast %65 : vector<8x1xi1> to vector<8x1xi1>
    %76 = vector.broadcast %75 : vector<8x1xi1> to vector<8x1024xi1>
    %77 = vector.shape_cast %1 : vector<1x1024xf32> to vector<1x1024xf32>
    %78 = vector.broadcast %77 : vector<1x1024xf32> to vector<8x1024xf32>
    %79 = arith.select %76, %78, %74 : vector<8x1024xi1>, vector<8x1024xf32>
    %80 = vector.shape_cast %63 : vector<8x1xi1> to vector<8x1xi1>
    %81 = vector.broadcast %80 : vector<8x1xi1> to vector<8x1024xi1>
    %82 = vector.shape_cast %0 : vector<1x1024xf32> to vector<1x1024xf32>
    %83 = vector.broadcast %82 : vector<1x1024xf32> to vector<8x1024xf32>
    %84 = arith.select %81, %83, %79 : vector<8x1024xi1>, vector<8x1024xf32>
    %c2_25 = arith.constant 2 : index
    %c0_26 = arith.constant 0 : index
    %c0_27 = arith.constant 0 : index
    %85 = vector.load %arg9[%c2_25, %c0_26, %c0_27] : memref<8x8x1024xf32, #tpu.memory_space<vmem>>, vector<1x8x1024xf32>
    %86 = vector.shape_cast %85 : vector<1x8x1024xf32> to vector<8x1024xf32>
    %87 = vector.shape_cast %84 : vector<8x1024xf32> to vector<1x8x1024xf32>
    tpu.vector_store %arg9[%c2_25, %c0_26, %c0_27], %87 {strides = array<i32>} : memref<8x8x1024xf32, #tpu.memory_space<vmem>>, vector<1x8x1024xf32>,
    %c3_28 = arith.constant 3 : index
    %c0_29 = arith.constant 0 : index
    %c0_30 = arith.constant 0 : index
    %88 = vector.load %arg1[%c3_28, %c0_29, %c0_30] : memref<8x8x1xi32, #tpu.memory_space<vmem>>, vector<1x8x1xi32>
    %89 = vector.shape_cast %88 : vector<1x8x1xi32> to vector<8x1xi32>
    %c0_i32_31 = arith.constant 0 : i32
    %90 = vector.broadcast %c0_i32_31 : i32 to vector<8x1xi32>
    %91 = arith.cmpi eq, %89, %90 : vector<8x1xi32>
    %c1_i32_32 = arith.constant 1 : i32
    %92 = vector.broadcast %c1_i32_32 : i32 to vector<8x1xi32>
    %93 = arith.cmpi eq, %89, %92 : vector<8x1xi32>
    %c2_i32_33 = arith.constant 2 : i32
    %94 = vector.broadcast %c2_i32_33 : i32 to vector<8x1xi32>
    %95 = arith.cmpi eq, %89, %94 : vector<8x1xi32>
    %96 = vector.shape_cast %95 : vector<8x1xi1> to vector<8x1xi1>
    %97 = vector.broadcast %96 : vector<8x1xi1> to vector<8x1024xi1>
    %98 = vector.shape_cast %2 : vector<1x1024xf32> to vector<1x1024xf32>
    %99 = vector.broadcast %98 : vector<1x1024xf32> to vector<8x1024xf32>
    %100 = vector.shape_cast %3 : vector<1x1024xf32> to vector<1x1024xf32>
    %101 = vector.broadcast %100 : vector<1x1024xf32> to vector<8x1024xf32>
    %102 = arith.select %97, %99, %101 : vector<8x1024xi1>, vector<8x1024xf32>
    %103 = vector.shape_cast %93 : vector<8x1xi1> to vector<8x1xi1>
    %104 = vector.broadcast %103 : vector<8x1xi1> to vector<8x1024xi1>
    %105 = vector.shape_cast %1 : vector<1x1024xf32> to vector<1x1024xf32>
    %106 = vector.broadcast %105 : vector<1x1024xf32> to vector<8x1024xf32>
    %107 = arith.select %104, %106, %102 : vector<8x1024xi1>, vector<8x1024xf32>
    %108 = vector.shape_cast %91 : vector<8x1xi1> to vector<8x1xi1>
    %109 = vector.broadcast %108 : vector<8x1xi1> to vector<8x1024xi1>
    %110 = vector.shape_cast %0 : vector<1x1024xf32> to vector<1x1024xf32>
    %111 = vector.broadcast %110 : vector<1x1024xf32> to vector<8x1024xf32>
    %112 = arith.select %109, %111, %107 : vector<8x1024xi1>, vector<8x1024xf32>
    %c3_34 = arith.constant 3 : index
    %c0_35 = arith.constant 0 : index
    %c0_36 = arith.constant 0 : index
    %113 = vector.load %arg9[%c3_34, %c0_35, %c0_36] : memref<8x8x1024xf32, #tpu.memory_space<vmem>>, vector<1x8x1024xf32>
    %114 = vector.shape_cast %113 : vector<1x8x1024xf32> to vector<8x1024xf32>
    %115 = vector.shape_cast %112 : vector<8x1024xf32> to vector<1x8x1024xf32>
    tpu.vector_store %arg9[%c3_34, %c0_35, %c0_36], %115 {strides = array<i32>} : memref<8x8x1024xf32, #tpu.memory_space<vmem>>, vector<1x8x1024xf32>,
    %c4 = arith.constant 4 : index
    %c0_37 = arith.constant 0 : index
    %c0_38 = arith.constant 0 : index
    %116 = vector.load %arg1[%c4, %c0_37, %c0_38] : memref<8x8x1xi32, #tpu.memory_space<vmem>>, vector<1x8x1xi32>
    %117 = vector.shape_cast %116 : vector<1x8x1xi32> to vector<8x1xi32>
    %c0_i32_39 = arith.constant 0 : i32
    %118 = vector.broadcast %c0_i32_39 : i32 to vector<8x1xi32>
    %119 = arith.cmpi eq, %117, %118 : vector<8x1xi32>
    %c1_i32_40 = arith.constant 1 : i32
    %120 = vector.broadcast %c1_i32_40 : i32 to vector<8x1xi32>
    %121 = arith.cmpi eq, %117, %120 : vector<8x1xi32>
    %c2_i32_41 = arith.constant 2 : i32
    %122 = vector.broadcast %c2_i32_41 : i32 to vector<8x1xi32>
    %123 = arith.cmpi eq, %117, %122 : vector<8x1xi32>
    %124 = vector.shape_cast %123 : vector<8x1xi1> to vector<8x1xi1>
    %125 = vector.broadcast %124 : vector<8x1xi1> to vector<8x1024xi1>
    %126 = vector.shape_cast %2 : vector<1x1024xf32> to vector<1x1024xf32>
    %127 = vector.broadcast %126 : vector<1x1024xf32> to vector<8x1024xf32>
    %128 = vector.shape_cast %3 : vector<1x1024xf32> to vector<1x1024xf32>
    %129 = vector.broadcast %128 : vector<1x1024xf32> to vector<8x1024xf32>
    %130 = arith.select %125, %127, %129 : vector<8x1024xi1>, vector<8x1024xf32>
    %131 = vector.shape_cast %121 : vector<8x1xi1> to vector<8x1xi1>
    %132 = vector.broadcast %131 : vector<8x1xi1> to vector<8x1024xi1>
    %133 = vector.shape_cast %1 : vector<1x1024xf32> to vector<1x1024xf32>
    %134 = vector.broadcast %133 : vector<1x1024xf32> to vector<8x1024xf32>
    %135 = arith.select %132, %134, %130 : vector<8x1024xi1>, vector<8x1024xf32>
    %136 = vector.shape_cast %119 : vector<8x1xi1> to vector<8x1xi1>
    %137 = vector.broadcast %136 : vector<8x1xi1> to vector<8x1024xi1>
    %138 = vector.shape_cast %0 : vector<1x1024xf32> to vector<1x1024xf32>
    %139 = vector.broadcast %138 : vector<1x1024xf32> to vector<8x1024xf32>
    %140 = arith.select %137, %139, %135 : vector<8x1024xi1>, vector<8x1024xf32>
    %c4_42 = arith.constant 4 : index
    %c0_43 = arith.constant 0 : index
    %c0_44 = arith.constant 0 : index
    %141 = vector.load %arg9[%c4_42, %c0_43, %c0_44] : memref<8x8x1024xf32, #tpu.memory_space<vmem>>, vector<1x8x1024xf32>
    %142 = vector.shape_cast %141 : vector<1x8x1024xf32> to vector<8x1024xf32>
    %143 = vector.shape_cast %140 : vector<8x1024xf32> to vector<1x8x1024xf32>
    tpu.vector_store %arg9[%c4_42, %c0_43, %c0_44], %143 {strides = array<i32>} : memref<8x8x1024xf32, #tpu.memory_space<vmem>>, vector<1x8x1024xf32>,
    %c5 = arith.constant 5 : index
    %c0_45 = arith.constant 0 : index
    %c0_46 = arith.constant 0 : index
    %144 = vector.load %arg1[%c5, %c0_45, %c0_46] : memref<8x8x1xi32, #tpu.memory_space<vmem>>, vector<1x8x1xi32>
    %145 = vector.shape_cast %144 : vector<1x8x1xi32> to vector<8x1xi32>
    %c0_i32_47 = arith.constant 0 : i32
    %146 = vector.broadcast %c0_i32_47 : i32 to vector<8x1xi32>
    %147 = arith.cmpi eq, %145, %146 : vector<8x1xi32>
    %c1_i32_48 = arith.constant 1 : i32
    %148 = vector.broadcast %c1_i32_48 : i32 to vector<8x1xi32>
    %149 = arith.cmpi eq, %145, %148 : vector<8x1xi32>
    %c2_i32_49 = arith.constant 2 : i32
    %150 = vector.broadcast %c2_i32_49 : i32 to vector<8x1xi32>
    %151 = arith.cmpi eq, %145, %150 : vector<8x1xi32>
    %152 = vector.shape_cast %151 : vector<8x1xi1> to vector<8x1xi1>
    %153 = vector.broadcast %152 : vector<8x1xi1> to vector<8x1024xi1>
    %154 = vector.shape_cast %2 : vector<1x1024xf32> to vector<1x1024xf32>
    %155 = vector.broadcast %154 : vector<1x1024xf32> to vector<8x1024xf32>
    %156 = vector.shape_cast %3 : vector<1x1024xf32> to vector<1x1024xf32>
    %157 = vector.broadcast %156 : vector<1x1024xf32> to vector<8x1024xf32>
    %158 = arith.select %153, %155, %157 : vector<8x1024xi1>, vector<8x1024xf32>
    %159 = vector.shape_cast %149 : vector<8x1xi1> to vector<8x1xi1>
    %160 = vector.broadcast %159 : vector<8x1xi1> to vector<8x1024xi1>
    %161 = vector.shape_cast %1 : vector<1x1024xf32> to vector<1x1024xf32>
    %162 = vector.broadcast %161 : vector<1x1024xf32> to vector<8x1024xf32>
    %163 = arith.select %160, %162, %158 : vector<8x1024xi1>, vector<8x1024xf32>
    %164 = vector.shape_cast %147 : vector<8x1xi1> to vector<8x1xi1>
    %165 = vector.broadcast %164 : vector<8x1xi1> to vector<8x1024xi1>
    %166 = vector.shape_cast %0 : vector<1x1024xf32> to vector<1x1024xf32>
    %167 = vector.broadcast %166 : vector<1x1024xf32> to vector<8x1024xf32>
    %168 = arith.select %165, %167, %163 : vector<8x1024xi1>, vector<8x1024xf32>
    %c5_50 = arith.constant 5 : index
    %c0_51 = arith.constant 0 : index
    %c0_52 = arith.constant 0 : index
    %169 = vector.load %arg9[%c5_50, %c0_51, %c0_52] : memref<8x8x1024xf32, #tpu.memory_space<vmem>>, vector<1x8x1024xf32>
    %170 = vector.shape_cast %169 : vector<1x8x1024xf32> to vector<8x1024xf32>
    %171 = vector.shape_cast %168 : vector<8x1024xf32> to vector<1x8x1024xf32>
    tpu.vector_store %arg9[%c5_50, %c0_51, %c0_52], %171 {strides = array<i32>} : memref<8x8x1024xf32, #tpu.memory_space<vmem>>, vector<1x8x1024xf32>,
    %c6 = arith.constant 6 : index
    %c0_53 = arith.constant 0 : index
    %c0_54 = arith.constant 0 : index
    %172 = vector.load %arg1[%c6, %c0_53, %c0_54] : memref<8x8x1xi32, #tpu.memory_space<vmem>>, vector<1x8x1xi32>
    %173 = vector.shape_cast %172 : vector<1x8x1xi32> to vector<8x1xi32>
    %c0_i32_55 = arith.constant 0 : i32
    %174 = vector.broadcast %c0_i32_55 : i32 to vector<8x1xi32>
    %175 = arith.cmpi eq, %173, %174 : vector<8x1xi32>
    %c1_i32_56 = arith.constant 1 : i32
    %176 = vector.broadcast %c1_i32_56 : i32 to vector<8x1xi32>
    %177 = arith.cmpi eq, %173, %176 : vector<8x1xi32>
    %c2_i32_57 = arith.constant 2 : i32
    %178 = vector.broadcast %c2_i32_57 : i32 to vector<8x1xi32>
    %179 = arith.cmpi eq, %173, %178 : vector<8x1xi32>
    %180 = vector.shape_cast %179 : vector<8x1xi1> to vector<8x1xi1>
    %181 = vector.broadcast %180 : vector<8x1xi1> to vector<8x1024xi1>
    %182 = vector.shape_cast %2 : vector<1x1024xf32> to vector<1x1024xf32>
    %183 = vector.broadcast %182 : vector<1x1024xf32> to vector<8x1024xf32>
    %184 = vector.shape_cast %3 : vector<1x1024xf32> to vector<1x1024xf32>
    %185 = vector.broadcast %184 : vector<1x1024xf32> to vector<8x1024xf32>
    %186 = arith.select %181, %183, %185 : vector<8x1024xi1>, vector<8x1024xf32>
    %187 = vector.shape_cast %177 : vector<8x1xi1> to vector<8x1xi1>
    %188 = vector.broadcast %187 : vector<8x1xi1> to vector<8x1024xi1>
    %189 = vector.shape_cast %1 : vector<1x1024xf32> to vector<1x1024xf32>
    %190 = vector.broadcast %189 : vector<1x1024xf32> to vector<8x1024xf32>
    %191 = arith.select %188, %190, %186 : vector<8x1024xi1>, vector<8x1024xf32>
    %192 = vector.shape_cast %175 : vector<8x1xi1> to vector<8x1xi1>
    %193 = vector.broadcast %192 : vector<8x1xi1> to vector<8x1024xi1>
    %194 = vector.shape_cast %0 : vector<1x1024xf32> to vector<1x1024xf32>
    %195 = vector.broadcast %194 : vector<1x1024xf32> to vector<8x1024xf32>
    %196 = arith.select %193, %195, %191 : vector<8x1024xi1>, vector<8x1024xf32>
    %c6_58 = arith.constant 6 : index
    %c0_59 = arith.constant 0 : index
    %c0_60 = arith.constant 0 : index
    %197 = vector.load %arg9[%c6_58, %c0_59, %c0_60] : memref<8x8x1024xf32, #tpu.memory_space<vmem>>, vector<1x8x1024xf32>
    %198 = vector.shape_cast %197 : vector<1x8x1024xf32> to vector<8x1024xf32>
    %199 = vector.shape_cast %196 : vector<8x1024xf32> to vector<1x8x1024xf32>
    tpu.vector_store %arg9[%c6_58, %c0_59, %c0_60], %199 {strides = array<i32>} : memref<8x8x1024xf32, #tpu.memory_space<vmem>>, vector<1x8x1024xf32>,
    %c7 = arith.constant 7 : index
    %c0_61 = arith.constant 0 : index
    %c0_62 = arith.constant 0 : index
    %200 = vector.load %arg1[%c7, %c0_61, %c0_62] : memref<8x8x1xi32, #tpu.memory_space<vmem>>, vector<1x8x1xi32>
    %201 = vector.shape_cast %200 : vector<1x8x1xi32> to vector<8x1xi32>
    %c0_i32_63 = arith.constant 0 : i32
    %202 = vector.broadcast %c0_i32_63 : i32 to vector<8x1xi32>
    %203 = arith.cmpi eq, %201, %202 : vector<8x1xi32>
    %c1_i32_64 = arith.constant 1 : i32
    %204 = vector.broadcast %c1_i32_64 : i32 to vector<8x1xi32>
    %205 = arith.cmpi eq, %201, %204 : vector<8x1xi32>
    %c2_i32_65 = arith.constant 2 : i32
    %206 = vector.broadcast %c2_i32_65 : i32 to vector<8x1xi32>
    %207 = arith.cmpi eq, %201, %206 : vector<8x1xi32>
    %208 = vector.shape_cast %207 : vector<8x1xi1> to vector<8x1xi1>
    %209 = vector.broadcast %208 : vector<8x1xi1> to vector<8x1024xi1>
    %210 = vector.shape_cast %2 : vector<1x1024xf32> to vector<1x1024xf32>
    %211 = vector.broadcast %210 : vector<1x1024xf32> to vector<8x1024xf32>
    %212 = vector.shape_cast %3 : vector<1x1024xf32> to vector<1x1024xf32>
    %213 = vector.broadcast %212 : vector<1x1024xf32> to vector<8x1024xf32>
    %214 = arith.select %209, %211, %213 : vector<8x1024xi1>, vector<8x1024xf32>
    %215 = vector.shape_cast %205 : vector<8x1xi1> to vector<8x1xi1>
    %216 = vector.broadcast %215 : vector<8x1xi1> to vector<8x1024xi1>
    %217 = vector.shape_cast %1 : vector<1x1024xf32> to vector<1x1024xf32>
    %218 = vector.broadcast %217 : vector<1x1024xf32> to vector<8x1024xf32>
    %219 = arith.select %216, %218, %214 : vector<8x1024xi1>, vector<8x1024xf32>
    %220 = vector.shape_cast %203 : vector<8x1xi1> to vector<8x1xi1>
    %221 = vector.broadcast %220 : vector<8x1xi1> to vector<8x1024xi1>
    %222 = vector.shape_cast %0 : vector<1x1024xf32> to vector<1x1024xf32>
    %223 = vector.broadcast %222 : vector<1x1024xf32> to vector<8x1024xf32>
    %224 = arith.select %221, %223, %219 : vector<8x1024xi1>, vector<8x1024xf32>
    %c7_66 = arith.constant 7 : index
    %c0_67 = arith.constant 0 : index
    %c0_68 = arith.constant 0 : index
    %225 = vector.load %arg9[%c7_66, %c0_67, %c0_68] : memref<8x8x1024xf32, #tpu.memory_space<vmem>>, vector<1x8x1024xf32>
    %226 = vector.shape_cast %225 : vector<1x8x1024xf32> to vector<8x1024xf32>
    %227 = vector.shape_cast %224 : vector<8x1024xf32> to vector<1x8x1024xf32>
    tpu.vector_store %arg9[%c7_66, %c0_67, %c0_68], %227 {strides = array<i32>} : memref<8x8x1024xf32, #tpu.memory_space<vmem>>, vector<1x8x1024xf32>,
    %c0_69 = arith.constant 0 : index
    %c0_70 = arith.constant 0 : index
    %228 = vector.load %arg4[%c0_69, %c0_70] : memref<1x256xf32, #tpu.memory_space<vmem>>, vector<1x256xf32>
    %229 = vector.shape_cast %228 : vector<1x256xf32> to vector<1x256xf32>
    %230 = vector.broadcast %229 : vector<1x256xf32> to vector<8x256xf32>
    %c0_71 = arith.constant 0 : index
    %c0_72 = arith.constant 0 : index
    %231 = vector.load %arg5[%c0_71, %c0_72] : memref<1x256xf32, #tpu.memory_space<vmem>>, vector<1x256xf32>
    %232 = vector.shape_cast %231 : vector<1x256xf32> to vector<1x256xf32>
    %233 = vector.broadcast %232 : vector<1x256xf32> to vector<8x256xf32>
    %c0_73 = arith.constant 0 : index
    %c0_74 = arith.constant 0 : index
    %c0_75 = arith.constant 0 : index
    %234 = vector.load %arg9[%c0_73, %c0_74, %c0_75] : memref<8x8x1024xf32, #tpu.memory_space<vmem>>, vector<1x8x1024xf32>
    %235 = vector.shape_cast %234 : vector<1x8x1024xf32> to vector<8x1024xf32>
    %236 = arith.truncf %230 : vector<8x256xf32> to vector<8x256xbf16>
    %c0_76 = arith.constant 0 : index
    %c0_77 = arith.constant 0 : index
    %237 = vector.load %arg3[%c0_76, %c0_77] : memref<256x1024xbf16, #tpu.memory_space<vmem>>, vector<256x1024xbf16>
    %cst = arith.constant dense<0.000000e+00> : vector<8x1024xf32>
    %238 = tpu.matmul %236, %237, %cst {dimension_numbers = #tpu.dot_dimension_numbers<[1], [0], [0], [1], [0, 0, 1, 1], [], []>} : vector<8x256xbf16>, vector<256x1024xbf16>, vector<8x1024xf32> -> vector<8x1024xf32>
    %239 = arith.addf %235, %238 : vector<8x1024xf32>
    %240 = vector.extract_strided_slice %239 {offsets = [0, 0], sizes = [8, 256], strides = [1, 1]} : vector<8x1024xf32> to vector<8x256xf32>
    %241 = arith.negf %240 : vector<8x256xf32>
    %242 = math.exp %241 : vector<8x256xf32>
    %cst_78 = arith.constant 1.000000e+00 : f32
    %243 = vector.broadcast %cst_78 : f32 to vector<8x256xf32>
    %244 = arith.addf %243, %242 : vector<8x256xf32>
    %245 = arith.divf %243, %244 : vector<8x256xf32>
    %246 = vector.extract_strided_slice %239 {offsets = [0, 256], sizes = [8, 256], strides = [1, 1]} : vector<8x1024xf32> to vector<8x256xf32>
    %247 = arith.negf %246 : vector<8x256xf32>
    %248 = math.exp %247 : vector<8x256xf32>
    %cst_79 = arith.constant 1.000000e+00 : f32
    %249 = vector.broadcast %cst_79 : f32 to vector<8x256xf32>
    %250 = arith.addf %249, %248 : vector<8x256xf32>
    %251 = arith.divf %249, %250 : vector<8x256xf32>
    %252 = vector.extract_strided_slice %239 {offsets = [0, 512], sizes = [8, 256], strides = [1, 1]} : vector<8x1024xf32> to vector<8x256xf32>
    %253 = math.tanh %252 : vector<8x256xf32>
    %254 = vector.extract_strided_slice %239 {offsets = [0, 768], sizes = [8, 256], strides = [1, 1]} : vector<8x1024xf32> to vector<8x256xf32>
    %255 = arith.negf %254 : vector<8x256xf32>
    %256 = math.exp %255 : vector<8x256xf32>
    %cst_80 = arith.constant 1.000000e+00 : f32
    %257 = vector.broadcast %cst_80 : f32 to vector<8x256xf32>
    %258 = arith.addf %257, %256 : vector<8x256xf32>
    %259 = arith.divf %257, %258 : vector<8x256xf32>
    %260 = arith.mulf %251, %233 : vector<8x256xf32>
    %261 = arith.mulf %245, %253 : vector<8x256xf32>
    %262 = arith.addf %260, %261 : vector<8x256xf32>
    %263 = math.tanh %262 : vector<8x256xf32>
    %264 = arith.mulf %259, %263 : vector<8x256xf32>
    %265 = arith.truncf %264 : vector<8x256xf32> to vector<8x256xbf16>
    %c0_81 = arith.constant 0 : index
    %c0_82 = arith.constant 0 : index
    %266 = vector.load %arg10[%c0_81, %c0_82] : memref<64x256xbf16, #tpu.memory_space<vmem>>, vector<8x256xbf16>
    tpu.vector_store %arg10[%c0_81, %c0_82], %265 {strides = array<i32>} : memref<64x256xbf16, #tpu.memory_space<vmem>>, vector<8x256xbf16>,
    %c1_83 = arith.constant 1 : index
    %c0_84 = arith.constant 0 : index
    %c0_85 = arith.constant 0 : index
    %267 = vector.load %arg9[%c1_83, %c0_84, %c0_85] : memref<8x8x1024xf32, #tpu.memory_space<vmem>>, vector<1x8x1024xf32>
    %268 = vector.shape_cast %267 : vector<1x8x1024xf32> to vector<8x1024xf32>
    %269 = arith.truncf %264 : vector<8x256xf32> to vector<8x256xbf16>
    %c0_86 = arith.constant 0 : index
    %c0_87 = arith.constant 0 : index
    %270 = vector.load %arg3[%c0_86, %c0_87] : memref<256x1024xbf16, #tpu.memory_space<vmem>>, vector<256x1024xbf16>
    %cst_88 = arith.constant dense<0.000000e+00> : vector<8x1024xf32>
    %271 = tpu.matmul %269, %270, %cst_88 {dimension_numbers = #tpu.dot_dimension_numbers<[1], [0], [0], [1], [0, 0, 1, 1], [], []>} : vector<8x256xbf16>, vector<256x1024xbf16>, vector<8x1024xf32> -> vector<8x1024xf32>
    %272 = arith.addf %268, %271 : vector<8x1024xf32>
    %273 = vector.extract_strided_slice %272 {offsets = [0, 0], sizes = [8, 256], strides = [1, 1]} : vector<8x1024xf32> to vector<8x256xf32>
    %274 = arith.negf %273 : vector<8x256xf32>
    %275 = math.exp %274 : vector<8x256xf32>
    %cst_89 = arith.constant 1.000000e+00 : f32
    %276 = vector.broadcast %cst_89 : f32 to vector<8x256xf32>
    %277 = arith.addf %276, %275 : vector<8x256xf32>
    %278 = arith.divf %276, %277 : vector<8x256xf32>
    %279 = vector.extract_strided_slice %272 {offsets = [0, 256], sizes = [8, 256], strides = [1, 1]} : vector<8x1024xf32> to vector<8x256xf32>
    %280 = arith.negf %279 : vector<8x256xf32>
    %281 = math.exp %280 : vector<8x256xf32>
    %cst_90 = arith.constant 1.000000e+00 : f32
    %282 = vector.broadcast %cst_90 : f32 to vector<8x256xf32>
    %283 = arith.addf %282, %281 : vector<8x256xf32>
    %284 = arith.divf %282, %283 : vector<8x256xf32>
    %285 = vector.extract_strided_slice %272 {offsets = [0, 512], sizes = [8, 256], strides = [1, 1]} : vector<8x1024xf32> to vector<8x256xf32>
    %286 = math.tanh %285 : vector<8x256xf32>
    %287 = vector.extract_strided_slice %272 {offsets = [0, 768], sizes = [8, 256], strides = [1, 1]} : vector<8x1024xf32> to vector<8x256xf32>
    %288 = arith.negf %287 : vector<8x256xf32>
    %289 = math.exp %288 : vector<8x256xf32>
    %cst_91 = arith.constant 1.000000e+00 : f32
    %290 = vector.broadcast %cst_91 : f32 to vector<8x256xf32>
    %291 = arith.addf %290, %289 : vector<8x256xf32>
    %292 = arith.divf %290, %291 : vector<8x256xf32>
    %293 = arith.mulf %284, %262 : vector<8x256xf32>
    %294 = arith.mulf %278, %286 : vector<8x256xf32>
    %295 = arith.addf %293, %294 : vector<8x256xf32>
    %296 = math.tanh %295 : vector<8x256xf32>
    %297 = arith.mulf %292, %296 : vector<8x256xf32>
    %298 = arith.truncf %297 : vector<8x256xf32> to vector<8x256xbf16>
    %c8 = arith.constant 8 : index
    %c0_92 = arith.constant 0 : index
    %299 = vector.load %arg10[%c8, %c0_92] : memref<64x256xbf16, #tpu.memory_space<vmem>>, vector<8x256xbf16>
    tpu.vector_store %arg10[%c8, %c0_92], %298 {strides = array<i32>} : memref<64x256xbf16, #tpu.memory_space<vmem>>, vector<8x256xbf16>,
    %c2_93 = arith.constant 2 : index
    %c0_94 = arith.constant 0 : index
    %c0_95 = arith.constant 0 : index
    %300 = vector.load %arg9[%c2_93, %c0_94, %c0_95] : memref<8x8x1024xf32, #tpu.memory_space<vmem>>, vector<1x8x1024xf32>
    %301 = vector.shape_cast %300 : vector<1x8x1024xf32> to vector<8x1024xf32>
    %302 = arith.truncf %297 : vector<8x256xf32> to vector<8x256xbf16>
    %c0_96 = arith.constant 0 : index
    %c0_97 = arith.constant 0 : index
    %303 = vector.load %arg3[%c0_96, %c0_97] : memref<256x1024xbf16, #tpu.memory_space<vmem>>, vector<256x1024xbf16>
    %cst_98 = arith.constant dense<0.000000e+00> : vector<8x1024xf32>
    %304 = tpu.matmul %302, %303, %cst_98 {dimension_numbers = #tpu.dot_dimension_numbers<[1], [0], [0], [1], [0, 0, 1, 1], [], []>} : vector<8x256xbf16>, vector<256x1024xbf16>, vector<8x1024xf32> -> vector<8x1024xf32>
    %305 = arith.addf %301, %304 : vector<8x1024xf32>
    %306 = vector.extract_strided_slice %305 {offsets = [0, 0], sizes = [8, 256], strides = [1, 1]} : vector<8x1024xf32> to vector<8x256xf32>
    %307 = arith.negf %306 : vector<8x256xf32>
    %308 = math.exp %307 : vector<8x256xf32>
    %cst_99 = arith.constant 1.000000e+00 : f32
    %309 = vector.broadcast %cst_99 : f32 to vector<8x256xf32>
    %310 = arith.addf %309, %308 : vector<8x256xf32>
    %311 = arith.divf %309, %310 : vector<8x256xf32>
    %312 = vector.extract_strided_slice %305 {offsets = [0, 256], sizes = [8, 256], strides = [1, 1]} : vector<8x1024xf32> to vector<8x256xf32>
    %313 = arith.negf %312 : vector<8x256xf32>
    %314 = math.exp %313 : vector<8x256xf32>
    %cst_100 = arith.constant 1.000000e+00 : f32
    %315 = vector.broadcast %cst_100 : f32 to vector<8x256xf32>
    %316 = arith.addf %315, %314 : vector<8x256xf32>
    %317 = arith.divf %315, %316 : vector<8x256xf32>
    %318 = vector.extract_strided_slice %305 {offsets = [0, 512], sizes = [8, 256], strides = [1, 1]} : vector<8x1024xf32> to vector<8x256xf32>
    %319 = math.tanh %318 : vector<8x256xf32>
    %320 = vector.extract_strided_slice %305 {offsets = [0, 768], sizes = [8, 256], strides = [1, 1]} : vector<8x1024xf32> to vector<8x256xf32>
    %321 = arith.negf %320 : vector<8x256xf32>
    %322 = math.exp %321 : vector<8x256xf32>
    %cst_101 = arith.constant 1.000000e+00 : f32
    %323 = vector.broadcast %cst_101 : f32 to vector<8x256xf32>
    %324 = arith.addf %323, %322 : vector<8x256xf32>
    %325 = arith.divf %323, %324 : vector<8x256xf32>
    %326 = arith.mulf %317, %295 : vector<8x256xf32>
    %327 = arith.mulf %311, %319 : vector<8x256xf32>
    %328 = arith.addf %326, %327 : vector<8x256xf32>
    %329 = math.tanh %328 : vector<8x256xf32>
    %330 = arith.mulf %325, %329 : vector<8x256xf32>
    %331 = arith.truncf %330 : vector<8x256xf32> to vector<8x256xbf16>
    %c16 = arith.constant 16 : index
    %c0_102 = arith.constant 0 : index
    %332 = vector.load %arg10[%c16, %c0_102] : memref<64x256xbf16, #tpu.memory_space<vmem>>, vector<8x256xbf16>
    tpu.vector_store %arg10[%c16, %c0_102], %331 {strides = array<i32>} : memref<64x256xbf16, #tpu.memory_space<vmem>>, vector<8x256xbf16>,
    %c3_103 = arith.constant 3 : index
    %c0_104 = arith.constant 0 : index
    %c0_105 = arith.constant 0 : index
    %333 = vector.load %arg9[%c3_103, %c0_104, %c0_105] : memref<8x8x1024xf32, #tpu.memory_space<vmem>>, vector<1x8x1024xf32>
    %334 = vector.shape_cast %333 : vector<1x8x1024xf32> to vector<8x1024xf32>
    %335 = arith.truncf %330 : vector<8x256xf32> to vector<8x256xbf16>
    %c0_106 = arith.constant 0 : index
    %c0_107 = arith.constant 0 : index
    %336 = vector.load %arg3[%c0_106, %c0_107] : memref<256x1024xbf16, #tpu.memory_space<vmem>>, vector<256x1024xbf16>
    %cst_108 = arith.constant dense<0.000000e+00> : vector<8x1024xf32>
    %337 = tpu.matmul %335, %336, %cst_108 {dimension_numbers = #tpu.dot_dimension_numbers<[1], [0], [0], [1], [0, 0, 1, 1], [], []>} : vector<8x256xbf16>, vector<256x1024xbf16>, vector<8x1024xf32> -> vector<8x1024xf32>
    %338 = arith.addf %334, %337 : vector<8x1024xf32>
    %339 = vector.extract_strided_slice %338 {offsets = [0, 0], sizes = [8, 256], strides = [1, 1]} : vector<8x1024xf32> to vector<8x256xf32>
    %340 = arith.negf %339 : vector<8x256xf32>
    %341 = math.exp %340 : vector<8x256xf32>
    %cst_109 = arith.constant 1.000000e+00 : f32
    %342 = vector.broadcast %cst_109 : f32 to vector<8x256xf32>
    %343 = arith.addf %342, %341 : vector<8x256xf32>
    %344 = arith.divf %342, %343 : vector<8x256xf32>
    %345 = vector.extract_strided_slice %338 {offsets = [0, 256], sizes = [8, 256], strides = [1, 1]} : vector<8x1024xf32> to vector<8x256xf32>
    %346 = arith.negf %345 : vector<8x256xf32>
    %347 = math.exp %346 : vector<8x256xf32>
    %cst_110 = arith.constant 1.000000e+00 : f32
    %348 = vector.broadcast %cst_110 : f32 to vector<8x256xf32>
    %349 = arith.addf %348, %347 : vector<8x256xf32>
    %350 = arith.divf %348, %349 : vector<8x256xf32>
    %351 = vector.extract_strided_slice %338 {offsets = [0, 512], sizes = [8, 256], strides = [1, 1]} : vector<8x1024xf32> to vector<8x256xf32>
    %352 = math.tanh %351 : vector<8x256xf32>
    %353 = vector.extract_strided_slice %338 {offsets = [0, 768], sizes = [8, 256], strides = [1, 1]} : vector<8x1024xf32> to vector<8x256xf32>
    %354 = arith.negf %353 : vector<8x256xf32>
    %355 = math.exp %354 : vector<8x256xf32>
    %cst_111 = arith.constant 1.000000e+00 : f32
    %356 = vector.broadcast %cst_111 : f32 to vector<8x256xf32>
    %357 = arith.addf %356, %355 : vector<8x256xf32>
    %358 = arith.divf %356, %357 : vector<8x256xf32>
    %359 = arith.mulf %350, %328 : vector<8x256xf32>
    %360 = arith.mulf %344, %352 : vector<8x256xf32>
    %361 = arith.addf %359, %360 : vector<8x256xf32>
    %362 = math.tanh %361 : vector<8x256xf32>
    %363 = arith.mulf %358, %362 : vector<8x256xf32>
    %364 = arith.truncf %363 : vector<8x256xf32> to vector<8x256xbf16>
    %c24 = arith.constant 24 : index
    %c0_112 = arith.constant 0 : index
    %365 = vector.load %arg10[%c24, %c0_112] : memref<64x256xbf16, #tpu.memory_space<vmem>>, vector<8x256xbf16>
    tpu.vector_store %arg10[%c24, %c0_112], %364 {strides = array<i32>} : memref<64x256xbf16, #tpu.memory_space<vmem>>, vector<8x256xbf16>,
    %c4_113 = arith.constant 4 : index
    %c0_114 = arith.constant 0 : index
    %c0_115 = arith.constant 0 : index
    %366 = vector.load %arg9[%c4_113, %c0_114, %c0_115] : memref<8x8x1024xf32, #tpu.memory_space<vmem>>, vector<1x8x1024xf32>
    %367 = vector.shape_cast %366 : vector<1x8x1024xf32> to vector<8x1024xf32>
    %368 = arith.truncf %363 : vector<8x256xf32> to vector<8x256xbf16>
    %c0_116 = arith.constant 0 : index
    %c0_117 = arith.constant 0 : index
    %369 = vector.load %arg3[%c0_116, %c0_117] : memref<256x1024xbf16, #tpu.memory_space<vmem>>, vector<256x1024xbf16>
    %cst_118 = arith.constant dense<0.000000e+00> : vector<8x1024xf32>
    %370 = tpu.matmul %368, %369, %cst_118 {dimension_numbers = #tpu.dot_dimension_numbers<[1], [0], [0], [1], [0, 0, 1, 1], [], []>} : vector<8x256xbf16>, vector<256x1024xbf16>, vector<8x1024xf32> -> vector<8x1024xf32>
    %371 = arith.addf %367, %370 : vector<8x1024xf32>
    %372 = vector.extract_strided_slice %371 {offsets = [0, 0], sizes = [8, 256], strides = [1, 1]} : vector<8x1024xf32> to vector<8x256xf32>
    %373 = arith.negf %372 : vector<8x256xf32>
    %374 = math.exp %373 : vector<8x256xf32>
    %cst_119 = arith.constant 1.000000e+00 : f32
    %375 = vector.broadcast %cst_119 : f32 to vector<8x256xf32>
    %376 = arith.addf %375, %374 : vector<8x256xf32>
    %377 = arith.divf %375, %376 : vector<8x256xf32>
    %378 = vector.extract_strided_slice %371 {offsets = [0, 256], sizes = [8, 256], strides = [1, 1]} : vector<8x1024xf32> to vector<8x256xf32>
    %379 = arith.negf %378 : vector<8x256xf32>
    %380 = math.exp %379 : vector<8x256xf32>
    %cst_120 = arith.constant 1.000000e+00 : f32
    %381 = vector.broadcast %cst_120 : f32 to vector<8x256xf32>
    %382 = arith.addf %381, %380 : vector<8x256xf32>
    %383 = arith.divf %381, %382 : vector<8x256xf32>
    %384 = vector.extract_strided_slice %371 {offsets = [0, 512], sizes = [8, 256], strides = [1, 1]} : vector<8x1024xf32> to vector<8x256xf32>
    %385 = math.tanh %384 : vector<8x256xf32>
    %386 = vector.extract_strided_slice %371 {offsets = [0, 768], sizes = [8, 256], strides = [1, 1]} : vector<8x1024xf32> to vector<8x256xf32>
    %387 = arith.negf %386 : vector<8x256xf32>
    %388 = math.exp %387 : vector<8x256xf32>
    %cst_121 = arith.constant 1.000000e+00 : f32
    %389 = vector.broadcast %cst_121 : f32 to vector<8x256xf32>
    %390 = arith.addf %389, %388 : vector<8x256xf32>
    %391 = arith.divf %389, %390 : vector<8x256xf32>
    %392 = arith.mulf %383, %361 : vector<8x256xf32>
    %393 = arith.mulf %377, %385 : vector<8x256xf32>
    %394 = arith.addf %392, %393 : vector<8x256xf32>
    %395 = math.tanh %394 : vector<8x256xf32>
    %396 = arith.mulf %391, %395 : vector<8x256xf32>
    %397 = arith.truncf %396 : vector<8x256xf32> to vector<8x256xbf16>
    %c32 = arith.constant 32 : index
    %c0_122 = arith.constant 0 : index
    %398 = vector.load %arg10[%c32, %c0_122] : memref<64x256xbf16, #tpu.memory_space<vmem>>, vector<8x256xbf16>
    tpu.vector_store %arg10[%c32, %c0_122], %397 {strides = array<i32>} : memref<64x256xbf16, #tpu.memory_space<vmem>>, vector<8x256xbf16>,
    %c5_123 = arith.constant 5 : index
    %c0_124 = arith.constant 0 : index
    %c0_125 = arith.constant 0 : index
    %399 = vector.load %arg9[%c5_123, %c0_124, %c0_125] : memref<8x8x1024xf32, #tpu.memory_space<vmem>>, vector<1x8x1024xf32>
    %400 = vector.shape_cast %399 : vector<1x8x1024xf32> to vector<8x1024xf32>
    %401 = arith.truncf %396 : vector<8x256xf32> to vector<8x256xbf16>
    %c0_126 = arith.constant 0 : index
    %c0_127 = arith.constant 0 : index
    %402 = vector.load %arg3[%c0_126, %c0_127] : memref<256x1024xbf16, #tpu.memory_space<vmem>>, vector<256x1024xbf16>
    %cst_128 = arith.constant dense<0.000000e+00> : vector<8x1024xf32>
    %403 = tpu.matmul %401, %402, %cst_128 {dimension_numbers = #tpu.dot_dimension_numbers<[1], [0], [0], [1], [0, 0, 1, 1], [], []>} : vector<8x256xbf16>, vector<256x1024xbf16>, vector<8x1024xf32> -> vector<8x1024xf32>
    %404 = arith.addf %400, %403 : vector<8x1024xf32>
    %405 = vector.extract_strided_slice %404 {offsets = [0, 0], sizes = [8, 256], strides = [1, 1]} : vector<8x1024xf32> to vector<8x256xf32>
    %406 = arith.negf %405 : vector<8x256xf32>
    %407 = math.exp %406 : vector<8x256xf32>
    %cst_129 = arith.constant 1.000000e+00 : f32
    %408 = vector.broadcast %cst_129 : f32 to vector<8x256xf32>
    %409 = arith.addf %408, %407 : vector<8x256xf32>
    %410 = arith.divf %408, %409 : vector<8x256xf32>
    %411 = vector.extract_strided_slice %404 {offsets = [0, 256], sizes = [8, 256], strides = [1, 1]} : vector<8x1024xf32> to vector<8x256xf32>
    %412 = arith.negf %411 : vector<8x256xf32>
    %413 = math.exp %412 : vector<8x256xf32>
    %cst_130 = arith.constant 1.000000e+00 : f32
    %414 = vector.broadcast %cst_130 : f32 to vector<8x256xf32>
    %415 = arith.addf %414, %413 : vector<8x256xf32>
    %416 = arith.divf %414, %415 : vector<8x256xf32>
    %417 = vector.extract_strided_slice %404 {offsets = [0, 512], sizes = [8, 256], strides = [1, 1]} : vector<8x1024xf32> to vector<8x256xf32>
    %418 = math.tanh %417 : vector<8x256xf32>
    %419 = vector.extract_strided_slice %404 {offsets = [0, 768], sizes = [8, 256], strides = [1, 1]} : vector<8x1024xf32> to vector<8x256xf32>
    %420 = arith.negf %419 : vector<8x256xf32>
    %421 = math.exp %420 : vector<8x256xf32>
    %cst_131 = arith.constant 1.000000e+00 : f32
    %422 = vector.broadcast %cst_131 : f32 to vector<8x256xf32>
    %423 = arith.addf %422, %421 : vector<8x256xf32>
    %424 = arith.divf %422, %423 : vector<8x256xf32>
    %425 = arith.mulf %416, %394 : vector<8x256xf32>
    %426 = arith.mulf %410, %418 : vector<8x256xf32>
    %427 = arith.addf %425, %426 : vector<8x256xf32>
    %428 = math.tanh %427 : vector<8x256xf32>
    %429 = arith.mulf %424, %428 : vector<8x256xf32>
    %430 = arith.truncf %429 : vector<8x256xf32> to vector<8x256xbf16>
    %c40 = arith.constant 40 : index
    %c0_132 = arith.constant 0 : index
    %431 = vector.load %arg10[%c40, %c0_132] : memref<64x256xbf16, #tpu.memory_space<vmem>>, vector<8x256xbf16>
    tpu.vector_store %arg10[%c40, %c0_132], %430 {strides = array<i32>} : memref<64x256xbf16, #tpu.memory_space<vmem>>, vector<8x256xbf16>,
    %c6_133 = arith.constant 6 : index
    %c0_134 = arith.constant 0 : index
    %c0_135 = arith.constant 0 : index
    %432 = vector.load %arg9[%c6_133, %c0_134, %c0_135] : memref<8x8x1024xf32, #tpu.memory_space<vmem>>, vector<1x8x1024xf32>
    %433 = vector.shape_cast %432 : vector<1x8x1024xf32> to vector<8x1024xf32>
    %434 = arith.truncf %429 : vector<8x256xf32> to vector<8x256xbf16>
    %c0_136 = arith.constant 0 : index
    %c0_137 = arith.constant 0 : index
    %435 = vector.load %arg3[%c0_136, %c0_137] : memref<256x1024xbf16, #tpu.memory_space<vmem>>, vector<256x1024xbf16>
    %cst_138 = arith.constant dense<0.000000e+00> : vector<8x1024xf32>
    %436 = tpu.matmul %434, %435, %cst_138 {dimension_numbers = #tpu.dot_dimension_numbers<[1], [0], [0], [1], [0, 0, 1, 1], [], []>} : vector<8x256xbf16>, vector<256x1024xbf16>, vector<8x1024xf32> -> vector<8x1024xf32>
    %437 = arith.addf %433, %436 : vector<8x1024xf32>
    %438 = vector.extract_strided_slice %437 {offsets = [0, 0], sizes = [8, 256], strides = [1, 1]} : vector<8x1024xf32> to vector<8x256xf32>
    %439 = arith.negf %438 : vector<8x256xf32>
    %440 = math.exp %439 : vector<8x256xf32>
    %cst_139 = arith.constant 1.000000e+00 : f32
    %441 = vector.broadcast %cst_139 : f32 to vector<8x256xf32>
    %442 = arith.addf %441, %440 : vector<8x256xf32>
    %443 = arith.divf %441, %442 : vector<8x256xf32>
    %444 = vector.extract_strided_slice %437 {offsets = [0, 256], sizes = [8, 256], strides = [1, 1]} : vector<8x1024xf32> to vector<8x256xf32>
    %445 = arith.negf %444 : vector<8x256xf32>
    %446 = math.exp %445 : vector<8x256xf32>
    %cst_140 = arith.constant 1.000000e+00 : f32
    %447 = vector.broadcast %cst_140 : f32 to vector<8x256xf32>
    %448 = arith.addf %447, %446 : vector<8x256xf32>
    %449 = arith.divf %447, %448 : vector<8x256xf32>
    %450 = vector.extract_strided_slice %437 {offsets = [0, 512], sizes = [8, 256], strides = [1, 1]} : vector<8x1024xf32> to vector<8x256xf32>
    %451 = math.tanh %450 : vector<8x256xf32>
    %452 = vector.extract_strided_slice %437 {offsets = [0, 768], sizes = [8, 256], strides = [1, 1]} : vector<8x1024xf32> to vector<8x256xf32>
    %453 = arith.negf %452 : vector<8x256xf32>
    %454 = math.exp %453 : vector<8x256xf32>
    %cst_141 = arith.constant 1.000000e+00 : f32
    %455 = vector.broadcast %cst_141 : f32 to vector<8x256xf32>
    %456 = arith.addf %455, %454 : vector<8x256xf32>
    %457 = arith.divf %455, %456 : vector<8x256xf32>
    %458 = arith.mulf %449, %427 : vector<8x256xf32>
    %459 = arith.mulf %443, %451 : vector<8x256xf32>
    %460 = arith.addf %458, %459 : vector<8x256xf32>
    %461 = math.tanh %460 : vector<8x256xf32>
    %462 = arith.mulf %457, %461 : vector<8x256xf32>
    %463 = arith.truncf %462 : vector<8x256xf32> to vector<8x256xbf16>
    %c48 = arith.constant 48 : index
    %c0_142 = arith.constant 0 : index
    %464 = vector.load %arg10[%c48, %c0_142] : memref<64x256xbf16, #tpu.memory_space<vmem>>, vector<8x256xbf16>
    tpu.vector_store %arg10[%c48, %c0_142], %463 {strides = array<i32>} : memref<64x256xbf16, #tpu.memory_space<vmem>>, vector<8x256xbf16>,
    %c7_143 = arith.constant 7 : index
    %c0_144 = arith.constant 0 : index
    %c0_145 = arith.constant 0 : index
    %465 = vector.load %arg9[%c7_143, %c0_144, %c0_145] : memref<8x8x1024xf32, #tpu.memory_space<vmem>>, vector<1x8x1024xf32>
    %466 = vector.shape_cast %465 : vector<1x8x1024xf32> to vector<8x1024xf32>
    %467 = arith.truncf %462 : vector<8x256xf32> to vector<8x256xbf16>
    %c0_146 = arith.constant 0 : index
    %c0_147 = arith.constant 0 : index
    %468 = vector.load %arg3[%c0_146, %c0_147] : memref<256x1024xbf16, #tpu.memory_space<vmem>>, vector<256x1024xbf16>
    %cst_148 = arith.constant dense<0.000000e+00> : vector<8x1024xf32>
    %469 = tpu.matmul %467, %468, %cst_148 {dimension_numbers = #tpu.dot_dimension_numbers<[1], [0], [0], [1], [0, 0, 1, 1], [], []>} : vector<8x256xbf16>, vector<256x1024xbf16>, vector<8x1024xf32> -> vector<8x1024xf32>
    %470 = arith.addf %466, %469 : vector<8x1024xf32>
    %471 = vector.extract_strided_slice %470 {offsets = [0, 0], sizes = [8, 256], strides = [1, 1]} : vector<8x1024xf32> to vector<8x256xf32>
    %472 = arith.negf %471 : vector<8x256xf32>
    %473 = math.exp %472 : vector<8x256xf32>
    %cst_149 = arith.constant 1.000000e+00 : f32
    %474 = vector.broadcast %cst_149 : f32 to vector<8x256xf32>
    %475 = arith.addf %474, %473 : vector<8x256xf32>
    %476 = arith.divf %474, %475 : vector<8x256xf32>
    %477 = vector.extract_strided_slice %470 {offsets = [0, 256], sizes = [8, 256], strides = [1, 1]} : vector<8x1024xf32> to vector<8x256xf32>
    %478 = arith.negf %477 : vector<8x256xf32>
    %479 = math.exp %478 : vector<8x256xf32>
    %cst_150 = arith.constant 1.000000e+00 : f32
    %480 = vector.broadcast %cst_150 : f32 to vector<8x256xf32>
    %481 = arith.addf %480, %479 : vector<8x256xf32>
    %482 = arith.divf %480, %481 : vector<8x256xf32>
    %483 = vector.extract_strided_slice %470 {offsets = [0, 512], sizes = [8, 256], strides = [1, 1]} : vector<8x1024xf32> to vector<8x256xf32>
    %484 = math.tanh %483 : vector<8x256xf32>
    %485 = vector.extract_strided_slice %470 {offsets = [0, 768], sizes = [8, 256], strides = [1, 1]} : vector<8x1024xf32> to vector<8x256xf32>
    %486 = arith.negf %485 : vector<8x256xf32>
    %487 = math.exp %486 : vector<8x256xf32>
    %cst_151 = arith.constant 1.000000e+00 : f32
    %488 = vector.broadcast %cst_151 : f32 to vector<8x256xf32>
    %489 = arith.addf %488, %487 : vector<8x256xf32>
    %490 = arith.divf %488, %489 : vector<8x256xf32>
    %491 = arith.mulf %482, %460 : vector<8x256xf32>
    %492 = arith.mulf %476, %484 : vector<8x256xf32>
    %493 = arith.addf %491, %492 : vector<8x256xf32>
    %494 = math.tanh %493 : vector<8x256xf32>
    %495 = arith.mulf %490, %494 : vector<8x256xf32>
    %496 = arith.truncf %495 : vector<8x256xf32> to vector<8x256xbf16>
    %c56 = arith.constant 56 : index
    %c0_152 = arith.constant 0 : index
    %497 = vector.load %arg10[%c56, %c0_152] : memref<64x256xbf16, #tpu.memory_space<vmem>>, vector<8x256xbf16>
    tpu.vector_store %arg10[%c56, %c0_152], %496 {strides = array<i32>} : memref<64x256xbf16, #tpu.memory_space<vmem>>, vector<8x256xbf16>,
    %c0_153 = arith.constant 0 : index
    %c0_154 = arith.constant 0 : index
    %498 = vector.load %arg10[%c0_153, %c0_154] : memref<64x256xbf16, #tpu.memory_space<vmem>>, vector<64x256xbf16>
    %c0_155 = arith.constant 0 : index
    %c0_156 = arith.constant 0 : index
    %499 = vector.load %arg6[%c0_155, %c0_156] : memref<256x128xbf16, #tpu.memory_space<vmem>>, vector<256x128xbf16>
    %cst_157 = arith.constant dense<0.000000e+00> : vector<64x128xf32>
    %500 = tpu.matmul %498, %499, %cst_157 {dimension_numbers = #tpu.dot_dimension_numbers<[1], [0], [0], [1], [0, 0, 1, 1], [], []>} : vector<64x256xbf16>, vector<256x128xbf16>, vector<64x128xf32> -> vector<64x128xf32>
    %c0_158 = arith.constant 0 : index
    %c0_159 = arith.constant 0 : index
    %501 = vector.load %arg7[%c0_158, %c0_159] : memref<1x128xf32, #tpu.memory_space<vmem>>, vector<1x128xf32>
    %502 = vector.broadcast %501 : vector<1x128xf32> to vector<64x128xf32>
    %503 = arith.addf %500, %502 : vector<64x128xf32>
    %504 = vector.shape_cast %503 : vector<64x128xf32> to vector<8x8x128xf32>
    %c0_160 = arith.constant 0 : index
    %c0_161 = arith.constant 0 : index
    %c0_162 = arith.constant 0 : index
    %505 = vector.load %arg8[%c0_160, %c0_161, %c0_162] : memref<8x8x128xf32, #tpu.memory_space<vmem>>, vector<8x8x128xf32>
    tpu.vector_store %arg8[%c0_160, %c0_161, %c0_162], %504 {strides = array<i32>} : memref<8x8x128xf32, #tpu.memory_space<vmem>>, vector<8x8x128xf32>,
    return
  }
  func.func @transform_0(%arg0: i32) -> (i32, i32, i32) {
    %c0_i32 = arith.constant 0 : i32
    %c0_i32_0 = arith.constant 0 : i32
    %c0_i32_1 = arith.constant 0 : i32
    return %c0_i32, %arg0, %c0_i32_0 : i32, i32, i32
  }
  func.func @transform_1(%arg0: i32) -> (i32, i32) {
    %c0_i32 = arith.constant 0 : i32
    %c0_i32_0 = arith.constant 0 : i32
    %c0_i32_1 = arith.constant 0 : i32
    return %c0_i32, %c0_i32_0 : i32, i32
  }
  func.func @transform_2(%arg0: i32) -> (i32, i32) {
    %c0_i32 = arith.constant 0 : i32
    %c0_i32_0 = arith.constant 0 : i32
    %c0_i32_1 = arith.constant 0 : i32
    return %c0_i32, %c0_i32_0 : i32, i32
  }
  func.func @transform_3(%arg0: i32) -> (i32, i32) {
    %c0_i32 = arith.constant 0 : i32
    %c0_i32_0 = arith.constant 0 : i32
    %c0_i32_1 = arith.constant 0 : i32
    return %c0_i32, %c0_i32_0 : i32, i32
  }
  func.func @transform_4(%arg0: i32) -> (i32, i32) {
    %c0_i32 = arith.constant 0 : i32
    %c0_i32_0 = arith.constant 0 : i32
    %c0_i32_1 = arith.constant 0 : i32
    return %c0_i32, %c0_i32_0 : i32, i32
  }
  func.func @transform_5(%arg0: i32) -> (i32, i32) {
    %c0_i32 = arith.constant 0 : i32
    %c0_i32_0 = arith.constant 0 : i32
    %c0_i32_1 = arith.constant 0 : i32
    return %c0_i32, %c0_i32_0 : i32, i32
  }
  func.func @transform_6(%arg0: i32) -> (i32, i32) {
    %c0_i32 = arith.constant 0 : i32
    %c0_i32_0 = arith.constant 0 : i32
    %c0_i32_1 = arith.constant 0 : i32
    return %c0_i32, %c0_i32_0 : i32, i32
  }
  func.func @transform_7(%arg0: i32) -> (i32, i32, i32) {
    %c0_i32 = arith.constant 0 : i32
    %c0_i32_0 = arith.constant 0 : i32
    %c0_i32_1 = arith.constant 0 : i32
    return %c0_i32, %arg0, %c0_i32_0 : i32, i32, i32
  }
}

</mosaic_0001>

<llo_original>
// kernel: tpu_custom_call.1
$region0: #{tpu_custom_call.1}
  #allocation0 [shape = 'u32[]', space=smem, size = 0x4, offset = 0x4, fixed_abs, tag = 'smem constant byte address 0x4 - core index']
  #allocation1 [shape = 'u32[144,128]{1,0:T(1,128)}', space=vmem, size = 0x12000, scoped, tag = 'internal scratch']
  #allocation2 [shape = 'f32[8,8,1024]{2,1,0:T(8,128)}', space=vmem, size = 0x40000, scoped, tag = 'scratch operand']
  #allocation3 [shape = 'bf16[64,256]{1,0:T(16,128)(2,1)}', space=vmem, size = 0x8000, scoped, tag = 'scratch operand']
  %s0 = inlined_call_operand.hbm [shape: s32[8,8,1], index: 0, kind: input, shape index: {}]
  %s1 = inlined_call_operand.hbm [shape: f32[4,1024], index: 1, kind: input, shape index: {}]
  %s2 = inlined_call_operand.hbm [shape: bf16[256,1024], index: 2, kind: input, shape index: {}]
  %s3 = inlined_call_operand.hbm [shape: f32[1,256], index: 3, kind: input, shape index: {}]
  %s4 = inlined_call_operand.hbm [shape: f32[1,256], index: 4, kind: input, shape index: {}]
  %s5 = inlined_call_operand.hbm [shape: bf16[256,128], index: 5, kind: input, shape index: {}]
  %s6 = inlined_call_operand.hbm [shape: f32[1,128], index: 6, kind: input, shape index: {}]
  %s7 = inlined_call_operand.hbm [shape: f32[8,8,128], index: 7, kind: output, shape index: {}]
  %s8 = sld [smem:[#allocation0]]
  $region66: #{tpu_custom_call.1} parent=0
    _
  %s10 = ssub.s32 1, %s8
  %s11 = scalar_select 0, %s10, %s8
  $region1: #{tpu_custom_call.1} parent=0
    #allocation4 [shape = 'u8[32768]{0}', space=vmem, size = 0x8000, scoped, tag = 'input window, operand 0, single buffered']
    #allocation5 [shape = 's32[1]{0}', space=sflag, size = 0x4, scoped, tag = 'scoped memory for tpu_custom_call.1']
    #allocation6 [shape = 's32[1]{0}', space=sflag, size = 0x4, scoped, tag = 'scoped memory for tpu_custom_call.1']
    #allocation7 [shape = 'u8[16384]{0}', space=vmem, size = 0x4000, scoped, tag = 'input window, operand 1, single buffered']
    #allocation8 [shape = 's32[1]{0}', space=sflag, size = 0x4, scoped, tag = 'scoped memory for tpu_custom_call.1']
    #allocation9 [shape = 'u8[524288]{0}', space=vmem, size = 0x80000, scoped, tag = 'input window, operand 2, single buffered']
    #allocation10 [shape = 'u8[1024]{0}', space=vmem, size = 0x400, scoped, tag = 'input window, operand 3, single buffered']
    #allocation11 [shape = 's32[1]{0}', space=sflag, size = 0x4, scoped, tag = 'scoped memory for tpu_custom_call.1']
    #allocation12 [shape = 'u8[1024]{0}', space=vmem, size = 0x400, scoped, tag = 'input window, operand 4, single buffered']
    #allocation13 [shape = 'u8[65536]{0}', space=vmem, size = 0x10000, scoped, tag = 'input window, operand 5, single buffered']
    #allocation14 [shape = 's32[1]{0}', space=sflag, size = 0x4, scoped, tag = 'scoped memory for tpu_custom_call.1']
    #allocation15 [shape = 'u8[512]{0}', space=vmem, size = 0x400, scoped, tag = 'input window, operand 6, single buffered']
    #allocation16 [shape = 'u8[32768]{0}', space=vmem, size = 0x8000, scoped, tag = 'output window, operand 0, single buffered']
    %12 = vsyncpa [#allocation5], 0
    %13 = vsyncpa [#allocation8], 0
    %14 = vsyncpa [#allocation11], 0
    %15 = vsyncpa [#allocation14], 0
    %16 = vsyncpa [#allocation6], 0
    // Predicated region
    $region2: #{tpu_custom_call.1} parent=1 // pred_check
      _
    $region3: #{tpu_custom_call.1} parent=1 // pred_check_branch
      %18 = sbr.rel (0) target = $region5
    $region4: #{tpu_custom_call.1} parent=1 // pred_region
      %s20 = ssub.s32 1024, 1024
      %21 = vsyncadd [#allocation5], %s20
      %s22 = sshll.u32 [#allocation4], 4
      %s23 = int_to_ptr.vmem [resolvable:$true] %s22
      %28 = dma.hbm_to_vmem [thread:$0]  %s0, 1024, %s23, [#allocation5], 128, 128, 8
    $region5: #{tpu_custom_call.1} parent=1 // pred_fallthru
      _
    // Predicated region
    $region6: #{tpu_custom_call.1} parent=1 // pred_check
      _
    $region7: #{tpu_custom_call.1} parent=1 // pred_check_branch
      %30 = sbr.rel (0) target = $region9
    $region8: #{tpu_custom_call.1} parent=1 // pred_region
      %s32 = ssub.s32 512, 512
      %33 = vsyncadd [#allocation8], %s32
      %s35 = sshll.u32 [#allocation7], 4
      %s36 = int_to_ptr.vmem [resolvable:$true] %s35
      %38 = dma.hbm_to_vmem [thread:$0]  %s1, 512, %s36, [#allocation8]
    $region9: #{tpu_custom_call.1} parent=1 // pred_fallthru
      _
    // Predicated region
    $region10: #{tpu_custom_call.1} parent=1 // pred_check
      _
    $region11: #{tpu_custom_call.1} parent=1 // pred_check_branch
      %40 = sbr.rel (0) target = $region13
    $region12: #{tpu_custom_call.1} parent=1 // pred_region
      %s42 = ssub.s32 16384, 16384
      %43 = vsyncadd [#allocation8], %s42
      %s44 = sshll.u32 [#allocation9], 4
      %s45 = int_to_ptr.vmem [resolvable:$true] %s44
      %50 = dma.hbm_to_vmem [thread:$0]  %s2, 16384, %s45, [#allocation8], 512, 512, 32
    $region13: #{tpu_custom_call.1} parent=1 // pred_fallthru
      _
    // Predicated region
    $region14: #{tpu_custom_call.1} parent=1 // pred_check
      _
    $region15: #{tpu_custom_call.1} parent=1 // pred_check_branch
      %52 = sbr.rel (0) target = $region17
    $region16: #{tpu_custom_call.1} parent=1 // pred_region
      %s54 = ssub.s32 32, 32
      %55 = vsyncadd [#allocation11], %s54
      %s57 = sshll.u32 [#allocation10], 4
      %s58 = int_to_ptr.vmem [resolvable:$true] %s57
      %60 = dma.hbm_to_vmem [thread:$0]  %s3, 32, %s58, [#allocation11]
    $region17: #{tpu_custom_call.1} parent=1 // pred_fallthru
      _
    // Predicated region
    $region18: #{tpu_custom_call.1} parent=1 // pred_check
      _
    $region19: #{tpu_custom_call.1} parent=1 // pred_check_branch
      %62 = sbr.rel (0) target = $region21
    $region20: #{tpu_custom_call.1} parent=1 // pred_region
      %s64 = ssub.s32 32, 32
      %65 = vsyncadd [#allocation11], %s64
      %s67 = sshll.u32 [#allocation12], 4
      %s68 = int_to_ptr.vmem [resolvable:$true] %s67
      %70 = dma.hbm_to_vmem [thread:$0]  %s4, 32, %s68, [#allocation11]
    $region21: #{tpu_custom_call.1} parent=1 // pred_fallthru
      _
    // Predicated region
    $region22: #{tpu_custom_call.1} parent=1 // pred_check
      _
    $region23: #{tpu_custom_call.1} parent=1 // pred_check_branch
      %72 = sbr.rel (0) target = $region25
    $region24: #{tpu_custom_call.1} parent=1 // pred_region
      %s74 = ssub.s32 2048, 2048
      %75 = vsyncadd [#allocation14], %s74
      %s76 = sshll.u32 [#allocation13], 4
      %s77 = int_to_ptr.vmem [resolvable:$true] %s76
      %82 = dma.hbm_to_vmem [thread:$0]  %s5, 2048, %s77, [#allocation14], 64, 64, 4
    $region25: #{tpu_custom_call.1} parent=1 // pred_fallthru
      _
    // Predicated region
    $region26: #{tpu_custom_call.1} parent=1 // pred_check
      _
    $region27: #{tpu_custom_call.1} parent=1 // pred_check_branch
      %84 = sbr.rel (0) target = $region29
    $region28: #{tpu_custom_call.1} parent=1 // pred_region
      %s86 = ssub.s32 16, 16
      %87 = vsyncadd [#allocation14], %s86
      %s89 = sshll.u32 [#allocation15], 4
      %s90 = int_to_ptr.vmem [resolvable:$true] %s89
      %92 = dma.hbm_to_vmem [thread:$0]  %s6, 16, %s90, [#allocation14]
    $region29: #{tpu_custom_call.1} parent=1 // pred_fallthru
      _
    // Predicated region
    $region30: #{tpu_custom_call.1} parent=1 // pred_check
      _
    $region31: #{tpu_custom_call.1} parent=1 // pred_check_branch
      %94 = sbr.rel (0) target = $region33
    $region32: #{tpu_custom_call.1} parent=1 // pred_region
      %95 = dma.done [#allocation5], 1024
    $region33: #{tpu_custom_call.1} parent=1 // pred_fallthru
      _
    // Predicated region
    $region34: #{tpu_custom_call.1} parent=1 // pred_check
      _
    $region35: #{tpu_custom_call.1} parent=1 // pred_check_branch
      %97 = sbr.rel (0) target = $region37
    $region36: #{tpu_custom_call.1} parent=1 // pred_region
      %98 = dma.done [#allocation8], 512
    $region37: #{tpu_custom_call.1} parent=1 // pred_fallthru
      _
    // Predicated region
    $region38: #{tpu_custom_call.1} parent=1 // pred_check
      _
    $region39: #{tpu_custom_call.1} parent=1 // pred_check_branch
      %100 = sbr.rel (0) target = $region41
    $region40: #{tpu_custom_call.1} parent=1 // pred_region
      %101 = dma.done [#allocation8], 16384
    $region41: #{tpu_custom_call.1} parent=1 // pred_fallthru
      _
    // Predicated region
    $region42: #{tpu_custom_call.1} parent=1 // pred_check
      _
    $region43: #{tpu_custom_call.1} parent=1 // pred_check_branch
      %103 = sbr.rel (0) target = $region45
    $region44: #{tpu_custom_call.1} parent=1 // pred_region
      %104 = dma.done [#allocation11], 32
    $region45: #{tpu_custom_call.1} parent=1 // pred_fallthru
      _
    // Predicated region
    $region46: #{tpu_custom_call.1} parent=1 // pred_check
      _
    $region47: #{tpu_custom_call.1} parent=1 // pred_check_branch
      %106 = sbr.rel (0) target = $region49
    $region48: #{tpu_custom_call.1} parent=1 // pred_region
      %107 = dma.done [#allocation11], 32
    $region49: #{tpu_custom_call.1} parent=1 // pred_fallthru
      _
    // Predicated region
    $region50: #{tpu_custom_call.1} parent=1 // pred_check
      _
    $region51: #{tpu_custom_call.1} parent=1 // pred_check_branch
      %109 = sbr.rel (0) target = $region53
    $region52: #{tpu_custom_call.1} parent=1 // pred_region
      %110 = dma.done [#allocation14], 2048
    $region53: #{tpu_custom_call.1} parent=1 // pred_fallthru
      _
    // Predicated region
    $region54: #{tpu_custom_call.1} parent=1 // pred_check
      _
    $region55: #{tpu_custom_call.1} parent=1 // pred_check_branch
      %112 = sbr.rel (0) target = $region57
    $region56: #{tpu_custom_call.1} parent=1 // pred_region
      %113 = dma.done [#allocation14], 16
    $region57: #{tpu_custom_call.1} parent=1 // pred_fallthru
      _
    %v115 = vld [vmem:[#allocation7] ss:$4 sm:$0xff]
    %s116 = scalar_lea.vmem [#allocation7], 1
    %v117 = vld [vmem:[%s116] ss:$4 sm:$0xff]
    %s118 = scalar_lea.vmem [#allocation7], 2
    %v119 = vld [vmem:[%s118] ss:$4 sm:$0xff]
    %s120 = scalar_lea.vmem [#allocation7], 3
    %v121 = vld [vmem:[%s120] ss:$4 sm:$0xff]
    %v122 = vld [vmem:[#allocation4] sm:$0xff]
    %vm123 = vcmp.eq.s32.totalorder %v122, 0
    %vm124 = vcmp.eq.s32.totalorder %v122, 1
    %vm125 = vcmp.eq.s32.totalorder %v122, 2
    %v126 = vsel %vm125, 1, 0
    %127 = vset.pattern.permute.xlu0 0
    %128 = vperm.xlu0 %127, %v126
    %v129 = vpop.permute.xlu0 %128
    %vm130 = vcmp.eq.s32.totalorder %v129, 1
    %v132 = vlaneseq
    %v133 = vshrl.u32 %v132, 7
    %v134 = vsub.s32 0, %v133
    %v135 = vrot.slane %v119, %v134
    %v136 = vlaneseq
    %v137 = vshrl.u32 %v136, 7
    %v138 = vsub.s32 1, %v137
    %v139 = vrot.slane %v119, %v138
    %v140 = vlaneseq
    %v141 = vshrl.u32 %v140, 7
    %v142 = vsub.s32 2, %v141
    %v143 = vrot.slane %v119, %v142
    %v144 = vlaneseq
    %v145 = vshrl.u32 %v144, 7
    %v146 = vsub.s32 3, %v145
    %v147 = vrot.slane %v119, %v146
    %v148 = vlaneseq
    %v149 = vshrl.u32 %v148, 7
    %v150 = vsub.s32 4, %v149
    %v151 = vrot.slane %v119, %v150
    %v152 = vlaneseq
    %v153 = vshrl.u32 %v152, 7
    %v154 = vsub.s32 5, %v153
    %v155 = vrot.slane %v119, %v154
    %v156 = vlaneseq
    %v157 = vshrl.u32 %v156, 7
    %v158 = vsub.s32 6, %v157
    %v159 = vrot.slane %v119, %v158
    %v160 = vlaneseq
    %v161 = vshrl.u32 %v160, 7
    %v162 = vsub.s32 7, %v161
    %v163 = vrot.slane %v119, %v162
    %v173 = vlaneseq
    %v174 = vshrl.u32 %v173, 7
    %v175 = vsub.s32 0, %v174
    %v176 = vrot.slane %v121, %v175
    %v177 = vlaneseq
    %v178 = vshrl.u32 %v177, 7
    %v179 = vsub.s32 1, %v178
    %v180 = vrot.slane %v121, %v179
    %v181 = vlaneseq
    %v182 = vshrl.u32 %v181, 7
    %v183 = vsub.s32 2, %v182
    %v184 = vrot.slane %v121, %v183
    %v185 = vlaneseq
    %v186 = vshrl.u32 %v185, 7
    %v187 = vsub.s32 3, %v186
    %v188 = vrot.slane %v121, %v187
    %v189 = vlaneseq
    %v190 = vshrl.u32 %v189, 7
    %v191 = vsub.s32 4, %v190
    %v192 = vrot.slane %v121, %v191
    %v193 = vlaneseq
    %v194 = vshrl.u32 %v193, 7
    %v195 = vsub.s32 5, %v194
    %v196 = vrot.slane %v121, %v195
    %v197 = vlaneseq
    %v198 = vshrl.u32 %v197, 7
    %v199 = vsub.s32 6, %v198
    %v200 = vrot.slane %v121, %v199
    %v201 = vlaneseq
    %v202 = vshrl.u32 %v201, 7
    %v203 = vsub.s32 7, %v202
    %v204 = vrot.slane %v121, %v203
    %v213 = vsel %vm130, %v135, %v176
    %v214 = vsel %vm130, %v139, %v180
    %v215 = vsel %vm130, %v143, %v184
    %v216 = vsel %vm130, %v147, %v188
    %v217 = vsel %vm130, %v151, %v192
    %v218 = vsel %vm130, %v155, %v196
    %v219 = vsel %vm130, %v159, %v200
    %v220 = vsel %vm130, %v163, %v204
    %v221 = vsel %vm124, 1, 0
    %222 = vset.pattern.permute.xlu0 0
    %223 = vperm.xlu0 %222, %v221
    %v224 = vpop.permute.xlu0 %223
    %vm225 = vcmp.eq.s32.totalorder %v224, 1
    %v227 = vlaneseq
    %v228 = vshrl.u32 %v227, 7
    %v229 = vsub.s32 0, %v228
    %v230 = vrot.slane %v117, %v229
    %v231 = vlaneseq
    %v232 = vshrl.u32 %v231, 7
    %v233 = vsub.s32 1, %v232
    %v234 = vrot.slane %v117, %v233
    %v235 = vlaneseq
    %v236 = vshrl.u32 %v235, 7
    %v237 = vsub.s32 2, %v236
    %v238 = vrot.slane %v117, %v237
    %v239 = vlaneseq
    %v240 = vshrl.u32 %v239, 7
    %v241 = vsub.s32 3, %v240
    %v242 = vrot.slane %v117, %v241
    %v243 = vlaneseq
    %v244 = vshrl.u32 %v243, 7
    %v245 = vsub.s32 4, %v244
    %v246 = vrot.slane %v117, %v245
    %v247 = vlaneseq
    %v248 = vshrl.u32 %v247, 7
    %v249 = vsub.s32 5, %v248
    %v250 = vrot.slane %v117, %v249
    %v251 = vlaneseq
    %v252 = vshrl.u32 %v251, 7
    %v253 = vsub.s32 6, %v252
    %v254 = vrot.slane %v117, %v253
    %v255 = vlaneseq
    %v256 = vshrl.u32 %v255, 7
    %v257 = vsub.s32 7, %v256
    %v258 = vrot.slane %v117, %v257
    %v267 = vsel %vm225, %v230, %v213
    %v268 = vsel %vm225, %v234, %v214
    %v269 = vsel %vm225, %v238, %v215
    %v270 = vsel %vm225, %v242, %v216
    %v271 = vsel %vm225, %v246, %v217
    %v272 = vsel %vm225, %v250, %v218
    %v273 = vsel %vm225, %v254, %v219
    %v274 = vsel %vm225, %v258, %v220
    %v275 = vsel %vm123, 1, 0
    %276 = vset.pattern.permute.xlu0 0
    %277 = vperm.xlu0 %276, %v275
    %v278 = vpop.permute.xlu0 %277
    %vm279 = vcmp.eq.s32.totalorder %v278, 1
    %v281 = vlaneseq
    %v282 = vshrl.u32 %v281, 7
    %v283 = vsub.s32 0, %v282
    %v284 = vrot.slane %v115, %v283
    %v285 = vlaneseq
    %v286 = vshrl.u32 %v285, 7
    %v287 = vsub.s32 1, %v286
    %v288 = vrot.slane %v115, %v287
    %v289 = vlaneseq
    %v290 = vshrl.u32 %v289, 7
    %v291 = vsub.s32 2, %v290
    %v292 = vrot.slane %v115, %v291
    %v293 = vlaneseq
    %v294 = vshrl.u32 %v293, 7
    %v295 = vsub.s32 3, %v294
    %v296 = vrot.slane %v115, %v295
    %v297 = vlaneseq
    %v298 = vshrl.u32 %v297, 7
    %v299 = vsub.s32 4, %v298
    %v300 = vrot.slane %v115, %v299
    %v301 = vlaneseq
    %v302 = vshrl.u32 %v301, 7
    %v303 = vsub.s32 5, %v302
    %v304 = vrot.slane %v115, %v303
    %v305 = vlaneseq
    %v306 = vshrl.u32 %v305, 7
    %v307 = vsub.s32 6, %v306
    %v308 = vrot.slane %v115, %v307
    %v309 = vlaneseq
    %v310 = vshrl.u32 %v309, 7
    %v311 = vsub.s32 7, %v310
    %v312 = vrot.slane %v115, %v311
    %v321 = vsel %vm279, %v284, %v267
    %v322 = vsel %vm279, %v288, %v268
    %v323 = vsel %vm279, %v292, %v269
    %v324 = vsel %vm279, %v296, %v270
    %v325 = vsel %vm279, %v300, %v271
    %v326 = vsel %vm279, %v304, %v272
    %v327 = vsel %vm279, %v308, %v273
    %v328 = vsel %vm279, %v312, %v274
    %329 = vst [vmem:[#allocation2] sm:$0xff] %v321
    %330 = vst [vmem:[#allocation2 + $0x8] sm:$0xff] %v322
    %331 = vst [vmem:[#allocation2 + $0x10] sm:$0xff] %v323
    %332 = vst [vmem:[#allocation2 + $0x18] sm:$0xff] %v324
    %333 = vst [vmem:[#allocation2 + $0x20] sm:$0xff] %v325
    %334 = vst [vmem:[#allocation2 + $0x28] sm:$0xff] %v326
    %335 = vst [vmem:[#allocation2 + $0x30] sm:$0xff] %v327
    %336 = vst [vmem:[#allocation2 + $0x38] sm:$0xff] %v328
    %s337 = scalar_lea.vmem [#allocation4], 8
    %v338 = vld [vmem:[%s337] sm:$0xff]
    %vm339 = vcmp.eq.s32.totalorder %v338, 0
    %vm340 = vcmp.eq.s32.totalorder %v338, 1
    %vm341 = vcmp.eq.s32.totalorder %v338, 2
    %v342 = vsel %vm341, 1, 0
    %343 = vset.pattern.permute.xlu0 0
    %344 = vperm.xlu0 %343, %v342
    %v345 = vpop.permute.xlu0 %344
    %vm346 = vcmp.eq.s32.totalorder %v345, 1
    %v347 = vsel %vm346, %v135, %v176
    %v348 = vsel %vm346, %v139, %v180
    %v349 = vsel %vm346, %v143, %v184
    %v350 = vsel %vm346, %v147, %v188
    %v351 = vsel %vm346, %v151, %v192
    %v352 = vsel %vm346, %v155, %v196
    %v353 = vsel %vm346, %v159, %v200
    %v354 = vsel %vm346, %v163, %v204
    %v355 = vsel %vm340, 1, 0
    %356 = vset.pattern.permute.xlu0 0
    %357 = vperm.xlu0 %356, %v355
    %v358 = vpop.permute.xlu0 %357
    %vm359 = vcmp.eq.s32.totalorder %v358, 1
    %v360 = vsel %vm359, %v230, %v347
    %v361 = vsel %vm359, %v234, %v348
    %v362 = vsel %vm359, %v238, %v349
    %v363 = vsel %vm359, %v242, %v350
    %v364 = vsel %vm359, %v246, %v351
    %v365 = vsel %vm359, %v250, %v352
    %v366 = vsel %vm359, %v254, %v353
    %v367 = vsel %vm359, %v258, %v354
    %v368 = vsel %vm339, 1, 0
    %369 = vset.pattern.permute.xlu0 0
    %370 = vperm.xlu0 %369, %v368
    %v371 = vpop.permute.xlu0 %370
    %vm372 = vcmp.eq.s32.totalorder %v371, 1
    %v373 = vsel %vm372, %v284, %v360
    %v374 = vsel %vm372, %v288, %v361
    %v375 = vsel %vm372, %v292, %v362
    %v376 = vsel %vm372, %v296, %v363
    %v377 = vsel %vm372, %v300, %v364
    %v378 = vsel %vm372, %v304, %v365
    %v379 = vsel %vm372, %v308, %v366
    %v380 = vsel %vm372, %v312, %v367
    %s381 = scalar_lea.vmem [#allocation2], 64
    %382 = vst [vmem:[%s381] sm:$0xff] %v373
    %383 = vst [vmem:[%s381 + $0x8] sm:$0xff] %v374
    %384 = vst [vmem:[%s381 + $0x10] sm:$0xff] %v375
    %385 = vst [vmem:[%s381 + $0x18] sm:$0xff] %v376
    %386 = vst [vmem:[%s381 + $0x20] sm:$0xff] %v377
    %387 = vst [vmem:[%s381 + $0x28] sm:$0xff] %v378
    %388 = vst [vmem:[%s381 + $0x30] sm:$0xff] %v379
    %389 = vst [vmem:[%s381 + $0x38] sm:$0xff] %v380
    %s390 = scalar_lea.vmem [#allocation4], 16
    %v391 = vld [vmem:[%s390] sm:$0xff]
    %vm392 = vcmp.eq.s32.totalorder %v391, 0
    %vm393 = vcmp.eq.s32.totalorder %v391, 1
    %vm394 = vcmp.eq.s32.totalorder %v391, 2
    %v395 = vsel %vm394, 1, 0
    %396 = vset.pattern.permute.xlu0 0
    %397 = vperm.xlu0 %396, %v395
    %v398 = vpop.permute.xlu0 %397
    %vm399 = vcmp.eq.s32.totalorder %v398, 1
    %v400 = vsel %vm399, %v135, %v176
    %v401 = vsel %vm399, %v139, %v180
    %v402 = vsel %vm399, %v143, %v184
    %v403 = vsel %vm399, %v147, %v188
    %v404 = vsel %vm399, %v151, %v192
    %v405 = vsel %vm399, %v155, %v196
    %v406 = vsel %vm399, %v159, %v200
    %v407 = vsel %vm399, %v163, %v204
    %v408 = vsel %vm393, 1, 0
    %409 = vset.pattern.permute.xlu0 0
    %410 = vperm.xlu0 %409, %v408
    %v411 = vpop.permute.xlu0 %410
    %vm412 = vcmp.eq.s32.totalorder %v411, 1
    %v413 = vsel %vm412, %v230, %v400
    %v414 = vsel %vm412, %v234, %v401
    %v415 = vsel %vm412, %v238, %v402
    %v416 = vsel %vm412, %v242, %v403
    %v417 = vsel %vm412, %v246, %v404
    %v418 = vsel %vm412, %v250, %v405
    %v419 = vsel %vm412, %v254, %v406
    %v420 = vsel %vm412, %v258, %v407
    %v421 = vsel %vm392, 1, 0
    %422 = vset.pattern.permute.xlu0 0
    %423 = vperm.xlu0 %422, %v421
    %v424 = vpop.permute.xlu0 %423
    %vm425 = vcmp.eq.s32.totalorder %v424, 1
    %v426 = vsel %vm425, %v284, %v413
    %v427 = vsel %vm425, %v288, %v414
    %v428 = vsel %vm425, %v292, %v415
    %v429 = vsel %vm425, %v296, %v416
    %v430 = vsel %vm425, %v300, %v417
    %v431 = vsel %vm425, %v304, %v418
    %v432 = vsel %vm425, %v308, %v419
    %v433 = vsel %vm425, %v312, %v420
    %s434 = scalar_lea.vmem [#allocation2], 128
    %435 = vst [vmem:[%s434] sm:$0xff] %v426
    %436 = vst [vmem:[%s434 + $0x8] sm:$0xff] %v427
    %437 = vst [vmem:[%s434 + $0x10] sm:$0xff] %v428
    %438 = vst [vmem:[%s434 + $0x18] sm:$0xff] %v429
    %439 = vst [vmem:[%s434 + $0x20] sm:$0xff] %v430
    %440 = vst [vmem:[%s434 + $0x28] sm:$0xff] %v431
    %441 = vst [vmem:[%s434 + $0x30] sm:$0xff] %v432
    %442 = vst [vmem:[%s434 + $0x38] sm:$0xff] %v433
    %s443 = scalar_lea.vmem [#allocation4], 24
    %v444 = vld [vmem:[%s443] sm:$0xff]
    %vm445 = vcmp.eq.s32.totalorder %v444, 0
    %vm446 = vcmp.eq.s32.totalorder %v444, 1
    %vm447 = vcmp.eq.s32.totalorder %v444, 2
    %v448 = vsel %vm447, 1, 0
    %449 = vset.pattern.permute.xlu0 0
    %450 = vperm.xlu0 %449, %v448
    %v451 = vpop.permute.xlu0 %450
    %vm452 = vcmp.eq.s32.totalorder %v451, 1
    %v453 = vsel %vm452, %v135, %v176
    %v454 = vsel %vm452, %v139, %v180
    %v455 = vsel %vm452, %v143, %v184
    %v456 = vsel %vm452, %v147, %v188
    %v457 = vsel %vm452, %v151, %v192
    %v458 = vsel %vm452, %v155, %v196
    %v459 = vsel %vm452, %v159, %v200
    %v460 = vsel %vm452, %v163, %v204
    %v461 = vsel %vm446, 1, 0
    %462 = vset.pattern.permute.xlu0 0
    %463 = vperm.xlu0 %462, %v461
    %v464 = vpop.permute.xlu0 %463
    %vm465 = vcmp.eq.s32.totalorder %v464, 1
    %v466 = vsel %vm465, %v230, %v453
    %v467 = vsel %vm465, %v234, %v454
    %v468 = vsel %vm465, %v238, %v455
    %v469 = vsel %vm465, %v242, %v456
    %v470 = vsel %vm465, %v246, %v457
    %v471 = vsel %vm465, %v250, %v458
    %v472 = vsel %vm465, %v254, %v459
    %v473 = vsel %vm465, %v258, %v460
    %v474 = vsel %vm445, 1, 0
    %475 = vset.pattern.permute.xlu0 0
    %476 = vperm.xlu0 %475, %v474
    %v477 = vpop.permute.xlu0 %476
    %vm478 = vcmp.eq.s32.totalorder %v477, 1
    %v479 = vsel %vm478, %v284, %v466
    %v480 = vsel %vm478, %v288, %v467
    %v481 = vsel %vm478, %v292, %v468
    %v482 = vsel %vm478, %v296, %v469
    %v483 = vsel %vm478, %v300, %v470
    %v484 = vsel %vm478, %v304, %v471
    %v485 = vsel %vm478, %v308, %v472
    %v486 = vsel %vm478, %v312, %v473
    %s487 = scalar_lea.vmem [#allocation2], 192
    %488 = vst [vmem:[%s487] sm:$0xff] %v479
    %489 = vst [vmem:[%s487 + $0x8] sm:$0xff] %v480
    %490 = vst [vmem:[%s487 + $0x10] sm:$0xff] %v481
    %491 = vst [vmem:[%s487 + $0x18] sm:$0xff] %v482
    %492 = vst [vmem:[%s487 + $0x20] sm:$0xff] %v483
    %493 = vst [vmem:[%s487 + $0x28] sm:$0xff] %v484
    %494 = vst [vmem:[%s487 + $0x30] sm:$0xff] %v485
    %495 = vst [vmem:[%s487 + $0x38] sm:$0xff] %v486
    %s496 = scalar_lea.vmem [#allocation4], 32
    %v497 = vld [vmem:[%s496] sm:$0xff]
    %vm498 = vcmp.eq.s32.totalorder %v497, 0
    %vm499 = vcmp.eq.s32.totalorder %v497, 1
    %vm500 = vcmp.eq.s32.totalorder %v497, 2
    %v501 = vsel %vm500, 1, 0
    %502 = vset.pattern.permute.xlu0 0
    %503 = vperm.xlu0 %502, %v501
    %v504 = vpop.permute.xlu0 %503
    %vm505 = vcmp.eq.s32.totalorder %v504, 1
    %v506 = vsel %vm505, %v135, %v176
    %v507 = vsel %vm505, %v139, %v180
    %v508 = vsel %vm505, %v143, %v184
    %v509 = vsel %vm505, %v147, %v188
    %v510 = vsel %vm505, %v151, %v192
    %v511 = vsel %vm505, %v155, %v196
    %v512 = vsel %vm505, %v159, %v200
    %v513 = vsel %vm505, %v163, %v204
    %v514 = vsel %vm499, 1, 0
    %515 = vset.pattern.permute.xlu0 0
    %516 = vperm.xlu0 %515, %v514
    %v517 = vpop.permute.xlu0 %516
    %vm518 = vcmp.eq.s32.totalorder %v517, 1
    %v519 = vsel %vm518, %v230, %v506
    %v520 = vsel %vm518, %v234, %v507
    %v521 = vsel %vm518, %v238, %v508
    %v522 = vsel %vm518, %v242, %v509
    %v523 = vsel %vm518, %v246, %v510
    %v524 = vsel %vm518, %v250, %v511
    %v525 = vsel %vm518, %v254, %v512
    %v526 = vsel %vm518, %v258, %v513
    %v527 = vsel %vm498, 1, 0
    %528 = vset.pattern.permute.xlu0 0
    %529 = vperm.xlu0 %528, %v527
    %v530 = vpop.permute.xlu0 %529
    %vm531 = vcmp.eq.s32.totalorder %v530, 1
    %v532 = vsel %vm531, %v284, %v519
    %v533 = vsel %vm531, %v288, %v520
    %v534 = vsel %vm531, %v292, %v521
    %v535 = vsel %vm531, %v296, %v522
    %v536 = vsel %vm531, %v300, %v523
    %v537 = vsel %vm531, %v304, %v524
    %v538 = vsel %vm531, %v308, %v525
    %v539 = vsel %vm531, %v312, %v526
    %s540 = scalar_lea.vmem [#allocation2], 256
    %541 = vst [vmem:[%s540] sm:$0xff] %v532
    %542 = vst [vmem:[%s540 + $0x8] sm:$0xff] %v533
    %543 = vst [vmem:[%s540 + $0x10] sm:$0xff] %v534
    %544 = vst [vmem:[%s540 + $0x18] sm:$0xff] %v535
    %545 = vst [vmem:[%s540 + $0x20] sm:$0xff] %v536
    %546 = vst [vmem:[%s540 + $0x28] sm:$0xff] %v537
    %547 = vst [vmem:[%s540 + $0x30] sm:$0xff] %v538
    %548 = vst [vmem:[%s540 + $0x38] sm:$0xff] %v539
    %s549 = scalar_lea.vmem [#allocation4], 40
    %v550 = vld [vmem:[%s549] sm:$0xff]
    %vm551 = vcmp.eq.s32.totalorder %v550, 0
    %vm552 = vcmp.eq.s32.totalorder %v550, 1
    %vm553 = vcmp.eq.s32.totalorder %v550, 2
    %v554 = vsel %vm553, 1, 0
    %555 = vset.pattern.permute.xlu0 0
    %556 = vperm.xlu0 %555, %v554
    %v557 = vpop.permute.xlu0 %556
    %vm558 = vcmp.eq.s32.totalorder %v557, 1
    %v559 = vsel %vm558, %v135, %v176
    %v560 = vsel %vm558, %v139, %v180
    %v561 = vsel %vm558, %v143, %v184
    %v562 = vsel %vm558, %v147, %v188
    %v563 = vsel %vm558, %v151, %v192
    %v564 = vsel %vm558, %v155, %v196
    %v565 = vsel %vm558, %v159, %v200
    %v566 = vsel %vm558, %v163, %v204
    %v567 = vsel %vm552, 1, 0
    %568 = vset.pattern.permute.xlu0 0
    %569 = vperm.xlu0 %568, %v567
    %v570 = vpop.permute.xlu0 %569
    %vm571 = vcmp.eq.s32.totalorder %v570, 1
    %v572 = vsel %vm571, %v230, %v559
    %v573 = vsel %vm571, %v234, %v560
    %v574 = vsel %vm571, %v238, %v561
    %v575 = vsel %vm571, %v242, %v562
    %v576 = vsel %vm571, %v246, %v563
    %v577 = vsel %vm571, %v250, %v564
    %v578 = vsel %vm571, %v254, %v565
    %v579 = vsel %vm571, %v258, %v566
    %v580 = vsel %vm551, 1, 0
    %581 = vset.pattern.permute.xlu0 0
    %582 = vperm.xlu0 %581, %v580
    %v583 = vpop.permute.xlu0 %582
    %vm584 = vcmp.eq.s32.totalorder %v583, 1
    %v585 = vsel %vm584, %v284, %v572
    %v586 = vsel %vm584, %v288, %v573
    %v587 = vsel %vm584, %v292, %v574
    %v588 = vsel %vm584, %v296, %v575
    %v589 = vsel %vm584, %v300, %v576
    %v590 = vsel %vm584, %v304, %v577
    %v591 = vsel %vm584, %v308, %v578
    %v592 = vsel %vm584, %v312, %v579
    %s593 = scalar_lea.vmem [#allocation2], 320
    %594 = vst [vmem:[%s593] sm:$0xff] %v585
    %595 = vst [vmem:[%s593 + $0x8] sm:$0xff] %v586
    %596 = vst [vmem:[%s593 + $0x10] sm:$0xff] %v587
    %597 = vst [vmem:[%s593 + $0x18] sm:$0xff] %v588
    %598 = vst [vmem:[%s593 + $0x20] sm:$0xff] %v589
    %599 = vst [vmem:[%s593 + $0x28] sm:$0xff] %v590
    %600 = vst [vmem:[%s593 + $0x30] sm:$0xff] %v591
    %601 = vst [vmem:[%s593 + $0x38] sm:$0xff] %v592
    %s602 = scalar_lea.vmem [#allocation4], 48
    %v603 = vld [vmem:[%s602] sm:$0xff]
    %vm604 = vcmp.eq.s32.totalorder %v603, 0
    %vm605 = vcmp.eq.s32.totalorder %v603, 1
    %vm606 = vcmp.eq.s32.totalorder %v603, 2
    %v607 = vsel %vm606, 1, 0
    %608 = vset.pattern.permute.xlu0 0
    %609 = vperm.xlu0 %608, %v607
    %v610 = vpop.permute.xlu0 %609
    %vm611 = vcmp.eq.s32.totalorder %v610, 1
    %v612 = vsel %vm611, %v135, %v176
    %v613 = vsel %vm611, %v139, %v180
    %v614 = vsel %vm611, %v143, %v184
    %v615 = vsel %vm611, %v147, %v188
    %v616 = vsel %vm611, %v151, %v192
    %v617 = vsel %vm611, %v155, %v196
    %v618 = vsel %vm611, %v159, %v200
    %v619 = vsel %vm611, %v163, %v204
    %v620 = vsel %vm605, 1, 0
    %621 = vset.pattern.permute.xlu0 0
    %622 = vperm.xlu0 %621, %v620
    %v623 = vpop.permute.xlu0 %622
    %vm624 = vcmp.eq.s32.totalorder %v623, 1
    %v625 = vsel %vm624, %v230, %v612
    %v626 = vsel %vm624, %v234, %v613
    %v627 = vsel %vm624, %v238, %v614
    %v628 = vsel %vm624, %v242, %v615
    %v629 = vsel %vm624, %v246, %v616
    %v630 = vsel %vm624, %v250, %v617
    %v631 = vsel %vm624, %v254, %v618
    %v632 = vsel %vm624, %v258, %v619
    %v633 = vsel %vm604, 1, 0
    %634 = vset.pattern.permute.xlu0 0
    %635 = vperm.xlu0 %634, %v633
    %v636 = vpop.permute.xlu0 %635
    %vm637 = vcmp.eq.s32.totalorder %v636, 1
    %v638 = vsel %vm637, %v284, %v625
    %v639 = vsel %vm637, %v288, %v626
    %v640 = vsel %vm637, %v292, %v627
    %v641 = vsel %vm637, %v296, %v628
    %v642 = vsel %vm637, %v300, %v629
    %v643 = vsel %vm637, %v304, %v630
    %v644 = vsel %vm637, %v308, %v631
    %v645 = vsel %vm637, %v312, %v632
    %s646 = scalar_lea.vmem [#allocation2], 384
    %647 = vst [vmem:[%s646] sm:$0xff] %v638
    %648 = vst [vmem:[%s646 + $0x8] sm:$0xff] %v639
    %649 = vst [vmem:[%s646 + $0x10] sm:$0xff] %v640
    %650 = vst [vmem:[%s646 + $0x18] sm:$0xff] %v641
    %651 = vst [vmem:[%s646 + $0x20] sm:$0xff] %v642
    %652 = vst [vmem:[%s646 + $0x28] sm:$0xff] %v643
    %653 = vst [vmem:[%s646 + $0x30] sm:$0xff] %v644
    %654 = vst [vmem:[%s646 + $0x38] sm:$0xff] %v645
    %s655 = scalar_lea.vmem [#allocation4], 56
    %v656 = vld [vmem:[%s655] sm:$0xff]
    %vm657 = vcmp.eq.s32.totalorder %v656, 0
    %vm658 = vcmp.eq.s32.totalorder %v656, 1
    %vm659 = vcmp.eq.s32.totalorder %v656, 2
    %v660 = vsel %vm659, 1, 0
    %661 = vset.pattern.permute.xlu0 0
    %662 = vperm.xlu0 %661, %v660
    %v663 = vpop.permute.xlu0 %662
    %vm664 = vcmp.eq.s32.totalorder %v663, 1
    %v665 = vsel %vm664, %v135, %v176
    %v666 = vsel %vm664, %v139, %v180
    %v667 = vsel %vm664, %v143, %v184
    %v668 = vsel %vm664, %v147, %v188
    %v669 = vsel %vm664, %v151, %v192
    %v670 = vsel %vm664, %v155, %v196
    %v671 = vsel %vm664, %v159, %v200
    %v672 = vsel %vm664, %v163, %v204
    %v673 = vsel %vm658, 1, 0
    %674 = vset.pattern.permute.xlu0 0
    %675 = vperm.xlu0 %674, %v673
    %v676 = vpop.permute.xlu0 %675
    %vm677 = vcmp.eq.s32.totalorder %v676, 1
    %v678 = vsel %vm677, %v230, %v665
    %v679 = vsel %vm677, %v234, %v666
    %v680 = vsel %vm677, %v238, %v667
    %v681 = vsel %vm677, %v242, %v668
    %v682 = vsel %vm677, %v246, %v669
    %v683 = vsel %vm677, %v250, %v670
    %v684 = vsel %vm677, %v254, %v671
    %v685 = vsel %vm677, %v258, %v672
    %v686 = vsel %vm657, 1, 0
    %687 = vset.pattern.permute.xlu0 0
    %688 = vperm.xlu0 %687, %v686
    %v689 = vpop.permute.xlu0 %688
    %vm690 = vcmp.eq.s32.totalorder %v689, 1
    %v691 = vsel %vm690, %v284, %v678
    %v692 = vsel %vm690, %v288, %v679
    %v693 = vsel %vm690, %v292, %v680
    %v694 = vsel %vm690, %v296, %v681
    %v695 = vsel %vm690, %v300, %v682
    %v696 = vsel %vm690, %v304, %v683
    %v697 = vsel %vm690, %v308, %v684
    %v698 = vsel %vm690, %v312, %v685
    %s699 = scalar_lea.vmem [#allocation2], 448
    %700 = vst [vmem:[%s699] sm:$0xff] %v691
    %701 = vst [vmem:[%s699 + $0x8] sm:$0xff] %v692
    %702 = vst [vmem:[%s699 + $0x10] sm:$0xff] %v693
    %703 = vst [vmem:[%s699 + $0x18] sm:$0xff] %v694
    %704 = vst [vmem:[%s699 + $0x20] sm:$0xff] %v695
    %705 = vst [vmem:[%s699 + $0x28] sm:$0xff] %v696
    %706 = vst [vmem:[%s699 + $0x30] sm:$0xff] %v697
    %707 = vst [vmem:[%s699 + $0x38] sm:$0xff] %v698
    %v708 = vld [vmem:[#allocation10] sm:$0x3]
    %v710 = vlaneseq
    %v711 = vshrl.u32 %v710, 7
    %v712 = vsub.s32 0, %v711
    %v713 = vrot.slane %v708, %v712
    %v714 = vlaneseq
    %v715 = vshrl.u32 %v714, 7
    %v716 = vsub.s32 1, %v715
    %v717 = vrot.slane %v708, %v716
    %v720 = vld [vmem:[#allocation12] sm:$0x3]
    %v722 = vlaneseq
    %v723 = vshrl.u32 %v722, 7
    %v724 = vsub.s32 0, %v723
    %v725 = vrot.slane %v720, %v724
    %v726 = vlaneseq
    %v727 = vshrl.u32 %v726, 7
    %v728 = vsub.s32 1, %v727
    %v729 = vrot.slane %v720, %v728
    %v732 = vld [vmem:[#allocation2] sm:$0xff]
    %v733 = vld [vmem:[#allocation2 + $0x8] sm:$0xff]
    %v734 = vld [vmem:[#allocation2 + $0x10] sm:$0xff]
    %v735 = vld [vmem:[#allocation2 + $0x18] sm:$0xff]
    %v736 = vld [vmem:[#allocation2 + $0x20] sm:$0xff]
    %v737 = vld [vmem:[#allocation2 + $0x28] sm:$0xff]
    %v738 = vld [vmem:[#allocation2 + $0x30] sm:$0xff]
    %v739 = vld [vmem:[#allocation2 + $0x38] sm:$0xff]
    %v740 = vpack.c.bf16 %v713, %v713
    %v741 = vpack.c.bf16 %v717, %v717
    %v742 = vld [vmem:[#allocation9] sm:$0xff]
    %v743 = vld [vmem:[#allocation9 + $0x8] sm:$0xff]
    %v744 = vld [vmem:[#allocation9 + $0x10] sm:$0xff]
    %v745 = vld [vmem:[#allocation9 + $0x18] sm:$0xff]
    %v746 = vld [vmem:[#allocation9 + $0x20] sm:$0xff]
    %v747 = vld [vmem:[#allocation9 + $0x28] sm:$0xff]
    %v748 = vld [vmem:[#allocation9 + $0x30] sm:$0xff]
    %v749 = vld [vmem:[#allocation9 + $0x38] sm:$0xff]
    %v750 = vld [vmem:[#allocation9 + $0x40] sm:$0xff]
    %v751 = vld [vmem:[#allocation9 + $0x48] sm:$0xff]
    %v752 = vld [vmem:[#allocation9 + $0x50] sm:$0xff]
    %v753 = vld [vmem:[#allocation9 + $0x58] sm:$0xff]
    %v754 = vld [vmem:[#allocation9 + $0x60] sm:$0xff]
    %v755 = vld [vmem:[#allocation9 + $0x68] sm:$0xff]
    %v756 = vld [vmem:[#allocation9 + $0x70] sm:$0xff]
    %v757 = vld [vmem:[#allocation9 + $0x78] sm:$0xff]
    %v758 = vld [vmem:[#allocation9 + $0x80] sm:$0xff]
    %v759 = vld [vmem:[#allocation9 + $0x88] sm:$0xff]
    %v760 = vld [vmem:[#allocation9 + $0x90] sm:$0xff]
    %v761 = vld [vmem:[#allocation9 + $0x98] sm:$0xff]
    %v762 = vld [vmem:[#allocation9 + $0xa0] sm:$0xff]
    %v763 = vld [vmem:[#allocation9 + $0xa8] sm:$0xff]
    %v764 = vld [vmem:[#allocation9 + $0xb0] sm:$0xff]
    %v765 = vld [vmem:[#allocation9 + $0xb8] sm:$0xff]
    %v766 = vld [vmem:[#allocation9 + $0xc0] sm:$0xff]
    %v767 = vld [vmem:[#allocation9 + $0xc8] sm:$0xff]
    %v768 = vld [vmem:[#allocation9 + $0xd0] sm:$0xff]
    %v769 = vld [vmem:[#allocation9 + $0xd8] sm:$0xff]
    %v770 = vld [vmem:[#allocation9 + $0xe0] sm:$0xff]
    %v771 = vld [vmem:[#allocation9 + $0xe8] sm:$0xff]
    %v772 = vld [vmem:[#allocation9 + $0xf0] sm:$0xff]
    %v773 = vld [vmem:[#allocation9 + $0xf8] sm:$0xff]
    %v774 = vld [vmem:[#allocation9 + $0x100] sm:$0xff]
    %v775 = vld [vmem:[#allocation9 + $0x108] sm:$0xff]
    %v776 = vld [vmem:[#allocation9 + $0x110] sm:$0xff]
    %v777 = vld [vmem:[#allocation9 + $0x118] sm:$0xff]
    %v778 = vld [vmem:[#allocation9 + $0x120] sm:$0xff]
    %v779 = vld [vmem:[#allocation9 + $0x128] sm:$0xff]
    %v780 = vld [vmem:[#allocation9 + $0x130] sm:$0xff]
    %v781 = vld [vmem:[#allocation9 + $0x138] sm:$0xff]
    %v782 = vld [vmem:[#allocation9 + $0x140] sm:$0xff]
    %v783 = vld [vmem:[#allocation9 + $0x148] sm:$0xff]
    %v784 = vld [vmem:[#allocation9 + $0x150] sm:$0xff]
    %v785 = vld [vmem:[#allocation9 + $0x158] sm:$0xff]
    %v786 = vld [vmem:[#allocation9 + $0x160] sm:$0xff]
    %v787 = vld [vmem:[#allocation9 + $0x168] sm:$0xff]
    %v788 = vld [vmem:[#allocation9 + $0x170] sm:$0xff]
    %v789 = vld [vmem:[#allocation9 + $0x178] sm:$0xff]
    %v790 = vld [vmem:[#allocation9 + $0x180] sm:$0xff]
    %v791 = vld [vmem:[#allocation9 + $0x188] sm:$0xff]
    %v792 = vld [vmem:[#allocation9 + $0x190] sm:$0xff]
    %v793 = vld [vmem:[#allocation9 + $0x198] sm:$0xff]
    %v794 = vld [vmem:[#allocation9 + $0x1a0] sm:$0xff]
    %v795 = vld [vmem:[#allocation9 + $0x1a8] sm:$0xff]
    %v796 = vld [vmem:[#allocation9 + $0x1b0] sm:$0xff]
    %v797 = vld [vmem:[#allocation9 + $0x1b8] sm:$0xff]
    %v798 = vld [vmem:[#allocation9 + $0x1c0] sm:$0xff]
    %v799 = vld [vmem:[#allocation9 + $0x1c8] sm:$0xff]
    %v800 = vld [vmem:[#allocation9 + $0x1d0] sm:$0xff]
    %v801 = vld [vmem:[#allocation9 + $0x1d8] sm:$0xff]
    %v802 = vld [vmem:[#allocation9 + $0x1e0] sm:$0xff]
    %v803 = vld [vmem:[#allocation9 + $0x1e8] sm:$0xff]
    %v804 = vld [vmem:[#allocation9 + $0x1f0] sm:$0xff]
    %v805 = vld [vmem:[#allocation9 + $0x1f8] sm:$0xff]
    %v806 = vld [vmem:[#allocation9 + $0x200] sm:$0xff]
    %v807 = vld [vmem:[#allocation9 + $0x208] sm:$0xff]
    %v808 = vld [vmem:[#allocation9 + $0x210] sm:$0xff]
    %v809 = vld [vmem:[#allocation9 + $0x218] sm:$0xff]
    %v810 = vld [vmem:[#allocation9 + $0x220] sm:$0xff]
    %v811 = vld [vmem:[#allocation9 + $0x228] sm:$0xff]
    %v812 = vld [vmem:[#allocation9 + $0x230] sm:$0xff]
    %v813 = vld [vmem:[#allocation9 + $0x238] sm:$0xff]
    %v814 = vld [vmem:[#allocation9 + $0x240] sm:$0xff]
    %v815 = vld [vmem:[#allocation9 + $0x248] sm:$0xff]
    %v816 = vld [vmem:[#allocation9 + $0x250] sm:$0xff]
    %v817 = vld [vmem:[#allocation9 + $0x258] sm:$0xff]
    %v818 = vld [vmem:[#allocation9 + $0x260] sm:$0xff]
    %v819 = vld [vmem:[#allocation9 + $0x268] sm:$0xff]
    %v820 = vld [vmem:[#allocation9 + $0x270] sm:$0xff]
    %v821 = vld [vmem:[#allocation9 + $0x278] sm:$0xff]
    %v822 = vld [vmem:[#allocation9 + $0x280] sm:$0xff]
    %v823 = vld [vmem:[#allocation9 + $0x288] sm:$0xff]
    %v824 = vld [vmem:[#allocation9 + $0x290] sm:$0xff]
    %v825 = vld [vmem:[#allocation9 + $0x298] sm:$0xff]
    %v826 = vld [vmem:[#allocation9 + $0x2a0] sm:$0xff]
    %v827 = vld [vmem:[#allocation9 + $0x2a8] sm:$0xff]
    %v828 = vld [vmem:[#allocation9 + $0x2b0] sm:$0xff]
    %v829 = vld [vmem:[#allocation9 + $0x2b8] sm:$0xff]
    %v830 = vld [vmem:[#allocation9 + $0x2c0] sm:$0xff]
    %v831 = vld [vmem:[#allocation9 + $0x2c8] sm:$0xff]
    %v832 = vld [vmem:[#allocation9 + $0x2d0] sm:$0xff]
    %v833 = vld [vmem:[#allocation9 + $0x2d8] sm:$0xff]
    %v834 = vld [vmem:[#allocation9 + $0x2e0] sm:$0xff]
    %v835 = vld [vmem:[#allocation9 + $0x2e8] sm:$0xff]
    %v836 = vld [vmem:[#allocation9 + $0x2f0] sm:$0xff]
    %v837 = vld [vmem:[#allocation9 + $0x2f8] sm:$0xff]
    %v838 = vld [vmem:[#allocation9 + $0x300] sm:$0xff]
    %v839 = vld [vmem:[#allocation9 + $0x308] sm:$0xff]
    %v840 = vld [vmem:[#allocation9 + $0x310] sm:$0xff]
    %v841 = vld [vmem:[#allocation9 + $0x318] sm:$0xff]
    %v842 = vld [vmem:[#allocation9 + $0x320] sm:$0xff]
    %v843 = vld [vmem:[#allocation9 + $0x328] sm:$0xff]
    %v844 = vld [vmem:[#allocation9 + $0x330] sm:$0xff]
    %v845 = vld [vmem:[#allocation9 + $0x338] sm:$0xff]
    %v846 = vld [vmem:[#allocation9 + $0x340] sm:$0xff]
    %v847 = vld [vmem:[#allocation9 + $0x348] sm:$0xff]
    %v848 = vld [vmem:[#allocation9 + $0x350] sm:$0xff]
    %v849 = vld [vmem:[#allocation9 + $0x358] sm:$0xff]
    %v850 = vld [vmem:[#allocation9 + $0x360] sm:$0xff]
    %v851 = vld [vmem:[#allocation9 + $0x368] sm:$0xff]
    %v852 = vld [vmem:[#allocation9 + $0x370] sm:$0xff]
    %v853 = vld [vmem:[#allocation9 + $0x378] sm:$0xff]
    %v854 = vld [vmem:[#allocation9 + $0x380] sm:$0xff]
    %v855 = vld [vmem:[#allocation9 + $0x388] sm:$0xff]
    %v856 = vld [vmem:[#allocation9 + $0x390] sm:$0xff]
    %v857 = vld [vmem:[#allocation9 + $0x398] sm:$0xff]
    %v858 = vld [vmem:[#allocation9 + $0x3a0] sm:$0xff]
    %v859 = vld [vmem:[#allocation9 + $0x3a8] sm:$0xff]
    %v860 = vld [vmem:[#allocation9 + $0x3b0] sm:$0xff]
    %v861 = vld [vmem:[#allocation9 + $0x3b8] sm:$0xff]
    %v862 = vld [vmem:[#allocation9 + $0x3c0] sm:$0xff]
    %v863 = vld [vmem:[#allocation9 + $0x3c8] sm:$0xff]
    %v864 = vld [vmem:[#allocation9 + $0x3d0] sm:$0xff]
    %v865 = vld [vmem:[#allocation9 + $0x3d8] sm:$0xff]
    %v866 = vld [vmem:[#allocation9 + $0x3e0] sm:$0xff]
    %v867 = vld [vmem:[#allocation9 + $0x3e8] sm:$0xff]
    %v868 = vld [vmem:[#allocation9 + $0x3f0] sm:$0xff]
    %v869 = vld [vmem:[#allocation9 + $0x3f8] sm:$0xff]
    %v998 = vunpack.c.l.b16 %v742
    %v999 = vunpack.c.h.b16 %v742
    %v1000 = vunpack.c.l.b16 %v743
    %v1001 = vunpack.c.h.b16 %v743
    %v1002 = vunpack.c.l.b16 %v744
    %v1003 = vunpack.c.h.b16 %v744
    %v1004 = vunpack.c.l.b16 %v745
    %v1005 = vunpack.c.h.b16 %v745
    %v1006 = vunpack.c.l.b16 %v746
    %v1007 = vunpack.c.h.b16 %v746
    %v1008 = vunpack.c.l.b16 %v747
    %v1009 = vunpack.c.h.b16 %v747
    %v1010 = vunpack.c.l.b16 %v748
    %v1011 = vunpack.c.h.b16 %v748
    %v1012 = vunpack.c.l.b16 %v749
    %v1013 = vunpack.c.h.b16 %v749
    %v1014 = vunpack.c.l.b16 %v750
    %v1015 = vunpack.c.h.b16 %v750
    %v1016 = vunpack.c.l.b16 %v751
    %v1017 = vunpack.c.h.b16 %v751
    %v1018 = vunpack.c.l.b16 %v752
    %v1019 = vunpack.c.h.b16 %v752
    %v1020 = vunpack.c.l.b16 %v753
    %v1021 = vunpack.c.h.b16 %v753
    %v1022 = vunpack.c.l.b16 %v754
    %v1023 = vunpack.c.h.b16 %v754
    %v1024 = vunpack.c.l.b16 %v755
    %v1025 = vunpack.c.h.b16 %v755
    %v1026 = vunpack.c.l.b16 %v756
    %v1027 = vunpack.c.h.b16 %v756
    %v1028 = vunpack.c.l.b16 %v757
    %v1029 = vunpack.c.h.b16 %v757
    %v1030 = vunpack.c.l.b16 %v758
    %v1031 = vunpack.c.h.b16 %v758
    %v1032 = vunpack.c.l.b16 %v759
    %v1033 = vunpack.c.h.b16 %v759
    %v1034 = vunpack.c.l.b16 %v760
    %v1035 = vunpack.c.h.b16 %v760
    %v1036 = vunpack.c.l.b16 %v761
    %v1037 = vunpack.c.h.b16 %v761
    %v1038 = vunpack.c.l.b16 %v762
    %v1039 = vunpack.c.h.b16 %v762
    %v1040 = vunpack.c.l.b16 %v763
    %v1041 = vunpack.c.h.b16 %v763
    %v1042 = vunpack.c.l.b16 %v764
    %v1043 = vunpack.c.h.b16 %v764
    %v1044 = vunpack.c.l.b16 %v765
    %v1045 = vunpack.c.h.b16 %v765
    %v1046 = vunpack.c.l.b16 %v766
    %v1047 = vunpack.c.h.b16 %v766
    %v1048 = vunpack.c.l.b16 %v767
    %v1049 = vunpack.c.h.b16 %v767
    %v1050 = vunpack.c.l.b16 %v768
    %v1051 = vunpack.c.h.b16 %v768
    %v1052 = vunpack.c.l.b16 %v769
    %v1053 = vunpack.c.h.b16 %v769
    %v1054 = vunpack.c.l.b16 %v770
    %v1055 = vunpack.c.h.b16 %v770
    %v1056 = vunpack.c.l.b16 %v771
    %v1057 = vunpack.c.h.b16 %v771
    %v1058 = vunpack.c.l.b16 %v772
    %v1059 = vunpack.c.h.b16 %v772
    %v1060 = vunpack.c.l.b16 %v773
    %v1061 = vunpack.c.h.b16 %v773
    %v1062 = vunpack.c.l.b16 %v774
    %v1063 = vunpack.c.h.b16 %v774
    %v1064 = vunpack.c.l.b16 %v775
    %v1065 = vunpack.c.h.b16 %v775
    %v1066 = vunpack.c.l.b16 %v776
    %v1067 = vunpack.c.h.b16 %v776
    %v1068 = vunpack.c.l.b16 %v777
    %v1069 = vunpack.c.h.b16 %v777
    %v1070 = vunpack.c.l.b16 %v778
    %v1071 = vunpack.c.h.b16 %v778
    %v1072 = vunpack.c.l.b16 %v779
    %v1073 = vunpack.c.h.b16 %v779
    %v1074 = vunpack.c.l.b16 %v780
    %v1075 = vunpack.c.h.b16 %v780
    %v1076 = vunpack.c.l.b16 %v781
    %v1077 = vunpack.c.h.b16 %v781
    %v1078 = vunpack.c.l.b16 %v782
    %v1079 = vunpack.c.h.b16 %v782
    %v1080 = vunpack.c.l.b16 %v783
    %v1081 = vunpack.c.h.b16 %v783
    %v1082 = vunpack.c.l.b16 %v784
    %v1083 = vunpack.c.h.b16 %v784
    %v1084 = vunpack.c.l.b16 %v785
    %v1085 = vunpack.c.h.b16 %v785
    %v1086 = vunpack.c.l.b16 %v786
    %v1087 = vunpack.c.h.b16 %v786
    %v1088 = vunpack.c.l.b16 %v787
    %v1089 = vunpack.c.h.b16 %v787
    %v1090 = vunpack.c.l.b16 %v788
    %v1091 = vunpack.c.h.b16 %v788
    %v1092 = vunpack.c.l.b16 %v789
    %v1093 = vunpack.c.h.b16 %v789
    %v1094 = vunpack.c.l.b16 %v790
    %v1095 = vunpack.c.h.b16 %v790
    %v1096 = vunpack.c.l.b16 %v791
    %v1097 = vunpack.c.h.b16 %v791
    %v1098 = vunpack.c.l.b16 %v792
    %v1099 = vunpack.c.h.b16 %v792
    %v1100 = vunpack.c.l.b16 %v793
    %v1101 = vunpack.c.h.b16 %v793
    %v1102 = vunpack.c.l.b16 %v794
    %v1103 = vunpack.c.h.b16 %v794
    %v1104 = vunpack.c.l.b16 %v795
    %v1105 = vunpack.c.h.b16 %v795
    %v1106 = vunpack.c.l.b16 %v796
    %v1107 = vunpack.c.h.b16 %v796
    %v1108 = vunpack.c.l.b16 %v797
    %v1109 = vunpack.c.h.b16 %v797
    %v1110 = vunpack.c.l.b16 %v798
    %v1111 = vunpack.c.h.b16 %v798
    %v1112 = vunpack.c.l.b16 %v799
    %v1113 = vunpack.c.h.b16 %v799
    %v1114 = vunpack.c.l.b16 %v800
    %v1115 = vunpack.c.h.b16 %v800
    %v1116 = vunpack.c.l.b16 %v801
    %v1117 = vunpack.c.h.b16 %v801
    %v1118 = vunpack.c.l.b16 %v802
    %v1119 = vunpack.c.h.b16 %v802
    %v1120 = vunpack.c.l.b16 %v803
    %v1121 = vunpack.c.h.b16 %v803
    %v1122 = vunpack.c.l.b16 %v804
    %v1123 = vunpack.c.h.b16 %v804
    %v1124 = vunpack.c.l.b16 %v805
    %v1125 = vunpack.c.h.b16 %v805
    %v1126 = vunpack.c.l.b16 %v806
    %v1127 = vunpack.c.h.b16 %v806
    %v1128 = vunpack.c.l.b16 %v807
    %v1129 = vunpack.c.h.b16 %v807
    %v1130 = vunpack.c.l.b16 %v808
    %v1131 = vunpack.c.h.b16 %v808
    %v1132 = vunpack.c.l.b16 %v809
    %v1133 = vunpack.c.h.b16 %v809
    %v1134 = vunpack.c.l.b16 %v810
    %v1135 = vunpack.c.h.b16 %v810
    %v1136 = vunpack.c.l.b16 %v811
    %v1137 = vunpack.c.h.b16 %v811
    %v1138 = vunpack.c.l.b16 %v812
    %v1139 = vunpack.c.h.b16 %v812
    %v1140 = vunpack.c.l.b16 %v813
    %v1141 = vunpack.c.h.b16 %v813
    %v1142 = vunpack.c.l.b16 %v814
    %v1143 = vunpack.c.h.b16 %v814
    %v1144 = vunpack.c.l.b16 %v815
    %v1145 = vunpack.c.h.b16 %v815
    %v1146 = vunpack.c.l.b16 %v816
    %v1147 = vunpack.c.h.b16 %v816
    %v1148 = vunpack.c.l.b16 %v817
    %v1149 = vunpack.c.h.b16 %v817
    %v1150 = vunpack.c.l.b16 %v818
    %v1151 = vunpack.c.h.b16 %v818
    %v1152 = vunpack.c.l.b16 %v819
    %v1153 = vunpack.c.h.b16 %v819
    %v1154 = vunpack.c.l.b16 %v820
    %v1155 = vunpack.c.h.b16 %v820
    %v1156 = vunpack.c.l.b16 %v821
    %v1157 = vunpack.c.h.b16 %v821
    %v1158 = vunpack.c.l.b16 %v822
    %v1159 = vunpack.c.h.b16 %v822
    %v1160 = vunpack.c.l.b16 %v823
    %v1161 = vunpack.c.h.b16 %v823
    %v1162 = vunpack.c.l.b16 %v824
    %v1163 = vunpack.c.h.b16 %v824
    %v1164 = vunpack.c.l.b16 %v825
    %v1165 = vunpack.c.h.b16 %v825
    %v1166 = vunpack.c.l.b16 %v826
    %v1167 = vunpack.c.h.b16 %v826
    %v1168 = vunpack.c.l.b16 %v827
    %v1169 = vunpack.c.h.b16 %v827
    %v1170 = vunpack.c.l.b16 %v828
    %v1171 = vunpack.c.h.b16 %v828
    %v1172 = vunpack.c.l.b16 %v829
    %v1173 = vunpack.c.h.b16 %v829
    %v1174 = vunpack.c.l.b16 %v830
    %v1175 = vunpack.c.h.b16 %v830
    %v1176 = vunpack.c.l.b16 %v831
    %v1177 = vunpack.c.h.b16 %v831
    %v1178 = vunpack.c.l.b16 %v832
    %v1179 = vunpack.c.h.b16 %v832
    %v1180 = vunpack.c.l.b16 %v833
    %v1181 = vunpack.c.h.b16 %v833
    %v1182 = vunpack.c.l.b16 %v834
    %v1183 = vunpack.c.h.b16 %v834
    %v1184 = vunpack.c.l.b16 %v835
    %v1185 = vunpack.c.h.b16 %v835
    %v1186 = vunpack.c.l.b16 %v836
    %v1187 = vunpack.c.h.b16 %v836
    %v1188 = vunpack.c.l.b16 %v837
    %v1189 = vunpack.c.h.b16 %v837
    %v1190 = vunpack.c.l.b16 %v838
    %v1191 = vunpack.c.h.b16 %v838
    %v1192 = vunpack.c.l.b16 %v839
    %v1193 = vunpack.c.h.b16 %v839
    %v1194 = vunpack.c.l.b16 %v840
    %v1195 = vunpack.c.h.b16 %v840
    %v1196 = vunpack.c.l.b16 %v841
    %v1197 = vunpack.c.h.b16 %v841
    %v1198 = vunpack.c.l.b16 %v842
    %v1199 = vunpack.c.h.b16 %v842
    %v1200 = vunpack.c.l.b16 %v843
    %v1201 = vunpack.c.h.b16 %v843
    %v1202 = vunpack.c.l.b16 %v844
    %v1203 = vunpack.c.h.b16 %v844
    %v1204 = vunpack.c.l.b16 %v845
    %v1205 = vunpack.c.h.b16 %v845
    %v1206 = vunpack.c.l.b16 %v846
    %v1207 = vunpack.c.h.b16 %v846
    %v1208 = vunpack.c.l.b16 %v847
    %v1209 = vunpack.c.h.b16 %v847
    %v1210 = vunpack.c.l.b16 %v848
    %v1211 = vunpack.c.h.b16 %v848
    %v1212 = vunpack.c.l.b16 %v849
    %v1213 = vunpack.c.h.b16 %v849
    %v1214 = vunpack.c.l.b16 %v850
    %v1215 = vunpack.c.h.b16 %v850
    %v1216 = vunpack.c.l.b16 %v851
    %v1217 = vunpack.c.h.b16 %v851
    %v1218 = vunpack.c.l.b16 %v852
    %v1219 = vunpack.c.h.b16 %v852
    %v1220 = vunpack.c.l.b16 %v853
    %v1221 = vunpack.c.h.b16 %v853
    %v1222 = vunpack.c.l.b16 %v854
    %v1223 = vunpack.c.h.b16 %v854
    %v1224 = vunpack.c.l.b16 %v855
    %v1225 = vunpack.c.h.b16 %v855
    %v1226 = vunpack.c.l.b16 %v856
    %v1227 = vunpack.c.h.b16 %v856
    %v1228 = vunpack.c.l.b16 %v857
    %v1229 = vunpack.c.h.b16 %v857
    %v1230 = vunpack.c.l.b16 %v858
    %v1231 = vunpack.c.h.b16 %v858
    %v1232 = vunpack.c.l.b16 %v859
    %v1233 = vunpack.c.h.b16 %v859
    %v1234 = vunpack.c.l.b16 %v860
    %v1235 = vunpack.c.h.b16 %v860
    %v1236 = vunpack.c.l.b16 %v861
    %v1237 = vunpack.c.h.b16 %v861
    %v1238 = vunpack.c.l.b16 %v862
    %v1239 = vunpack.c.h.b16 %v862
    %v1240 = vunpack.c.l.b16 %v863
    %v1241 = vunpack.c.h.b16 %v863
    %v1242 = vunpack.c.l.b16 %v864
    %v1243 = vunpack.c.h.b16 %v864
    %v1244 = vunpack.c.l.b16 %v865
    %v1245 = vunpack.c.h.b16 %v865
    %v1246 = vunpack.c.l.b16 %v866
    %v1247 = vunpack.c.h.b16 %v866
    %v1248 = vunpack.c.l.b16 %v867
    %v1249 = vunpack.c.h.b16 %v867
    %v1250 = vunpack.c.l.b16 %v868
    %v1251 = vunpack.c.h.b16 %v868
    %v1252 = vunpack.c.l.b16 %v869
    %v1253 = vunpack.c.h.b16 %v869
    %v1254 = vpack.c.b16 %v1006, %v998
    %v1255 = vpack.c.b16 %v1007, %v999
    %v1256 = vpack.c.b16 %v1008, %v1000
    %v1257 = vpack.c.b16 %v1009, %v1001
    %v1258 = vpack.c.b16 %v1010, %v1002
    %v1259 = vpack.c.b16 %v1011, %v1003
    %v1260 = vpack.c.b16 %v1012, %v1004
    %v1261 = vpack.c.b16 %v1013, %v1005
    %v1262 = vpack.c.b16 %v1022, %v1014
    %v1263 = vpack.c.b16 %v1023, %v1015
    %v1264 = vpack.c.b16 %v1024, %v1016
    %v1265 = vpack.c.b16 %v1025, %v1017
    %v1266 = vpack.c.b16 %v1026, %v1018
    %v1267 = vpack.c.b16 %v1027, %v1019
    %v1268 = vpack.c.b16 %v1028, %v1020
    %v1269 = vpack.c.b16 %v1029, %v1021
    %v1270 = vpack.c.b16 %v1038, %v1030
    %v1271 = vpack.c.b16 %v1039, %v1031
    %v1272 = vpack.c.b16 %v1040, %v1032
    %v1273 = vpack.c.b16 %v1041, %v1033
    %v1274 = vpack.c.b16 %v1042, %v1034
    %v1275 = vpack.c.b16 %v1043, %v1035
    %v1276 = vpack.c.b16 %v1044, %v1036
    %v1277 = vpack.c.b16 %v1045, %v1037
    %v1278 = vpack.c.b16 %v1054, %v1046
    %v1279 = vpack.c.b16 %v1055, %v1047
    %v1280 = vpack.c.b16 %v1056, %v1048
    %v1281 = vpack.c.b16 %v1057, %v1049
    %v1282 = vpack.c.b16 %v1058, %v1050
    %v1283 = vpack.c.b16 %v1059, %v1051
    %v1284 = vpack.c.b16 %v1060, %v1052
    %v1285 = vpack.c.b16 %v1061, %v1053
    %v1286 = vpack.c.b16 %v1070, %v1062
    %v1287 = vpack.c.b16 %v1071, %v1063
    %v1288 = vpack.c.b16 %v1072, %v1064
    %v1289 = vpack.c.b16 %v1073, %v1065
    %v1290 = vpack.c.b16 %v1074, %v1066
    %v1291 = vpack.c.b16 %v1075, %v1067
    %v1292 = vpack.c.b16 %v1076, %v1068
    %v1293 = vpack.c.b16 %v1077, %v1069
    %v1294 = vpack.c.b16 %v1086, %v1078
    %v1295 = vpack.c.b16 %v1087, %v1079
    %v1296 = vpack.c.b16 %v1088, %v1080
    %v1297 = vpack.c.b16 %v1089, %v1081
    %v1298 = vpack.c.b16 %v1090, %v1082
    %v1299 = vpack.c.b16 %v1091, %v1083
    %v1300 = vpack.c.b16 %v1092, %v1084
    %v1301 = vpack.c.b16 %v1093, %v1085
    %v1302 = vpack.c.b16 %v1102, %v1094
    %v1303 = vpack.c.b16 %v1103, %v1095
    %v1304 = vpack.c.b16 %v1104, %v1096
    %v1305 = vpack.c.b16 %v1105, %v1097
    %v1306 = vpack.c.b16 %v1106, %v1098
    %v1307 = vpack.c.b16 %v1107, %v1099
    %v1308 = vpack.c.b16 %v1108, %v1100
    %v1309 = vpack.c.b16 %v1109, %v1101
    %v1310 = vpack.c.b16 %v1118, %v1110
    %v1311 = vpack.c.b16 %v1119, %v1111
    %v1312 = vpack.c.b16 %v1120, %v1112
    %v1313 = vpack.c.b16 %v1121, %v1113
    %v1314 = vpack.c.b16 %v1122, %v1114
    %v1315 = vpack.c.b16 %v1123, %v1115
    %v1316 = vpack.c.b16 %v1124, %v1116
    %v1317 = vpack.c.b16 %v1125, %v1117
    %v1318 = vpack.c.b16 %v1134, %v1126
    %v1319 = vpack.c.b16 %v1135, %v1127
    %v1320 = vpack.c.b16 %v1136, %v1128
    %v1321 = vpack.c.b16 %v1137, %v1129
    %v1322 = vpack.c.b16 %v1138, %v1130
    %v1323 = vpack.c.b16 %v1139, %v1131
    %v1324 = vpack.c.b16 %v1140, %v1132
    %v1325 = vpack.c.b16 %v1141, %v1133
    %v1326 = vpack.c.b16 %v1150, %v1142
    %v1327 = vpack.c.b16 %v1151, %v1143
    %v1328 = vpack.c.b16 %v1152, %v1144
    %v1329 = vpack.c.b16 %v1153, %v1145
    %v1330 = vpack.c.b16 %v1154, %v1146
    %v1331 = vpack.c.b16 %v1155, %v1147
    %v1332 = vpack.c.b16 %v1156, %v1148
    %v1333 = vpack.c.b16 %v1157, %v1149
    %v1334 = vpack.c.b16 %v1166, %v1158
    %v1335 = vpack.c.b16 %v1167, %v1159
    %v1336 = vpack.c.b16 %v1168, %v1160
    %v1337 = vpack.c.b16 %v1169, %v1161
    %v1338 = vpack.c.b16 %v1170, %v1162
    %v1339 = vpack.c.b16 %v1171, %v1163
    %v1340 = vpack.c.b16 %v1172, %v1164
    %v1341 = vpack.c.b16 %v1173, %v1165
    %v1342 = vpack.c.b16 %v1182, %v1174
    %v1343 = vpack.c.b16 %v1183, %v1175
    %v1344 = vpack.c.b16 %v1184, %v1176
    %v1345 = vpack.c.b16 %v1185, %v1177
    %v1346 = vpack.c.b16 %v1186, %v1178
    %v1347 = vpack.c.b16 %v1187, %v1179
    %v1348 = vpack.c.b16 %v1188, %v1180
    %v1349 = vpack.c.b16 %v1189, %v1181
    %v1350 = vpack.c.b16 %v1198, %v1190
    %v1351 = vpack.c.b16 %v1199, %v1191
    %v1352 = vpack.c.b16 %v1200, %v1192
    %v1353 = vpack.c.b16 %v1201, %v1193
    %v1354 = vpack.c.b16 %v1202, %v1194
    %v1355 = vpack.c.b16 %v1203, %v1195
    %v1356 = vpack.c.b16 %v1204, %v1196
    %v1357 = vpack.c.b16 %v1205, %v1197
    %v1358 = vpack.c.b16 %v1214, %v1206
    %v1359 = vpack.c.b16 %v1215, %v1207
    %v1360 = vpack.c.b16 %v1216, %v1208
    %v1361 = vpack.c.b16 %v1217, %v1209
    %v1362 = vpack.c.b16 %v1218, %v1210
    %v1363 = vpack.c.b16 %v1219, %v1211
    %v1364 = vpack.c.b16 %v1220, %v1212
    %v1365 = vpack.c.b16 %v1221, %v1213
    %v1366 = vpack.c.b16 %v1230, %v1222
    %v1367 = vpack.c.b16 %v1231, %v1223
    %v1368 = vpack.c.b16 %v1232, %v1224
    %v1369 = vpack.c.b16 %v1233, %v1225
    %v1370 = vpack.c.b16 %v1234, %v1226
    %v1371 = vpack.c.b16 %v1235, %v1227
    %v1372 = vpack.c.b16 %v1236, %v1228
    %v1373 = vpack.c.b16 %v1237, %v1229
    %v1374 = vpack.c.b16 %v1246, %v1238
    %v1375 = vpack.c.b16 %v1247, %v1239
    %v1376 = vpack.c.b16 %v1248, %v1240
    %v1377 = vpack.c.b16 %v1249, %v1241
    %v1378 = vpack.c.b16 %v1250, %v1242
    %v1379 = vpack.c.b16 %v1251, %v1243
    %v1380 = vpack.c.b16 %v1252, %v1244
    %v1381 = vpack.c.b16 %v1253, %v1245
    %1510 = vmatprep.subr.bf16.mxu0 %v1255
    %1511 = vmatpush1.bf16.msra.mxu0 %v1254
    %1512 = vmatprep.subr.bf16.mxu0 %v1263
    %1513 = vmatpush1.bf16.msra.mxu0 %v1262
    %1514 = vmatprep.subr.bf16.mxu0 %v1271
    %1515 = vmatpush1.bf16.msra.mxu0 %v1270
    %1516 = vmatprep.subr.bf16.mxu0 %v1279
    %1517 = vmatpush1.bf16.msra.mxu0 %v1278
    %1518 = vmatprep.subr.bf16.mxu0 %v1287
    %1519 = vmatpush1.bf16.msra.mxu0 %v1286
    %1520 = vmatprep.subr.bf16.mxu0 %v1295
    %1521 = vmatpush1.bf16.msra.mxu0 %v1294
    %1522 = vmatprep.subr.bf16.mxu0 %v1303
    %1523 = vmatpush1.bf16.msra.mxu0 %v1302
    %1524 = vmatprep.subr.bf16.mxu0 %v1311
    %1525 = vmatpush1.bf16.msra.mxu0 %v1310
    %1526 = vmatprep.subr.bf16.mxu0 %v1319
    %1527 = vmatpush1.bf16.msra.mxu0 %v1318
    %1528 = vmatprep.subr.bf16.mxu0 %v1327
    %1529 = vmatpush1.bf16.msra.mxu0 %v1326
    %1530 = vmatprep.subr.bf16.mxu0 %v1335
    %1531 = vmatpush1.bf16.msra.mxu0 %v1334
    %1532 = vmatprep.subr.bf16.mxu0 %v1343
    %1533 = vmatpush1.bf16.msra.mxu0 %v1342
    %1534 = vmatprep.subr.bf16.mxu0 %v1351
    %1535 = vmatpush1.bf16.msra.mxu0 %v1350
    %1536 = vmatprep.subr.bf16.mxu0 %v1359
    %1537 = vmatpush1.bf16.msra.mxu0 %v1358
    %1538 = vmatprep.subr.bf16.mxu0 %v1367
    %1539 = vmatpush1.bf16.msra.mxu0 %v1366
    %1540 = vmatprep.subr.bf16.mxu0 %v1375
    %1541 = vmatpush1.bf16.msra.mxu0 %v1374
    %1542 = vmatprep.mubr.bf16.mxu0 %v741
    %1543 = vmatmul.mubr.bf16.gmra.mrb[0].mxu0 %v740
    %v1544 = vpop.f32.mrb[0].mxu0
    %v1545 = vadd.f32 0.0, %v1544
    %v1546 = vpop.f32.mrb[0].mxu0
    %v1547 = vadd.f32 0.0, %v1546
    %v1548 = vpop.f32.mrb[0].mxu0
    %v1549 = vpop.f32.mrb[0].mxu0
    %1550 = vdwg.mxu0
    %1551 = vmatprep.subr.bf16.mxu0 %v1257
    %1552 = vmatpush1.bf16.msra.mxu0 %v1256
    %1553 = vmatprep.subr.bf16.mxu0 %v1265
    %1554 = vmatpush1.bf16.msra.mxu0 %v1264
    %1555 = vmatprep.subr.bf16.mxu0 %v1273
    %1556 = vmatpush1.bf16.msra.mxu0 %v1272
    %1557 = vmatprep.subr.bf16.mxu0 %v1281
    %1558 = vmatpush1.bf16.msra.mxu0 %v1280
    %1559 = vmatprep.subr.bf16.mxu0 %v1289
    %1560 = vmatpush1.bf16.msra.mxu0 %v1288
    %1561 = vmatprep.subr.bf16.mxu0 %v1297
    %1562 = vmatpush1.bf16.msra.mxu0 %v1296
    %1563 = vmatprep.subr.bf16.mxu0 %v1305
    %1564 = vmatpush1.bf16.msra.mxu0 %v1304
    %1565 = vmatprep.subr.bf16.mxu0 %v1313
    %1566 = vmatpush1.bf16.msra.mxu0 %v1312
    %1567 = vmatprep.subr.bf16.mxu0 %v1321
    %1568 = vmatpush1.bf16.msra.mxu0 %v1320
    %1569 = vmatprep.subr.bf16.mxu0 %v1329
    %1570 = vmatpush1.bf16.msra.mxu0 %v1328
    %1571 = vmatprep.subr.bf16.mxu0 %v1337
    %1572 = vmatpush1.bf16.msra.mxu0 %v1336
    %1573 = vmatprep.subr.bf16.mxu0 %v1345
    %1574 = vmatpush1.bf16.msra.mxu0 %v1344
    %1575 = vmatprep.subr.bf16.mxu0 %v1353
    %1576 = vmatpush1.bf16.msra.mxu0 %v1352
    %1577 = vmatprep.subr.bf16.mxu0 %v1361
    %1578 = vmatpush1.bf16.msra.mxu0 %v1360
    %1579 = vmatprep.subr.bf16.mxu0 %v1369
    %1580 = vmatpush1.bf16.msra.mxu0 %v1368
    %1581 = vmatprep.subr.bf16.mxu0 %v1377
    %1582 = vmatpush1.bf16.msra.mxu0 %v1376
    %1583 = vmatprep.mubr.bf16.mxu0 %v741
    %1584 = vmatmul.mubr.bf16.gmra.mrb[0].mxu0 %v740
    %v1585 = vpop.f32.mrb[0].mxu0
    %v1586 = vadd.f32 0.0, %v1585
    %v1587 = vpop.f32.mrb[0].mxu0
    %v1588 = vadd.f32 0.0, %v1587
    %v1589 = vpop.f32.mrb[0].mxu0
    %v1590 = vpop.f32.mrb[0].mxu0
    %1591 = vdwg.mxu0
    %1592 = vmatprep.subr.bf16.mxu0 %v1259
    %1593 = vmatpush1.bf16.msra.mxu0 %v1258
    %1594 = vmatprep.subr.bf16.mxu0 %v1267
    %1595 = vmatpush1.bf16.msra.mxu0 %v1266
    %1596 = vmatprep.subr.bf16.mxu0 %v1275
    %1597 = vmatpush1.bf16.msra.mxu0 %v1274
    %1598 = vmatprep.subr.bf16.mxu0 %v1283
    %1599 = vmatpush1.bf16.msra.mxu0 %v1282
    %1600 = vmatprep.subr.bf16.mxu0 %v1291
    %1601 = vmatpush1.bf16.msra.mxu0 %v1290
    %1602 = vmatprep.subr.bf16.mxu0 %v1299
    %1603 = vmatpush1.bf16.msra.mxu0 %v1298
    %1604 = vmatprep.subr.bf16.mxu0 %v1307
    %1605 = vmatpush1.bf16.msra.mxu0 %v1306
    %1606 = vmatprep.subr.bf16.mxu0 %v1315
    %1607 = vmatpush1.bf16.msra.mxu0 %v1314
    %1608 = vmatprep.subr.bf16.mxu0 %v1323
    %1609 = vmatpush1.bf16.msra.mxu0 %v1322
    %1610 = vmatprep.subr.bf16.mxu0 %v1331
    %1611 = vmatpush1.bf16.msra.mxu0 %v1330
    %1612 = vmatprep.subr.bf16.mxu0 %v1339
    %1613 = vmatpush1.bf16.msra.mxu0 %v1338
    %1614 = vmatprep.subr.bf16.mxu0 %v1347
    %1615 = vmatpush1.bf16.msra.mxu0 %v1346
    %1616 = vmatprep.subr.bf16.mxu0 %v1355
    %1617 = vmatpush1.bf16.msra.mxu0 %v1354
    %1618 = vmatprep.subr.bf16.mxu0 %v1363
    %1619 = vmatpush1.bf16.msra.mxu0 %v1362
    %1620 = vmatprep.subr.bf16.mxu0 %v1371
    %1621 = vmatpush1.bf16.msra.mxu0 %v1370
    %1622 = vmatprep.subr.bf16.mxu0 %v1379
    %1623 = vmatpush1.bf16.msra.mxu0 %v1378
    %1624 = vmatprep.mubr.bf16.mxu0 %v741
    %1625 = vmatmul.mubr.bf16.gmra.mrb[0].mxu0 %v740
    %v1626 = vpop.f32.mrb[0].mxu0
    %v1627 = vadd.f32 0.0, %v1626
    %v1628 = vpop.f32.mrb[0].mxu0
    %v1629 = vadd.f32 0.0, %v1628
    %v1630 = vpop.f32.mrb[0].mxu0
    %v1631 = vpop.f32.mrb[0].mxu0
    %1632 = vdwg.mxu0
    %1633 = vmatprep.subr.bf16.mxu0 %v1261
    %1634 = vmatpush1.bf16.msra.mxu0 %v1260
    %1635 = vmatprep.subr.bf16.mxu0 %v1269
    %1636 = vmatpush1.bf16.msra.mxu0 %v1268
    %1637 = vmatprep.subr.bf16.mxu0 %v1277
    %1638 = vmatpush1.bf16.msra.mxu0 %v1276
    %1639 = vmatprep.subr.bf16.mxu0 %v1285
    %1640 = vmatpush1.bf16.msra.mxu0 %v1284
    %1641 = vmatprep.subr.bf16.mxu0 %v1293
    %1642 = vmatpush1.bf16.msra.mxu0 %v1292
    %1643 = vmatprep.subr.bf16.mxu0 %v1301
    %1644 = vmatpush1.bf16.msra.mxu0 %v1300
    %1645 = vmatprep.subr.bf16.mxu0 %v1309
    %1646 = vmatpush1.bf16.msra.mxu0 %v1308
    %1647 = vmatprep.subr.bf16.mxu0 %v1317
    %1648 = vmatpush1.bf16.msra.mxu0 %v1316
    %1649 = vmatprep.subr.bf16.mxu0 %v1325
    %1650 = vmatpush1.bf16.msra.mxu0 %v1324
    %1651 = vmatprep.subr.bf16.mxu0 %v1333
    %1652 = vmatpush1.bf16.msra.mxu0 %v1332
    %1653 = vmatprep.subr.bf16.mxu0 %v1341
    %1654 = vmatpush1.bf16.msra.mxu0 %v1340
    %1655 = vmatprep.subr.bf16.mxu0 %v1349
    %1656 = vmatpush1.bf16.msra.mxu0 %v1348
    %1657 = vmatprep.subr.bf16.mxu0 %v1357
    %1658 = vmatpush1.bf16.msra.mxu0 %v1356
    %1659 = vmatprep.subr.bf16.mxu0 %v1365
    %1660 = vmatpush1.bf16.msra.mxu0 %v1364
    %1661 = vmatprep.subr.bf16.mxu0 %v1373
    %1662 = vmatpush1.bf16.msra.mxu0 %v1372
    %1663 = vmatprep.subr.bf16.mxu0 %v1381
    %1664 = vmatpush1.bf16.msra.mxu0 %v1380
    %1665 = vmatprep.mubr.bf16.mxu0 %v741
    %1666 = vmatmul.mubr.bf16.gmra.mrb[0].mxu0 %v740
    %v1667 = vpop.f32.mrb[0].mxu0
    %v1668 = vadd.f32 0.0, %v1667
    %v1669 = vpop.f32.mrb[0].mxu0
    %v1670 = vadd.f32 0.0, %v1669
    %v1671 = vpop.f32.mrb[0].mxu0
    %v1672 = vpop.f32.mrb[0].mxu0
    %1673 = vdwg.mxu0
    %v1674 = vadd.f32 %v732, %v1545
    %v1675 = vadd.f32 %v733, %v1547
    %v1676 = vadd.f32 %v734, %v1586
    %v1677 = vadd.f32 %v735, %v1588
    %v1678 = vadd.f32 %v736, %v1627
    %v1679 = vadd.f32 %v737, %v1629
    %v1680 = vadd.f32 %v738, %v1668
    %v1681 = vadd.f32 %v739, %v1670
    %v1682 = vxor.u32 %v1674, 2147483648
    %v1683 = vxor.u32 %v1675, 2147483648
    %v1684 = vmul.f32 %v1682, 1.442695
    %v1685 = vpow.pop %v1684
    %v1686 = vmul.f32 %v1683, 1.442695
    %v1687 = vpow.pop %v1686
    %v1688 = vadd.f32 %v1685, 1.0
    %v1689 = vadd.f32 %v1687, 1.0
    %v1690 = vrcp.pop %v1688
    %v1691 = vmul.f32 1.0, %v1690
    %v1692 = vrcp.pop %v1689
    %v1693 = vmul.f32 1.0, %v1692
    %v1694 = vxor.u32 %v1676, 2147483648
    %v1695 = vxor.u32 %v1677, 2147483648
    %v1696 = vmul.f32 %v1694, 1.442695
    %v1697 = vpow.pop %v1696
    %v1698 = vmul.f32 %v1695, 1.442695
    %v1699 = vpow.pop %v1698
    %v1700 = vadd.f32 %v1697, 1.0
    %v1701 = vadd.f32 %v1699, 1.0
    %v1702 = vrcp.pop %v1700
    %v1703 = vmul.f32 1.0, %v1702
    %v1704 = vrcp.pop %v1701
    %v1705 = vmul.f32 1.0, %v1704
    %v1706 = vtanh.pop %v1678
    %v1707 = vtanh.pop %v1679
    %v1708 = vxor.u32 %v1680, 2147483648
    %v1709 = vxor.u32 %v1681, 2147483648
    %v1710 = vmul.f32 %v1708, 1.442695
    %v1711 = vpow.pop %v1710
    %v1712 = vmul.f32 %v1709, 1.442695
    %v1713 = vpow.pop %v1712
    %v1714 = vadd.f32 %v1711, 1.0
    %v1715 = vadd.f32 %v1713, 1.0
    %v1716 = vrcp.pop %v1714
    %v1717 = vmul.f32 1.0, %v1716
    %v1718 = vrcp.pop %v1715
    %v1719 = vmul.f32 1.0, %v1718
    %v1720 = vmul.f32 %v1703, %v725
    %v1721 = vmul.f32 %v1705, %v729
    %v1722 = vmul.f32 %v1691, %v1706
    %v1723 = vmul.f32 %v1693, %v1707
    %v1724 = vadd.f32 %v1720, %v1722
    %v1725 = vadd.f32 %v1721, %v1723
    %v1726 = vtanh.pop %v1724
    %v1727 = vtanh.pop %v1725
    %v1728 = vmul.f32 %v1717, %v1726
    %v1729 = vmul.f32 %v1719, %v1727
    %v1730 = vpack.c.bf16 %v1728, %v1728
    %v1731 = vpack.c.bf16 %v1729, %v1729
    %1732 = vst [vmem:[#allocation3] sm:$0xf] %v1730
    %1733 = vst [vmem:[#allocation3 + $0x8] sm:$0xf] %v1731
    %v1734 = vld [vmem:[%s381] sm:$0xff]
    %v1735 = vld [vmem:[%s381 + $0x8] sm:$0xff]
    %v1736 = vld [vmem:[%s381 + $0x10] sm:$0xff]
    %v1737 = vld [vmem:[%s381 + $0x18] sm:$0xff]
    %v1738 = vld [vmem:[%s381 + $0x20] sm:$0xff]
    %v1739 = vld [vmem:[%s381 + $0x28] sm:$0xff]
    %v1740 = vld [vmem:[%s381 + $0x30] sm:$0xff]
    %v1741 = vld [vmem:[%s381 + $0x38] sm:$0xff]
    %v1742 = vld [vmem:[#allocation9] sm:$0xff]
    %v1743 = vld [vmem:[#allocation9 + $0x8] sm:$0xff]
    %v1744 = vld [vmem:[#allocation9 + $0x10] sm:$0xff]
    %v1745 = vld [vmem:[#allocation9 + $0x18] sm:$0xff]
    %v1746 = vld [vmem:[#allocation9 + $0x20] sm:$0xff]
    %v1747 = vld [vmem:[#allocation9 + $0x28] sm:$0xff]
    %v1748 = vld [vmem:[#allocation9 + $0x30] sm:$0xff]
    %v1749 = vld [vmem:[#allocation9 + $0x38] sm:$0xff]
    %v1750 = vld [vmem:[#allocation9 + $0x40] sm:$0xff]
    %v1751 = vld [vmem:[#allocation9 + $0x48] sm:$0xff]
    %v1752 = vld [vmem:[#allocation9 + $0x50] sm:$0xff]
    %v1753 = vld [vmem:[#allocation9 + $0x58] sm:$0xff]
    %v1754 = vld [vmem:[#allocation9 + $0x60] sm:$0xff]
    %v1755 = vld [vmem:[#allocation9 + $0x68] sm:$0xff]
    %v1756 = vld [vmem:[#allocation9 + $0x70] sm:$0xff]
    %v1757 = vld [vmem:[#allocation9 + $0x78] sm:$0xff]
    %v1758 = vld [vmem:[#allocation9 + $0x80] sm:$0xff]
    %v1759 = vld [vmem:[#allocation9 + $0x88] sm:$0xff]
    %v1760 = vld [vmem:[#allocation9 + $0x90] sm:$0xff]
    %v1761 = vld [vmem:[#allocation9 + $0x98] sm:$0xff]
    %v1762 = vld [vmem:[#allocation9 + $0xa0] sm:$0xff]
    %v1763 = vld [vmem:[#allocation9 + $0xa8] sm:$0xff]
    %v1764 = vld [vmem:[#allocation9 + $0xb0] sm:$0xff]
    %v1765 = vld [vmem:[#allocation9 + $0xb8] sm:$0xff]
    %v1766 = vld [vmem:[#allocation9 + $0xc0] sm:$0xff]
    %v1767 = vld [vmem:[#allocation9 + $0xc8] sm:$0xff]
    %v1768 = vld [vmem:[#allocation9 + $0xd0] sm:$0xff]
    %v1769 = vld [vmem:[#allocation9 + $0xd8] sm:$0xff]
    %v1770 = vld [vmem:[#allocation9 + $0xe0] sm:$0xff]
    %v1771 = vld [vmem:[#allocation9 + $0xe8] sm:$0xff]
    %v1772 = vld [vmem:[#allocation9 + $0xf0] sm:$0xff]
    %v1773 = vld [vmem:[#allocation9 + $0xf8] sm:$0xff]
    %v1774 = vld [vmem:[#allocation9 + $0x100] sm:$0xff]
    %v1775 = vld [vmem:[#allocation9 + $0x108] sm:$0xff]
    %v1776 = vld [vmem:[#allocation9 + $0x110] sm:$0xff]
    %v1777 = vld [vmem:[#allocation9 + $0x118] sm:$0xff]
    %v1778 = vld [vmem:[#allocation9 + $0x120] sm:$0xff]
    %v1779 = vld [vmem:[#allocation9 + $0x128] sm:$0xff]
    %v1780 = vld [vmem:[#allocation9 + $0x130] sm:$0xff]
    %v1781 = vld [vmem:[#allocation9 + $0x138] sm:$0xff]
    %v1782 = vld [vmem:[#allocation9 + $0x140] sm:$0xff]
    %v1783 = vld [vmem:[#allocation9 + $0x148] sm:$0xff]
    %v1784 = vld [vmem:[#allocation9 + $0x150] sm:$0xff]
    %v1785 = vld [vmem:[#allocation9 + $0x158] sm:$0xff]
    %v1786 = vld [vmem:[#allocation9 + $0x160] sm:$0xff]
    %v1787 = vld [vmem:[#allocation9 + $0x168] sm:$0xff]
    %v1788 = vld [vmem:[#allocation9 + $0x170] sm:$0xff]
    %v1789 = vld [vmem:[#allocation9 + $0x178] sm:$0xff]
    %v1790 = vld [vmem:[#allocation9 + $0x180] sm:$0xff]
    %v1791 = vld [vmem:[#allocation9 + $0x188] sm:$0xff]
    %v1792 = vld [vmem:[#allocation9 + $0x190] sm:$0xff]
    %v1793 = vld [vmem:[#allocation9 + $0x198] sm:$0xff]
    %v1794 = vld [vmem:[#allocation9 + $0x1a0] sm:$0xff]
    %v1795 = vld [vmem:[#allocation9 + $0x1a8] sm:$0xff]
    %v1796 = vld [vmem:[#allocation9 + $0x1b0] sm:$0xff]
    %v1797 = vld [vmem:[#allocation9 + $0x1b8] sm:$0xff]
    %v1798 = vld [vmem:[#allocation9 + $0x1c0] sm:$0xff]
    %v1799 = vld [vmem:[#allocation9 + $0x1c8] sm:$0xff]
    %v1800 = vld [vmem:[#allocation9 + $0x1d0] sm:$0xff]
    %v1801 = vld [vmem:[#allocation9 + $0x1d8] sm:$0xff]
    %v1802 = vld [vmem:[#allocation9 + $0x1e0] sm:$0xff]
    %v1803 = vld [vmem:[#allocation9 + $0x1e8] sm:$0xff]
    %v1804 = vld [vmem:[#allocation9 + $0x1f0] sm:$0xff]
    %v1805 = vld [vmem:[#allocation9 + $0x1f8] sm:$0xff]
    %v1806 = vld [vmem:[#allocation9 + $0x200] sm:$0xff]
    %v1807 = vld [vmem:[#allocation9 + $0x208] sm:$0xff]
    %v1808 = vld [vmem:[#allocation9 + $0x210] sm:$0xff]
    %v1809 = vld [vmem:[#allocation9 + $0x218] sm:$0xff]
    %v1810 = vld [vmem:[#allocation9 + $0x220] sm:$0xff]
    %v1811 = vld [vmem:[#allocation9 + $0x228] sm:$0xff]
    %v1812 = vld [vmem:[#allocation9 + $0x230] sm:$0xff]
    %v1813 = vld [vmem:[#allocation9 + $0x238] sm:$0xff]
    %v1814 = vld [vmem:[#allocation9 + $0x240] sm:$0xff]
    %v1815 = vld [vmem:[#allocation9 + $0x248] sm:$0xff]
    %v1816 = vld [vmem:[#allocation9 + $0x250] sm:$0xff]
    %v1817 = vld [vmem:[#allocation9 + $0x258] sm:$0xff]
    %v1818 = vld [vmem:[#allocation9 + $0x260] sm:$0xff]
    %v1819 = vld [vmem:[#allocation9 + $0x268] sm:$0xff]
    %v1820 = vld [vmem:[#allocation9 + $0x270] sm:$0xff]
    %v1821 = vld [vmem:[#allocation9 + $0x278] sm:$0xff]
    %v1822 = vld [vmem:[#allocation9 + $0x280] sm:$0xff]
    %v1823 = vld [vmem:[#allocation9 + $0x288] sm:$0xff]
    %v1824 = vld [vmem:[#allocation9 + $0x290] sm:$0xff]
    %v1825 = vld [vmem:[#allocation9 + $0x298] sm:$0xff]
    %v1826 = vld [vmem:[#allocation9 + $0x2a0] sm:$0xff]
    %v1827 = vld [vmem:[#allocation9 + $0x2a8] sm:$0xff]
    %v1828 = vld [vmem:[#allocation9 + $0x2b0] sm:$0xff]
    %v1829 = vld [vmem:[#allocation9 + $0x2b8] sm:$0xff]
    %v1830 = vld [vmem:[#allocation9 + $0x2c0] sm:$0xff]
    %v1831 = vld [vmem:[#allocation9 + $0x2c8] sm:$0xff]
    %v1832 = vld [vmem:[#allocation9 + $0x2d0] sm:$0xff]
    %v1833 = vld [vmem:[#allocation9 + $0x2d8] sm:$0xff]
    %v1834 = vld [vmem:[#allocation9 + $0x2e0] sm:$0xff]
    %v1835 = vld [vmem:[#allocation9 + $0x2e8] sm:$0xff]
    %v1836 = vld [vmem:[#allocation9 + $0x2f0] sm:$0xff]
    %v1837 = vld [vmem:[#allocation9 + $0x2f8] sm:$0xff]
    %v1838 = vld [vmem:[#allocation9 + $0x300] sm:$0xff]
    %v1839 = vld [vmem:[#allocation9 + $0x308] sm:$0xff]
    %v1840 = vld [vmem:[#allocation9 + $0x310] sm:$0xff]
    %v1841 = vld [vmem:[#allocation9 + $0x318] sm:$0xff]
    %v1842 = vld [vmem:[#allocation9 + $0x320] sm:$0xff]
    %v1843 = vld [vmem:[#allocation9 + $0x328] sm:$0xff]
    %v1844 = vld [vmem:[#allocation9 + $0x330] sm:$0xff]
    %v1845 = vld [vmem:[#allocation9 + $0x338] sm:$0xff]
    %v1846 = vld [vmem:[#allocation9 + $0x340] sm:$0xff]
    %v1847 = vld [vmem:[#allocation9 + $0x348] sm:$0xff]
    %v1848 = vld [vmem:[#allocation9 + $0x350] sm:$0xff]
    %v1849 = vld [vmem:[#allocation9 + $0x358] sm:$0xff]
    %v1850 = vld [vmem:[#allocation9 + $0x360] sm:$0xff]
    %v1851 = vld [vmem:[#allocation9 + $0x368] sm:$0xff]
    %v1852 = vld [vmem:[#allocation9 + $0x370] sm:$0xff]
    %v1853 = vld [vmem:[#allocation9 + $0x378] sm:$0xff]
    %v1854 = vld [vmem:[#allocation9 + $0x380] sm:$0xff]
    %v1855 = vld [vmem:[#allocation9 + $0x388] sm:$0xff]
    %v1856 = vld [vmem:[#allocation9 + $0x390] sm:$0xff]
    %v1857 = vld [vmem:[#allocation9 + $0x398] sm:$0xff]
    %v1858 = vld [vmem:[#allocation9 + $0x3a0] sm:$0xff]
    %v1859 = vld [vmem:[#allocation9 + $0x3a8] sm:$0xff]
    %v1860 = vld [vmem:[#allocation9 + $0x3b0] sm:$0xff]
    %v1861 = vld [vmem:[#allocation9 + $0x3b8] sm:$0xff]
    %v1862 = vld [vmem:[#allocation9 + $0x3c0] sm:$0xff]
    %v1863 = vld [vmem:[#allocation9 + $0x3c8] sm:$0xff]
    %v1864 = vld [vmem:[#allocation9 + $0x3d0] sm:$0xff]
    %v1865 = vld [vmem:[#allocation9 + $0x3d8] sm:$0xff]
    %v1866 = vld [vmem:[#allocation9 + $0x3e0] sm:$0xff]
    %v1867 = vld [vmem:[#allocation9 + $0x3e8] sm:$0xff]
    %v1868 = vld [vmem:[#allocation9 + $0x3f0] sm:$0xff]
    %v1869 = vld [vmem:[#allocation9 + $0x3f8] sm:$0xff]
    %v1998 = vunpack.c.l.b16 %v1742
    %v1999 = vunpack.c.h.b16 %v1742
    %v2000 = vunpack.c.l.b16 %v1743
    %v2001 = vunpack.c.h.b16 %v1743
    %v2002 = vunpack.c.l.b16 %v1744
    %v2003 = vunpack.c.h.b16 %v1744
    %v2004 = vunpack.c.l.b16 %v1745
    %v2005 = vunpack.c.h.b16 %v1745
    %v2006 = vunpack.c.l.b16 %v1746
    %v2007 = vunpack.c.h.b16 %v1746
    %v2008 = vunpack.c.l.b16 %v1747
    %v2009 = vunpack.c.h.b16 %v1747
    %v2010 = vunpack.c.l.b16 %v1748
    %v2011 = vunpack.c.h.b16 %v1748
    %v2012 = vunpack.c.l.b16 %v1749
    %v2013 = vunpack.c.h.b16 %v1749
    %v2014 = vunpack.c.l.b16 %v1750
    %v2015 = vunpack.c.h.b16 %v1750
    %v2016 = vunpack.c.l.b16 %v1751
    %v2017 = vunpack.c.h.b16 %v1751
    %v2018 = vunpack.c.l.b16 %v1752
    %v2019 = vunpack.c.h.b16 %v1752
    %v2020 = vunpack.c.l.b16 %v1753
    %v2021 = vunpack.c.h.b16 %v1753
    %v2022 = vunpack.c.l.b16 %v1754
    %v2023 = vunpack.c.h.b16 %v1754
    %v2024 = vunpack.c.l.b16 %v1755
    %v2025 = vunpack.c.h.b16 %v1755
    %v2026 = vunpack.c.l.b16 %v1756
    %v2027 = vunpack.c.h.b16 %v1756
    %v2028 = vunpack.c.l.b16 %v1757
    %v2029 = vunpack.c.h.b16 %v1757
    %v2030 = vunpack.c.l.b16 %v1758
    %v2031 = vunpack.c.h.b16 %v1758
    %v2032 = vunpack.c.l.b16 %v1759
    %v2033 = vunpack.c.h.b16 %v1759
    %v2034 = vunpack.c.l.b16 %v1760
    %v2035 = vunpack.c.h.b16 %v1760
    %v2036 = vunpack.c.l.b16 %v1761
    %v2037 = vunpack.c.h.b16 %v1761
    %v2038 = vunpack.c.l.b16 %v1762
    %v2039 = vunpack.c.h.b16 %v1762
    %v2040 = vunpack.c.l.b16 %v1763
    %v2041 = vunpack.c.h.b16 %v1763
    %v2042 = vunpack.c.l.b16 %v1764
    %v2043 = vunpack.c.h.b16 %v1764
    %v2044 = vunpack.c.l.b16 %v1765
    %v2045 = vunpack.c.h.b16 %v1765
    %v2046 = vunpack.c.l.b16 %v1766
    %v2047 = vunpack.c.h.b16 %v1766
    %v2048 = vunpack.c.l.b16 %v1767
    %v2049 = vunpack.c.h.b16 %v1767
    %v2050 = vunpack.c.l.b16 %v1768
    %v2051 = vunpack.c.h.b16 %v1768
    %v2052 = vunpack.c.l.b16 %v1769
    %v2053 = vunpack.c.h.b16 %v1769
    %v2054 = vunpack.c.l.b16 %v1770
    %v2055 = vunpack.c.h.b16 %v1770
    %v2056 = vunpack.c.l.b16 %v1771
    %v2057 = vunpack.c.h.b16 %v1771
    %v2058 = vunpack.c.l.b16 %v1772
    %v2059 = vunpack.c.h.b16 %v1772
    %v2060 = vunpack.c.l.b16 %v1773
    %v2061 = vunpack.c.h.b16 %v1773
    %v2062 = vunpack.c.l.b16 %v1774
    %v2063 = vunpack.c.h.b16 %v1774
    %v2064 = vunpack.c.l.b16 %v1775
    %v2065 = vunpack.c.h.b16 %v1775
    %v2066 = vunpack.c.l.b16 %v1776
    %v2067 = vunpack.c.h.b16 %v1776
    %v2068 = vunpack.c.l.b16 %v1777
    %v2069 = vunpack.c.h.b16 %v1777
    %v2070 = vunpack.c.l.b16 %v1778
    %v2071 = vunpack.c.h.b16 %v1778
    %v2072 = vunpack.c.l.b16 %v1779
    %v2073 = vunpack.c.h.b16 %v1779
    %v2074 = vunpack.c.l.b16 %v1780
    %v2075 = vunpack.c.h.b16 %v1780
    %v2076 = vunpack.c.l.b16 %v1781
    %v2077 = vunpack.c.h.b16 %v1781
    %v2078 = vunpack.c.l.b16 %v1782
    %v2079 = vunpack.c.h.b16 %v1782
    %v2080 = vunpack.c.l.b16 %v1783
    %v2081 = vunpack.c.h.b16 %v1783
    %v2082 = vunpack.c.l.b16 %v1784
    %v2083 = vunpack.c.h.b16 %v1784
    %v2084 = vunpack.c.l.b16 %v1785
    %v2085 = vunpack.c.h.b16 %v1785
    %v2086 = vunpack.c.l.b16 %v1786
    %v2087 = vunpack.c.h.b16 %v1786
    %v2088 = vunpack.c.l.b16 %v1787
    %v2089 = vunpack.c.h.b16 %v1787
    %v2090 = vunpack.c.l.b16 %v1788
    %v2091 = vunpack.c.h.b16 %v1788
    %v2092 = vunpack.c.l.b16 %v1789
    %v2093 = vunpack.c.h.b16 %v1789
    %v2094 = vunpack.c.l.b16 %v1790
    %v2095 = vunpack.c.h.b16 %v1790
    %v2096 = vunpack.c.l.b16 %v1791
    %v2097 = vunpack.c.h.b16 %v1791
    %v2098 = vunpack.c.l.b16 %v1792
    %v2099 = vunpack.c.h.b16 %v1792
    %v2100 = vunpack.c.l.b16 %v1793
    %v2101 = vunpack.c.h.b16 %v1793
    %v2102 = vunpack.c.l.b16 %v1794
    %v2103 = vunpack.c.h.b16 %v1794
    %v2104 = vunpack.c.l.b16 %v1795
    %v2105 = vunpack.c.h.b16 %v1795
    %v2106 = vunpack.c.l.b16 %v1796
    %v2107 = vunpack.c.h.b16 %v1796
    %v2108 = vunpack.c.l.b16 %v1797
    %v2109 = vunpack.c.h.b16 %v1797
    %v2110 = vunpack.c.l.b16 %v1798
    %v2111 = vunpack.c.h.b16 %v1798
    %v2112 = vunpack.c.l.b16 %v1799
    %v2113 = vunpack.c.h.b16 %v1799
    %v2114 = vunpack.c.l.b16 %v1800
    %v2115 = vunpack.c.h.b16 %v1800
    %v2116 = vunpack.c.l.b16 %v1801
    %v2117 = vunpack.c.h.b16 %v1801
    %v2118 = vunpack.c.l.b16 %v1802
    %v2119 = vunpack.c.h.b16 %v1802
    %v2120 = vunpack.c.l.b16 %v1803
    %v2121 = vunpack.c.h.b16 %v1803
    %v2122 = vunpack.c.l.b16 %v1804
    %v2123 = vunpack.c.h.b16 %v1804
    %v2124 = vunpack.c.l.b16 %v1805
    %v2125 = vunpack.c.h.b16 %v1805
    %v2126 = vunpack.c.l.b16 %v1806
    %v2127 = vunpack.c.h.b16 %v1806
    %v2128 = vunpack.c.l.b16 %v1807
    %v2129 = vunpack.c.h.b16 %v1807
    %v2130 = vunpack.c.l.b16 %v1808
    %v2131 = vunpack.c.h.b16 %v1808
    %v2132 = vunpack.c.l.b16 %v1809
    %v2133 = vunpack.c.h.b16 %v1809
    %v2134 = vunpack.c.l.b16 %v1810
    %v2135 = vunpack.c.h.b16 %v1810
    %v2136 = vunpack.c.l.b16 %v1811
    %v2137 = vunpack.c.h.b16 %v1811
    %v2138 = vunpack.c.l.b16 %v1812
    %v2139 = vunpack.c.h.b16 %v1812
    %v2140 = vunpack.c.l.b16 %v1813
    %v2141 = vunpack.c.h.b16 %v1813
    %v2142 = vunpack.c.l.b16 %v1814
    %v2143 = vunpack.c.h.b16 %v1814
    %v2144 = vunpack.c.l.b16 %v1815
    %v2145 = vunpack.c.h.b16 %v1815
    %v2146 = vunpack.c.l.b16 %v1816
    %v2147 = vunpack.c.h.b16 %v1816
    %v2148 = vunpack.c.l.b16 %v1817
    %v2149 = vunpack.c.h.b16 %v1817
    %v2150 = vunpack.c.l.b16 %v1818
    %v2151 = vunpack.c.h.b16 %v1818
    %v2152 = vunpack.c.l.b16 %v1819
    %v2153 = vunpack.c.h.b16 %v1819
    %v2154 = vunpack.c.l.b16 %v1820
    %v2155 = vunpack.c.h.b16 %v1820
    %v2156 = vunpack.c.l.b16 %v1821
    %v2157 = vunpack.c.h.b16 %v1821
    %v2158 = vunpack.c.l.b16 %v1822
    %v2159 = vunpack.c.h.b16 %v1822
    %v2160 = vunpack.c.l.b16 %v1823
    %v2161 = vunpack.c.h.b16 %v1823
    %v2162 = vunpack.c.l.b16 %v1824
    %v2163 = vunpack.c.h.b16 %v1824
    %v2164 = vunpack.c.l.b16 %v1825
    %v2165 = vunpack.c.h.b16 %v1825
    %v2166 = vunpack.c.l.b16 %v1826
    %v2167 = vunpack.c.h.b16 %v1826
    %v2168 = vunpack.c.l.b16 %v1827
    %v2169 = vunpack.c.h.b16 %v1827
    %v2170 = vunpack.c.l.b16 %v1828
    %v2171 = vunpack.c.h.b16 %v1828
    %v2172 = vunpack.c.l.b16 %v1829
    %v2173 = vunpack.c.h.b16 %v1829
    %v2174 = vunpack.c.l.b16 %v1830
    %v2175 = vunpack.c.h.b16 %v1830
    %v2176 = vunpack.c.l.b16 %v1831
    %v2177 = vunpack.c.h.b16 %v1831
    %v2178 = vunpack.c.l.b16 %v1832
    %v2179 = vunpack.c.h.b16 %v1832
    %v2180 = vunpack.c.l.b16 %v1833
    %v2181 = vunpack.c.h.b16 %v1833
    %v2182 = vunpack.c.l.b16 %v1834
    %v2183 = vunpack.c.h.b16 %v1834
    %v2184 = vunpack.c.l.b16 %v1835
    %v2185 = vunpack.c.h.b16 %v1835
    %v2186 = vunpack.c.l.b16 %v1836
    %v2187 = vunpack.c.h.b16 %v1836
    %v2188 = vunpack.c.l.b16 %v1837
    %v2189 = vunpack.c.h.b16 %v1837
    %v2190 = vunpack.c.l.b16 %v1838
    %v2191 = vunpack.c.h.b16 %v1838
    %v2192 = vunpack.c.l.b16 %v1839
    %v2193 = vunpack.c.h.b16 %v1839
    %v2194 = vunpack.c.l.b16 %v1840
    %v2195 = vunpack.c.h.b16 %v1840
    %v2196 = vunpack.c.l.b16 %v1841
    %v2197 = vunpack.c.h.b16 %v1841
    %v2198 = vunpack.c.l.b16 %v1842
    %v2199 = vunpack.c.h.b16 %v1842
    %v2200 = vunpack.c.l.b16 %v1843
    %v2201 = vunpack.c.h.b16 %v1843
    %v2202 = vunpack.c.l.b16 %v1844
    %v2203 = vunpack.c.h.b16 %v1844
    %v2204 = vunpack.c.l.b16 %v1845
    %v2205 = vunpack.c.h.b16 %v1845
    %v2206 = vunpack.c.l.b16 %v1846
    %v2207 = vunpack.c.h.b16 %v1846
    %v2208 = vunpack.c.l.b16 %v1847
    %v2209 = vunpack.c.h.b16 %v1847
    %v2210 = vunpack.c.l.b16 %v1848
    %v2211 = vunpack.c.h.b16 %v1848
    %v2212 = vunpack.c.l.b16 %v1849
    %v2213 = vunpack.c.h.b16 %v1849
    %v2214 = vunpack.c.l.b16 %v1850
    %v2215 = vunpack.c.h.b16 %v1850
    %v2216 = vunpack.c.l.b16 %v1851
    %v2217 = vunpack.c.h.b16 %v1851
    %v2218 = vunpack.c.l.b16 %v1852
    %v2219 = vunpack.c.h.b16 %v1852
    %v2220 = vunpack.c.l.b16 %v1853
    %v2221 = vunpack.c.h.b16 %v1853
    %v2222 = vunpack.c.l.b16 %v1854
    %v2223 = vunpack.c.h.b16 %v1854
    %v2224 = vunpack.c.l.b16 %v1855
    %v2225 = vunpack.c.h.b16 %v1855
    %v2226 = vunpack.c.l.b16 %v1856
    %v2227 = vunpack.c.h.b16 %v1856
    %v2228 = vunpack.c.l.b16 %v1857
    %v2229 = vunpack.c.h.b16 %v1857
    %v2230 = vunpack.c.l.b16 %v1858
    %v2231 = vunpack.c.h.b16 %v1858
    %v2232 = vunpack.c.l.b16 %v1859
    %v2233 = vunpack.c.h.b16 %v1859
    %v2234 = vunpack.c.l.b16 %v1860
    %v2235 = vunpack.c.h.b16 %v1860
    %v2236 = vunpack.c.l.b16 %v1861
    %v2237 = vunpack.c.h.b16 %v1861
    %v2238 = vunpack.c.l.b16 %v1862
    %v2239 = vunpack.c.h.b16 %v1862
    %v2240 = vunpack.c.l.b16 %v1863
    %v2241 = vunpack.c.h.b16 %v1863
    %v2242 = vunpack.c.l.b16 %v1864
    %v2243 = vunpack.c.h.b16 %v1864
    %v2244 = vunpack.c.l.b16 %v1865
    %v2245 = vunpack.c.h.b16 %v1865
    %v2246 = vunpack.c.l.b16 %v1866
    %v2247 = vunpack.c.h.b16 %v1866
    %v2248 = vunpack.c.l.b16 %v1867
    %v2249 = vunpack.c.h.b16 %v1867
    %v2250 = vunpack.c.l.b16 %v1868
    %v2251 = vunpack.c.h.b16 %v1868
    %v2252 = vunpack.c.l.b16 %v1869
    %v2253 = vunpack.c.h.b16 %v1869
    %v2254 = vpack.c.b16 %v2006, %v1998
    %v2255 = vpack.c.b16 %v2007, %v1999
    %v2256 = vpack.c.b16 %v2008, %v2000
    %v2257 = vpack.c.b16 %v2009, %v2001
    %v2258 = vpack.c.b16 %v2010, %v2002
    %v2259 = vpack.c.b16 %v2011, %v2003
    %v2260 = vpack.c.b16 %v2012, %v2004
    %v2261 = vpack.c.b16 %v2013, %v2005
    %v2262 = vpack.c.b16 %v2022, %v2014
    %v2263 = vpack.c.b16 %v2023, %v2015
    %v2264 = vpack.c.b16 %v2024, %v2016
    %v2265 = vpack.c.b16 %v2025, %v2017
    %v2266 = vpack.c.b16 %v2026, %v2018
    %v2267 = vpack.c.b16 %v2027, %v2019
    %v2268 = vpack.c.b16 %v2028, %v2020
    %v2269 = vpack.c.b16 %v2029, %v2021
    %v2270 = vpack.c.b16 %v2038, %v2030
    %v2271 = vpack.c.b16 %v2039, %v2031
    %v2272 = vpack.c.b16 %v2040, %v2032
    %v2273 = vpack.c.b16 %v2041, %v2033
    %v2274 = vpack.c.b16 %v2042, %v2034
    %v2275 = vpack.c.b16 %v2043, %v2035
    %v2276 = vpack.c.b16 %v2044, %v2036
    %v2277 = vpack.c.b16 %v2045, %v2037
    %v2278 = vpack.c.b16 %v2054, %v2046
    %v2279 = vpack.c.b16 %v2055, %v2047
    %v2280 = vpack.c.b16 %v2056, %v2048
    %v2281 = vpack.c.b16 %v2057, %v2049
    %v2282 = vpack.c.b16 %v2058, %v2050
    %v2283 = vpack.c.b16 %v2059, %v2051
    %v2284 = vpack.c.b16 %v2060, %v2052
    %v2285 = vpack.c.b16 %v2061, %v2053
    %v2286 = vpack.c.b16 %v2070, %v2062
    %v2287 = vpack.c.b16 %v2071, %v2063
    %v2288 = vpack.c.b16 %v2072, %v2064
    %v2289 = vpack.c.b16 %v2073, %v2065
    %v2290 = vpack.c.b16 %v2074, %v2066
    %v2291 = vpack.c.b16 %v2075, %v2067
    %v2292 = vpack.c.b16 %v2076, %v2068
    %v2293 = vpack.c.b16 %v2077, %v2069
    %v2294 = vpack.c.b16 %v2086, %v2078
    %v2295 = vpack.c.b16 %v2087, %v2079
    %v2296 = vpack.c.b16 %v2088, %v2080
    %v2297 = vpack.c.b16 %v2089, %v2081
    %v2298 = vpack.c.b16 %v2090, %v2082
    %v2299 = vpack.c.b16 %v2091, %v2083
    %v2300 = vpack.c.b16 %v2092, %v2084
    %v2301 = vpack.c.b16 %v2093, %v2085
    %v2302 = vpack.c.b16 %v2102, %v2094
    %v2303 = vpack.c.b16 %v2103, %v2095
    %v2304 = vpack.c.b16 %v2104, %v2096
    %v2305 = vpack.c.b16 %v2105, %v2097
    %v2306 = vpack.c.b16 %v2106, %v2098
    %v2307 = vpack.c.b16 %v2107, %v2099
    %v2308 = vpack.c.b16 %v2108, %v2100
    %v2309 = vpack.c.b16 %v2109, %v2101
    %v2310 = vpack.c.b16 %v2118, %v2110
    %v2311 = vpack.c.b16 %v2119, %v2111
    %v2312 = vpack.c.b16 %v2120, %v2112
    %v2313 = vpack.c.b16 %v2121, %v2113
    %v2314 = vpack.c.b16 %v2122, %v2114
    %v2315 = vpack.c.b16 %v2123, %v2115
    %v2316 = vpack.c.b16 %v2124, %v2116
    %v2317 = vpack.c.b16 %v2125, %v2117
    %v2318 = vpack.c.b16 %v2134, %v2126
    %v2319 = vpack.c.b16 %v2135, %v2127
    %v2320 = vpack.c.b16 %v2136, %v2128
    %v2321 = vpack.c.b16 %v2137, %v2129
    %v2322 = vpack.c.b16 %v2138, %v2130
    %v2323 = vpack.c.b16 %v2139, %v2131
    %v2324 = vpack.c.b16 %v2140, %v2132
    %v2325 = vpack.c.b16 %v2141, %v2133
    %v2326 = vpack.c.b16 %v2150, %v2142
    %v2327 = vpack.c.b16 %v2151, %v2143
    %v2328 = vpack.c.b16 %v2152, %v2144
    %v2329 = vpack.c.b16 %v2153, %v2145
    %v2330 = vpack.c.b16 %v2154, %v2146
    %v2331 = vpack.c.b16 %v2155, %v2147
    %v2332 = vpack.c.b16 %v2156, %v2148
    %v2333 = vpack.c.b16 %v2157, %v2149
    %v2334 = vpack.c.b16 %v2166, %v2158
    %v2335 = vpack.c.b16 %v2167, %v2159
    %v2336 = vpack.c.b16 %v2168, %v2160
    %v2337 = vpack.c.b16 %v2169, %v2161
    %v2338 = vpack.c.b16 %v2170, %v2162
    %v2339 = vpack.c.b16 %v2171, %v2163
    %v2340 = vpack.c.b16 %v2172, %v2164
    %v2341 = vpack.c.b16 %v2173, %v2165
    %v2342 = vpack.c.b16 %v2182, %v2174
    %v2343 = vpack.c.b16 %v2183, %v2175
    %v2344 = vpack.c.b16 %v2184, %v2176
    %v2345 = vpack.c.b16 %v2185, %v2177
    %v2346 = vpack.c.b16 %v2186, %v2178
    %v2347 = vpack.c.b16 %v2187, %v2179
    %v2348 = vpack.c.b16 %v2188, %v2180
    %v2349 = vpack.c.b16 %v2189, %v2181
    %v2350 = vpack.c.b16 %v2198, %v2190
    %v2351 = vpack.c.b16 %v2199, %v2191
    %v2352 = vpack.c.b16 %v2200, %v2192
    %v2353 = vpack.c.b16 %v2201, %v2193
    %v2354 = vpack.c.b16 %v2202, %v2194
    %v2355 = vpack.c.b16 %v2203, %v2195
    %v2356 = vpack.c.b16 %v2204, %v2196
    %v2357 = vpack.c.b16 %v2205, %v2197
    %v2358 = vpack.c.b16 %v2214, %v2206
    %v2359 = vpack.c.b16 %v2215, %v2207
    %v2360 = vpack.c.b16 %v2216, %v2208
    %v2361 = vpack.c.b16 %v2217, %v2209
    %v2362 = vpack.c.b16 %v2218, %v2210
    %v2363 = vpack.c.b16 %v2219, %v2211
    %v2364 = vpack.c.b16 %v2220, %v2212
    %v2365 = vpack.c.b16 %v2221, %v2213
    %v2366 = vpack.c.b16 %v2230, %v2222
    %v2367 = vpack.c.b16 %v2231, %v2223
    %v2368 = vpack.c.b16 %v2232, %v2224
    %v2369 = vpack.c.b16 %v2233, %v2225
    %v2370 = vpack.c.b16 %v2234, %v2226
    %v2371 = vpack.c.b16 %v2235, %v2227
    %v2372 = vpack.c.b16 %v2236, %v2228
    %v2373 = vpack.c.b16 %v2237, %v2229
    %v2374 = vpack.c.b16 %v2246, %v2238
    %v2375 = vpack.c.b16 %v2247, %v2239
    %v2376 = vpack.c.b16 %v2248, %v2240
    %v2377 = vpack.c.b16 %v2249, %v2241
    %v2378 = vpack.c.b16 %v2250, %v2242
    %v2379 = vpack.c.b16 %v2251, %v2243
    %v2380 = vpack.c.b16 %v2252, %v2244
    %v2381 = vpack.c.b16 %v2253, %v2245
    %2510 = vmatprep.subr.bf16.mxu0 %v2255
    %2511 = vmatpush1.bf16.msra.mxu0 %v2254
    %2512 = vmatprep.subr.bf16.mxu0 %v2263
    %2513 = vmatpush1.bf16.msra.mxu0 %v2262
    %2514 = vmatprep.subr.bf16.mxu0 %v2271
    %2515 = vmatpush1.bf16.msra.mxu0 %v2270
    %2516 = vmatprep.subr.bf16.mxu0 %v2279
    %2517 = vmatpush1.bf16.msra.mxu0 %v2278
    %2518 = vmatprep.subr.bf16.mxu0 %v2287
    %2519 = vmatpush1.bf16.msra.mxu0 %v2286
    %2520 = vmatprep.subr.bf16.mxu0 %v2295
    %2521 = vmatpush1.bf16.msra.mxu0 %v2294
    %2522 = vmatprep.subr.bf16.mxu0 %v2303
    %2523 = vmatpush1.bf16.msra.mxu0 %v2302
    %2524 = vmatprep.subr.bf16.mxu0 %v2311
    %2525 = vmatpush1.bf16.msra.mxu0 %v2310
    %2526 = vmatprep.subr.bf16.mxu0 %v2319
    %2527 = vmatpush1.bf16.msra.mxu0 %v2318
    %2528 = vmatprep.subr.bf16.mxu0 %v2327
    %2529 = vmatpush1.bf16.msra.mxu0 %v2326
    %2530 = vmatprep.subr.bf16.mxu0 %v2335
    %2531 = vmatpush1.bf16.msra.mxu0 %v2334
    %2532 = vmatprep.subr.bf16.mxu0 %v2343
    %2533 = vmatpush1.bf16.msra.mxu0 %v2342
    %2534 = vmatprep.subr.bf16.mxu0 %v2351
    %2535 = vmatpush1.bf16.msra.mxu0 %v2350
    %2536 = vmatprep.subr.bf16.mxu0 %v2359
    %2537 = vmatpush1.bf16.msra.mxu0 %v2358
    %2538 = vmatprep.subr.bf16.mxu0 %v2367
    %2539 = vmatpush1.bf16.msra.mxu0 %v2366
    %2540 = vmatprep.subr.bf16.mxu0 %v2375
    %2541 = vmatpush1.bf16.msra.mxu0 %v2374
    %2542 = vmatprep.mubr.bf16.mxu0 %v1731
    %2543 = vmatmul.mubr.bf16.gmra.mrb[0].mxu0 %v1730
    %v2544 = vpop.f32.mrb[0].mxu0
    %v2545 = vadd.f32 0.0, %v2544
    %v2546 = vpop.f32.mrb[0].mxu0
    %v2547 = vadd.f32 0.0, %v2546
    %v2548 = vpop.f32.mrb[0].mxu0
    %v2549 = vpop.f32.mrb[0].mxu0
    %2550 = vdwg.mxu0
    %2551 = vmatprep.subr.bf16.mxu0 %v2257
    %2552 = vmatpush1.bf16.msra.mxu0 %v2256
    %2553 = vmatprep.subr.bf16.mxu0 %v2265
    %2554 = vmatpush1.bf16.msra.mxu0 %v2264
    %2555 = vmatprep.subr.bf16.mxu0 %v2273
    %2556 = vmatpush1.bf16.msra.mxu0 %v2272
    %2557 = vmatprep.subr.bf16.mxu0 %v2281
    %2558 = vmatpush1.bf16.msra.mxu0 %v2280
    %2559 = vmatprep.subr.bf16.mxu0 %v2289
    %2560 = vmatpush1.bf16.msra.mxu0 %v2288
    %2561 = vmatprep.subr.bf16.mxu0 %v2297
    %2562 = vmatpush1.bf16.msra.mxu0 %v2296
    %2563 = vmatprep.subr.bf16.mxu0 %v2305
    %2564 = vmatpush1.bf16.msra.mxu0 %v2304
    %2565 = vmatprep.subr.bf16.mxu0 %v2313
    %2566 = vmatpush1.bf16.msra.mxu0 %v2312
    %2567 = vmatprep.subr.bf16.mxu0 %v2321
    %2568 = vmatpush1.bf16.msra.mxu0 %v2320
    %2569 = vmatprep.subr.bf16.mxu0 %v2329
    %2570 = vmatpush1.bf16.msra.mxu0 %v2328
    %2571 = vmatprep.subr.bf16.mxu0 %v2337
    %2572 = vmatpush1.bf16.msra.mxu0 %v2336
    %2573 = vmatprep.subr.bf16.mxu0 %v2345
    %2574 = vmatpush1.bf16.msra.mxu0 %v2344
    %2575 = vmatprep.subr.bf16.mxu0 %v2353
    %2576 = vmatpush1.bf16.msra.mxu0 %v2352
    %2577 = vmatprep.subr.bf16.mxu0 %v2361
    %2578 = vmatpush1.bf16.msra.mxu0 %v2360
    %2579 = vmatprep.subr.bf16.mxu0 %v2369
    %2580 = vmatpush1.bf16.msra.mxu0 %v2368
    %2581 = vmatprep.subr.bf16.mxu0 %v2377
    %2582 = vmatpush1.bf16.msra.mxu0 %v2376
    %2583 = vmatprep.mubr.bf16.mxu0 %v1731
    %2584 = vmatmul.mubr.bf16.gmra.mrb[0].mxu0 %v1730
    %v2585 = vpop.f32.mrb[0].mxu0
    %v2586 = vadd.f32 0.0, %v2585
    %v2587 = vpop.f32.mrb[0].mxu0
    %v2588 = vadd.f32 0.0, %v2587
    %v2589 = vpop.f32.mrb[0].mxu0
    %v2590 = vpop.f32.mrb[0].mxu0
    %2591 = vdwg.mxu0
    %2592 = vmatprep.subr.bf16.mxu0 %v2259
    %2593 = vmatpush1.bf16.msra.mxu0 %v2258
    %2594 = vmatprep.subr.bf16.mxu0 %v2267
    %2595 = vmatpush1.bf16.msra.mxu0 %v2266
    %2596 = vmatprep.subr.bf16.mxu0 %v2275
    %2597 = vmatpush1.bf16.msra.mxu0 %v2274
    %2598 = vmatprep.subr.bf16.mxu0 %v2283
    %2599 = vmatpush1.bf16.msra.mxu0 %v2282
    %2600 = vmatprep.subr.bf16.mxu0 %v2291
    %2601 = vmatpush1.bf16.msra.mxu0 %v2290
    %2602 = vmatprep.subr.bf16.mxu0 %v2299
    %2603 = vmatpush1.bf16.msra.mxu0 %v2298
    %2604 = vmatprep.subr.bf16.mxu0 %v2307
    %2605 = vmatpush1.bf16.msra.mxu0 %v2306
    %2606 = vmatprep.subr.bf16.mxu0 %v2315
    %2607 = vmatpush1.bf16.msra.mxu0 %v2314
    %2608 = vmatprep.subr.bf16.mxu0 %v2323
    %2609 = vmatpush1.bf16.msra.mxu0 %v2322
    %2610 = vmatprep.subr.bf16.mxu0 %v2331
    %2611 = vmatpush1.bf16.msra.mxu0 %v2330
    %2612 = vmatprep.subr.bf16.mxu0 %v2339
    %2613 = vmatpush1.bf16.msra.mxu0 %v2338
    %2614 = vmatprep.subr.bf16.mxu0 %v2347
    %2615 = vmatpush1.bf16.msra.mxu0 %v2346
    %2616 = vmatprep.subr.bf16.mxu0 %v2355
    %2617 = vmatpush1.bf16.msra.mxu0 %v2354
    %2618 = vmatprep.subr.bf16.mxu0 %v2363
    %2619 = vmatpush1.bf16.msra.mxu0 %v2362
    %2620 = vmatprep.subr.bf16.mxu0 %v2371
    %2621 = vmatpush1.bf16.msra.mxu0 %v2370
    %2622 = vmatprep.subr.bf16.mxu0 %v2379
    %2623 = vmatpush1.bf16.msra.mxu0 %v2378
    %2624 = vmatprep.mubr.bf16.mxu0 %v1731
    %2625 = vmatmul.mubr.bf16.gmra.mrb[0].mxu0 %v1730
    %v2626 = vpop.f32.mrb[0].mxu0
    %v2627 = vadd.f32 0.0, %v2626
    %v2628 = vpop.f32.mrb[0].mxu0
    %v2629 = vadd.f32 0.0, %v2628
    %v2630 = vpop.f32.mrb[0].mxu0
    %v2631 = vpop.f32.mrb[0].mxu0
    %2632 = vdwg.mxu0
    %2633 = vmatprep.subr.bf16.mxu0 %v2261
    %2634 = vmatpush1.bf16.msra.mxu0 %v2260
    %2635 = vmatprep.subr.bf16.mxu0 %v2269
    %2636 = vmatpush1.bf16.msra.mxu0 %v2268
    %2637 = vmatprep.subr.bf16.mxu0 %v2277
    %2638 = vmatpush1.bf16.msra.mxu0 %v2276
    %2639 = vmatprep.subr.bf16.mxu0 %v2285
    %2640 = vmatpush1.bf16.msra.mxu0 %v2284
    %2641 = vmatprep.subr.bf16.mxu0 %v2293
    %2642 = vmatpush1.bf16.msra.mxu0 %v2292
    %2643 = vmatprep.subr.bf16.mxu0 %v2301
    %2644 = vmatpush1.bf16.msra.mxu0 %v2300
    %2645 = vmatprep.subr.bf16.mxu0 %v2309
    %2646 = vmatpush1.bf16.msra.mxu0 %v2308
    %2647 = vmatprep.subr.bf16.mxu0 %v2317
    %2648 = vmatpush1.bf16.msra.mxu0 %v2316
    %2649 = vmatprep.subr.bf16.mxu0 %v2325
    %2650 = vmatpush1.bf16.msra.mxu0 %v2324
    %2651 = vmatprep.subr.bf16.mxu0 %v2333
    %2652 = vmatpush1.bf16.msra.mxu0 %v2332
    %2653 = vmatprep.subr.bf16.mxu0 %v2341
    %2654 = vmatpush1.bf16.msra.mxu0 %v2340
    %2655 = vmatprep.subr.bf16.mxu0 %v2349
    %2656 = vmatpush1.bf16.msra.mxu0 %v2348
    %2657 = vmatprep.subr.bf16.mxu0 %v2357
    %2658 = vmatpush1.bf16.msra.mxu0 %v2356
    %2659 = vmatprep.subr.bf16.mxu0 %v2365
    %2660 = vmatpush1.bf16.msra.mxu0 %v2364
    %2661 = vmatprep.subr.bf16.mxu0 %v2373
    %2662 = vmatpush1.bf16.msra.mxu0 %v2372
    %2663 = vmatprep.subr.bf16.mxu0 %v2381
    %2664 = vmatpush1.bf16.msra.mxu0 %v2380
    %2665 = vmatprep.mubr.bf16.mxu0 %v1731
    %2666 = vmatmul.mubr.bf16.gmra.mrb[0].mxu0 %v1730
    %v2667 = vpop.f32.mrb[0].mxu0
    %v2668 = vadd.f32 0.0, %v2667
    %v2669 = vpop.f32.mrb[0].mxu0
    %v2670 = vadd.f32 0.0, %v2669
    %v2671 = vpop.f32.mrb[0].mxu0
    %v2672 = vpop.f32.mrb[0].mxu0
    %2673 = vdwg.mxu0
    %v2674 = vadd.f32 %v1734, %v2545
    %v2675 = vadd.f32 %v1735, %v2547
    %v2676 = vadd.f32 %v1736, %v2586
    %v2677 = vadd.f32 %v1737, %v2588
    %v2678 = vadd.f32 %v1738, %v2627
    %v2679 = vadd.f32 %v1739, %v2629
    %v2680 = vadd.f32 %v1740, %v2668
    %v2681 = vadd.f32 %v1741, %v2670
    %v2682 = vxor.u32 %v2674, 2147483648
    %v2683 = vxor.u32 %v2675, 2147483648
    %v2684 = vmul.f32 %v2682, 1.442695
    %v2685 = vpow.pop %v2684
    %v2686 = vmul.f32 %v2683, 1.442695
    %v2687 = vpow.pop %v2686
    %v2688 = vadd.f32 %v2685, 1.0
    %v2689 = vadd.f32 %v2687, 1.0
    %v2690 = vrcp.pop %v2688
    %v2691 = vmul.f32 1.0, %v2690
    %v2692 = vrcp.pop %v2689
    %v2693 = vmul.f32 1.0, %v2692
    %v2694 = vxor.u32 %v2676, 2147483648
    %v2695 = vxor.u32 %v2677, 2147483648
    %v2696 = vmul.f32 %v2694, 1.442695
    %v2697 = vpow.pop %v2696
    %v2698 = vmul.f32 %v2695, 1.442695
    %v2699 = vpow.pop %v2698
    %v2700 = vadd.f32 %v2697, 1.0
    %v2701 = vadd.f32 %v2699, 1.0
    %v2702 = vrcp.pop %v2700
    %v2703 = vmul.f32 1.0, %v2702
    %v2704 = vrcp.pop %v2701
    %v2705 = vmul.f32 1.0, %v2704
    %v2706 = vtanh.pop %v2678
    %v2707 = vtanh.pop %v2679
    %v2708 = vxor.u32 %v2680, 2147483648
    %v2709 = vxor.u32 %v2681, 2147483648
    %v2710 = vmul.f32 %v2708, 1.442695
    %v2711 = vpow.pop %v2710
    %v2712 = vmul.f32 %v2709, 1.442695
    %v2713 = vpow.pop %v2712
    %v2714 = vadd.f32 %v2711, 1.0
    %v2715 = vadd.f32 %v2713, 1.0
    %v2716 = vrcp.pop %v2714
    %v2717 = vmul.f32 1.0, %v2716
    %v2718 = vrcp.pop %v2715
    %v2719 = vmul.f32 1.0, %v2718
    %v2720 = vmul.f32 %v2703, %v1724
    %v2721 = vmul.f32 %v2705, %v1725
    %v2722 = vmul.f32 %v2691, %v2706
    %v2723 = vmul.f32 %v2693, %v2707
    %v2724 = vadd.f32 %v2720, %v2722
    %v2725 = vadd.f32 %v2721, %v2723
    %v2726 = vtanh.pop %v2724
    %v2727 = vtanh.pop %v2725
    %v2728 = vmul.f32 %v2717, %v2726
    %v2729 = vmul.f32 %v2719, %v2727
    %v2730 = vpack.c.bf16 %v2728, %v2728
    %v2731 = vpack.c.bf16 %v2729, %v2729
    %v2734 = vrot.slane %v2730, 4
    %v2735 = vrot.slane %v2731, 4
    %2738 = vst [vmem:[#allocation3] sm:$0xf0] %v2734
    %2739 = vst [vmem:[#allocation3 + $0x8] sm:$0xf0] %v2735
    %v2740 = vld [vmem:[%s434] sm:$0xff]
    %v2741 = vld [vmem:[%s434 + $0x8] sm:$0xff]
    %v2742 = vld [vmem:[%s434 + $0x10] sm:$0xff]
    %v2743 = vld [vmem:[%s434 + $0x18] sm:$0xff]
    %v2744 = vld [vmem:[%s434 + $0x20] sm:$0xff]
    %v2745 = vld [vmem:[%s434 + $0x28] sm:$0xff]
    %v2746 = vld [vmem:[%s434 + $0x30] sm:$0xff]
    %v2747 = vld [vmem:[%s434 + $0x38] sm:$0xff]
    %v2748 = vld [vmem:[#allocation9] sm:$0xff]
    %v2749 = vld [vmem:[#allocation9 + $0x8] sm:$0xff]
    %v2750 = vld [vmem:[#allocation9 + $0x10] sm:$0xff]
    %v2751 = vld [vmem:[#allocation9 + $0x18] sm:$0xff]
    %v2752 = vld [vmem:[#allocation9 + $0x20] sm:$0xff]
    %v2753 = vld [vmem:[#allocation9 + $0x28] sm:$0xff]
    %v2754 = vld [vmem:[#allocation9 + $0x30] sm:$0xff]
    %v2755 = vld [vmem:[#allocation9 + $0x38] sm:$0xff]
    %v2756 = vld [vmem:[#allocation9 + $0x40] sm:$0xff]
    %v2757 = vld [vmem:[#allocation9 + $0x48] sm:$0xff]
    %v2758 = vld [vmem:[#allocation9 + $0x50] sm:$0xff]
    %v2759 = vld [vmem:[#allocation9 + $0x58] sm:$0xff]
    %v2760 = vld [vmem:[#allocation9 + $0x60] sm:$0xff]
    %v2761 = vld [vmem:[#allocation9 + $0x68] sm:$0xff]
    %v2762 = vld [vmem:[#allocation9 + $0x70] sm:$0xff]
    %v2763 = vld [vmem:[#allocation9 + $0x78] sm:$0xff]
    %v2764 = vld [vmem:[#allocation9 + $0x80] sm:$0xff]
    %v2765 = vld [vmem:[#allocation9 + $0x88] sm:$0xff]
    %v2766 = vld [vmem:[#allocation9 + $0x90] sm:$0xff]
    %v2767 = vld [vmem:[#allocation9 + $0x98] sm:$0xff]
    %v2768 = vld [vmem:[#allocation9 + $0xa0] sm:$0xff]
    %v2769 = vld [vmem:[#allocation9 + $0xa8] sm:$0xff]
    %v2770 = vld [vmem:[#allocation9 + $0xb0] sm:$0xff]
    %v2771 = vld [vmem:[#allocation9 + $0xb8] sm:$0xff]
    %v2772 = vld [vmem:[#allocation9 + $0xc0] sm:$0xff]
    %v2773 = vld [vmem:[#allocation9 + $0xc8] sm:$0xff]
    %v2774 = vld [vmem:[#allocation9 + $0xd0] sm:$0xff]
    %v2775 = vld [vmem:[#allocation9 + $0xd8] sm:$0xff]
    %v2776 = vld [vmem:[#allocation9 + $0xe0] sm:$0xff]
    %v2777 = vld [vmem:[#allocation9 + $0xe8] sm:$0xff]
    %v2778 = vld [vmem:[#allocation9 + $0xf0] sm:$0xff]
    %v2779 = vld [vmem:[#allocation9 + $0xf8] sm:$0xff]
    %v2780 = vld [vmem:[#allocation9 + $0x100] sm:$0xff]
    %v2781 = vld [vmem:[#allocation9 + $0x108] sm:$0xff]
    %v2782 = vld [vmem:[#allocation9 + $0x110] sm:$0xff]
    %v2783 = vld [vmem:[#allocation9 + $0x118] sm:$0xff]
    %v2784 = vld [vmem:[#allocation9 + $0x120] sm:$0xff]
    %v2785 = vld [vmem:[#allocation9 + $0x128] sm:$0xff]
    %v2786 = vld [vmem:[#allocation9 + $0x130] sm:$0xff]
    %v2787 = vld [vmem:[#allocation9 + $0x138] sm:$0xff]
    %v2788 = vld [vmem:[#allocation9 + $0x140] sm:$0xff]
    %v2789 = vld [vmem:[#allocation9 + $0x148] sm:$0xff]
    %v2790 = vld [vmem:[#allocation9 + $0x150] sm:$0xff]
    %v2791 = vld [vmem:[#allocation9 + $0x158] sm:$0xff]
    %v2792 = vld [vmem:[#allocation9 + $0x160] sm:$0xff]
    %v2793 = vld [vmem:[#allocation9 + $0x168] sm:$0xff]
    %v2794 = vld [vmem:[#allocation9 + $0x170] sm:$0xff]
    %v2795 = vld [vmem:[#allocation9 + $0x178] sm:$0xff]
    %v2796 = vld [vmem:[#allocation9 + $0x180] sm:$0xff]
    %v2797 = vld [vmem:[#allocation9 + $0x188] sm:$0xff]
    %v2798 = vld [vmem:[#allocation9 + $0x190] sm:$0xff]
    %v2799 = vld [vmem:[#allocation9 + $0x198] sm:$0xff]
    %v2800 = vld [vmem:[#allocation9 + $0x1a0] sm:$0xff]
    %v2801 = vld [vmem:[#allocation9 + $0x1a8] sm:$0xff]
    %v2802 = vld [vmem:[#allocation9 + $0x1b0] sm:$0xff]
    %v2803 = vld [vmem:[#allocation9 + $0x1b8] sm:$0xff]
    %v2804 = vld [vmem:[#allocation9 + $0x1c0] sm:$0xff]
    %v2805 = vld [vmem:[#allocation9 + $0x1c8] sm:$0xff]
    %v2806 = vld [vmem:[#allocation9 + $0x1d0] sm:$0xff]
    %v2807 = vld [vmem:[#allocation9 + $0x1d8] sm:$0xff]
    %v2808 = vld [vmem:[#allocation9 + $0x1e0] sm:$0xff]
    %v2809 = vld [vmem:[#allocation9 + $0x1e8] sm:$0xff]
    %v2810 = vld [vmem:[#allocation9 + $0x1f0] sm:$0xff]
    %v2811 = vld [vmem:[#allocation9 + $0x1f8] sm:$0xff]
    %v2812 = vld [vmem:[#allocation9 + $0x200] sm:$0xff]
    %v2813 = vld [vmem:[#allocation9 + $0x208] sm:$0xff]
    %v2814 = vld [vmem:[#allocation9 + $0x210] sm:$0xff]
    %v2815 = vld [vmem:[#allocation9 + $0x218] sm:$0xff]
    %v2816 = vld [vmem:[#allocation9 + $0x220] sm:$0xff]
    %v2817 = vld [vmem:[#allocation9 + $0x228] sm:$0xff]
    %v2818 = vld [vmem:[#allocation9 + $0x230] sm:$0xff]
    %v2819 = vld [vmem:[#allocation9 + $0x238] sm:$0xff]
    %v2820 = vld [vmem:[#allocation9 + $0x240] sm:$0xff]
    %v2821 = vld [vmem:[#allocation9 + $0x248] sm:$0xff]
    %v2822 = vld [vmem:[#allocation9 + $0x250] sm:$0xff]
    %v2823 = vld [vmem:[#allocation9 + $0x258] sm:$0xff]
    %v2824 = vld [vmem:[#allocation9 + $0x260] sm:$0xff]
    %v2825 = vld [vmem:[#allocation9 + $0x268] sm:$0xff]
    %v2826 = vld [vmem:[#allocation9 + $0x270] sm:$0xff]
    %v2827 = vld [vmem:[#allocation9 + $0x278] sm:$0xff]
    %v2828 = vld [vmem:[#allocation9 + $0x280] sm:$0xff]
    %v2829 = vld [vmem:[#allocation9 + $0x288] sm:$0xff]
    %v2830 = vld [vmem:[#allocation9 + $0x290] sm:$0xff]
    %v2831 = vld [vmem:[#allocation9 + $0x298] sm:$0xff]
    %v2832 = vld [vmem:[#allocation9 + $0x2a0] sm:$0xff]
    %v2833 = vld [vmem:[#allocation9 + $0x2a8] sm:$0xff]
    %v2834 = vld [vmem:[#allocation9 + $0x2b0] sm:$0xff]
    %v2835 = vld [vmem:[#allocation9 + $0x2b8] sm:$0xff]
    %v2836 = vld [vmem:[#allocation9 + $0x2c0] sm:$0xff]
    %v2837 = vld [vmem:[#allocation9 + $0x2c8] sm:$0xff]
    %v2838 = vld [vmem:[#allocation9 + $0x2d0] sm:$0xff]
    %v2839 = vld [vmem:[#allocation9 + $0x2d8] sm:$0xff]
    %v2840 = vld [vmem:[#allocation9 + $0x2e0] sm:$0xff]
    %v2841 = vld [vmem:[#allocation9 + $0x2e8] sm:$0xff]
    %v2842 = vld [vmem:[#allocation9 + $0x2f0] sm:$0xff]
    %v2843 = vld [vmem:[#allocation9 + $0x2f8] sm:$0xff]
    %v2844 = vld [vmem:[#allocation9 + $0x300] sm:$0xff]
    %v2845 = vld [vmem:[#allocation9 + $0x308] sm:$0xff]
    %v2846 = vld [vmem:[#allocation9 + $0x310] sm:$0xff]
    %v2847 = vld [vmem:[#allocation9 + $0x318] sm:$0xff]
    %v2848 = vld [vmem:[#allocation9 + $0x320] sm:$0xff]
    %v2849 = vld [vmem:[#allocation9 + $0x328] sm:$0xff]
    %v2850 = vld [vmem:[#allocation9 + $0x330] sm:$0xff]
    %v2851 = vld [vmem:[#allocation9 + $0x338] sm:$0xff]
    %v2852 = vld [vmem:[#allocation9 + $0x340] sm:$0xff]
    %v2853 = vld [vmem:[#allocation9 + $0x348] sm:$0xff]
    %v2854 = vld [vmem:[#allocation9 + $0x350] sm:$0xff]
    %v2855 = vld [vmem:[#allocation9 + $0x358] sm:$0xff]
    %v2856 = vld [vmem:[#allocation9 + $0x360] sm:$0xff]
    %v2857 = vld [vmem:[#allocation9 + $0x368] sm:$0xff]
    %v2858 = vld [vmem:[#allocation9 + $0x370] sm:$0xff]
    %v2859 = vld [vmem:[#allocation9 + $0x378] sm:$0xff]
    %v2860 = vld [vmem:[#allocation9 + $0x380] sm:$0xff]
    %v2861 = vld [vmem:[#allocation9 + $0x388] sm:$0xff]
    %v2862 = vld [vmem:[#allocation9 + $0x390] sm:$0xff]
    %v2863 = vld [vmem:[#allocation9 + $0x398] sm:$0xff]
    %v2864 = vld [vmem:[#allocation9 + $0x3a0] sm:$0xff]
    %v2865 = vld [vmem:[#allocation9 + $0x3a8] sm:$0xff]
    %v2866 = vld [vmem:[#allocation9 + $0x3b0] sm:$0xff]
    %v2867 = vld [vmem:[#allocation9 + $0x3b8] sm:$0xff]
    %v2868 = vld [vmem:[#allocation9 + $0x3c0] sm:$0xff]
    %v2869 = vld [vmem:[#allocation9 + $0x3c8] sm:$0xff]
    %v2870 = vld [vmem:[#allocation9 + $0x3d0] sm:$0xff]
    %v2871 = vld [vmem:[#allocation9 + $0x3d8] sm:$0xff]
    %v2872 = vld [vmem:[#allocation9 + $0x3e0] sm:$0xff]
    %v2873 = vld [vmem:[#allocation9 + $0x3e8] sm:$0xff]
    %v2874 = vld [vmem:[#allocation9 + $0x3f0] sm:$0xff]
    %v2875 = vld [vmem:[#allocation9 + $0x3f8] sm:$0xff]
    %v3004 = vunpack.c.l.b16 %v2748
    %v3005 = vunpack.c.h.b16 %v2748
    %v3006 = vunpack.c.l.b16 %v2749
    %v3007 = vunpack.c.h.b16 %v2749
    %v3008 = vunpack.c.l.b16 %v2750
    %v3009 = vunpack.c.h.b16 %v2750
    %v3010 = vunpack.c.l.b16 %v2751
    %v3011 = vunpack.c.h.b16 %v2751
    %v3012 = vunpack.c.l.b16 %v2752
    %v3013 = vunpack.c.h.b16 %v2752
    %v3014 = vunpack.c.l.b16 %v2753
    %v3015 = vunpack.c.h.b16 %v2753
    %v3016 = vunpack.c.l.b16 %v2754
    %v3017 = vunpack.c.h.b16 %v2754
    %v3018 = vunpack.c.l.b16 %v2755
    %v3019 = vunpack.c.h.b16 %v2755
    %v3020 = vunpack.c.l.b16 %v2756
    %v3021 = vunpack.c.h.b16 %v2756
    %v3022 = vunpack.c.l.b16 %v2757
    %v3023 = vunpack.c.h.b16 %v2757
    %v3024 = vunpack.c.l.b16 %v2758
    %v3025 = vunpack.c.h.b16 %v2758
    %v3026 = vunpack.c.l.b16 %v2759
    %v3027 = vunpack.c.h.b16 %v2759
    %v3028 = vunpack.c.l.b16 %v2760
    %v3029 = vunpack.c.h.b16 %v2760
    %v3030 = vunpack.c.l.b16 %v2761
    %v3031 = vunpack.c.h.b16 %v2761
    %v3032 = vunpack.c.l.b16 %v2762
    %v3033 = vunpack.c.h.b16 %v2762
    %v3034 = vunpack.c.l.b16 %v2763
    %v3035 = vunpack.c.h.b16 %v2763
    %v3036 = vunpack.c.l.b16 %v2764
    %v3037 = vunpack.c.h.b16 %v2764
    %v3038 = vunpack.c.l.b16 %v2765
    %v3039 = vunpack.c.h.b16 %v2765
    %v3040 = vunpack.c.l.b16 %v2766
    %v3041 = vunpack.c.h.b16 %v2766
    %v3042 = vunpack.c.l.b16 %v2767
    %v3043 = vunpack.c.h.b16 %v2767
    %v3044 = vunpack.c.l.b16 %v2768
    %v3045 = vunpack.c.h.b16 %v2768
    %v3046 = vunpack.c.l.b16 %v2769
    %v3047 = vunpack.c.h.b16 %v2769
    %v3048 = vunpack.c.l.b16 %v2770
    %v3049 = vunpack.c.h.b16 %v2770
    %v3050 = vunpack.c.l.b16 %v2771
    %v3051 = vunpack.c.h.b16 %v2771
    %v3052 = vunpack.c.l.b16 %v2772
    %v3053 = vunpack.c.h.b16 %v2772
    %v3054 = vunpack.c.l.b16 %v2773
    %v3055 = vunpack.c.h.b16 %v2773
    %v3056 = vunpack.c.l.b16 %v2774
    %v3057 = vunpack.c.h.b16 %v2774
    %v3058 = vunpack.c.l.b16 %v2775
    %v3059 = vunpack.c.h.b16 %v2775
    %v3060 = vunpack.c.l.b16 %v2776
    %v3061 = vunpack.c.h.b16 %v2776
    %v3062 = vunpack.c.l.b16 %v2777
    %v3063 = vunpack.c.h.b16 %v2777
    %v3064 = vunpack.c.l.b16 %v2778
    %v3065 = vunpack.c.h.b16 %v2778
    %v3066 = vunpack.c.l.b16 %v2779
    %v3067 = vunpack.c.h.b16 %v2779
    %v3068 = vunpack.c.l.b16 %v2780
    %v3069 = vunpack.c.h.b16 %v2780
    %v3070 = vunpack.c.l.b16 %v2781
    %v3071 = vunpack.c.h.b16 %v2781
    %v3072 = vunpack.c.l.b16 %v2782
    %v3073 = vunpack.c.h.b16 %v2782
    %v3074 = vunpack.c.l.b16 %v2783
    %v3075 = vunpack.c.h.b16 %v2783
    %v3076 = vunpack.c.l.b16 %v2784
    %v3077 = vunpack.c.h.b16 %v2784
    %v3078 = vunpack.c.l.b16 %v2785
    %v3079 = vunpack.c.h.b16 %v2785
    %v3080 = vunpack.c.l.b16 %v2786
    %v3081 = vunpack.c.h.b16 %v2786
    %v3082 = vunpack.c.l.b16 %v2787
    %v3083 = vunpack.c.h.b16 %v2787
    %v3084 = vunpack.c.l.b16 %v2788
    %v3085 = vunpack.c.h.b16 %v2788
    %v3086 = vunpack.c.l.b16 %v2789
    %v3087 = vunpack.c.h.b16 %v2789
    %v3088 = vunpack.c.l.b16 %v2790
    %v3089 = vunpack.c.h.b16 %v2790
    %v3090 = vunpack.c.l.b16 %v2791
    %v3091 = vunpack.c.h.b16 %v2791
    %v3092 = vunpack.c.l.b16 %v2792
    %v3093 = vunpack.c.h.b16 %v2792
    %v3094 = vunpack.c.l.b16 %v2793
    %v3095 = vunpack.c.h.b16 %v2793
    %v3096 = vunpack.c.l.b16 %v2794
    %v3097 = vunpack.c.h.b16 %v2794
    %v3098 = vunpack.c.l.b16 %v2795
    %v3099 = vunpack.c.h.b16 %v2795
    %v3100 = vunpack.c.l.b16 %v2796
    %v3101 = vunpack.c.h.b16 %v2796
    %v3102 = vunpack.c.l.b16 %v2797
    %v3103 = vunpack.c.h.b16 %v2797
    %v3104 = vunpack.c.l.b16 %v2798
    %v3105 = vunpack.c.h.b16 %v2798
    %v3106 = vunpack.c.l.b16 %v2799
    %v3107 = vunpack.c.h.b16 %v2799
    %v3108 = vunpack.c.l.b16 %v2800
    %v3109 = vunpack.c.h.b16 %v2800
    %v3110 = vunpack.c.l.b16 %v2801
    %v3111 = vunpack.c.h.b16 %v2801
    %v3112 = vunpack.c.l.b16 %v2802
    %v3113 = vunpack.c.h.b16 %v2802
    %v3114 = vunpack.c.l.b16 %v2803
    %v3115 = vunpack.c.h.b16 %v2803
    %v3116 = vunpack.c.l.b16 %v2804
    %v3117 = vunpack.c.h.b16 %v2804
    %v3118 = vunpack.c.l.b16 %v2805
    %v3119 = vunpack.c.h.b16 %v2805
    %v3120 = vunpack.c.l.b16 %v2806
    %v3121 = vunpack.c.h.b16 %v2806
    %v3122 = vunpack.c.l.b16 %v2807
    %v3123 = vunpack.c.h.b16 %v2807
    %v3124 = vunpack.c.l.b16 %v2808
    %v3125 = vunpack.c.h.b16 %v2808
    %v3126 = vunpack.c.l.b16 %v2809
    %v3127 = vunpack.c.h.b16 %v2809
    %v3128 = vunpack.c.l.b16 %v2810
    %v3129 = vunpack.c.h.b16 %v2810
    %v3130 = vunpack.c.l.b16 %v2811
    %v3131 = vunpack.c.h.b16 %v2811
    %v3132 = vunpack.c.l.b16 %v2812
    %v3133 = vunpack.c.h.b16 %v2812
    %v3134 = vunpack.c.l.b16 %v2813
    %v3135 = vunpack.c.h.b16 %v2813
    %v3136 = vunpack.c.l.b16 %v2814
    %v3137 = vunpack.c.h.b16 %v2814
    %v3138 = vunpack.c.l.b16 %v2815
    %v3139 = vunpack.c.h.b16 %v2815
    %v3140 = vunpack.c.l.b16 %v2816
    %v3141 = vunpack.c.h.b16 %v2816
    %v3142 = vunpack.c.l.b16 %v2817
    %v3143 = vunpack.c.h.b16 %v2817
    %v3144 = vunpack.c.l.b16 %v2818
    %v3145 = vunpack.c.h.b16 %v2818
    %v3146 = vunpack.c.l.b16 %v2819
    %v3147 = vunpack.c.h.b16 %v2819
    %v3148 = vunpack.c.l.b16 %v2820
    %v3149 = vunpack.c.h.b16 %v2820
    %v3150 = vunpack.c.l.b16 %v2821
    %v3151 = vunpack.c.h.b16 %v2821
    %v3152 = vunpack.c.l.b16 %v2822
    %v3153 = vunpack.c.h.b16 %v2822
    %v3154 = vunpack.c.l.b16 %v2823
    %v3155 = vunpack.c.h.b16 %v2823
    %v3156 = vunpack.c.l.b16 %v2824
    %v3157 = vunpack.c.h.b16 %v2824
    %v3158 = vunpack.c.l.b16 %v2825
    %v3159 = vunpack.c.h.b16 %v2825
    %v3160 = vunpack.c.l.b16 %v2826
    %v3161 = vunpack.c.h.b16 %v2826
    %v3162 = vunpack.c.l.b16 %v2827
    %v3163 = vunpack.c.h.b16 %v2827
    %v3164 = vunpack.c.l.b16 %v2828
    %v3165 = vunpack.c.h.b16 %v2828
    %v3166 = vunpack.c.l.b16 %v2829
    %v3167 = vunpack.c.h.b16 %v2829
    %v3168 = vunpack.c.l.b16 %v2830
    %v3169 = vunpack.c.h.b16 %v2830
    %v3170 = vunpack.c.l.b16 %v2831
    %v3171 = vunpack.c.h.b16 %v2831
    %v3172 = vunpack.c.l.b16 %v2832
    %v3173 = vunpack.c.h.b16 %v2832
    %v3174 = vunpack.c.l.b16 %v2833
    %v3175 = vunpack.c.h.b16 %v2833
    %v3176 = vunpack.c.l.b16 %v2834
    %v3177 = vunpack.c.h.b16 %v2834
    %v3178 = vunpack.c.l.b16 %v2835
    %v3179 = vunpack.c.h.b16 %v2835
    %v3180 = vunpack.c.l.b16 %v2836
    %v3181 = vunpack.c.h.b16 %v2836
    %v3182 = vunpack.c.l.b16 %v2837
    %v3183 = vunpack.c.h.b16 %v2837
    %v3184 = vunpack.c.l.b16 %v2838
    %v3185 = vunpack.c.h.b16 %v2838
    %v3186 = vunpack.c.l.b16 %v2839
    %v3187 = vunpack.c.h.b16 %v2839
    %v3188 = vunpack.c.l.b16 %v2840
    %v3189 = vunpack.c.h.b16 %v2840
    %v3190 = vunpack.c.l.b16 %v2841
    %v3191 = vunpack.c.h.b16 %v2841
    %v3192 = vunpack.c.l.b16 %v2842
    %v3193 = vunpack.c.h.b16 %v2842
    %v3194 = vunpack.c.l.b16 %v2843
    %v3195 = vunpack.c.h.b16 %v2843
    %v3196 = vunpack.c.l.b16 %v2844
    %v3197 = vunpack.c.h.b16 %v2844
    %v3198 = vunpack.c.l.b16 %v2845
    %v3199 = vunpack.c.h.b16 %v2845
    %v3200 = vunpack.c.l.b16 %v2846
    %v3201 = vunpack.c.h.b16 %v2846
    %v3202 = vunpack.c.l.b16 %v2847
    %v3203 = vunpack.c.h.b16 %v2847
    %v3204 = vunpack.c.l.b16 %v2848
    %v3205 = vunpack.c.h.b16 %v2848
    %v3206 = vunpack.c.l.b16 %v2849
    %v3207 = vunpack.c.h.b16 %v2849
    %v3208 = vunpack.c.l.b16 %v2850
    %v3209 = vunpack.c.h.b16 %v2850
    %v3210 = vunpack.c.l.b16 %v2851
    %v3211 = vunpack.c.h.b16 %v2851
    %v3212 = vunpack.c.l.b16 %v2852
    %v3213 = vunpack.c.h.b16 %v2852
    %v3214 = vunpack.c.l.b16 %v2853
    %v3215 = vunpack.c.h.b16 %v2853
    %v3216 = vunpack.c.l.b16 %v2854
    %v3217 = vunpack.c.h.b16 %v2854
    %v3218 = vunpack.c.l.b16 %v2855
    %v3219 = vunpack.c.h.b16 %v2855
    %v3220 = vunpack.c.l.b16 %v2856
    %v3221 = vunpack.c.h.b16 %v2856
    %v3222 = vunpack.c.l.b16 %v2857
    %v3223 = vunpack.c.h.b16 %v2857
    %v3224 = vunpack.c.l.b16 %v2858
    %v3225 = vunpack.c.h.b16 %v2858
    %v3226 = vunpack.c.l.b16 %v2859
    %v3227 = vunpack.c.h.b16 %v2859
    %v3228 = vunpack.c.l.b16 %v2860
    %v3229 = vunpack.c.h.b16 %v2860
    %v3230 = vunpack.c.l.b16 %v2861
    %v3231 = vunpack.c.h.b16 %v2861
    %v3232 = vunpack.c.l.b16 %v2862
    %v3233 = vunpack.c.h.b16 %v2862
    %v3234 = vunpack.c.l.b16 %v2863
    %v3235 = vunpack.c.h.b16 %v2863
    %v3236 = vunpack.c.l.b16 %v2864
    %v3237 = vunpack.c.h.b16 %v2864
    %v3238 = vunpack.c.l.b16 %v2865
    %v3239 = vunpack.c.h.b16 %v2865
    %v3240 = vunpack.c.l.b16 %v2866
    %v3241 = vunpack.c.h.b16 %v2866
    %v3242 = vunpack.c.l.b16 %v2867
    %v3243 = vunpack.c.h.b16 %v2867
    %v3244 = vunpack.c.l.b16 %v2868
    %v3245 = vunpack.c.h.b16 %v2868
    %v3246 = vunpack.c.l.b16 %v2869
    %v3247 = vunpack.c.h.b16 %v2869
    %v3248 = vunpack.c.l.b16 %v2870
    %v3249 = vunpack.c.h.b16 %v2870
    %v3250 = vunpack.c.l.b16 %v2871
    %v3251 = vunpack.c.h.b16 %v2871
    %v3252 = vunpack.c.l.b16 %v2872
    %v3253 = vunpack.c.h.b16 %v2872
    %v3254 = vunpack.c.l.b16 %v2873
    %v3255 = vunpack.c.h.b16 %v2873
    %v3256 = vunpack.c.l.b16 %v2874
    %v3257 = vunpack.c.h.b16 %v2874
    %v3258 = vunpack.c.l.b16 %v2875
    %v3259 = vunpack.c.h.b16 %v2875
    %v3260 = vpack.c.b16 %v3012, %v3004
    %v3261 = vpack.c.b16 %v3013, %v3005
    %v3262 = vpack.c.b16 %v3014, %v3006
    %v3263 = vpack.c.b16 %v3015, %v3007
    %v3264 = vpack.c.b16 %v3016, %v3008
    %v3265 = vpack.c.b16 %v3017, %v3009
    %v3266 = vpack.c.b16 %v3018, %v3010
    %v3267 = vpack.c.b16 %v3019, %v3011
    %v3268 = vpack.c.b16 %v3028, %v3020
    %v3269 = vpack.c.b16 %v3029, %v3021
    %v3270 = vpack.c.b16 %v3030, %v3022
    %v3271 = vpack.c.b16 %v3031, %v3023
    %v3272 = vpack.c.b16 %v3032, %v3024
    %v3273 = vpack.c.b16 %v3033, %v3025
    %v3274 = vpack.c.b16 %v3034, %v3026
    %v3275 = vpack.c.b16 %v3035, %v3027
    %v3276 = vpack.c.b16 %v3044, %v3036
    %v3277 = vpack.c.b16 %v3045, %v3037
    %v3278 = vpack.c.b16 %v3046, %v3038
    %v3279 = vpack.c.b16 %v3047, %v3039
    %v3280 = vpack.c.b16 %v3048, %v3040
    %v3281 = vpack.c.b16 %v3049, %v3041
    %v3282 = vpack.c.b16 %v3050, %v3042
    %v3283 = vpack.c.b16 %v3051, %v3043
    %v3284 = vpack.c.b16 %v3060, %v3052
    %v3285 = vpack.c.b16 %v3061, %v3053
    %v3286 = vpack.c.b16 %v3062, %v3054
    %v3287 = vpack.c.b16 %v3063, %v3055
    %v3288 = vpack.c.b16 %v3064, %v3056
    %v3289 = vpack.c.b16 %v3065, %v3057
    %v3290 = vpack.c.b16 %v3066, %v3058
    %v3291 = vpack.c.b16 %v3067, %v3059
    %v3292 = vpack.c.b16 %v3076, %v3068
    %v3293 = vpack.c.b16 %v3077, %v3069
    %v3294 = vpack.c.b16 %v3078, %v3070
    %v3295 = vpack.c.b16 %v3079, %v3071
    %v3296 = vpack.c.b16 %v3080, %v3072
    %v3297 = vpack.c.b16 %v3081, %v3073
    %v3298 = vpack.c.b16 %v3082, %v3074
    %v3299 = vpack.c.b16 %v3083, %v3075
    %v3300 = vpack.c.b16 %v3092, %v3084
    %v3301 = vpack.c.b16 %v3093, %v3085
    %v3302 = vpack.c.b16 %v3094, %v3086
    %v3303 = vpack.c.b16 %v3095, %v3087
    %v3304 = vpack.c.b16 %v3096, %v3088
    %v3305 = vpack.c.b16 %v3097, %v3089
    %v3306 = vpack.c.b16 %v3098, %v3090
    %v3307 = vpack.c.b16 %v3099, %v3091
    %v3308 = vpack.c.b16 %v3108, %v3100
    %v3309 = vpack.c.b16 %v3109, %v3101
    %v3310 = vpack.c.b16 %v3110, %v3102
    %v3311 = vpack.c.b16 %v3111, %v3103
    %v3312 = vpack.c.b16 %v3112, %v3104
    %v3313 = vpack.c.b16 %v3113, %v3105
    %v3314 = vpack.c.b16 %v3114, %v3106
    %v3315 = vpack.c.b16 %v3115, %v3107
    %v3316 = vpack.c.b16 %v3124, %v3116
    %v3317 = vpack.c.b16 %v3125, %v3117
    %v3318 = vpack.c.b16 %v3126, %v3118
    %v3319 = vpack.c.b16 %v3127, %v3119
    %v3320 = vpack.c.b16 %v3128, %v3120
    %v3321 = vpack.c.b16 %v3129, %v3121
    %v3322 = vpack.c.b16 %v3130, %v3122
    %v3323 = vpack.c.b16 %v3131, %v3123
    %v3324 = vpack.c.b16 %v3140, %v3132
    %v3325 = vpack.c.b16 %v3141, %v3133
    %v3326 = vpack.c.b16 %v3142, %v3134
    %v3327 = vpack.c.b16 %v3143, %v3135
    %v3328 = vpack.c.b16 %v3144, %v3136
    %v3329 = vpack.c.b16 %v3145, %v3137
    %v3330 = vpack.c.b16 %v3146, %v3138
    %v3331 = vpack.c.b16 %v3147, %v3139
    %v3332 = vpack.c.b16 %v3156, %v3148
    %v3333 = vpack.c.b16 %v3157, %v3149
    %v3334 = vpack.c.b16 %v3158, %v3150
    %v3335 = vpack.c.b16 %v3159, %v3151
    %v3336 = vpack.c.b16 %v3160, %v3152
    %v3337 = vpack.c.b16 %v3161, %v3153
    %v3338 = vpack.c.b16 %v3162, %v3154
    %v3339 = vpack.c.b16 %v3163, %v3155
    %v3340 = vpack.c.b16 %v3172, %v3164
    %v3341 = vpack.c.b16 %v3173, %v3165
    %v3342 = vpack.c.b16 %v3174, %v3166
    %v3343 = vpack.c.b16 %v3175, %v3167
    %v3344 = vpack.c.b16 %v3176, %v3168
    %v3345 = vpack.c.b16 %v3177, %v3169
    %v3346 = vpack.c.b16 %v3178, %v3170
    %v3347 = vpack.c.b16 %v3179, %v3171
    %v3348 = vpack.c.b16 %v3188, %v3180
    %v3349 = vpack.c.b16 %v3189, %v3181
    %v3350 = vpack.c.b16 %v3190, %v3182
    %v3351 = vpack.c.b16 %v3191, %v3183
    %v3352 = vpack.c.b16 %v3192, %v3184
    %v3353 = vpack.c.b16 %v3193, %v3185
    %v3354 = vpack.c.b16 %v3194, %v3186
    %v3355 = vpack.c.b16 %v3195, %v3187
    %v3356 = vpack.c.b16 %v3204, %v3196
    %v3357 = vpack.c.b16 %v3205, %v3197
    %v3358 = vpack.c.b16 %v3206, %v3198
    %v3359 = vpack.c.b16 %v3207, %v3199
    %v3360 = vpack.c.b16 %v3208, %v3200
    %v3361 = vpack.c.b16 %v3209, %v3201
    %v3362 = vpack.c.b16 %v3210, %v3202
    %v3363 = vpack.c.b16 %v3211, %v3203
    %v3364 = vpack.c.b16 %v3220, %v3212
    %v3365 = vpack.c.b16 %v3221, %v3213
    %v3366 = vpack.c.b16 %v3222, %v3214
    %v3367 = vpack.c.b16 %v3223, %v3215
    %v3368 = vpack.c.b16 %v3224, %v3216
    %v3369 = vpack.c.b16 %v3225, %v3217
    %v3370 = vpack.c.b16 %v3226, %v3218
    %v3371 = vpack.c.b16 %v3227, %v3219
    %v3372 = vpack.c.b16 %v3236, %v3228
    %v3373 = vpack.c.b16 %v3237, %v3229
    %v3374 = vpack.c.b16 %v3238, %v3230
    %v3375 = vpack.c.b16 %v3239, %v3231
    %v3376 = vpack.c.b16 %v3240, %v3232
    %v3377 = vpack.c.b16 %v3241, %v3233
    %v3378 = vpack.c.b16 %v3242, %v3234
    %v3379 = vpack.c.b16 %v3243, %v3235
    %v3380 = vpack.c.b16 %v3252, %v3244
    %v3381 = vpack.c.b16 %v3253, %v3245
    %v3382 = vpack.c.b16 %v3254, %v3246
    %v3383 = vpack.c.b16 %v3255, %v3247
    %v3384 = vpack.c.b16 %v3256, %v3248
    %v3385 = vpack.c.b16 %v3257, %v3249
    %v3386 = vpack.c.b16 %v3258, %v3250
    %v3387 = vpack.c.b16 %v3259, %v3251
    %3516 = vmatprep.subr.bf16.mxu0 %v3261
    %3517 = vmatpush1.bf16.msra.mxu0 %v3260
    %3518 = vmatprep.subr.bf16.mxu0 %v3269
    %3519 = vmatpush1.bf16.msra.mxu0 %v3268
    %3520 = vmatprep.subr.bf16.mxu0 %v3277
    %3521 = vmatpush1.bf16.msra.mxu0 %v3276
    %3522 = vmatprep.subr.bf16.mxu0 %v3285
    %3523 = vmatpush1.bf16.msra.mxu0 %v3284
    %3524 = vmatprep.subr.bf16.mxu0 %v3293
    %3525 = vmatpush1.bf16.msra.mxu0 %v3292
    %3526 = vmatprep.subr.bf16.mxu0 %v3301
    %3527 = vmatpush1.bf16.msra.mxu0 %v3300
    %3528 = vmatprep.subr.bf16.mxu0 %v3309
    %3529 = vmatpush1.bf16.msra.mxu0 %v3308
    %3530 = vmatprep.subr.bf16.mxu0 %v3317
    %3531 = vmatpush1.bf16.msra.mxu0 %v3316
    %3532 = vmatprep.subr.bf16.mxu0 %v3325
    %3533 = vmatpush1.bf16.msra.mxu0 %v3324
    %3534 = vmatprep.subr.bf16.mxu0 %v3333
    %3535 = vmatpush1.bf16.msra.mxu0 %v3332
    %3536 = vmatprep.subr.bf16.mxu0 %v3341
    %3537 = vmatpush1.bf16.msra.mxu0 %v3340
    %3538 = vmatprep.subr.bf16.mxu0 %v3349
    %3539 = vmatpush1.bf16.msra.mxu0 %v3348
    %3540 = vmatprep.subr.bf16.mxu0 %v3357
    %3541 = vmatpush1.bf16.msra.mxu0 %v3356
    %3542 = vmatprep.subr.bf16.mxu0 %v3365
    %3543 = vmatpush1.bf16.msra.mxu0 %v3364
    %3544 = vmatprep.subr.bf16.mxu0 %v3373
    %3545 = vmatpush1.bf16.msra.mxu0 %v3372
    %3546 = vmatprep.subr.bf16.mxu0 %v3381
    %3547 = vmatpush1.bf16.msra.mxu0 %v3380
    %3548 = vmatprep.mubr.bf16.mxu0 %v2731
    %3549 = vmatmul.mubr.bf16.gmra.mrb[0].mxu0 %v2730
    %v3550 = vpop.f32.mrb[0].mxu0
    %v3551 = vadd.f32 0.0, %v3550
    %v3552 = vpop.f32.mrb[0].mxu0
    %v3553 = vadd.f32 0.0, %v3552
    %v3554 = vpop.f32.mrb[0].mxu0
    %v3555 = vpop.f32.mrb[0].mxu0
    %3556 = vdwg.mxu0
    %3557 = vmatprep.subr.bf16.mxu0 %v3263
    %3558 = vmatpush1.bf16.msra.mxu0 %v3262
    %3559 = vmatprep.subr.bf16.mxu0 %v3271
    %3560 = vmatpush1.bf16.msra.mxu0 %v3270
    %3561 = vmatprep.subr.bf16.mxu0 %v3279
    %3562 = vmatpush1.bf16.msra.mxu0 %v3278
    %3563 = vmatprep.subr.bf16.mxu0 %v3287
    %3564 = vmatpush1.bf16.msra.mxu0 %v3286
    %3565 = vmatprep.subr.bf16.mxu0 %v3295
    %3566 = vmatpush1.bf16.msra.mxu0 %v3294
    %3567 = vmatprep.subr.bf16.mxu0 %v3303
    %3568 = vmatpush1.bf16.msra.mxu0 %v3302
    %3569 = vmatprep.subr.bf16.mxu0 %v3311
    %3570 = vmatpush1.bf16.msra.mxu0 %v3310
    %3571 = vmatprep.subr.bf16.mxu0 %v3319
    %3572 = vmatpush1.bf16.msra.mxu0 %v3318
    %3573 = vmatprep.subr.bf16.mxu0 %v3327
    %3574 = vmatpush1.bf16.msra.mxu0 %v3326
    %3575 = vmatprep.subr.bf16.mxu0 %v3335
    %3576 = vmatpush1.bf16.msra.mxu0 %v3334
    %3577 = vmatprep.subr.bf16.mxu0 %v3343
    %3578 = vmatpush1.bf16.msra.mxu0 %v3342
    %3579 = vmatprep.subr.bf16.mxu0 %v3351
    %3580 = vmatpush1.bf16.msra.mxu0 %v3350
    %3581 = vmatprep.subr.bf16.mxu0 %v3359
    %3582 = vmatpush1.bf16.msra.mxu0 %v3358
    %3583 = vmatprep.subr.bf16.mxu0 %v3367
    %3584 = vmatpush1.bf16.msra.mxu0 %v3366
    %3585 = vmatprep.subr.bf16.mxu0 %v3375
    %3586 = vmatpush1.bf16.msra.mxu0 %v3374
    %3587 = vmatprep.subr.bf16.mxu0 %v3383
    %3588 = vmatpush1.bf16.msra.mxu0 %v3382
    %3589 = vmatprep.mubr.bf16.mxu0 %v2731
    %3590 = vmatmul.mubr.bf16.gmra.mrb[0].mxu0 %v2730
    %v3591 = vpop.f32.mrb[0].mxu0
    %v3592 = vadd.f32 0.0, %v3591
    %v3593 = vpop.f32.mrb[0].mxu0
    %v3594 = vadd.f32 0.0, %v3593
    %v3595 = vpop.f32.mrb[0].mxu0
    %v3596 = vpop.f32.mrb[0].mxu0
    %3597 = vdwg.mxu0
    %3598 = vmatprep.subr.bf16.mxu0 %v3265
    %3599 = vmatpush1.bf16.msra.mxu0 %v3264
    %3600 = vmatprep.subr.bf16.mxu0 %v3273
    %3601 = vmatpush1.bf16.msra.mxu0 %v3272
    %3602 = vmatprep.subr.bf16.mxu0 %v3281
    %3603 = vmatpush1.bf16.msra.mxu0 %v3280
    %3604 = vmatprep.subr.bf16.mxu0 %v3289
    %3605 = vmatpush1.bf16.msra.mxu0 %v3288
    %3606 = vmatprep.subr.bf16.mxu0 %v3297
    %3607 = vmatpush1.bf16.msra.mxu0 %v3296
    %3608 = vmatprep.subr.bf16.mxu0 %v3305
    %3609 = vmatpush1.bf16.msra.mxu0 %v3304
    %3610 = vmatprep.subr.bf16.mxu0 %v3313
    %3611 = vmatpush1.bf16.msra.mxu0 %v3312
    %3612 = vmatprep.subr.bf16.mxu0 %v3321
    %3613 = vmatpush1.bf16.msra.mxu0 %v3320
    %3614 = vmatprep.subr.bf16.mxu0 %v3329
    %3615 = vmatpush1.bf16.msra.mxu0 %v3328
    %3616 = vmatprep.subr.bf16.mxu0 %v3337
    %3617 = vmatpush1.bf16.msra.mxu0 %v3336
    %3618 = vmatprep.subr.bf16.mxu0 %v3345
    %3619 = vmatpush1.bf16.msra.mxu0 %v3344
    %3620 = vmatprep.subr.bf16.mxu0 %v3353
    %3621 = vmatpush1.bf16.msra.mxu0 %v3352
    %3622 = vmatprep.subr.bf16.mxu0 %v3361
    %3623 = vmatpush1.bf16.msra.mxu0 %v3360
    %3624 = vmatprep.subr.bf16.mxu0 %v3369
    %3625 = vmatpush1.bf16.msra.mxu0 %v3368
    %3626 = vmatprep.subr.bf16.mxu0 %v3377
    %3627 = vmatpush1.bf16.msra.mxu0 %v3376
    %3628 = vmatprep.subr.bf16.mxu0 %v3385
    %3629 = vmatpush1.bf16.msra.mxu0 %v3384
    %3630 = vmatprep.mubr.bf16.mxu0 %v2731
    %3631 = vmatmul.mubr.bf16.gmra.mrb[0].mxu0 %v2730
    %v3632 = vpop.f32.mrb[0].mxu0
    %v3633 = vadd.f32 0.0, %v3632
    %v3634 = vpop.f32.mrb[0].mxu0
    %v3635 = vadd.f32 0.0, %v3634
    %v3636 = vpop.f32.mrb[0].mxu0
    %v3637 = vpop.f32.mrb[0].mxu0
    %3638 = vdwg.mxu0
    %3639 = vmatprep.subr.bf16.mxu0 %v3267
    %3640 = vmatpush1.bf16.msra.mxu0 %v3266
    %3641 = vmatprep.subr.bf16.mxu0 %v3275
    %3642 = vmatpush1.bf16.msra.mxu0 %v3274
    %3643 = vmatprep.subr.bf16.mxu0 %v3283
    %3644 = vmatpush1.bf16.msra.mxu0 %v3282
    %3645 = vmatprep.subr.bf16.mxu0 %v3291
    %3646 = vmatpush1.bf16.msra.mxu0 %v3290
    %3647 = vmatprep.subr.bf16.mxu0 %v3299
    %3648 = vmatpush1.bf16.msra.mxu0 %v3298
    %3649 = vmatprep.subr.bf16.mxu0 %v3307
    %3650 = vmatpush1.bf16.msra.mxu0 %v3306
    %3651 = vmatprep.subr.bf16.mxu0 %v3315
    %3652 = vmatpush1.bf16.msra.mxu0 %v3314
    %3653 = vmatprep.subr.bf16.mxu0 %v3323
    %3654 = vmatpush1.bf16.msra.mxu0 %v3322
    %3655 = vmatprep.subr.bf16.mxu0 %v3331
    %3656 = vmatpush1.bf16.msra.mxu0 %v3330
    %3657 = vmatprep.subr.bf16.mxu0 %v3339
    %3658 = vmatpush1.bf16.msra.mxu0 %v3338
    %3659 = vmatprep.subr.bf16.mxu0 %v3347
    %3660 = vmatpush1.bf16.msra.mxu0 %v3346
    %3661 = vmatprep.subr.bf16.mxu0 %v3355
    %3662 = vmatpush1.bf16.msra.mxu0 %v3354
    %3663 = vmatprep.subr.bf16.mxu0 %v3363
    %3664 = vmatpush1.bf16.msra.mxu0 %v3362
    %3665 = vmatprep.subr.bf16.mxu0 %v3371
    %3666 = vmatpush1.bf16.msra.mxu0 %v3370
    %3667 = vmatprep.subr.bf16.mxu0 %v3379
    %3668 = vmatpush1.bf16.msra.mxu0 %v3378
    %3669 = vmatprep.subr.bf16.mxu0 %v3387
    %3670 = vmatpush1.bf16.msra.mxu0 %v3386
    %3671 = vmatprep.mubr.bf16.mxu0 %v2731
    %3672 = vmatmul.mubr.bf16.gmra.mrb[0].mxu0 %v2730
    %v3673 = vpop.f32.mrb[0].mxu0
    %v3674 = vadd.f32 0.0, %v3673
    %v3675 = vpop.f32.mrb[0].mxu0
    %v3676 = vadd.f32 0.0, %v3675
    %v3677 = vpop.f32.mrb[0].mxu0
    %v3678 = vpop.f32.mrb[0].mxu0
    %3679 = vdwg.mxu0
    %v3680 = vadd.f32 %v2740, %v3551
    %v3681 = vadd.f32 %v2741, %v3553
    %v3682 = vadd.f32 %v2742, %v3592
    %v3683 = vadd.f32 %v2743, %v3594
    %v3684 = vadd.f32 %v2744, %v3633
    %v3685 = vadd.f32 %v2745, %v3635
    %v3686 = vadd.f32 %v2746, %v3674
    %v3687 = vadd.f32 %v2747, %v3676
    %v3688 = vxor.u32 %v3680, 2147483648
    %v3689 = vxor.u32 %v3681, 2147483648
    %v3690 = vmul.f32 %v3688, 1.442695
    %v3691 = vpow.pop %v3690
    %v3692 = vmul.f32 %v3689, 1.442695
    %v3693 = vpow.pop %v3692
    %v3694 = vadd.f32 %v3691, 1.0
    %v3695 = vadd.f32 %v3693, 1.0
    %v3696 = vrcp.pop %v3694
    %v3697 = vmul.f32 1.0, %v3696
    %v3698 = vrcp.pop %v3695
    %v3699 = vmul.f32 1.0, %v3698
    %v3700 = vxor.u32 %v3682, 2147483648
    %v3701 = vxor.u32 %v3683, 2147483648
    %v3702 = vmul.f32 %v3700, 1.442695
    %v3703 = vpow.pop %v3702
    %v3704 = vmul.f32 %v3701, 1.442695
    %v3705 = vpow.pop %v3704
    %v3706 = vadd.f32 %v3703, 1.0
    %v3707 = vadd.f32 %v3705, 1.0
    %v3708 = vrcp.pop %v3706
    %v3709 = vmul.f32 1.0, %v3708
    %v3710 = vrcp.pop %v3707
    %v3711 = vmul.f32 1.0, %v3710
    %v3712 = vtanh.pop %v3684
    %v3713 = vtanh.pop %v3685
    %v3714 = vxor.u32 %v3686, 2147483648
    %v3715 = vxor.u32 %v3687, 2147483648
    %v3716 = vmul.f32 %v3714, 1.442695
    %v3717 = vpow.pop %v3716
    %v3718 = vmul.f32 %v3715, 1.442695
    %v3719 = vpow.pop %v3718
    %v3720 = vadd.f32 %v3717, 1.0
    %v3721 = vadd.f32 %v3719, 1.0
    %v3722 = vrcp.pop %v3720
    %v3723 = vmul.f32 1.0, %v3722
    %v3724 = vrcp.pop %v3721
    %v3725 = vmul.f32 1.0, %v3724
    %v3726 = vmul.f32 %v3709, %v2724
    %v3727 = vmul.f32 %v3711, %v2725
    %v3728 = vmul.f32 %v3697, %v3712
    %v3729 = vmul.f32 %v3699, %v3713
    %v3730 = vadd.f32 %v3726, %v3728
    %v3731 = vadd.f32 %v3727, %v3729
    %v3732 = vtanh.pop %v3730
    %v3733 = vtanh.pop %v3731
    %v3734 = vmul.f32 %v3723, %v3732
    %v3735 = vmul.f32 %v3725, %v3733
    %v3736 = vpack.c.bf16 %v3734, %v3734
    %v3737 = vpack.c.bf16 %v3735, %v3735
    %3738 = vst [vmem:[#allocation3 + $0x10] sm:$0xf] %v3736
    %3739 = vst [vmem:[#allocation3 + $0x18] sm:$0xf] %v3737
    %v3740 = vld [vmem:[%s487] sm:$0xff]
    %v3741 = vld [vmem:[%s487 + $0x8] sm:$0xff]
    %v3742 = vld [vmem:[%s487 + $0x10] sm:$0xff]
    %v3743 = vld [vmem:[%s487 + $0x18] sm:$0xff]
    %v3744 = vld [vmem:[%s487 + $0x20] sm:$0xff]
    %v3745 = vld [vmem:[%s487 + $0x28] sm:$0xff]
    %v3746 = vld [vmem:[%s487 + $0x30] sm:$0xff]
    %v3747 = vld [vmem:[%s487 + $0x38] sm:$0xff]
    %v3748 = vld [vmem:[#allocation9] sm:$0xff]
    %v3749 = vld [vmem:[#allocation9 + $0x8] sm:$0xff]
    %v3750 = vld [vmem:[#allocation9 + $0x10] sm:$0xff]
    %v3751 = vld [vmem:[#allocation9 + $0x18] sm:$0xff]
    %v3752 = vld [vmem:[#allocation9 + $0x20] sm:$0xff]
    %v3753 = vld [vmem:[#allocation9 + $0x28] sm:$0xff]
    %v3754 = vld [vmem:[#allocation9 + $0x30] sm:$0xff]
    %v3755 = vld [vmem:[#allocation9 + $0x38] sm:$0xff]
    %v3756 = vld [vmem:[#allocation9 + $0x40] sm:$0xff]
    %v3757 = vld [vmem:[#allocation9 + $0x48] sm:$0xff]
    %v3758 = vld [vmem:[#allocation9 + $0x50] sm:$0xff]
    %v3759 = vld [vmem:[#allocation9 + $0x58] sm:$0xff]
    %v3760 = vld [vmem:[#allocation9 + $0x60] sm:$0xff]
    %v3761 = vld [vmem:[#allocation9 + $0x68] sm:$0xff]
    %v3762 = vld [vmem:[#allocation9 + $0x70] sm:$0xff]
    %v3763 = vld [vmem:[#allocation9 + $0x78] sm:$0xff]
    %v3764 = vld [vmem:[#allocation9 + $0x80] sm:$0xff]
    %v3765 = vld [vmem:[#allocation9 + $0x88] sm:$0xff]
    %v3766 = vld [vmem:[#allocation9 + $0x90] sm:$0xff]
    %v3767 = vld [vmem:[#allocation9 + $0x98] sm:$0xff]
    %v3768 = vld [vmem:[#allocation9 + $0xa0] sm:$0xff]
    %v3769 = vld [vmem:[#allocation9 + $0xa8] sm:$0xff]
    %v3770 = vld [vmem:[#allocation9 + $0xb0] sm:$0xff]
    %v3771 = vld [vmem:[#allocation9 + $0xb8] sm:$0xff]
    %v3772 = vld [vmem:[#allocation9 + $0xc0] sm:$0xff]
    %v3773 = vld [vmem:[#allocation9 + $0xc8] sm:$0xff]
    %v3774 = vld [vmem:[#allocation9 + $0xd0] sm:$0xff]
    %v3775 = vld [vmem:[#allocation9 + $0xd8] sm:$0xff]
    %v3776 = vld [vmem:[#allocation9 + $0xe0] sm:$0xff]
    %v3777 = vld [vmem:[#allocation9 + $0xe8] sm:$0xff]
    %v3778 = vld [vmem:[#allocation9 + $0xf0] sm:$0xff]
    %v3779 = vld [vmem:[#allocation9 + $0xf8] sm:$0xff]
    %v3780 = vld [vmem:[#allocation9 + $0x100] sm:$0xff]
    %v3781 = vld [vmem:[#allocation9 + $0x108] sm:$0xff]
    %v3782 = vld [vmem:[#allocation9 + $0x110] sm:$0xff]
    %v3783 = vld [vmem:[#allocation9 + $0x118] sm:$0xff]
    %v3784 = vld [vmem:[#allocation9 + $0x120] sm:$0xff]
    %v3785 = vld [vmem:[#allocation9 + $0x128] sm:$0xff]
    %v3786 = vld [vmem:[#allocation9 + $0x130] sm:$0xff]
    %v3787 = vld [vmem:[#allocation9 + $0x138] sm:$0xff]
    %v3788 = vld [vmem:[#allocation9 + $0x140] sm:$0xff]
    %v3789 = vld [vmem:[#allocation9 + $0x148] sm:$0xff]
    %v3790 = vld [vmem:[#allocation9 + $0x150] sm:$0xff]
    %v3791 = vld [vmem:[#allocation9 + $0x158] sm:$0xff]
    %v3792 = vld [vmem:[#allocation9 + $0x160] sm:$0xff]
    %v3793 = vld [vmem:[#allocation9 + $0x168] sm:$0xff]
    %v3794 = vld [vmem:[#allocation9 + $0x170] sm:$0xff]
    %v3795 = vld [vmem:[#allocation9 + $0x178] sm:$0xff]
    %v3796 = vld [vmem:[#allocation9 + $0x180] sm:$0xff]
    %v3797 = vld [vmem:[#allocation9 + $0x188] sm:$0xff]
    %v3798 = vld [vmem:[#allocation9 + $0x190] sm:$0xff]
    %v3799 = vld [vmem:[#allocation9 + $0x198] sm:$0xff]
    %v3800 = vld [vmem:[#allocation9 + $0x1a0] sm:$0xff]
    %v3801 = vld [vmem:[#allocation9 + $0x1a8] sm:$0xff]
    %v3802 = vld [vmem:[#allocation9 + $0x1b0] sm:$0xff]
    %v3803 = vld [vmem:[#allocation9 + $0x1b8] sm:$0xff]
    %v3804 = vld [vmem:[#allocation9 + $0x1c0] sm:$0xff]
    %v3805 = vld [vmem:[#allocation9 + $0x1c8] sm:$0xff]
    %v3806 = vld [vmem:[#allocation9 + $0x1d0] sm:$0xff]
    %v3807 = vld [vmem:[#allocation9 + $0x1d8] sm:$0xff]
    %v3808 = vld [vmem:[#allocation9 + $0x1e0] sm:$0xff]
    %v3809 = vld [vmem:[#allocation9 + $0x1e8] sm:$0xff]
    %v3810 = vld [vmem:[#allocation9 + $0x1f0] sm:$0xff]
    %v3811 = vld [vmem:[#allocation9 + $0x1f8] sm:$0xff]
    %v3812 = vld [vmem:[#allocation9 + $0x200] sm:$0xff]
    %v3813 = vld [vmem:[#allocation9 + $0x208] sm:$0xff]
    %v3814 = vld [vmem:[#allocation9 + $0x210] sm:$0xff]
    %v3815 = vld [vmem:[#allocation9 + $0x218] sm:$0xff]
    %v3816 = vld [vmem:[#allocation9 + $0x220] sm:$0xff]
    %v3817 = vld [vmem:[#allocation9 + $0x228] sm:$0xff]
    %v3818 = vld [vmem:[#allocation9 + $0x230] sm:$0xff]
    %v3819 = vld [vmem:[#allocation9 + $0x238] sm:$0xff]
    %v3820 = vld [vmem:[#allocation9 + $0x240] sm:$0xff]
    %v3821 = vld [vmem:[#allocation9 + $0x248] sm:$0xff]
    %v3822 = vld [vmem:[#allocation9 + $0x250] sm:$0xff]
    %v3823 = vld [vmem:[#allocation9 + $0x258] sm:$0xff]
    %v3824 = vld [vmem:[#allocation9 + $0x260] sm:$0xff]
    %v3825 = vld [vmem:[#allocation9 + $0x268] sm:$0xff]
    %v3826 = vld [vmem:[#allocation9 + $0x270] sm:$0xff]
    %v3827 = vld [vmem:[#allocation9 + $0x278] sm:$0xff]
    %v3828 = vld [vmem:[#allocation9 + $0x280] sm:$0xff]
    %v3829 = vld [vmem:[#allocation9 + $0x288] sm:$0xff]
    %v3830 = vld [vmem:[#allocation9 + $0x290] sm:$0xff]
    %v3831 = vld [vmem:[#allocation9 + $0x298] sm:$0xff]
    %v3832 = vld [vmem:[#allocation9 + $0x2a0] sm:$0xff]
    %v3833 = vld [vmem:[#allocation9 + $0x2a8] sm:$0xff]
    %v3834 = vld [vmem:[#allocation9 + $0x2b0] sm:$0xff]
    %v3835 = vld [vmem:[#allocation9 + $0x2b8] sm:$0xff]
    %v3836 = vld [vmem:[#allocation9 + $0x2c0] sm:$0xff]
    %v3837 = vld [vmem:[#allocation9 + $0x2c8] sm:$0xff]
    %v3838 = vld [vmem:[#allocation9 + $0x2d0] sm:$0xff]
    %v3839 = vld [vmem:[#allocation9 + $0x2d8] sm:$0xff]
    %v3840 = vld [vmem:[#allocation9 + $0x2e0] sm:$0xff]
    %v3841 = vld [vmem:[#allocation9 + $0x2e8] sm:$0xff]
    %v3842 = vld [vmem:[#allocation9 + $0x2f0] sm:$0xff]
    %v3843 = vld [vmem:[#allocation9 + $0x2f8] sm:$0xff]
    %v3844 = vld [vmem:[#allocation9 + $0x300] sm:$0xff]
    %v3845 = vld [vmem:[#allocation9 + $0x308] sm:$0xff]
    %v3846 = vld [vmem:[#allocation9 + $0x310] sm:$0xff]
    %v3847 = vld [vmem:[#allocation9 + $0x318] sm:$0xff]
    %v3848 = vld [vmem:[#allocation9 + $0x320] sm:$0xff]
    %v3849 = vld [vmem:[#allocation9 + $0x328] sm:$0xff]
    %v3850 = vld [vmem:[#allocation9 + $0x330] sm:$0xff]
    %v3851 = vld [vmem:[#allocation9 + $0x338] sm:$0xff]
    %v3852 = vld [vmem:[#allocation9 + $0x340] sm:$0xff]
    %v3853 = vld [vmem:[#allocation9 + $0x348] sm:$0xff]
    %v3854 = vld [vmem:[#allocation9 + $0x350] sm:$0xff]
    %v3855 = vld [vmem:[#allocation9 + $0x358] sm:$0xff]
    %v3856 = vld [vmem:[#allocation9 + $0x360] sm:$0xff]
    %v3857 = vld [vmem:[#allocation9 + $0x368] sm:$0xff]
    %v3858 = vld [vmem:[#allocation9 + $0x370] sm:$0xff]
    %v3859 = vld [vmem:[#allocation9 + $0x378] sm:$0xff]
    %v3860 = vld [vmem:[#allocation9 + $0x380] sm:$0xff]
    %v3861 = vld [vmem:[#allocation9 + $0x388] sm:$0xff]
    %v3862 = vld [vmem:[#allocation9 + $0x390] sm:$0xff]
    %v3863 = vld [vmem:[#allocation9 + $0x398] sm:$0xff]
    %v3864 = vld [vmem:[#allocation9 + $0x3a0] sm:$0xff]
    %v3865 = vld [vmem:[#allocation9 + $0x3a8] sm:$0xff]
    %v3866 = vld [vmem:[#allocation9 + $0x3b0] sm:$0xff]
    %v3867 = vld [vmem:[#allocation9 + $0x3b8] sm:$0xff]
    %v3868 = vld [vmem:[#allocation9 + $0x3c0] sm:$0xff]
    %v3869 = vld [vmem:[#allocation9 + $0x3c8] sm:$0xff]
    %v3870 = vld [vmem:[#allocation9 + $0x3d0] sm:$0xff]
    %v3871 = vld [vmem:[#allocation9 + $0x3d8] sm:$0xff]
    %v3872 = vld [vmem:[#allocation9 + $0x3e0] sm:$0xff]
    %v3873 = vld [vmem:[#allocation9 + $0x3e8] sm:$0xff]
    %v3874 = vld [vmem:[#allocation9 + $0x3f0] sm:$0xff]
    %v3875 = vld [vmem:[#allocation9 + $0x3f8] sm:$0xff]
    %v4004 = vunpack.c.l.b16 %v3748
    %v4005 = vunpack.c.h.b16 %v3748
    %v4006 = vunpack.c.l.b16 %v3749
    %v4007 = vunpack.c.h.b16 %v3749
    %v4008 = vunpack.c.l.b16 %v3750
    %v4009 = vunpack.c.h.b16 %v3750
    %v4010 = vunpack.c.l.b16 %v3751
    %v4011 = vunpack.c.h.b16 %v3751
    %v4012 = vunpack.c.l.b16 %v3752
    %v4013 = vunpack.c.h.b16 %v3752
    %v4014 = vunpack.c.l.b16 %v3753
    %v4015 = vunpack.c.h.b16 %v3753
    %v4016 = vunpack.c.l.b16 %v3754
    %v4017 = vunpack.c.h.b16 %v3754
    %v4018 = vunpack.c.l.b16 %v3755
    %v4019 = vunpack.c.h.b16 %v3755
    %v4020 = vunpack.c.l.b16 %v3756
    %v4021 = vunpack.c.h.b16 %v3756
    %v4022 = vunpack.c.l.b16 %v3757
    %v4023 = vunpack.c.h.b16 %v3757
    %v4024 = vunpack.c.l.b16 %v3758
    %v4025 = vunpack.c.h.b16 %v3758
    %v4026 = vunpack.c.l.b16 %v3759
    %v4027 = vunpack.c.h.b16 %v3759
    %v4028 = vunpack.c.l.b16 %v3760
    %v4029 = vunpack.c.h.b16 %v3760
    %v4030 = vunpack.c.l.b16 %v3761
    %v4031 = vunpack.c.h.b16 %v3761
    %v4032 = vunpack.c.l.b16 %v3762
    %v4033 = vunpack.c.h.b16 %v3762
    %v4034 = vunpack.c.l.b16 %v3763
    %v4035 = vunpack.c.h.b16 %v3763
    %v4036 = vunpack.c.l.b16 %v3764
    %v4037 = vunpack.c.h.b16 %v3764
    %v4038 = vunpack.c.l.b16 %v3765
    %v4039 = vunpack.c.h.b16 %v3765
    %v4040 = vunpack.c.l.b16 %v3766
    %v4041 = vunpack.c.h.b16 %v3766
    %v4042 = vunpack.c.l.b16 %v3767
    %v4043 = vunpack.c.h.b16 %v3767
    %v4044 = vunpack.c.l.b16 %v3768
    %v4045 = vunpack.c.h.b16 %v3768
    %v4046 = vunpack.c.l.b16 %v3769
    %v4047 = vunpack.c.h.b16 %v3769
    %v4048 = vunpack.c.l.b16 %v3770
    %v4049 = vunpack.c.h.b16 %v3770
    %v4050 = vunpack.c.l.b16 %v3771
    %v4051 = vunpack.c.h.b16 %v3771
    %v4052 = vunpack.c.l.b16 %v3772
    %v4053 = vunpack.c.h.b16 %v3772
    %v4054 = vunpack.c.l.b16 %v3773
    %v4055 = vunpack.c.h.b16 %v3773
    %v4056 = vunpack.c.l.b16 %v3774
    %v4057 = vunpack.c.h.b16 %v3774
    %v4058 = vunpack.c.l.b16 %v3775
    %v4059 = vunpack.c.h.b16 %v3775
    %v4060 = vunpack.c.l.b16 %v3776
    %v4061 = vunpack.c.h.b16 %v3776
    %v4062 = vunpack.c.l.b16 %v3777
    %v4063 = vunpack.c.h.b16 %v3777
    %v4064 = vunpack.c.l.b16 %v3778
    %v4065 = vunpack.c.h.b16 %v3778
    %v4066 = vunpack.c.l.b16 %v3779
    %v4067 = vunpack.c.h.b16 %v3779
    %v4068 = vunpack.c.l.b16 %v3780
    %v4069 = vunpack.c.h.b16 %v3780
    %v4070 = vunpack.c.l.b16 %v3781
    %v4071 = vunpack.c.h.b16 %v3781
    %v4072 = vunpack.c.l.b16 %v3782
    %v4073 = vunpack.c.h.b16 %v3782
    %v4074 = vunpack.c.l.b16 %v3783
    %v4075 = vunpack.c.h.b16 %v3783
    %v4076 = vunpack.c.l.b16 %v3784
    %v4077 = vunpack.c.h.b16 %v3784
    %v4078 = vunpack.c.l.b16 %v3785
    %v4079 = vunpack.c.h.b16 %v3785
    %v4080 = vunpack.c.l.b16 %v3786
    %v4081 = vunpack.c.h.b16 %v3786
    %v4082 = vunpack.c.l.b16 %v3787
    %v4083 = vunpack.c.h.b16 %v3787
    %v4084 = vunpack.c.l.b16 %v3788
    %v4085 = vunpack.c.h.b16 %v3788
    %v4086 = vunpack.c.l.b16 %v3789
    %v4087 = vunpack.c.h.b16 %v3789
    %v4088 = vunpack.c.l.b16 %v3790
    %v4089 = vunpack.c.h.b16 %v3790
    %v4090 = vunpack.c.l.b16 %v3791
    %v4091 = vunpack.c.h.b16 %v3791
    %v4092 = vunpack.c.l.b16 %v3792
    %v4093 = vunpack.c.h.b16 %v3792
    %v4094 = vunpack.c.l.b16 %v3793
    %v4095 = vunpack.c.h.b16 %v3793
    %v4096 = vunpack.c.l.b16 %v3794
    %v4097 = vunpack.c.h.b16 %v3794
    %v4098 = vunpack.c.l.b16 %v3795
    %v4099 = vunpack.c.h.b16 %v3795
    %v4100 = vunpack.c.l.b16 %v3796
    %v4101 = vunpack.c.h.b16 %v3796
    %v4102 = vunpack.c.l.b16 %v3797
    %v4103 = vunpack.c.h.b16 %v3797
    %v4104 = vunpack.c.l.b16 %v3798
    %v4105 = vunpack.c.h.b16 %v3798
    %v4106 = vunpack.c.l.b16 %v3799
    %v4107 = vunpack.c.h.b16 %v3799
    %v4108 = vunpack.c.l.b16 %v3800
    %v4109 = vunpack.c.h.b16 %v3800
    %v4110 = vunpack.c.l.b16 %v3801
    %v4111 = vunpack.c.h.b16 %v3801
    %v4112 = vunpack.c.l.b16 %v3802
    %v4113 = vunpack.c.h.b16 %v3802
    %v4114 = vunpack.c.l.b16 %v3803
    %v4115 = vunpack.c.h.b16 %v3803
    %v4116 = vunpack.c.l.b16 %v3804
    %v4117 = vunpack.c.h.b16 %v3804
    %v4118 = vunpack.c.l.b16 %v3805
    %v4119 = vunpack.c.h.b16 %v3805
    %v4120 = vunpack.c.l.b16 %v3806
    %v4121 = vunpack.c.h.b16 %v3806
    %v4122 = vunpack.c.l.b16 %v3807
    %v4123 = vunpack.c.h.b16 %v3807
    %v4124 = vunpack.c.l.b16 %v3808
    %v4125 = vunpack.c.h.b16 %v3808
    %v4126 = vunpack.c.l.b16 %v3809
    %v4127 = vunpack.c.h.b16 %v3809
    %v4128 = vunpack.c.l.b16 %v3810
    %v4129 = vunpack.c.h.b16 %v3810
    %v4130 = vunpack.c.l.b16 %v3811
    %v4131 = vunpack.c.h.b16 %v3811
    %v4132 = vunpack.c.l.b16 %v3812
    %v4133 = vunpack.c.h.b16 %v3812
    %v4134 = vunpack.c.l.b16 %v3813
    %v4135 = vunpack.c.h.b16 %v3813
    %v4136 = vunpack.c.l.b16 %v3814
    %v4137 = vunpack.c.h.b16 %v3814
    %v4138 = vunpack.c.l.b16 %v3815
    %v4139 = vunpack.c.h.b16 %v3815
    %v4140 = vunpack.c.l.b16 %v3816
    %v4141 = vunpack.c.h.b16 %v3816
    %v4142 = vunpack.c.l.b16 %v3817
    %v4143 = vunpack.c.h.b16 %v3817
    %v4144 = vunpack.c.l.b16 %v3818
    %v4145 = vunpack.c.h.b16 %v3818
    %v4146 = vunpack.c.l.b16 %v3819
    %v4147 = vunpack.c.h.b16 %v3819
    %v4148 = vunpack.c.l.b16 %v3820
    %v4149 = vunpack.c.h.b16 %v3820
    %v4150 = vunpack.c.l.b16 %v3821
    %v4151 = vunpack.c.h.b16 %v3821
    %v4152 = vunpack.c.l.b16 %v3822
    %v4153 = vunpack.c.h.b16 %v3822
    %v4154 = vunpack.c.l.b16 %v3823
    %v4155 = vunpack.c.h.b16 %v3823
    %v4156 = vunpack.c.l.b16 %v3824
    %v4157 = vunpack.c.h.b16 %v3824
    %v4158 = vunpack.c.l.b16 %v3825
    %v4159 = vunpack.c.h.b16 %v3825
    %v4160 = vunpack.c.l.b16 %v3826
    %v4161 = vunpack.c.h.b16 %v3826
    %v4162 = vunpack.c.l.b16 %v3827
    %v4163 = vunpack.c.h.b16 %v3827
    %v4164 = vunpack.c.l.b16 %v3828
    %v4165 = vunpack.c.h.b16 %v3828
    %v4166 = vunpack.c.l.b16 %v3829
    %v4167 = vunpack.c.h.b16 %v3829
    %v4168 = vunpack.c.l.b16 %v3830
    %v4169 = vunpack.c.h.b16 %v3830
    %v4170 = vunpack.c.l.b16 %v3831
    %v4171 = vunpack.c.h.b16 %v3831
    %v4172 = vunpack.c.l.b16 %v3832
    %v4173 = vunpack.c.h.b16 %v3832
    %v4174 = vunpack.c.l.b16 %v3833
    %v4175 = vunpack.c.h.b16 %v3833
    %v4176 = vunpack.c.l.b16 %v3834
    %v4177 = vunpack.c.h.b16 %v3834
    %v4178 = vunpack.c.l.b16 %v3835
    %v4179 = vunpack.c.h.b16 %v3835
    %v4180 = vunpack.c.l.b16 %v3836
    %v4181 = vunpack.c.h.b16 %v3836
    %v4182 = vunpack.c.l.b16 %v3837
    %v4183 = vunpack.c.h.b16 %v3837
    %v4184 = vunpack.c.l.b16 %v3838
    %v4185 = vunpack.c.h.b16 %v3838
    %v4186 = vunpack.c.l.b16 %v3839
    %v4187 = vunpack.c.h.b16 %v3839
    %v4188 = vunpack.c.l.b16 %v3840
    %v4189 = vunpack.c.h.b16 %v3840
    %v4190 = vunpack.c.l.b16 %v3841
    %v4191 = vunpack.c.h.b16 %v3841
    %v4192 = vunpack.c.l.b16 %v3842
    %v4193 = vunpack.c.h.b16 %v3842
    %v4194 = vunpack.c.l.b16 %v3843
    %v4195 = vunpack.c.h.b16 %v3843
    %v4196 = vunpack.c.l.b16 %v3844
    %v4197 = vunpack.c.h.b16 %v3844
    %v4198 = vunpack.c.l.b16 %v3845
    %v4199 = vunpack.c.h.b16 %v3845
    %v4200 = vunpack.c.l.b16 %v3846
    %v4201 = vunpack.c.h.b16 %v3846
    %v4202 = vunpack.c.l.b16 %v3847
    %v4203 = vunpack.c.h.b16 %v3847
    %v4204 = vunpack.c.l.b16 %v3848
    %v4205 = vunpack.c.h.b16 %v3848
    %v4206 = vunpack.c.l.b16 %v3849
    %v4207 = vunpack.c.h.b16 %v3849
    %v4208 = vunpack.c.l.b16 %v3850
    %v4209 = vunpack.c.h.b16 %v3850
    %v4210 = vunpack.c.l.b16 %v3851
    %v4211 = vunpack.c.h.b16 %v3851
    %v4212 = vunpack.c.l.b16 %v3852
    %v4213 = vunpack.c.h.b16 %v3852
    %v4214 = vunpack.c.l.b16 %v3853
    %v4215 = vunpack.c.h.b16 %v3853
    %v4216 = vunpack.c.l.b16 %v3854
    %v4217 = vunpack.c.h.b16 %v3854
    %v4218 = vunpack.c.l.b16 %v3855
    %v4219 = vunpack.c.h.b16 %v3855
    %v4220 = vunpack.c.l.b16 %v3856
    %v4221 = vunpack.c.h.b16 %v3856
    %v4222 = vunpack.c.l.b16 %v3857
    %v4223 = vunpack.c.h.b16 %v3857
    %v4224 = vunpack.c.l.b16 %v3858
    %v4225 = vunpack.c.h.b16 %v3858
    %v4226 = vunpack.c.l.b16 %v3859
    %v4227 = vunpack.c.h.b16 %v3859
    %v4228 = vunpack.c.l.b16 %v3860
    %v4229 = vunpack.c.h.b16 %v3860
    %v4230 = vunpack.c.l.b16 %v3861
    %v4231 = vunpack.c.h.b16 %v3861
    %v4232 = vunpack.c.l.b16 %v3862
    %v4233 = vunpack.c.h.b16 %v3862
    %v4234 = vunpack.c.l.b16 %v3863
    %v4235 = vunpack.c.h.b16 %v3863
    %v4236 = vunpack.c.l.b16 %v3864
    %v4237 = vunpack.c.h.b16 %v3864
    %v4238 = vunpack.c.l.b16 %v3865
    %v4239 = vunpack.c.h.b16 %v3865
    %v4240 = vunpack.c.l.b16 %v3866
    %v4241 = vunpack.c.h.b16 %v3866
    %v4242 = vunpack.c.l.b16 %v3867
    %v4243 = vunpack.c.h.b16 %v3867
    %v4244 = vunpack.c.l.b16 %v3868
    %v4245 = vunpack.c.h.b16 %v3868
    %v4246 = vunpack.c.l.b16 %v3869
    %v4247 = vunpack.c.h.b16 %v3869
    %v4248 = vunpack.c.l.b16 %v3870
    %v4249 = vunpack.c.h.b16 %v3870
    %v4250 = vunpack.c.l.b16 %v3871
    %v4251 = vunpack.c.h.b16 %v3871
    %v4252 = vunpack.c.l.b16 %v3872
    %v4253 = vunpack.c.h.b16 %v3872
    %v4254 = vunpack.c.l.b16 %v3873
    %v4255 = vunpack.c.h.b16 %v3873
    %v4256 = vunpack.c.l.b16 %v3874
    %v4257 = vunpack.c.h.b16 %v3874
    %v4258 = vunpack.c.l.b16 %v3875
    %v4259 = vunpack.c.h.b16 %v3875
    %v4260 = vpack.c.b16 %v4012, %v4004
    %v4261 = vpack.c.b16 %v4013, %v4005
    %v4262 = vpack.c.b16 %v4014, %v4006
    %v4263 = vpack.c.b16 %v4015, %v4007
    %v4264 = vpack.c.b16 %v4016, %v4008
    %v4265 = vpack.c.b16 %v4017, %v4009
    %v4266 = vpack.c.b16 %v4018, %v4010
    %v4267 = vpack.c.b16 %v4019, %v4011
    %v4268 = vpack.c.b16 %v4028, %v4020
    %v4269 = vpack.c.b16 %v4029, %v4021
    %v4270 = vpack.c.b16 %v4030, %v4022
    %v4271 = vpack.c.b16 %v4031, %v4023
    %v4272 = vpack.c.b16 %v4032, %v4024
    %v4273 = vpack.c.b16 %v4033, %v4025
    %v4274 = vpack.c.b16 %v4034, %v4026
    %v4275 = vpack.c.b16 %v4035, %v4027
    %v4276 = vpack.c.b16 %v4044, %v4036
    %v4277 = vpack.c.b16 %v4045, %v4037
    %v4278 = vpack.c.b16 %v4046, %v4038
    %v4279 = vpack.c.b16 %v4047, %v4039
    %v4280 = vpack.c.b16 %v4048, %v4040
    %v4281 = vpack.c.b16 %v4049, %v4041
    %v4282 = vpack.c.b16 %v4050, %v4042
    %v4283 = vpack.c.b16 %v4051, %v4043
    %v4284 = vpack.c.b16 %v4060, %v4052
    %v4285 = vpack.c.b16 %v4061, %v4053
    %v4286 = vpack.c.b16 %v4062, %v4054
    %v4287 = vpack.c.b16 %v4063, %v4055
    %v4288 = vpack.c.b16 %v4064, %v4056
    %v4289 = vpack.c.b16 %v4065, %v4057
    %v4290 = vpack.c.b16 %v4066, %v4058
    %v4291 = vpack.c.b16 %v4067, %v4059
    %v4292 = vpack.c.b16 %v4076, %v4068
    %v4293 = vpack.c.b16 %v4077, %v4069
    %v4294 = vpack.c.b16 %v4078, %v4070
    %v4295 = vpack.c.b16 %v4079, %v4071
    %v4296 = vpack.c.b16 %v4080, %v4072
    %v4297 = vpack.c.b16 %v4081, %v4073
    %v4298 = vpack.c.b16 %v4082, %v4074
    %v4299 = vpack.c.b16 %v4083, %v4075
    %v4300 = vpack.c.b16 %v4092, %v4084
    %v4301 = vpack.c.b16 %v4093, %v4085
    %v4302 = vpack.c.b16 %v4094, %v4086
    %v4303 = vpack.c.b16 %v4095, %v4087
    %v4304 = vpack.c.b16 %v4096, %v4088
    %v4305 = vpack.c.b16 %v4097, %v4089
    %v4306 = vpack.c.b16 %v4098, %v4090
    %v4307 = vpack.c.b16 %v4099, %v4091
    %v4308 = vpack.c.b16 %v4108, %v4100
    %v4309 = vpack.c.b16 %v4109, %v4101
    %v4310 = vpack.c.b16 %v4110, %v4102
    %v4311 = vpack.c.b16 %v4111, %v4103
    %v4312 = vpack.c.b16 %v4112, %v4104
    %v4313 = vpack.c.b16 %v4113, %v4105
    %v4314 = vpack.c.b16 %v4114, %v4106
    %v4315 = vpack.c.b16 %v4115, %v4107
    %v4316 = vpack.c.b16 %v4124, %v4116
    %v4317 = vpack.c.b16 %v4125, %v4117
    %v4318 = vpack.c.b16 %v4126, %v4118
    %v4319 = vpack.c.b16 %v4127, %v4119
    %v4320 = vpack.c.b16 %v4128, %v4120
    %v4321 = vpack.c.b16 %v4129, %v4121
    %v4322 = vpack.c.b16 %v4130, %v4122
    %v4323 = vpack.c.b16 %v4131, %v4123
    %v4324 = vpack.c.b16 %v4140, %v4132
    %v4325 = vpack.c.b16 %v4141, %v4133
    %v4326 = vpack.c.b16 %v4142, %v4134
    %v4327 = vpack.c.b16 %v4143, %v4135
    %v4328 = vpack.c.b16 %v4144, %v4136
    %v4329 = vpack.c.b16 %v4145, %v4137
    %v4330 = vpack.c.b16 %v4146, %v4138
    %v4331 = vpack.c.b16 %v4147, %v4139
    %v4332 = vpack.c.b16 %v4156, %v4148
    %v4333 = vpack.c.b16 %v4157, %v4149
    %v4334 = vpack.c.b16 %v4158, %v4150
    %v4335 = vpack.c.b16 %v4159, %v4151
    %v4336 = vpack.c.b16 %v4160, %v4152
    %v4337 = vpack.c.b16 %v4161, %v4153
    %v4338 = vpack.c.b16 %v4162, %v4154
    %v4339 = vpack.c.b16 %v4163, %v4155
    %v4340 = vpack.c.b16 %v4172, %v4164
    %v4341 = vpack.c.b16 %v4173, %v4165
    %v4342 = vpack.c.b16 %v4174, %v4166
    %v4343 = vpack.c.b16 %v4175, %v4167
    %v4344 = vpack.c.b16 %v4176, %v4168
    %v4345 = vpack.c.b16 %v4177, %v4169
    %v4346 = vpack.c.b16 %v4178, %v4170
    %v4347 = vpack.c.b16 %v4179, %v4171
    %v4348 = vpack.c.b16 %v4188, %v4180
    %v4349 = vpack.c.b16 %v4189, %v4181
    %v4350 = vpack.c.b16 %v4190, %v4182
    %v4351 = vpack.c.b16 %v4191, %v4183
    %v4352 = vpack.c.b16 %v4192, %v4184
    %v4353 = vpack.c.b16 %v4193, %v4185
    %v4354 = vpack.c.b16 %v4194, %v4186
    %v4355 = vpack.c.b16 %v4195, %v4187
    %v4356 = vpack.c.b16 %v4204, %v4196
    %v4357 = vpack.c.b16 %v4205, %v4197
    %v4358 = vpack.c.b16 %v4206, %v4198
    %v4359 = vpack.c.b16 %v4207, %v4199
    %v4360 = vpack.c.b16 %v4208, %v4200
    %v4361 = vpack.c.b16 %v4209, %v4201
    %v4362 = vpack.c.b16 %v4210, %v4202
    %v4363 = vpack.c.b16 %v4211, %v4203
    %v4364 = vpack.c.b16 %v4220, %v4212
    %v4365 = vpack.c.b16 %v4221, %v4213
    %v4366 = vpack.c.b16 %v4222, %v4214
    %v4367 = vpack.c.b16 %v4223, %v4215
    %v4368 = vpack.c.b16 %v4224, %v4216
    %v4369 = vpack.c.b16 %v4225, %v4217
    %v4370 = vpack.c.b16 %v4226, %v4218
    %v4371 = vpack.c.b16 %v4227, %v4219
    %v4372 = vpack.c.b16 %v4236, %v4228
    %v4373 = vpack.c.b16 %v4237, %v4229
    %v4374 = vpack.c.b16 %v4238, %v4230
    %v4375 = vpack.c.b16 %v4239, %v4231
    %v4376 = vpack.c.b16 %v4240, %v4232
    %v4377 = vpack.c.b16 %v4241, %v4233
    %v4378 = vpack.c.b16 %v4242, %v4234
    %v4379 = vpack.c.b16 %v4243, %v4235
    %v4380 = vpack.c.b16 %v4252, %v4244
    %v4381 = vpack.c.b16 %v4253, %v4245
    %v4382 = vpack.c.b16 %v4254, %v4246
    %v4383 = vpack.c.b16 %v4255, %v4247
    %v4384 = vpack.c.b16 %v4256, %v4248
    %v4385 = vpack.c.b16 %v4257, %v4249
    %v4386 = vpack.c.b16 %v4258, %v4250
    %v4387 = vpack.c.b16 %v4259, %v4251
    %4516 = vmatprep.subr.bf16.mxu0 %v4261
    %4517 = vmatpush1.bf16.msra.mxu0 %v4260
    %4518 = vmatprep.subr.bf16.mxu0 %v4269
    %4519 = vmatpush1.bf16.msra.mxu0 %v4268
    %4520 = vmatprep.subr.bf16.mxu0 %v4277
    %4521 = vmatpush1.bf16.msra.mxu0 %v4276
    %4522 = vmatprep.subr.bf16.mxu0 %v4285
    %4523 = vmatpush1.bf16.msra.mxu0 %v4284
    %4524 = vmatprep.subr.bf16.mxu0 %v4293
    %4525 = vmatpush1.bf16.msra.mxu0 %v4292
    %4526 = vmatprep.subr.bf16.mxu0 %v4301
    %4527 = vmatpush1.bf16.msra.mxu0 %v4300
    %4528 = vmatprep.subr.bf16.mxu0 %v4309
    %4529 = vmatpush1.bf16.msra.mxu0 %v4308
    %4530 = vmatprep.subr.bf16.mxu0 %v4317
    %4531 = vmatpush1.bf16.msra.mxu0 %v4316
    %4532 = vmatprep.subr.bf16.mxu0 %v4325
    %4533 = vmatpush1.bf16.msra.mxu0 %v4324
    %4534 = vmatprep.subr.bf16.mxu0 %v4333
    %4535 = vmatpush1.bf16.msra.mxu0 %v4332
    %4536 = vmatprep.subr.bf16.mxu0 %v4341
    %4537 = vmatpush1.bf16.msra.mxu0 %v4340
    %4538 = vmatprep.subr.bf16.mxu0 %v4349
    %4539 = vmatpush1.bf16.msra.mxu0 %v4348
    %4540 = vmatprep.subr.bf16.mxu0 %v4357
    %4541 = vmatpush1.bf16.msra.mxu0 %v4356
    %4542 = vmatprep.subr.bf16.mxu0 %v4365
    %4543 = vmatpush1.bf16.msra.mxu0 %v4364
    %4544 = vmatprep.subr.bf16.mxu0 %v4373
    %4545 = vmatpush1.bf16.msra.mxu0 %v4372
    %4546 = vmatprep.subr.bf16.mxu0 %v4381
    %4547 = vmatpush1.bf16.msra.mxu0 %v4380
    %4548 = vmatprep.mubr.bf16.mxu0 %v3737
    %4549 = vmatmul.mubr.bf16.gmra.mrb[0].mxu0 %v3736
    %v4550 = vpop.f32.mrb[0].mxu0
    %v4551 = vadd.f32 0.0, %v4550
    %v4552 = vpop.f32.mrb[0].mxu0
    %v4553 = vadd.f32 0.0, %v4552
    %v4554 = vpop.f32.mrb[0].mxu0
    %v4555 = vpop.f32.mrb[0].mxu0
    %4556 = vdwg.mxu0
    %4557 = vmatprep.subr.bf16.mxu0 %v4263
    %4558 = vmatpush1.bf16.msra.mxu0 %v4262
    %4559 = vmatprep.subr.bf16.mxu0 %v4271
    %4560 = vmatpush1.bf16.msra.mxu0 %v4270
    %4561 = vmatprep.subr.bf16.mxu0 %v4279
    %4562 = vmatpush1.bf16.msra.mxu0 %v4278
    %4563 = vmatprep.subr.bf16.mxu0 %v4287
    %4564 = vmatpush1.bf16.msra.mxu0 %v4286
    %4565 = vmatprep.subr.bf16.mxu0 %v4295
    %4566 = vmatpush1.bf16.msra.mxu0 %v4294
    %4567 = vmatprep.subr.bf16.mxu0 %v4303
    %4568 = vmatpush1.bf16.msra.mxu0 %v4302
    %4569 = vmatprep.subr.bf16.mxu0 %v4311
    %4570 = vmatpush1.bf16.msra.mxu0 %v4310
    %4571 = vmatprep.subr.bf16.mxu0 %v4319
    %4572 = vmatpush1.bf16.msra.mxu0 %v4318
    %4573 = vmatprep.subr.bf16.mxu0 %v4327
    %4574 = vmatpush1.bf16.msra.mxu0 %v4326
    %4575 = vmatprep.subr.bf16.mxu0 %v4335
    %4576 = vmatpush1.bf16.msra.mxu0 %v4334
    %4577 = vmatprep.subr.bf16.mxu0 %v4343
    %4578 = vmatpush1.bf16.msra.mxu0 %v4342
    %4579 = vmatprep.subr.bf16.mxu0 %v4351
    %4580 = vmatpush1.bf16.msra.mxu0 %v4350
    %4581 = vmatprep.subr.bf16.mxu0 %v4359
    %4582 = vmatpush1.bf16.msra.mxu0 %v4358
    %4583 = vmatprep.subr.bf16.mxu0 %v4367
    %4584 = vmatpush1.bf16.msra.mxu0 %v4366
    %4585 = vmatprep.subr.bf16.mxu0 %v4375
    %4586 = vmatpush1.bf16.msra.mxu0 %v4374
    %4587 = vmatprep.subr.bf16.mxu0 %v4383
    %4588 = vmatpush1.bf16.msra.mxu0 %v4382
    %4589 = vmatprep.mubr.bf16.mxu0 %v3737
    %4590 = vmatmul.mubr.bf16.gmra.mrb[0].mxu0 %v3736
    %v4591 = vpop.f32.mrb[0].mxu0
    %v4592 = vadd.f32 0.0, %v4591
    %v4593 = vpop.f32.mrb[0].mxu0
    %v4594 = vadd.f32 0.0, %v4593
    %v4595 = vpop.f32.mrb[0].mxu0
    %v4596 = vpop.f32.mrb[0].mxu0
    %4597 = vdwg.mxu0
    %4598 = vmatprep.subr.bf16.mxu0 %v4265
    %4599 = vmatpush1.bf16.msra.mxu0 %v4264
    %4600 = vmatprep.subr.bf16.mxu0 %v4273
    %4601 = vmatpush1.bf16.msra.mxu0 %v4272
    %4602 = vmatprep.subr.bf16.mxu0 %v4281
    %4603 = vmatpush1.bf16.msra.mxu0 %v4280
    %4604 = vmatprep.subr.bf16.mxu0 %v4289
    %4605 = vmatpush1.bf16.msra.mxu0 %v4288
    %4606 = vmatprep.subr.bf16.mxu0 %v4297
    %4607 = vmatpush1.bf16.msra.mxu0 %v4296
    %4608 = vmatprep.subr.bf16.mxu0 %v4305
    %4609 = vmatpush1.bf16.msra.mxu0 %v4304
    %4610 = vmatprep.subr.bf16.mxu0 %v4313
    %4611 = vmatpush1.bf16.msra.mxu0 %v4312
    %4612 = vmatprep.subr.bf16.mxu0 %v4321
    %4613 = vmatpush1.bf16.msra.mxu0 %v4320
    %4614 = vmatprep.subr.bf16.mxu0 %v4329
    %4615 = vmatpush1.bf16.msra.mxu0 %v4328
    %4616 = vmatprep.subr.bf16.mxu0 %v4337
    %4617 = vmatpush1.bf16.msra.mxu0 %v4336
    %4618 = vmatprep.subr.bf16.mxu0 %v4345
    %4619 = vmatpush1.bf16.msra.mxu0 %v4344
    %4620 = vmatprep.subr.bf16.mxu0 %v4353
    %4621 = vmatpush1.bf16.msra.mxu0 %v4352
    %4622 = vmatprep.subr.bf16.mxu0 %v4361
    %4623 = vmatpush1.bf16.msra.mxu0 %v4360
    %4624 = vmatprep.subr.bf16.mxu0 %v4369
    %4625 = vmatpush1.bf16.msra.mxu0 %v4368
    %4626 = vmatprep.subr.bf16.mxu0 %v4377
    %4627 = vmatpush1.bf16.msra.mxu0 %v4376
    %4628 = vmatprep.subr.bf16.mxu0 %v4385
    %4629 = vmatpush1.bf16.msra.mxu0 %v4384
    %4630 = vmatprep.mubr.bf16.mxu0 %v3737
    %4631 = vmatmul.mubr.bf16.gmra.mrb[0].mxu0 %v3736
    %v4632 = vpop.f32.mrb[0].mxu0
    %v4633 = vadd.f32 0.0, %v4632
    %v4634 = vpop.f32.mrb[0].mxu0
    %v4635 = vadd.f32 0.0, %v4634
    %v4636 = vpop.f32.mrb[0].mxu0
    %v4637 = vpop.f32.mrb[0].mxu0
    %4638 = vdwg.mxu0
    %4639 = vmatprep.subr.bf16.mxu0 %v4267
    %4640 = vmatpush1.bf16.msra.mxu0 %v4266
    %4641 = vmatprep.subr.bf16.mxu0 %v4275
    %4642 = vmatpush1.bf16.msra.mxu0 %v4274
    %4643 = vmatprep.subr.bf16.mxu0 %v4283
    %4644 = vmatpush1.bf16.msra.mxu0 %v4282
    %4645 = vmatprep.subr.bf16.mxu0 %v4291
    %4646 = vmatpush1.bf16.msra.mxu0 %v4290
    %4647 = vmatprep.subr.bf16.mxu0 %v4299
    %4648 = vmatpush1.bf16.msra.mxu0 %v4298
    %4649 = vmatprep.subr.bf16.mxu0 %v4307
    %4650 = vmatpush1.bf16.msra.mxu0 %v4306
    %4651 = vmatprep.subr.bf16.mxu0 %v4315
    %4652 = vmatpush1.bf16.msra.mxu0 %v4314
    %4653 = vmatprep.subr.bf16.mxu0 %v4323
    %4654 = vmatpush1.bf16.msra.mxu0 %v4322
    %4655 = vmatprep.subr.bf16.mxu0 %v4331
    %4656 = vmatpush1.bf16.msra.mxu0 %v4330
    %4657 = vmatprep.subr.bf16.mxu0 %v4339
    %4658 = vmatpush1.bf16.msra.mxu0 %v4338
    %4659 = vmatprep.subr.bf16.mxu0 %v4347
    %4660 = vmatpush1.bf16.msra.mxu0 %v4346
    %4661 = vmatprep.subr.bf16.mxu0 %v4355
    %4662 = vmatpush1.bf16.msra.mxu0 %v4354
    %4663 = vmatprep.subr.bf16.mxu0 %v4363
    %4664 = vmatpush1.bf16.msra.mxu0 %v4362
    %4665 = vmatprep.subr.bf16.mxu0 %v4371
    %4666 = vmatpush1.bf16.msra.mxu0 %v4370
    %4667 = vmatprep.subr.bf16.mxu0 %v4379
    %4668 = vmatpush1.bf16.msra.mxu0 %v4378
    %4669 = vmatprep.subr.bf16.mxu0 %v4387
    %4670 = vmatpush1.bf16.msra.mxu0 %v4386
    %4671 = vmatprep.mubr.bf16.mxu0 %v3737
    %4672 = vmatmul.mubr.bf16.gmra.mrb[0].mxu0 %v3736
    %v4673 = vpop.f32.mrb[0].mxu0
    %v4674 = vadd.f32 0.0, %v4673
    %v4675 = vpop.f32.mrb[0].mxu0
    %v4676 = vadd.f32 0.0, %v4675
    %v4677 = vpop.f32.mrb[0].mxu0
    %v4678 = vpop.f32.mrb[0].mxu0
    %4679 = vdwg.mxu0
    %v4680 = vadd.f32 %v3740, %v4551
    %v4681 = vadd.f32 %v3741, %v4553
    %v4682 = vadd.f32 %v3742, %v4592
    %v4683 = vadd.f32 %v3743, %v4594
    %v4684 = vadd.f32 %v3744, %v4633
    %v4685 = vadd.f32 %v3745, %v4635
    %v4686 = vadd.f32 %v3746, %v4674
    %v4687 = vadd.f32 %v3747, %v4676
    %v4688 = vxor.u32 %v4680, 2147483648
    %v4689 = vxor.u32 %v4681, 2147483648
    %v4690 = vmul.f32 %v4688, 1.442695
    %v4691 = vpow.pop %v4690
    %v4692 = vmul.f32 %v4689, 1.442695
    %v4693 = vpow.pop %v4692
    %v4694 = vadd.f32 %v4691, 1.0
    %v4695 = vadd.f32 %v4693, 1.0
    %v4696 = vrcp.pop %v4694
    %v4697 = vmul.f32 1.0, %v4696
    %v4698 = vrcp.pop %v4695
    %v4699 = vmul.f32 1.0, %v4698
    %v4700 = vxor.u32 %v4682, 2147483648
    %v4701 = vxor.u32 %v4683, 2147483648
    %v4702 = vmul.f32 %v4700, 1.442695
    %v4703 = vpow.pop %v4702
    %v4704 = vmul.f32 %v4701, 1.442695
    %v4705 = vpow.pop %v4704
    %v4706 = vadd.f32 %v4703, 1.0
    %v4707 = vadd.f32 %v4705, 1.0
    %v4708 = vrcp.pop %v4706
    %v4709 = vmul.f32 1.0, %v4708
    %v4710 = vrcp.pop %v4707
    %v4711 = vmul.f32 1.0, %v4710
    %v4712 = vtanh.pop %v4684
    %v4713 = vtanh.pop %v4685
    %v4714 = vxor.u32 %v4686, 2147483648
    %v4715 = vxor.u32 %v4687, 2147483648
    %v4716 = vmul.f32 %v4714, 1.442695
    %v4717 = vpow.pop %v4716
    %v4718 = vmul.f32 %v4715, 1.442695
    %v4719 = vpow.pop %v4718
    %v4720 = vadd.f32 %v4717, 1.0
    %v4721 = vadd.f32 %v4719, 1.0
    %v4722 = vrcp.pop %v4720
    %v4723 = vmul.f32 1.0, %v4722
    %v4724 = vrcp.pop %v4721
    %v4725 = vmul.f32 1.0, %v4724
    %v4726 = vmul.f32 %v4709, %v3730
    %v4727 = vmul.f32 %v4711, %v3731
    %v4728 = vmul.f32 %v4697, %v4712
    %v4729 = vmul.f32 %v4699, %v4713
    %v4730 = vadd.f32 %v4726, %v4728
    %v4731 = vadd.f32 %v4727, %v4729
    %v4732 = vtanh.pop %v4730
    %v4733 = vtanh.pop %v4731
    %v4734 = vmul.f32 %v4723, %v4732
    %v4735 = vmul.f32 %v4725, %v4733
    %v4736 = vpack.c.bf16 %v4734, %v4734
    %v4737 = vpack.c.bf16 %v4735, %v4735
    %v4740 = vrot.slane %v4736, 4
    %v4741 = vrot.slane %v4737, 4
    %4744 = vst [vmem:[#allocation3 + $0x10] sm:$0xf0] %v4740
    %4745 = vst [vmem:[#allocation3 + $0x18] sm:$0xf0] %v4741
    %v4746 = vld [vmem:[%s540] sm:$0xff]
    %v4747 = vld [vmem:[%s540 + $0x8] sm:$0xff]
    %v4748 = vld [vmem:[%s540 + $0x10] sm:$0xff]
    %v4749 = vld [vmem:[%s540 + $0x18] sm:$0xff]
    %v4750 = vld [vmem:[%s540 + $0x20] sm:$0xff]
    %v4751 = vld [vmem:[%s540 + $0x28] sm:$0xff]
    %v4752 = vld [vmem:[%s540 + $0x30] sm:$0xff]
    %v4753 = vld [vmem:[%s540 + $0x38] sm:$0xff]
    %v4754 = vld [vmem:[#allocation9] sm:$0xff]
    %v4755 = vld [vmem:[#allocation9 + $0x8] sm:$0xff]
    %v4756 = vld [vmem:[#allocation9 + $0x10] sm:$0xff]
    %v4757 = vld [vmem:[#allocation9 + $0x18] sm:$0xff]
    %v4758 = vld [vmem:[#allocation9 + $0x20] sm:$0xff]
    %v4759 = vld [vmem:[#allocation9 + $0x28] sm:$0xff]
    %v4760 = vld [vmem:[#allocation9 + $0x30] sm:$0xff]
    %v4761 = vld [vmem:[#allocation9 + $0x38] sm:$0xff]
    %v4762 = vld [vmem:[#allocation9 + $0x40] sm:$0xff]
    %v4763 = vld [vmem:[#allocation9 + $0x48] sm:$0xff]
    %v4764 = vld [vmem:[#allocation9 + $0x50] sm:$0xff]
    %v4765 = vld [vmem:[#allocation9 + $0x58] sm:$0xff]
    %v4766 = vld [vmem:[#allocation9 + $0x60] sm:$0xff]
    %v4767 = vld [vmem:[#allocation9 + $0x68] sm:$0xff]
    %v4768 = vld [vmem:[#allocation9 + $0x70] sm:$0xff]
    %v4769 = vld [vmem:[#allocation9 + $0x78] sm:$0xff]
    %v4770 = vld [vmem:[#allocation9 + $0x80] sm:$0xff]
    %v4771 = vld [vmem:[#allocation9 + $0x88] sm:$0xff]
    %v4772 = vld [vmem:[#allocation9 + $0x90] sm:$0xff]
    %v4773 = vld [vmem:[#allocation9 + $0x98] sm:$0xff]
    %v4774 = vld [vmem:[#allocation9 + $0xa0] sm:$0xff]
    %v4775 = vld [vmem:[#allocation9 + $0xa8] sm:$0xff]
    %v4776 = vld [vmem:[#allocation9 + $0xb0] sm:$0xff]
    %v4777 = vld [vmem:[#allocation9 + $0xb8] sm:$0xff]
    %v4778 = vld [vmem:[#allocation9 + $0xc0] sm:$0xff]
    %v4779 = vld [vmem:[#allocation9 + $0xc8] sm:$0xff]
    %v4780 = vld [vmem:[#allocation9 + $0xd0] sm:$0xff]
    %v4781 = vld [vmem:[#allocation9 + $0xd8] sm:$0xff]
    %v4782 = vld [vmem:[#allocation9 + $0xe0] sm:$0xff]
    %v4783 = vld [vmem:[#allocation9 + $0xe8] sm:$0xff]
    %v4784 = vld [vmem:[#allocation9 + $0xf0] sm:$0xff]
    %v4785 = vld [vmem:[#allocation9 + $0xf8] sm:$0xff]
    %v4786 = vld [vmem:[#allocation9 + $0x100] sm:$0xff]
    %v4787 = vld [vmem:[#allocation9 + $0x108] sm:$0xff]
    %v4788 = vld [vmem:[#allocation9 + $0x110] sm:$0xff]
    %v4789 = vld [vmem:[#allocation9 + $0x118] sm:$0xff]
    %v4790 = vld [vmem:[#allocation9 + $0x120] sm:$0xff]
    %v4791 = vld [vmem:[#allocation9 + $0x128] sm:$0xff]
    %v4792 = vld [vmem:[#allocation9 + $0x130] sm:$0xff]
    %v4793 = vld [vmem:[#allocation9 + $0x138] sm:$0xff]
    %v4794 = vld [vmem:[#allocation9 + $0x140] sm:$0xff]
    %v4795 = vld [vmem:[#allocation9 + $0x148] sm:$0xff]
    %v4796 = vld [vmem:[#allocation9 + $0x150] sm:$0xff]
    %v4797 = vld [vmem:[#allocation9 + $0x158] sm:$0xff]
    %v4798 = vld [vmem:[#allocation9 + $0x160] sm:$0xff]
    %v4799 = vld [vmem:[#allocation9 + $0x168] sm:$0xff]
    %v4800 = vld [vmem:[#allocation9 + $0x170] sm:$0xff]
    %v4801 = vld [vmem:[#allocation9 + $0x178] sm:$0xff]
    %v4802 = vld [vmem:[#allocation9 + $0x180] sm:$0xff]
    %v4803 = vld [vmem:[#allocation9 + $0x188] sm:$0xff]
    %v4804 = vld [vmem:[#allocation9 + $0x190] sm:$0xff]
    %v4805 = vld [vmem:[#allocation9 + $0x198] sm:$0xff]
    %v4806 = vld [vmem:[#allocation9 + $0x1a0] sm:$0xff]
    %v4807 = vld [vmem:[#allocation9 + $0x1a8] sm:$0xff]
    %v4808 = vld [vmem:[#allocation9 + $0x1b0] sm:$0xff]
    %v4809 = vld [vmem:[#allocation9 + $0x1b8] sm:$0xff]
    %v4810 = vld [vmem:[#allocation9 + $0x1c0] sm:$0xff]
    %v4811 = vld [vmem:[#allocation9 + $0x1c8] sm:$0xff]
    %v4812 = vld [vmem:[#allocation9 + $0x1d0] sm:$0xff]
    %v4813 = vld [vmem:[#allocation9 + $0x1d8] sm:$0xff]
    %v4814 = vld [vmem:[#allocation9 + $0x1e0] sm:$0xff]
    %v4815 = vld [vmem:[#allocation9 + $0x1e8] sm:$0xff]
    %v4816 = vld [vmem:[#allocation9 + $0x1f0] sm:$0xff]
    %v4817 = vld [vmem:[#allocation9 + $0x1f8] sm:$0xff]
    %v4818 = vld [vmem:[#allocation9 + $0x200] sm:$0xff]
    %v4819 = vld [vmem:[#allocation9 + $0x208] sm:$0xff]
    %v4820 = vld [vmem:[#allocation9 + $0x210] sm:$0xff]
    %v4821 = vld [vmem:[#allocation9 + $0x218] sm:$0xff]
    %v4822 = vld [vmem:[#allocation9 + $0x220] sm:$0xff]
    %v4823 = vld [vmem:[#allocation9 + $0x228] sm:$0xff]
    %v4824 = vld [vmem:[#allocation9 + $0x230] sm:$0xff]
    %v4825 = vld [vmem:[#allocation9 + $0x238] sm:$0xff]
    %v4826 = vld [vmem:[#allocation9 + $0x240] sm:$0xff]
    %v4827 = vld [vmem:[#allocation9 + $0x248] sm:$0xff]
    %v4828 = vld [vmem:[#allocation9 + $0x250] sm:$0xff]
    %v4829 = vld [vmem:[#allocation9 + $0x258] sm:$0xff]
    %v4830 = vld [vmem:[#allocation9 + $0x260] sm:$0xff]
    %v4831 = vld [vmem:[#allocation9 + $0x268] sm:$0xff]
    %v4832 = vld [vmem:[#allocation9 + $0x270] sm:$0xff]
    %v4833 = vld [vmem:[#allocation9 + $0x278] sm:$0xff]
    %v4834 = vld [vmem:[#allocation9 + $0x280] sm:$0xff]
    %v4835 = vld [vmem:[#allocation9 + $0x288] sm:$0xff]
    %v4836 = vld [vmem:[#allocation9 + $0x290] sm:$0xff]
    %v4837 = vld [vmem:[#allocation9 + $0x298] sm:$0xff]
    %v4838 = vld [vmem:[#allocation9 + $0x2a0] sm:$0xff]
    %v4839 = vld [vmem:[#allocation9 + $0x2a8] sm:$0xff]
    %v4840 = vld [vmem:[#allocation9 + $0x2b0] sm:$0xff]
    %v4841 = vld [vmem:[#allocation9 + $0x2b8] sm:$0xff]
    %v4842 = vld [vmem:[#allocation9 + $0x2c0] sm:$0xff]
    %v4843 = vld [vmem:[#allocation9 + $0x2c8] sm:$0xff]
    %v4844 = vld [vmem:[#allocation9 + $0x2d0] sm:$0xff]
    %v4845 = vld [vmem:[#allocation9 + $0x2d8] sm:$0xff]
    %v4846 = vld [vmem:[#allocation9 + $0x2e0] sm:$0xff]
    %v4847 = vld [vmem:[#allocation9 + $0x2e8] sm:$0xff]
    %v4848 = vld [vmem:[#allocation9 + $0x2f0] sm:$0xff]
    %v4849 = vld [vmem:[#allocation9 + $0x2f8] sm:$0xff]
    %v4850 = vld [vmem:[#allocation9 + $0x300] sm:$0xff]
    %v4851 = vld [vmem:[#allocation9 + $0x308] sm:$0xff]
    %v4852 = vld [vmem:[#allocation9 + $0x310] sm:$0xff]
    %v4853 = vld [vmem:[#allocation9 + $0x318] sm:$0xff]
    %v4854 = vld [vmem:[#allocation9 + $0x320] sm:$0xff]
    %v4855 = vld [vmem:[#allocation9 + $0x328] sm:$0xff]
    %v4856 = vld [vmem:[#allocation9 + $0x330] sm:$0xff]
    %v4857 = vld [vmem:[#allocation9 + $0x338] sm:$0xff]
    %v4858 = vld [vmem:[#allocation9 + $0x340] sm:$0xff]
    %v4859 = vld [vmem:[#allocation9 + $0x348] sm:$0xff]
    %v4860 = vld [vmem:[#allocation9 + $0x350] sm:$0xff]
    %v4861 = vld [vmem:[#allocation9 + $0x358] sm:$0xff]
    %v4862 = vld [vmem:[#allocation9 + $0x360] sm:$0xff]
    %v4863 = vld [vmem:[#allocation9 + $0x368] sm:$0xff]
    %v4864 = vld [vmem:[#allocation9 + $0x370] sm:$0xff]
    %v4865 = vld [vmem:[#allocation9 + $0x378] sm:$0xff]
    %v4866 = vld [vmem:[#allocation9 + $0x380] sm:$0xff]
    %v4867 = vld [vmem:[#allocation9 + $0x388] sm:$0xff]
    %v4868 = vld [vmem:[#allocation9 + $0x390] sm:$0xff]
    %v4869 = vld [vmem:[#allocation9 + $0x398] sm:$0xff]
    %v4870 = vld [vmem:[#allocation9 + $0x3a0] sm:$0xff]
    %v4871 = vld [vmem:[#allocation9 + $0x3a8] sm:$0xff]
    %v4872 = vld [vmem:[#allocation9 + $0x3b0] sm:$0xff]
    %v4873 = vld [vmem:[#allocation9 + $0x3b8] sm:$0xff]
    %v4874 = vld [vmem:[#allocation9 + $0x3c0] sm:$0xff]
    %v4875 = vld [vmem:[#allocation9 + $0x3c8] sm:$0xff]
    %v4876 = vld [vmem:[#allocation9 + $0x3d0] sm:$0xff]
    %v4877 = vld [vmem:[#allocation9 + $0x3d8] sm:$0xff]
    %v4878 = vld [vmem:[#allocation9 + $0x3e0] sm:$0xff]
    %v4879 = vld [vmem:[#allocation9 + $0x3e8] sm:$0xff]
    %v4880 = vld [vmem:[#allocation9 + $0x3f0] sm:$0xff]
    %v4881 = vld [vmem:[#allocation9 + $0x3f8] sm:$0xff]
    %v5010 = vunpack.c.l.b16 %v4754
    %v5011 = vunpack.c.h.b16 %v4754
    %v5012 = vunpack.c.l.b16 %v4755
    %v5013 = vunpack.c.h.b16 %v4755
    %v5014 = vunpack.c.l.b16 %v4756
    %v5015 = vunpack.c.h.b16 %v4756
    %v5016 = vunpack.c.l.b16 %v4757
    %v5017 = vunpack.c.h.b16 %v4757
    %v5018 = vunpack.c.l.b16 %v4758
    %v5019 = vunpack.c.h.b16 %v4758
    %v5020 = vunpack.c.l.b16 %v4759
    %v5021 = vunpack.c.h.b16 %v4759
    %v5022 = vunpack.c.l.b16 %v4760
    %v5023 = vunpack.c.h.b16 %v4760
    %v5024 = vunpack.c.l.b16 %v4761
    %v5025 = vunpack.c.h.b16 %v4761
    %v5026 = vunpack.c.l.b16 %v4762
    %v5027 = vunpack.c.h.b16 %v4762
    %v5028 = vunpack.c.l.b16 %v4763
    %v5029 = vunpack.c.h.b16 %v4763
    %v5030 = vunpack.c.l.b16 %v4764
    %v5031 = vunpack.c.h.b16 %v4764
    %v5032 = vunpack.c.l.b16 %v4765
    %v5033 = vunpack.c.h.b16 %v4765
    %v5034 = vunpack.c.l.b16 %v4766
    %v5035 = vunpack.c.h.b16 %v4766
    %v5036 = vunpack.c.l.b16 %v4767
    %v5037 = vunpack.c.h.b16 %v4767
    %v5038 = vunpack.c.l.b16 %v4768
    %v5039 = vunpack.c.h.b16 %v4768
    %v5040 = vunpack.c.l.b16 %v4769
    %v5041 = vunpack.c.h.b16 %v4769
    %v5042 = vunpack.c.l.b16 %v4770
    %v5043 = vunpack.c.h.b16 %v4770
    %v5044 = vunpack.c.l.b16 %v4771
    %v5045 = vunpack.c.h.b16 %v4771
    %v5046 = vunpack.c.l.b16 %v4772
    %v5047 = vunpack.c.h.b16 %v4772
    %v5048 = vunpack.c.l.b16 %v4773
    %v5049 = vunpack.c.h.b16 %v4773
    %v5050 = vunpack.c.l.b16 %v4774
    %v5051 = vunpack.c.h.b16 %v4774
    %v5052 = vunpack.c.l.b16 %v4775
    %v5053 = vunpack.c.h.b16 %v4775
    %v5054 = vunpack.c.l.b16 %v4776
    %v5055 = vunpack.c.h.b16 %v4776
    %v5056 = vunpack.c.l.b16 %v4777
    %v5057 = vunpack.c.h.b16 %v4777
    %v5058 = vunpack.c.l.b16 %v4778
    %v5059 = vunpack.c.h.b16 %v4778
    %v5060 = vunpack.c.l.b16 %v4779
    %v5061 = vunpack.c.h.b16 %v4779
    %v5062 = vunpack.c.l.b16 %v4780
    %v5063 = vunpack.c.h.b16 %v4780
    %v5064 = vunpack.c.l.b16 %v4781
    %v5065 = vunpack.c.h.b16 %v4781
    %v5066 = vunpack.c.l.b16 %v4782
    %v5067 = vunpack.c.h.b16 %v4782
    %v5068 = vunpack.c.l.b16 %v4783
    %v5069 = vunpack.c.h.b16 %v4783
    %v5070 = vunpack.c.l.b16 %v4784
    %v5071 = vunpack.c.h.b16 %v4784
    %v5072 = vunpack.c.l.b16 %v4785
    %v5073 = vunpack.c.h.b16 %v4785
    %v5074 = vunpack.c.l.b16 %v4786
    %v5075 = vunpack.c.h.b16 %v4786
    %v5076 = vunpack.c.l.b16 %v4787
    %v5077 = vunpack.c.h.b16 %v4787
    %v5078 = vunpack.c.l.b16 %v4788
    %v5079 = vunpack.c.h.b16 %v4788
    %v5080 = vunpack.c.l.b16 %v4789
    %v5081 = vunpack.c.h.b16 %v4789
    %v5082 = vunpack.c.l.b16 %v4790
    %v5083 = vunpack.c.h.b16 %v4790
    %v5084 = vunpack.c.l.b16 %v4791
    %v5085 = vunpack.c.h.b16 %v4791
    %v5086 = vunpack.c.l.b16 %v4792
    %v5087 = vunpack.c.h.b16 %v4792
    %v5088 = vunpack.c.l.b16 %v4793
    %v5089 = vunpack.c.h.b16 %v4793
    %v5090 = vunpack.c.l.b16 %v4794
    %v5091 = vunpack.c.h.b16 %v4794
    %v5092 = vunpack.c.l.b16 %v4795
    %v5093 = vunpack.c.h.b16 %v4795
    %v5094 = vunpack.c.l.b16 %v4796
    %v5095 = vunpack.c.h.b16 %v4796
    %v5096 = vunpack.c.l.b16 %v4797
    %v5097 = vunpack.c.h.b16 %v4797
    %v5098 = vunpack.c.l.b16 %v4798
    %v5099 = vunpack.c.h.b16 %v4798
    %v5100 = vunpack.c.l.b16 %v4799
    %v5101 = vunpack.c.h.b16 %v4799
    %v5102 = vunpack.c.l.b16 %v4800
    %v5103 = vunpack.c.h.b16 %v4800
    %v5104 = vunpack.c.l.b16 %v4801
    %v5105 = vunpack.c.h.b16 %v4801
    %v5106 = vunpack.c.l.b16 %v4802
    %v5107 = vunpack.c.h.b16 %v4802
    %v5108 = vunpack.c.l.b16 %v4803
    %v5109 = vunpack.c.h.b16 %v4803
    %v5110 = vunpack.c.l.b16 %v4804
    %v5111 = vunpack.c.h.b16 %v4804
    %v5112 = vunpack.c.l.b16 %v4805
    %v5113 = vunpack.c.h.b16 %v4805
    %v5114 = vunpack.c.l.b16 %v4806
    %v5115 = vunpack.c.h.b16 %v4806
    %v5116 = vunpack.c.l.b16 %v4807
    %v5117 = vunpack.c.h.b16 %v4807
    %v5118 = vunpack.c.l.b16 %v4808
    %v5119 = vunpack.c.h.b16 %v4808
    %v5120 = vunpack.c.l.b16 %v4809
    %v5121 = vunpack.c.h.b16 %v4809
    %v5122 = vunpack.c.l.b16 %v4810
    %v5123 = vunpack.c.h.b16 %v4810
    %v5124 = vunpack.c.l.b16 %v4811
    %v5125 = vunpack.c.h.b16 %v4811
    %v5126 = vunpack.c.l.b16 %v4812
    %v5127 = vunpack.c.h.b16 %v4812
    %v5128 = vunpack.c.l.b16 %v4813
    %v5129 = vunpack.c.h.b16 %v4813
    %v5130 = vunpack.c.l.b16 %v4814
    %v5131 = vunpack.c.h.b16 %v4814
    %v5132 = vunpack.c.l.b16 %v4815
    %v5133 = vunpack.c.h.b16 %v4815
    %v5134 = vunpack.c.l.b16 %v4816
    %v5135 = vunpack.c.h.b16 %v4816
    %v5136 = vunpack.c.l.b16 %v4817
    %v5137 = vunpack.c.h.b16 %v4817
    %v5138 = vunpack.c.l.b16 %v4818
    %v5139 = vunpack.c.h.b16 %v4818
    %v5140 = vunpack.c.l.b16 %v4819
    %v5141 = vunpack.c.h.b16 %v4819
    %v5142 = vunpack.c.l.b16 %v4820
    %v5143 = vunpack.c.h.b16 %v4820
    %v5144 = vunpack.c.l.b16 %v4821
    %v5145 = vunpack.c.h.b16 %v4821
    %v5146 = vunpack.c.l.b16 %v4822
    %v5147 = vunpack.c.h.b16 %v4822
    %v5148 = vunpack.c.l.b16 %v4823
    %v5149 = vunpack.c.h.b16 %v4823
    %v5150 = vunpack.c.l.b16 %v4824
    %v5151 = vunpack.c.h.b16 %v4824
    %v5152 = vunpack.c.l.b16 %v4825
    %v5153 = vunpack.c.h.b16 %v4825
    %v5154 = vunpack.c.l.b16 %v4826
    %v5155 = vunpack.c.h.b16 %v4826
    %v5156 = vunpack.c.l.b16 %v4827
    %v5157 = vunpack.c.h.b16 %v4827
    %v5158 = vunpack.c.l.b16 %v4828
    %v5159 = vunpack.c.h.b16 %v4828
    %v5160 = vunpack.c.l.b16 %v4829
    %v5161 = vunpack.c.h.b16 %v4829
    %v5162 = vunpack.c.l.b16 %v4830
    %v5163 = vunpack.c.h.b16 %v4830
    %v5164 = vunpack.c.l.b16 %v4831
    %v5165 = vunpack.c.h.b16 %v4831
    %v5166 = vunpack.c.l.b16 %v4832
    %v5167 = vunpack.c.h.b16 %v4832
    %v5168 = vunpack.c.l.b16 %v4833
    %v5169 = vunpack.c.h.b16 %v4833
    %v5170 = vunpack.c.l.b16 %v4834
    %v5171 = vunpack.c.h.b16 %v4834
    %v5172 = vunpack.c.l.b16 %v4835
    %v5173 = vunpack.c.h.b16 %v4835
    %v5174 = vunpack.c.l.b16 %v4836
    %v5175 = vunpack.c.h.b16 %v4836
    %v5176 = vunpack.c.l.b16 %v4837
    %v5177 = vunpack.c.h.b16 %v4837
    %v5178 = vunpack.c.l.b16 %v4838
    %v5179 = vunpack.c.h.b16 %v4838
    %v5180 = vunpack.c.l.b16 %v4839
    %v5181 = vunpack.c.h.b16 %v4839
    %v5182 = vunpack.c.l.b16 %v4840
    %v5183 = vunpack.c.h.b16 %v4840
    %v5184 = vunpack.c.l.b16 %v4841
    %v5185 = vunpack.c.h.b16 %v4841
    %v5186 = vunpack.c.l.b16 %v4842
    %v5187 = vunpack.c.h.b16 %v4842
    %v5188 = vunpack.c.l.b16 %v4843
    %v5189 = vunpack.c.h.b16 %v4843
    %v5190 = vunpack.c.l.b16 %v4844
    %v5191 = vunpack.c.h.b16 %v4844
    %v5192 = vunpack.c.l.b16 %v4845
    %v5193 = vunpack.c.h.b16 %v4845
    %v5194 = vunpack.c.l.b16 %v4846
    %v5195 = vunpack.c.h.b16 %v4846
    %v5196 = vunpack.c.l.b16 %v4847
    %v5197 = vunpack.c.h.b16 %v4847
    %v5198 = vunpack.c.l.b16 %v4848
    %v5199 = vunpack.c.h.b16 %v4848
    %v5200 = vunpack.c.l.b16 %v4849
    %v5201 = vunpack.c.h.b16 %v4849
    %v5202 = vunpack.c.l.b16 %v4850
    %v5203 = vunpack.c.h.b16 %v4850
    %v5204 = vunpack.c.l.b16 %v4851
    %v5205 = vunpack.c.h.b16 %v4851
    %v5206 = vunpack.c.l.b16 %v4852
    %v5207 = vunpack.c.h.b16 %v4852
    %v5208 = vunpack.c.l.b16 %v4853
    %v5209 = vunpack.c.h.b16 %v4853
    %v5210 = vunpack.c.l.b16 %v4854
    %v5211 = vunpack.c.h.b16 %v4854
    %v5212 = vunpack.c.l.b16 %v4855
    %v5213 = vunpack.c.h.b16 %v4855
    %v5214 = vunpack.c.l.b16 %v4856
    %v5215 = vunpack.c.h.b16 %v4856
    %v5216 = vunpack.c.l.b16 %v4857
    %v5217 = vunpack.c.h.b16 %v4857
    %v5218 = vunpack.c.l.b16 %v4858
    %v5219 = vunpack.c.h.b16 %v4858
    %v5220 = vunpack.c.l.b16 %v4859
    %v5221 = vunpack.c.h.b16 %v4859
    %v5222 = vunpack.c.l.b16 %v4860
    %v5223 = vunpack.c.h.b16 %v4860
    %v5224 = vunpack.c.l.b16 %v4861
    %v5225 = vunpack.c.h.b16 %v4861
    %v5226 = vunpack.c.l.b16 %v4862
    %v5227 = vunpack.c.h.b16 %v4862
    %v5228 = vunpack.c.l.b16 %v4863
    %v5229 = vunpack.c.h.b16 %v4863
    %v5230 = vunpack.c.l.b16 %v4864
    %v5231 = vunpack.c.h.b16 %v4864
    %v5232 = vunpack.c.l.b16 %v4865
    %v5233 = vunpack.c.h.b16 %v4865
    %v5234 = vunpack.c.l.b16 %v4866
    %v5235 = vunpack.c.h.b16 %v4866
    %v5236 = vunpack.c.l.b16 %v4867
    %v5237 = vunpack.c.h.b16 %v4867
    %v5238 = vunpack.c.l.b16 %v4868
    %v5239 = vunpack.c.h.b16 %v4868
    %v5240 = vunpack.c.l.b16 %v4869
    %v5241 = vunpack.c.h.b16 %v4869
    %v5242 = vunpack.c.l.b16 %v4870
    %v5243 = vunpack.c.h.b16 %v4870
    %v5244 = vunpack.c.l.b16 %v4871
    %v5245 = vunpack.c.h.b16 %v4871
    %v5246 = vunpack.c.l.b16 %v4872
    %v5247 = vunpack.c.h.b16 %v4872
    %v5248 = vunpack.c.l.b16 %v4873
    %v5249 = vunpack.c.h.b16 %v4873
    %v5250 = vunpack.c.l.b16 %v4874
    %v5251 = vunpack.c.h.b16 %v4874
    %v5252 = vunpack.c.l.b16 %v4875
    %v5253 = vunpack.c.h.b16 %v4875
    %v5254 = vunpack.c.l.b16 %v4876
    %v5255 = vunpack.c.h.b16 %v4876
    %v5256 = vunpack.c.l.b16 %v4877
    %v5257 = vunpack.c.h.b16 %v4877
    %v5258 = vunpack.c.l.b16 %v4878
    %v5259 = vunpack.c.h.b16 %v4878
    %v5260 = vunpack.c.l.b16 %v4879
    %v5261 = vunpack.c.h.b16 %v4879
    %v5262 = vunpack.c.l.b16 %v4880
    %v5263 = vunpack.c.h.b16 %v4880
    %v5264 = vunpack.c.l.b16 %v4881
    %v5265 = vunpack.c.h.b16 %v4881
    %v5266 = vpack.c.b16 %v5018, %v5010
    %v5267 = vpack.c.b16 %v5019, %v5011
    %v5268 = vpack.c.b16 %v5020, %v5012
    %v5269 = vpack.c.b16 %v5021, %v5013
    %v5270 = vpack.c.b16 %v5022, %v5014
    %v5271 = vpack.c.b16 %v5023, %v5015
    %v5272 = vpack.c.b16 %v5024, %v5016
    %v5273 = vpack.c.b16 %v5025, %v5017
    %v5274 = vpack.c.b16 %v5034, %v5026
    %v5275 = vpack.c.b16 %v5035, %v5027
    %v5276 = vpack.c.b16 %v5036, %v5028
    %v5277 = vpack.c.b16 %v5037, %v5029
    %v5278 = vpack.c.b16 %v5038, %v5030
    %v5279 = vpack.c.b16 %v5039, %v5031
    %v5280 = vpack.c.b16 %v5040, %v5032
    %v5281 = vpack.c.b16 %v5041, %v5033
    %v5282 = vpack.c.b16 %v5050, %v5042
    %v5283 = vpack.c.b16 %v5051, %v5043
    %v5284 = vpack.c.b16 %v5052, %v5044
    %v5285 = vpack.c.b16 %v5053, %v5045
    %v5286 = vpack.c.b16 %v5054, %v5046
    %v5287 = vpack.c.b16 %v5055, %v5047
    %v5288 = vpack.c.b16 %v5056, %v5048
    %v5289 = vpack.c.b16 %v5057, %v5049
    %v5290 = vpack.c.b16 %v5066, %v5058
    %v5291 = vpack.c.b16 %v5067, %v5059
    %v5292 = vpack.c.b16 %v5068, %v5060
    %v5293 = vpack.c.b16 %v5069, %v5061
    %v5294 = vpack.c.b16 %v5070, %v5062
    %v5295 = vpack.c.b16 %v5071, %v5063
    %v5296 = vpack.c.b16 %v5072, %v5064
    %v5297 = vpack.c.b16 %v5073, %v5065
    %v5298 = vpack.c.b16 %v5082, %v5074
    %v5299 = vpack.c.b16 %v5083, %v5075
    %v5300 = vpack.c.b16 %v5084, %v5076
    %v5301 = vpack.c.b16 %v5085, %v5077
    %v5302 = vpack.c.b16 %v5086, %v5078
    %v5303 = vpack.c.b16 %v5087, %v5079
    %v5304 = vpack.c.b16 %v5088, %v5080
    %v5305 = vpack.c.b16 %v5089, %v5081
    %v5306 = vpack.c.b16 %v5098, %v5090
    %v5307 = vpack.c.b16 %v5099, %v5091
    %v5308 = vpack.c.b16 %v5100, %v5092
    %v5309 = vpack.c.b16 %v5101, %v5093
    %v5310 = vpack.c.b16 %v5102, %v5094
    %v5311 = vpack.c.b16 %v5103, %v5095
    %v5312 = vpack.c.b16 %v5104, %v5096
    %v5313 = vpack.c.b16 %v5105, %v5097
    %v5314 = vpack.c.b16 %v5114, %v5106
    %v5315 = vpack.c.b16 %v5115, %v5107
    %v5316 = vpack.c.b16 %v5116, %v5108
    %v5317 = vpack.c.b16 %v5117, %v5109
    %v5318 = vpack.c.b16 %v5118, %v5110
    %v5319 = vpack.c.b16 %v5119, %v5111
    %v5320 = vpack.c.b16 %v5120, %v5112
    %v5321 = vpack.c.b16 %v5121, %v5113
    %v5322 = vpack.c.b16 %v5130, %v5122
    %v5323 = vpack.c.b16 %v5131, %v5123
    %v5324 = vpack.c.b16 %v5132, %v5124
    %v5325 = vpack.c.b16 %v5133, %v5125
    %v5326 = vpack.c.b16 %v5134, %v5126
    %v5327 = vpack.c.b16 %v5135, %v5127
    %v5328 = vpack.c.b16 %v5136, %v5128
    %v5329 = vpack.c.b16 %v5137, %v5129
    %v5330 = vpack.c.b16 %v5146, %v5138
    %v5331 = vpack.c.b16 %v5147, %v5139
    %v5332 = vpack.c.b16 %v5148, %v5140
    %v5333 = vpack.c.b16 %v5149, %v5141
    %v5334 = vpack.c.b16 %v5150, %v5142
    %v5335 = vpack.c.b16 %v5151, %v5143
    %v5336 = vpack.c.b16 %v5152, %v5144
    %v5337 = vpack.c.b16 %v5153, %v5145
    %v5338 = vpack.c.b16 %v5162, %v5154
    %v5339 = vpack.c.b16 %v5163, %v5155
    %v5340 = vpack.c.b16 %v5164, %v5156
    %v5341 = vpack.c.b16 %v5165, %v5157
    %v5342 = vpack.c.b16 %v5166, %v5158
    %v5343 = vpack.c.b16 %v5167, %v5159
    %v5344 = vpack.c.b16 %v5168, %v5160
    %v5345 = vpack.c.b16 %v5169, %v5161
    %v5346 = vpack.c.b16 %v5178, %v5170
    %v5347 = vpack.c.b16 %v5179, %v5171
    %v5348 = vpack.c.b16 %v5180, %v5172
    %v5349 = vpack.c.b16 %v5181, %v5173
    %v5350 = vpack.c.b16 %v5182, %v5174
    %v5351 = vpack.c.b16 %v5183, %v5175
    %v5352 = vpack.c.b16 %v5184, %v5176
    %v5353 = vpack.c.b16 %v5185, %v5177
    %v5354 = vpack.c.b16 %v5194, %v5186
    %v5355 = vpack.c.b16 %v5195, %v5187
    %v5356 = vpack.c.b16 %v5196, %v5188
    %v5357 = vpack.c.b16 %v5197, %v5189
    %v5358 = vpack.c.b16 %v5198, %v5190
    %v5359 = vpack.c.b16 %v5199, %v5191
    %v5360 = vpack.c.b16 %v5200, %v5192
    %v5361 = vpack.c.b16 %v5201, %v5193
    %v5362 = vpack.c.b16 %v5210, %v5202
    %v5363 = vpack.c.b16 %v5211, %v5203
    %v5364 = vpack.c.b16 %v5212, %v5204
    %v5365 = vpack.c.b16 %v5213, %v5205
    %v5366 = vpack.c.b16 %v5214, %v5206
    %v5367 = vpack.c.b16 %v5215, %v5207
    %v5368 = vpack.c.b16 %v5216, %v5208
    %v5369 = vpack.c.b16 %v5217, %v5209
    %v5370 = vpack.c.b16 %v5226, %v5218
    %v5371 = vpack.c.b16 %v5227, %v5219
    %v5372 = vpack.c.b16 %v5228, %v5220
    %v5373 = vpack.c.b16 %v5229, %v5221
    %v5374 = vpack.c.b16 %v5230, %v5222
    %v5375 = vpack.c.b16 %v5231, %v5223
    %v5376 = vpack.c.b16 %v5232, %v5224
    %v5377 = vpack.c.b16 %v5233, %v5225
    %v5378 = vpack.c.b16 %v5242, %v5234
    %v5379 = vpack.c.b16 %v5243, %v5235
    %v5380 = vpack.c.b16 %v5244, %v5236
    %v5381 = vpack.c.b16 %v5245, %v5237
    %v5382 = vpack.c.b16 %v5246, %v5238
    %v5383 = vpack.c.b16 %v5247, %v5239
    %v5384 = vpack.c.b16 %v5248, %v5240
    %v5385 = vpack.c.b16 %v5249, %v5241
    %v5386 = vpack.c.b16 %v5258, %v5250
    %v5387 = vpack.c.b16 %v5259, %v5251
    %v5388 = vpack.c.b16 %v5260, %v5252
    %v5389 = vpack.c.b16 %v5261, %v5253
    %v5390 = vpack.c.b16 %v5262, %v5254
    %v5391 = vpack.c.b16 %v5263, %v5255
    %v5392 = vpack.c.b16 %v5264, %v5256
    %v5393 = vpack.c.b16 %v5265, %v5257
    %5522 = vmatprep.subr.bf16.mxu0 %v5267
    %5523 = vmatpush1.bf16.msra.mxu0 %v5266
    %5524 = vmatprep.subr.bf16.mxu0 %v5275
    %5525 = vmatpush1.bf16.msra.mxu0 %v5274
    %5526 = vmatprep.subr.bf16.mxu0 %v5283
    %5527 = vmatpush1.bf16.msra.mxu0 %v5282
    %5528 = vmatprep.subr.bf16.mxu0 %v5291
    %5529 = vmatpush1.bf16.msra.mxu0 %v5290
    %5530 = vmatprep.subr.bf16.mxu0 %v5299
    %5531 = vmatpush1.bf16.msra.mxu0 %v5298
    %5532 = vmatprep.subr.bf16.mxu0 %v5307
    %5533 = vmatpush1.bf16.msra.mxu0 %v5306
    %5534 = vmatprep.subr.bf16.mxu0 %v5315
    %5535 = vmatpush1.bf16.msra.mxu0 %v5314
    %5536 = vmatprep.subr.bf16.mxu0 %v5323
    %5537 = vmatpush1.bf16.msra.mxu0 %v5322
    %5538 = vmatprep.subr.bf16.mxu0 %v5331
    %5539 = vmatpush1.bf16.msra.mxu0 %v5330
    %5540 = vmatprep.subr.bf16.mxu0 %v5339
    %5541 = vmatpush1.bf16.msra.mxu0 %v5338
    %5542 = vmatprep.subr.bf16.mxu0 %v5347
    %5543 = vmatpush1.bf16.msra.mxu0 %v5346
    %5544 = vmatprep.subr.bf16.mxu0 %v5355
    %5545 = vmatpush1.bf16.msra.mxu0 %v5354
    %5546 = vmatprep.subr.bf16.mxu0 %v5363
    %5547 = vmatpush1.bf16.msra.mxu0 %v5362
    %5548 = vmatprep.subr.bf16.mxu0 %v5371
    %5549 = vmatpush1.bf16.msra.mxu0 %v5370
    %5550 = vmatprep.subr.bf16.mxu0 %v5379
    %5551 = vmatpush1.bf16.msra.mxu0 %v5378
    %5552 = vmatprep.subr.bf16.mxu0 %v5387
    %5553 = vmatpush1.bf16.msra.mxu0 %v5386
    %5554 = vmatprep.mubr.bf16.mxu0 %v4737
    %5555 = vmatmul.mubr.bf16.gmra.mrb[0].mxu0 %v4736
    %v5556 = vpop.f32.mrb[0].mxu0
    %v5557 = vadd.f32 0.0, %v5556
    %v5558 = vpop.f32.mrb[0].mxu0
    %v5559 = vadd.f32 0.0, %v5558
    %v5560 = vpop.f32.mrb[0].mxu0
    %v5561 = vpop.f32.mrb[0].mxu0
    %5562 = vdwg.mxu0
    %5563 = vmatprep.subr.bf16.mxu0 %v5269
    %5564 = vmatpush1.bf16.msra.mxu0 %v5268
    %5565 = vmatprep.subr.bf16.mxu0 %v5277
    %5566 = vmatpush1.bf16.msra.mxu0 %v5276
    %5567 = vmatprep.subr.bf16.mxu0 %v5285
    %5568 = vmatpush1.bf16.msra.mxu0 %v5284
    %5569 = vmatprep.subr.bf16.mxu0 %v5293
    %5570 = vmatpush1.bf16.msra.mxu0 %v5292
    %5571 = vmatprep.subr.bf16.mxu0 %v5301
    %5572 = vmatpush1.bf16.msra.mxu0 %v5300
    %5573 = vmatprep.subr.bf16.mxu0 %v5309
    %5574 = vmatpush1.bf16.msra.mxu0 %v5308
    %5575 = vmatprep.subr.bf16.mxu0 %v5317
    %5576 = vmatpush1.bf16.msra.mxu0 %v5316
    %5577 = vmatprep.subr.bf16.mxu0 %v5325
    %5578 = vmatpush1.bf16.msra.mxu0 %v5324
    %5579 = vmatprep.subr.bf16.mxu0 %v5333
    %5580 = vmatpush1.bf16.msra.mxu0 %v5332
    %5581 = vmatprep.subr.bf16.mxu0 %v5341
    %5582 = vmatpush1.bf16.msra.mxu0 %v5340
    %5583 = vmatprep.subr.bf16.mxu0 %v5349
    %5584 = vmatpush1.bf16.msra.mxu0 %v5348
    %5585 = vmatprep.subr.bf16.mxu0 %v5357
    %5586 = vmatpush1.bf16.msra.mxu0 %v5356
    %5587 = vmatprep.subr.bf16.mxu0 %v5365
    %5588 = vmatpush1.bf16.msra.mxu0 %v5364
    %5589 = vmatprep.subr.bf16.mxu0 %v5373
    %5590 = vmatpush1.bf16.msra.mxu0 %v5372
    %5591 = vmatprep.subr.bf16.mxu0 %v5381
    %5592 = vmatpush1.bf16.msra.mxu0 %v5380
    %5593 = vmatprep.subr.bf16.mxu0 %v5389
    %5594 = vmatpush1.bf16.msra.mxu0 %v5388
    %5595 = vmatprep.mubr.bf16.mxu0 %v4737
    %5596 = vmatmul.mubr.bf16.gmra.mrb[0].mxu0 %v4736
    %v5597 = vpop.f32.mrb[0].mxu0
    %v5598 = vadd.f32 0.0, %v5597
    %v5599 = vpop.f32.mrb[0].mxu0
    %v5600 = vadd.f32 0.0, %v5599
    %v5601 = vpop.f32.mrb[0].mxu0
    %v5602 = vpop.f32.mrb[0].mxu0
    %5603 = vdwg.mxu0
    %5604 = vmatprep.subr.bf16.mxu0 %v5271
    %5605 = vmatpush1.bf16.msra.mxu0 %v5270
    %5606 = vmatprep.subr.bf16.mxu0 %v5279
    %5607 = vmatpush1.bf16.msra.mxu0 %v5278
    %5608 = vmatprep.subr.bf16.mxu0 %v5287
    %5609 = vmatpush1.bf16.msra.mxu0 %v5286
    %5610 = vmatprep.subr.bf16.mxu0 %v5295
    %5611 = vmatpush1.bf16.msra.mxu0 %v5294
    %5612 = vmatprep.subr.bf16.mxu0 %v5303
    %5613 = vmatpush1.bf16.msra.mxu0 %v5302
    %5614 = vmatprep.subr.bf16.mxu0 %v5311
    %5615 = vmatpush1.bf16.msra.mxu0 %v5310
    %5616 = vmatprep.subr.bf16.mxu0 %v5319
    %5617 = vmatpush1.bf16.msra.mxu0 %v5318
    %5618 = vmatprep.subr.bf16.mxu0 %v5327
    %5619 = vmatpush1.bf16.msra.mxu0 %v5326
    %5620 = vmatprep.subr.bf16.mxu0 %v5335
    %5621 = vmatpush1.bf16.msra.mxu0 %v5334
    %5622 = vmatprep.subr.bf16.mxu0 %v5343
    %5623 = vmatpush1.bf16.msra.mxu0 %v5342
    %5624 = vmatprep.subr.bf16.mxu0 %v5351
    %5625 = vmatpush1.bf16.msra.mxu0 %v5350
    %5626 = vmatprep.subr.bf16.mxu0 %v5359
    %5627 = vmatpush1.bf16.msra.mxu0 %v5358
    %5628 = vmatprep.subr.bf16.mxu0 %v5367
    %5629 = vmatpush1.bf16.msra.mxu0 %v5366
    %5630 = vmatprep.subr.bf16.mxu0 %v5375
    %5631 = vmatpush1.bf16.msra.mxu0 %v5374
    %5632 = vmatprep.subr.bf16.mxu0 %v5383
    %5633 = vmatpush1.bf16.msra.mxu0 %v5382
    %5634 = vmatprep.subr.bf16.mxu0 %v5391
    %5635 = vmatpush1.bf16.msra.mxu0 %v5390
    %5636 = vmatprep.mubr.bf16.mxu0 %v4737
    %5637 = vmatmul.mubr.bf16.gmra.mrb[0].mxu0 %v4736
    %v5638 = vpop.f32.mrb[0].mxu0
    %v5639 = vadd.f32 0.0, %v5638
    %v5640 = vpop.f32.mrb[0].mxu0
    %v5641 = vadd.f32 0.0, %v5640
    %v5642 = vpop.f32.mrb[0].mxu0
    %v5643 = vpop.f32.mrb[0].mxu0
    %5644 = vdwg.mxu0
    %5645 = vmatprep.subr.bf16.mxu0 %v5273
    %5646 = vmatpush1.bf16.msra.mxu0 %v5272
    %5647 = vmatprep.subr.bf16.mxu0 %v5281
    %5648 = vmatpush1.bf16.msra.mxu0 %v5280
    %5649 = vmatprep.subr.bf16.mxu0 %v5289
    %5650 = vmatpush1.bf16.msra.mxu0 %v5288
    %5651 = vmatprep.subr.bf16.mxu0 %v5297
    %5652 = vmatpush1.bf16.msra.mxu0 %v5296
    %5653 = vmatprep.subr.bf16.mxu0 %v5305
    %5654 = vmatpush1.bf16.msra.mxu0 %v5304
    %5655 = vmatprep.subr.bf16.mxu0 %v5313
    %5656 = vmatpush1.bf16.msra.mxu0 %v5312
    %5657 = vmatprep.subr.bf16.mxu0 %v5321
    %5658 = vmatpush1.bf16.msra.mxu0 %v5320
    %5659 = vmatprep.subr.bf16.mxu0 %v5329
    %5660 = vmatpush1.bf16.msra.mxu0 %v5328
    %5661 = vmatprep.subr.bf16.mxu0 %v5337
    %5662 = vmatpush1.bf16.msra.mxu0 %v5336
    %5663 = vmatprep.subr.bf16.mxu0 %v5345
    %5664 = vmatpush1.bf16.msra.mxu0 %v5344
    %5665 = vmatprep.subr.bf16.mxu0 %v5353
    %5666 = vmatpush1.bf16.msra.mxu0 %v5352
    %5667 = vmatprep.subr.bf16.mxu0 %v5361
    %5668 = vmatpush1.bf16.msra.mxu0 %v5360
    %5669 = vmatprep.subr.bf16.mxu0 %v5369
    %5670 = vmatpush1.bf16.msra.mxu0 %v5368
    %5671 = vmatprep.subr.bf16.mxu0 %v5377
    %5672 = vmatpush1.bf16.msra.mxu0 %v5376
    %5673 = vmatprep.subr.bf16.mxu0 %v5385
    %5674 = vmatpush1.bf16.msra.mxu0 %v5384
    %5675 = vmatprep.subr.bf16.mxu0 %v5393
    %5676 = vmatpush1.bf16.msra.mxu0 %v5392
    %5677 = vmatprep.mubr.bf16.mxu0 %v4737
    %5678 = vmatmul.mubr.bf16.gmra.mrb[0].mxu0 %v4736
    %v5679 = vpop.f32.mrb[0].mxu0
    %v5680 = vadd.f32 0.0, %v5679
    %v5681 = vpop.f32.mrb[0].mxu0
    %v5682 = vadd.f32 0.0, %v5681
    %v5683 = vpop.f32.mrb[0].mxu0
    %v5684 = vpop.f32.mrb[0].mxu0
    %5685 = vdwg.mxu0
    %v5686 = vadd.f32 %v4746, %v5557
    %v5687 = vadd.f32 %v4747, %v5559
    %v5688 = vadd.f32 %v4748, %v5598
    %v5689 = vadd.f32 %v4749, %v5600
    %v5690 = vadd.f32 %v4750, %v5639
    %v5691 = vadd.f32 %v4751, %v5641
    %v5692 = vadd.f32 %v4752, %v5680
    %v5693 = vadd.f32 %v4753, %v5682
    %v5694 = vxor.u32 %v5686, 2147483648
    %v5695 = vxor.u32 %v5687, 2147483648
    %v5696 = vmul.f32 %v5694, 1.442695
    %v5697 = vpow.pop %v5696
    %v5698 = vmul.f32 %v5695, 1.442695
    %v5699 = vpow.pop %v5698
    %v5700 = vadd.f32 %v5697, 1.0
    %v5701 = vadd.f32 %v5699, 1.0
    %v5702 = vrcp.pop %v5700
    %v5703 = vmul.f32 1.0, %v5702
    %v5704 = vrcp.pop %v5701
    %v5705 = vmul.f32 1.0, %v5704
    %v5706 = vxor.u32 %v5688, 2147483648
    %v5707 = vxor.u32 %v5689, 2147483648
    %v5708 = vmul.f32 %v5706, 1.442695
    %v5709 = vpow.pop %v5708
    %v5710 = vmul.f32 %v5707, 1.442695
    %v5711 = vpow.pop %v5710
    %v5712 = vadd.f32 %v5709, 1.0
    %v5713 = vadd.f32 %v5711, 1.0
    %v5714 = vrcp.pop %v5712
    %v5715 = vmul.f32 1.0, %v5714
    %v5716 = vrcp.pop %v5713
    %v5717 = vmul.f32 1.0, %v5716
    %v5718 = vtanh.pop %v5690
    %v5719 = vtanh.pop %v5691
    %v5720 = vxor.u32 %v5692, 2147483648
    %v5721 = vxor.u32 %v5693, 2147483648
    %v5722 = vmul.f32 %v5720, 1.442695
    %v5723 = vpow.pop %v5722
    %v5724 = vmul.f32 %v5721, 1.442695
    %v5725 = vpow.pop %v5724
    %v5726 = vadd.f32 %v5723, 1.0
    %v5727 = vadd.f32 %v5725, 1.0
    %v5728 = vrcp.pop %v5726
    %v5729 = vmul.f32 1.0, %v5728
    %v5730 = vrcp.pop %v5727
    %v5731 = vmul.f32 1.0, %v5730
    %v5732 = vmul.f32 %v5715, %v4730
    %v5733 = vmul.f32 %v5717, %v4731
    %v5734 = vmul.f32 %v5703, %v5718
    %v5735 = vmul.f32 %v5705, %v5719
    %v5736 = vadd.f32 %v5732, %v5734
    %v5737 = vadd.f32 %v5733, %v5735
    %v5738 = vtanh.pop %v5736
    %v5739 = vtanh.pop %v5737
    %v5740 = vmul.f32 %v5729, %v5738
    %v5741 = vmul.f32 %v5731, %v5739
    %v5742 = vpack.c.bf16 %v5740, %v5740
    %v5743 = vpack.c.bf16 %v5741, %v5741
    %5744 = vst [vmem:[#allocation3 + $0x20] sm:$0xf] %v5742
    %5745 = vst [vmem:[#allocation3 + $0x28] sm:$0xf] %v5743
    %v5746 = vld [vmem:[%s593] sm:$0xff]
    %v5747 = vld [vmem:[%s593 + $0x8] sm:$0xff]
    %v5748 = vld [vmem:[%s593 + $0x10] sm:$0xff]
    %v5749 = vld [vmem:[%s593 + $0x18] sm:$0xff]
    %v5750 = vld [vmem:[%s593 + $0x20] sm:$0xff]
    %v5751 = vld [vmem:[%s593 + $0x28] sm:$0xff]
    %v5752 = vld [vmem:[%s593 + $0x30] sm:$0xff]
    %v5753 = vld [vmem:[%s593 + $0x38] sm:$0xff]
    %v5754 = vld [vmem:[#allocation9] sm:$0xff]
    %v5755 = vld [vmem:[#allocation9 + $0x8] sm:$0xff]
    %v5756 = vld [vmem:[#allocation9 + $0x10] sm:$0xff]
    %v5757 = vld [vmem:[#allocation9 + $0x18] sm:$0xff]
    %v5758 = vld [vmem:[#allocation9 + $0x20] sm:$0xff]
    %v5759 = vld [vmem:[#allocation9 + $0x28] sm:$0xff]
    %v5760 = vld [vmem:[#allocation9 + $0x30] sm:$0xff]
    %v5761 = vld [vmem:[#allocation9 + $0x38] sm:$0xff]
    %v5762 = vld [vmem:[#allocation9 + $0x40] sm:$0xff]
    %v5763 = vld [vmem:[#allocation9 + $0x48] sm:$0xff]
    %v5764 = vld [vmem:[#allocation9 + $0x50] sm:$0xff]
    %v5765 = vld [vmem:[#allocation9 + $0x58] sm:$0xff]
    %v5766 = vld [vmem:[#allocation9 + $0x60] sm:$0xff]
    %v5767 = vld [vmem:[#allocation9 + $0x68] sm:$0xff]
    %v5768 = vld [vmem:[#allocation9 + $0x70] sm:$0xff]
    %v5769 = vld [vmem:[#allocation9 + $0x78] sm:$0xff]
    %v5770 = vld [vmem:[#allocation9 + $0x80] sm:$0xff]
    %v5771 = vld [vmem:[#allocation9 + $0x88] sm:$0xff]
    %v5772 = vld [vmem:[#allocation9 + $0x90] sm:$0xff]
    %v5773 = vld [vmem:[#allocation9 + $0x98] sm:$0xff]
    %v5774 = vld [vmem:[#allocation9 + $0xa0] sm:$0xff]
    %v5775 = vld [vmem:[#allocation9 + $0xa8] sm:$0xff]
    %v5776 = vld [vmem:[#allocation9 + $0xb0] sm:$0xff]
    %v5777 = vld [vmem:[#allocation9 + $0xb8] sm:$0xff]
    %v5778 = vld [vmem:[#allocation9 + $0xc0] sm:$0xff]
    %v5779 = vld [vmem:[#allocation9 + $0xc8] sm:$0xff]
    %v5780 = vld [vmem:[#allocation9 + $0xd0] sm:$0xff]
    %v5781 = vld [vmem:[#allocation9 + $0xd8] sm:$0xff]
    %v5782 = vld [vmem:[#allocation9 + $0xe0] sm:$0xff]
    %v5783 = vld [vmem:[#allocation9 + $0xe8] sm:$0xff]
    %v5784 = vld [vmem:[#allocation9 + $0xf0] sm:$0xff]
    %v5785 = vld [vmem:[#allocation9 + $0xf8] sm:$0xff]
    %v5786 = vld [vmem:[#allocation9 + $0x100] sm:$0xff]
    %v5787 = vld [vmem:[#allocation9 + $0x108] sm:$0xff]
    %v5788 = vld [vmem:[#allocation9 + $0x110] sm:$0xff]
    %v5789 = vld [vmem:[#allocation9 + $0x118] sm:$0xff]
    %v5790 = vld [vmem:[#allocation9 + $0x120] sm:$0xff]
    %v5791 = vld [vmem:[#allocation9 + $0x128] sm:$0xff]
    %v5792 = vld [vmem:[#allocation9 + $0x130] sm:$0xff]
    %v5793 = vld [vmem:[#allocation9 + $0x138] sm:$0xff]
    %v5794 = vld [vmem:[#allocation9 + $0x140] sm:$0xff]
    %v5795 = vld [vmem:[#allocation9 + $0x148] sm:$0xff]
    %v5796 = vld [vmem:[#allocation9 + $0x150] sm:$0xff]
    %v5797 = vld [vmem:[#allocation9 + $0x158] sm:$0xff]
    %v5798 = vld [vmem:[#allocation9 + $0x160] sm:$0xff]
    %v5799 = vld [vmem:[#allocation9 + $0x168] sm:$0xff]
    %v5800 = vld [vmem:[#allocation9 + $0x170] sm:$0xff]
    %v5801 = vld [vmem:[#allocation9 + $0x178] sm:$0xff]
    %v5802 = vld [vmem:[#allocation9 + $0x180] sm:$0xff]
    %v5803 = vld [vmem:[#allocation9 + $0x188] sm:$0xff]
    %v5804 = vld [vmem:[#allocation9 + $0x190] sm:$0xff]
    %v5805 = vld [vmem:[#allocation9 + $0x198] sm:$0xff]
    %v5806 = vld [vmem:[#allocation9 + $0x1a0] sm:$0xff]
    %v5807 = vld [vmem:[#allocation9 + $0x1a8] sm:$0xff]
    %v5808 = vld [vmem:[#allocation9 + $0x1b0] sm:$0xff]
    %v5809 = vld [vmem:[#allocation9 + $0x1b8] sm:$0xff]
    %v5810 = vld [vmem:[#allocation9 + $0x1c0] sm:$0xff]
    %v5811 = vld [vmem:[#allocation9 + $0x1c8] sm:$0xff]
    %v5812 = vld [vmem:[#allocation9 + $0x1d0] sm:$0xff]
    %v5813 = vld [vmem:[#allocation9 + $0x1d8] sm:$0xff]
    %v5814 = vld [vmem:[#allocation9 + $0x1e0] sm:$0xff]
    %v5815 = vld [vmem:[#allocation9 + $0x1e8] sm:$0xff]
    %v5816 = vld [vmem:[#allocation9 + $0x1f0] sm:$0xff]
    %v5817 = vld [vmem:[#allocation9 + $0x1f8] sm:$0xff]
    %v5818 = vld [vmem:[#allocation9 + $0x200] sm:$0xff]
    %v5819 = vld [vmem:[#allocation9 + $0x208] sm:$0xff]
    %v5820 = vld [vmem:[#allocation9 + $0x210] sm:$0xff]
    %v5821 = vld [vmem:[#allocation9 + $0x218] sm:$0xff]
    %v5822 = vld [vmem:[#allocation9 + $0x220] sm:$0xff]
    %v5823 = vld [vmem:[#allocation9 + $0x228] sm:$0xff]
    %v5824 = vld [vmem:[#allocation9 + $0x230] sm:$0xff]
    %v5825 = vld [vmem:[#allocation9 + $0x238] sm:$0xff]
    %v5826 = vld [vmem:[#allocation9 + $0x240] sm:$0xff]
    %v5827 = vld [vmem:[#allocation9 + $0x248] sm:$0xff]
    %v5828 = vld [vmem:[#allocation9 + $0x250] sm:$0xff]
    %v5829 = vld [vmem:[#allocation9 + $0x258] sm:$0xff]
    %v5830 = vld [vmem:[#allocation9 + $0x260] sm:$0xff]
    %v5831 = vld [vmem:[#allocation9 + $0x268] sm:$0xff]
    %v5832 = vld [vmem:[#allocation9 + $0x270] sm:$0xff]
    %v5833 = vld [vmem:[#allocation9 + $0x278] sm:$0xff]
    %v5834 = vld [vmem:[#allocation9 + $0x280] sm:$0xff]
    %v5835 = vld [vmem:[#allocation9 + $0x288] sm:$0xff]
    %v5836 = vld [vmem:[#allocation9 + $0x290] sm:$0xff]
    %v5837 = vld [vmem:[#allocation9 + $0x298] sm:$0xff]
    %v5838 = vld [vmem:[#allocation9 + $0x2a0] sm:$0xff]
    %v5839 = vld [vmem:[#allocation9 + $0x2a8] sm:$0xff]
    %v5840 = vld [vmem:[#allocation9 + $0x2b0] sm:$0xff]
    %v5841 = vld [vmem:[#allocation9 + $0x2b8] sm:$0xff]
    %v5842 = vld [vmem:[#allocation9 + $0x2c0] sm:$0xff]
    %v5843 = vld [vmem:[#allocation9 + $0x2c8] sm:$0xff]
    %v5844 = vld [vmem:[#allocation9 + $0x2d0] sm:$0xff]
    %v5845 = vld [vmem:[#allocation9 + $0x2d8] sm:$0xff]
    %v5846 = vld [vmem:[#allocation9 + $0x2e0] sm:$0xff]
    %v5847 = vld [vmem:[#allocation9 + $0x2e8] sm:$0xff]
    %v5848 = vld [vmem:[#allocation9 + $0x2f0] sm:$0xff]
    %v5849 = vld [vmem:[#allocation9 + $0x2f8] sm:$0xff]
    %v5850 = vld [vmem:[#allocation9 + $0x300] sm:$0xff]
    %v5851 = vld [vmem:[#allocation9 + $0x308] sm:$0xff]
    %v5852 = vld [vmem:[#allocation9 + $0x310] sm:$0xff]
    %v5853 = vld [vmem:[#allocation9 + $0x318] sm:$0xff]
    %v5854 = vld [vmem:[#allocation9 + $0x320] sm:$0xff]
    %v5855 = vld [vmem:[#allocation9 + $0x328] sm:$0xff]
    %v5856 = vld [vmem:[#allocation9 + $0x330] sm:$0xff]
    %v5857 = vld [vmem:[#allocation9 + $0x338] sm:$0xff]
    %v5858 = vld [vmem:[#allocation9 + $0x340] sm:$0xff]
    %v5859 = vld [vmem:[#allocation9 + $0x348] sm:$0xff]
    %v5860 = vld [vmem:[#allocation9 + $0x350] sm:$0xff]
    %v5861 = vld [vmem:[#allocation9 + $0x358] sm:$0xff]
    %v5862 = vld [vmem:[#allocation9 + $0x360] sm:$0xff]
    %v5863 = vld [vmem:[#allocation9 + $0x368] sm:$0xff]
    %v5864 = vld [vmem:[#allocation9 + $0x370] sm:$0xff]
    %v5865 = vld [vmem:[#allocation9 + $0x378] sm:$0xff]
    %v5866 = vld [vmem:[#allocation9 + $0x380] sm:$0xff]
    %v5867 = vld [vmem:[#allocation9 + $0x388] sm:$0xff]
    %v5868 = vld [vmem:[#allocation9 + $0x390] sm:$0xff]
    %v5869 = vld [vmem:[#allocation9 + $0x398] sm:$0xff]
    %v5870 = vld [vmem:[#allocation9 + $0x3a0] sm:$0xff]
    %v5871 = vld [vmem:[#allocation9 + $0x3a8] sm:$0xff]
    %v5872 = vld [vmem:[#allocation9 + $0x3b0] sm:$0xff]
    %v5873 = vld [vmem:[#allocation9 + $0x3b8] sm:$0xff]
    %v5874 = vld [vmem:[#allocation9 + $0x3c0] sm:$0xff]
    %v5875 = vld [vmem:[#allocation9 + $0x3c8] sm:$0xff]
    %v5876 = vld [vmem:[#allocation9 + $0x3d0] sm:$0xff]
    %v5877 = vld [vmem:[#allocation9 + $0x3d8] sm:$0xff]
    %v5878 = vld [vmem:[#allocation9 + $0x3e0] sm:$0xff]
    %v5879 = vld [vmem:[#allocation9 + $0x3e8] sm:$0xff]
    %v5880 = vld [vmem:[#allocation9 + $0x3f0] sm:$0xff]
    %v5881 = vld [vmem:[#allocation9 + $0x3f8] sm:$0xff]
    %v6010 = vunpack.c.l.b16 %v5754
    %v6011 = vunpack.c.h.b16 %v5754
    %v6012 = vunpack.c.l.b16 %v5755
    %v6013 = vunpack.c.h.b16 %v5755
    %v6014 = vunpack.c.l.b16 %v5756
    %v6015 = vunpack.c.h.b16 %v5756
    %v6016 = vunpack.c.l.b16 %v5757
    %v6017 = vunpack.c.h.b16 %v5757
    %v6018 = vunpack.c.l.b16 %v5758
    %v6019 = vunpack.c.h.b16 %v5758
    %v6020 = vunpack.c.l.b16 %v5759
    %v6021 = vunpack.c.h.b16 %v5759
    %v6022 = vunpack.c.l.b16 %v5760
    %v6023 = vunpack.c.h.b16 %v5760
    %v6024 = vunpack.c.l.b16 %v5761
    %v6025 = vunpack.c.h.b16 %v5761
    %v6026 = vunpack.c.l.b16 %v5762
    %v6027 = vunpack.c.h.b16 %v5762
    %v6028 = vunpack.c.l.b16 %v5763
    %v6029 = vunpack.c.h.b16 %v5763
    %v6030 = vunpack.c.l.b16 %v5764
    %v6031 = vunpack.c.h.b16 %v5764
    %v6032 = vunpack.c.l.b16 %v5765
    %v6033 = vunpack.c.h.b16 %v5765
    %v6034 = vunpack.c.l.b16 %v5766
    %v6035 = vunpack.c.h.b16 %v5766
    %v6036 = vunpack.c.l.b16 %v5767
    %v6037 = vunpack.c.h.b16 %v5767
    %v6038 = vunpack.c.l.b16 %v5768
    %v6039 = vunpack.c.h.b16 %v5768
    %v6040 = vunpack.c.l.b16 %v5769
    %v6041 = vunpack.c.h.b16 %v5769
    %v6042 = vunpack.c.l.b16 %v5770
    %v6043 = vunpack.c.h.b16 %v5770
    %v6044 = vunpack.c.l.b16 %v5771
    %v6045 = vunpack.c.h.b16 %v5771
    %v6046 = vunpack.c.l.b16 %v5772
    %v6047 = vunpack.c.h.b16 %v5772
    %v6048 = vunpack.c.l.b16 %v5773
    %v6049 = vunpack.c.h.b16 %v5773
    %v6050 = vunpack.c.l.b16 %v5774
    %v6051 = vunpack.c.h.b16 %v5774
    %v6052 = vunpack.c.l.b16 %v5775
    %v6053 = vunpack.c.h.b16 %v5775
    %v6054 = vunpack.c.l.b16 %v5776
    %v6055 = vunpack.c.h.b16 %v5776
    %v6056 = vunpack.c.l.b16 %v5777
    %v6057 = vunpack.c.h.b16 %v5777
    %v6058 = vunpack.c.l.b16 %v5778
    %v6059 = vunpack.c.h.b16 %v5778
    %v6060 = vunpack.c.l.b16 %v5779
    %v6061 = vunpack.c.h.b16 %v5779
    %v6062 = vunpack.c.l.b16 %v5780
    %v6063 = vunpack.c.h.b16 %v5780
    %v6064 = vunpack.c.l.b16 %v5781
    %v6065 = vunpack.c.h.b16 %v5781
    %v6066 = vunpack.c.l.b16 %v5782
    %v6067 = vunpack.c.h.b16 %v5782
    %v6068 = vunpack.c.l.b16 %v5783
    %v6069 = vunpack.c.h.b16 %v5783
    %v6070 = vunpack.c.l.b16 %v5784
    %v6071 = vunpack.c.h.b16 %v5784
    %v6072 = vunpack.c.l.b16 %v5785
    %v6073 = vunpack.c.h.b16 %v5785
    %v6074 = vunpack.c.l.b16 %v5786
    %v6075 = vunpack.c.h.b16 %v5786
    %v6076 = vunpack.c.l.b16 %v5787
    %v6077 = vunpack.c.h.b16 %v5787
    %v6078 = vunpack.c.l.b16 %v5788
    %v6079 = vunpack.c.h.b16 %v5788
    %v6080 = vunpack.c.l.b16 %v5789
    %v6081 = vunpack.c.h.b16 %v5789
    %v6082 = vunpack.c.l.b16 %v5790
    %v6083 = vunpack.c.h.b16 %v5790
    %v6084 = vunpack.c.l.b16 %v5791
    %v6085 = vunpack.c.h.b16 %v5791
    %v6086 = vunpack.c.l.b16 %v5792
    %v6087 = vunpack.c.h.b16 %v5792
    %v6088 = vunpack.c.l.b16 %v5793
    %v6089 = vunpack.c.h.b16 %v5793
    %v6090 = vunpack.c.l.b16 %v5794
    %v6091 = vunpack.c.h.b16 %v5794
    %v6092 = vunpack.c.l.b16 %v5795
    %v6093 = vunpack.c.h.b16 %v5795
    %v6094 = vunpack.c.l.b16 %v5796
    %v6095 = vunpack.c.h.b16 %v5796
    %v6096 = vunpack.c.l.b16 %v5797
    %v6097 = vunpack.c.h.b16 %v5797
    %v6098 = vunpack.c.l.b16 %v5798
    %v6099 = vunpack.c.h.b16 %v5798
    %v6100 = vunpack.c.l.b16 %v5799
    %v6101 = vunpack.c.h.b16 %v5799
    %v6102 = vunpack.c.l.b16 %v5800
    %v6103 = vunpack.c.h.b16 %v5800
    %v6104 = vunpack.c.l.b16 %v5801
    %v6105 = vunpack.c.h.b16 %v5801
    %v6106 = vunpack.c.l.b16 %v5802
    %v6107 = vunpack.c.h.b16 %v5802
    %v6108 = vunpack.c.l.b16 %v5803
    %v6109 = vunpack.c.h.b16 %v5803
    %v6110 = vunpack.c.l.b16 %v5804
    %v6111 = vunpack.c.h.b16 %v5804
    %v6112 = vunpack.c.l.b16 %v5805
    %v6113 = vunpack.c.h.b16 %v5805
    %v6114 = vunpack.c.l.b16 %v5806
    %v6115 = vunpack.c.h.b16 %v5806
    %v6116 = vunpack.c.l.b16 %v5807
    %v6117 = vunpack.c.h.b16 %v5807
    %v6118 = vunpack.c.l.b16 %v5808
    %v6119 = vunpack.c.h.b16 %v5808
    %v6120 = vunpack.c.l.b16 %v5809
    %v6121 = vunpack.c.h.b16 %v5809
    %v6122 = vunpack.c.l.b16 %v5810
    %v6123 = vunpack.c.h.b16 %v5810
    %v6124 = vunpack.c.l.b16 %v5811
    %v6125 = vunpack.c.h.b16 %v5811
    %v6126 = vunpack.c.l.b16 %v5812
    %v6127 = vunpack.c.h.b16 %v5812
    %v6128 = vunpack.c.l.b16 %v5813
    %v6129 = vunpack.c.h.b16 %v5813
    %v6130 = vunpack.c.l.b16 %v5814
    %v6131 = vunpack.c.h.b16 %v5814
    %v6132 = vunpack.c.l.b16 %v5815
    %v6133 = vunpack.c.h.b16 %v5815
    %v6134 = vunpack.c.l.b16 %v5816
    %v6135 = vunpack.c.h.b16 %v5816
    %v6136 = vunpack.c.l.b16 %v5817
    %v6137 = vunpack.c.h.b16 %v5817
    %v6138 = vunpack.c.l.b16 %v5818
    %v6139 = vunpack.c.h.b16 %v5818
    %v6140 = vunpack.c.l.b16 %v5819
    %v6141 = vunpack.c.h.b16 %v5819
    %v6142 = vunpack.c.l.b16 %v5820
    %v6143 = vunpack.c.h.b16 %v5820
    %v6144 = vunpack.c.l.b16 %v5821
    %v6145 = vunpack.c.h.b16 %v5821
    %v6146 = vunpack.c.l.b16 %v5822
    %v6147 = vunpack.c.h.b16 %v5822
    %v6148 = vunpack.c.l.b16 %v5823
    %v6149 = vunpack.c.h.b16 %v5823
    %v6150 = vunpack.c.l.b16 %v5824
    %v6151 = vunpack.c.h.b16 %v5824
    %v6152 = vunpack.c.l.b16 %v5825
    %v6153 = vunpack.c.h.b16 %v5825
    %v6154 = vunpack.c.l.b16 %v5826
    %v6155 = vunpack.c.h.b16 %v5826
    %v6156 = vunpack.c.l.b16 %v5827
    %v6157 = vunpack.c.h.b16 %v5827
    %v6158 = vunpack.c.l.b16 %v5828
    %v6159 = vunpack.c.h.b16 %v5828
    %v6160 = vunpack.c.l.b16 %v5829
    %v6161 = vunpack.c.h.b16 %v5829
    %v6162 = vunpack.c.l.b16 %v5830
    %v6163 = vunpack.c.h.b16 %v5830
    %v6164 = vunpack.c.l.b16 %v5831
    %v6165 = vunpack.c.h.b16 %v5831
    %v6166 = vunpack.c.l.b16 %v5832
    %v6167 = vunpack.c.h.b16 %v5832
    %v6168 = vunpack.c.l.b16 %v5833
    %v6169 = vunpack.c.h.b16 %v5833
    %v6170 = vunpack.c.l.b16 %v5834
    %v6171 = vunpack.c.h.b16 %v5834
    %v6172 = vunpack.c.l.b16 %v5835
    %v6173 = vunpack.c.h.b16 %v5835
    %v6174 = vunpack.c.l.b16 %v5836
    %v6175 = vunpack.c.h.b16 %v5836
    %v6176 = vunpack.c.l.b16 %v5837
    %v6177 = vunpack.c.h.b16 %v5837
    %v6178 = vunpack.c.l.b16 %v5838
    %v6179 = vunpack.c.h.b16 %v5838
    %v6180 = vunpack.c.l.b16 %v5839
    %v6181 = vunpack.c.h.b16 %v5839
    %v6182 = vunpack.c.l.b16 %v5840
    %v6183 = vunpack.c.h.b16 %v5840
    %v6184 = vunpack.c.l.b16 %v5841
    %v6185 = vunpack.c.h.b16 %v5841
    %v6186 = vunpack.c.l.b16 %v5842
    %v6187 = vunpack.c.h.b16 %v5842
    %v6188 = vunpack.c.l.b16 %v5843
    %v6189 = vunpack.c.h.b16 %v5843
    %v6190 = vunpack.c.l.b16 %v5844
    %v6191 = vunpack.c.h.b16 %v5844
    %v6192 = vunpack.c.l.b16 %v5845
    %v6193 = vunpack.c.h.b16 %v5845
    %v6194 = vunpack.c.l.b16 %v5846
    %v6195 = vunpack.c.h.b16 %v5846
    %v6196 = vunpack.c.l.b16 %v5847
    %v6197 = vunpack.c.h.b16 %v5847
    %v6198 = vunpack.c.l.b16 %v5848
    %v6199 = vunpack.c.h.b16 %v5848
    %v6200 = vunpack.c.l.b16 %v5849
    %v6201 = vunpack.c.h.b16 %v5849
    %v6202 = vunpack.c.l.b16 %v5850
    %v6203 = vunpack.c.h.b16 %v5850
    %v6204 = vunpack.c.l.b16 %v5851
    %v6205 = vunpack.c.h.b16 %v5851
    %v6206 = vunpack.c.l.b16 %v5852
    %v6207 = vunpack.c.h.b16 %v5852
    %v6208 = vunpack.c.l.b16 %v5853
    %v6209 = vunpack.c.h.b16 %v5853
    %v6210 = vunpack.c.l.b16 %v5854
    %v6211 = vunpack.c.h.b16 %v5854
    %v6212 = vunpack.c.l.b16 %v5855
    %v6213 = vunpack.c.h.b16 %v5855
    %v6214 = vunpack.c.l.b16 %v5856
    %v6215 = vunpack.c.h.b16 %v5856
    %v6216 = vunpack.c.l.b16 %v5857
    %v6217 = vunpack.c.h.b16 %v5857
    %v6218 = vunpack.c.l.b16 %v5858
    %v6219 = vunpack.c.h.b16 %v5858
    %v6220 = vunpack.c.l.b16 %v5859
    %v6221 = vunpack.c.h.b16 %v5859
    %v6222 = vunpack.c.l.b16 %v5860
    %v6223 = vunpack.c.h.b16 %v5860
    %v6224 = vunpack.c.l.b16 %v5861
    %v6225 = vunpack.c.h.b16 %v5861
    %v6226 = vunpack.c.l.b16 %v5862
    %v6227 = vunpack.c.h.b16 %v5862
    %v6228 = vunpack.c.l.b16 %v5863
    %v6229 = vunpack.c.h.b16 %v5863
    %v6230 = vunpack.c.l.b16 %v5864
    %v6231 = vunpack.c.h.b16 %v5864
    %v6232 = vunpack.c.l.b16 %v5865
    %v6233 = vunpack.c.h.b16 %v5865
    %v6234 = vunpack.c.l.b16 %v5866
    %v6235 = vunpack.c.h.b16 %v5866
    %v6236 = vunpack.c.l.b16 %v5867
    %v6237 = vunpack.c.h.b16 %v5867
    %v6238 = vunpack.c.l.b16 %v5868
    %v6239 = vunpack.c.h.b16 %v5868
    %v6240 = vunpack.c.l.b16 %v5869
    %v6241 = vunpack.c.h.b16 %v5869
    %v6242 = vunpack.c.l.b16 %v5870
    %v6243 = vunpack.c.h.b16 %v5870
    %v6244 = vunpack.c.l.b16 %v5871
    %v6245 = vunpack.c.h.b16 %v5871
    %v6246 = vunpack.c.l.b16 %v5872
    %v6247 = vunpack.c.h.b16 %v5872
    %v6248 = vunpack.c.l.b16 %v5873
    %v6249 = vunpack.c.h.b16 %v5873
    %v6250 = vunpack.c.l.b16 %v5874
    %v6251 = vunpack.c.h.b16 %v5874
    %v6252 = vunpack.c.l.b16 %v5875
    %v6253 = vunpack.c.h.b16 %v5875
    %v6254 = vunpack.c.l.b16 %v5876
    %v6255 = vunpack.c.h.b16 %v5876
    %v6256 = vunpack.c.l.b16 %v5877
    %v6257 = vunpack.c.h.b16 %v5877
    %v6258 = vunpack.c.l.b16 %v5878
    %v6259 = vunpack.c.h.b16 %v5878
    %v6260 = vunpack.c.l.b16 %v5879
    %v6261 = vunpack.c.h.b16 %v5879
    %v6262 = vunpack.c.l.b16 %v5880
    %v6263 = vunpack.c.h.b16 %v5880
    %v6264 = vunpack.c.l.b16 %v5881
    %v6265 = vunpack.c.h.b16 %v5881
    %v6266 = vpack.c.b16 %v6018, %v6010
    %v6267 = vpack.c.b16 %v6019, %v6011
    %v6268 = vpack.c.b16 %v6020, %v6012
    %v6269 = vpack.c.b16 %v6021, %v6013
    %v6270 = vpack.c.b16 %v6022, %v6014
    %v6271 = vpack.c.b16 %v6023, %v6015
    %v6272 = vpack.c.b16 %v6024, %v6016
    %v6273 = vpack.c.b16 %v6025, %v6017
    %v6274 = vpack.c.b16 %v6034, %v6026
    %v6275 = vpack.c.b16 %v6035, %v6027
    %v6276 = vpack.c.b16 %v6036, %v6028
    %v6277 = vpack.c.b16 %v6037, %v6029
    %v6278 = vpack.c.b16 %v6038, %v6030
    %v6279 = vpack.c.b16 %v6039, %v6031
    %v6280 = vpack.c.b16 %v6040, %v6032
    %v6281 = vpack.c.b16 %v6041, %v6033
    %v6282 = vpack.c.b16 %v6050, %v6042
    %v6283 = vpack.c.b16 %v6051, %v6043
    %v6284 = vpack.c.b16 %v6052, %v6044
    %v6285 = vpack.c.b16 %v6053, %v6045
    %v6286 = vpack.c.b16 %v6054, %v6046
    %v6287 = vpack.c.b16 %v6055, %v6047
    %v6288 = vpack.c.b16 %v6056, %v6048
    %v6289 = vpack.c.b16 %v6057, %v6049
    %v6290 = vpack.c.b16 %v6066, %v6058
    %v6291 = vpack.c.b16 %v6067, %v6059
    %v6292 = vpack.c.b16 %v6068, %v6060
    %v6293 = vpack.c.b16 %v6069, %v6061
    %v6294 = vpack.c.b16 %v6070, %v6062
    %v6295 = vpack.c.b16 %v6071, %v6063
    %v6296 = vpack.c.b16 %v6072, %v6064
    %v6297 = vpack.c.b16 %v6073, %v6065
    %v6298 = vpack.c.b16 %v6082, %v6074
    %v6299 = vpack.c.b16 %v6083, %v6075
    %v6300 = vpack.c.b16 %v6084, %v6076
    %v6301 = vpack.c.b16 %v6085, %v6077
    %v6302 = vpack.c.b16 %v6086, %v6078
    %v6303 = vpack.c.b16 %v6087, %v6079
    %v6304 = vpack.c.b16 %v6088, %v6080
    %v6305 = vpack.c.b16 %v6089, %v6081
    %v6306 = vpack.c.b16 %v6098, %v6090
    %v6307 = vpack.c.b16 %v6099, %v6091
    %v6308 = vpack.c.b16 %v6100, %v6092
    %v6309 = vpack.c.b16 %v6101, %v6093
    %v6310 = vpack.c.b16 %v6102, %v6094
    %v6311 = vpack.c.b16 %v6103, %v6095
    %v6312 = vpack.c.b16 %v6104, %v6096
    %v6313 = vpack.c.b16 %v6105, %v6097
    %v6314 = vpack.c.b16 %v6114, %v6106
    %v6315 = vpack.c.b16 %v6115, %v6107
    %v6316 = vpack.c.b16 %v6116, %v6108
    %v6317 = vpack.c.b16 %v6117, %v6109
    %v6318 = vpack.c.b16 %v6118, %v6110
    %v6319 = vpack.c.b16 %v6119, %v6111
    %v6320 = vpack.c.b16 %v6120, %v6112
    %v6321 = vpack.c.b16 %v6121, %v6113
    %v6322 = vpack.c.b16 %v6130, %v6122
    %v6323 = vpack.c.b16 %v6131, %v6123
    %v6324 = vpack.c.b16 %v6132, %v6124
    %v6325 = vpack.c.b16 %v6133, %v6125
    %v6326 = vpack.c.b16 %v6134, %v6126
    %v6327 = vpack.c.b16 %v6135, %v6127
    %v6328 = vpack.c.b16 %v6136, %v6128
    %v6329 = vpack.c.b16 %v6137, %v6129
    %v6330 = vpack.c.b16 %v6146, %v6138
    %v6331 = vpack.c.b16 %v6147, %v6139
    %v6332 = vpack.c.b16 %v6148, %v6140
    %v6333 = vpack.c.b16 %v6149, %v6141
    %v6334 = vpack.c.b16 %v6150, %v6142
    %v6335 = vpack.c.b16 %v6151, %v6143
    %v6336 = vpack.c.b16 %v6152, %v6144
    %v6337 = vpack.c.b16 %v6153, %v6145
    %v6338 = vpack.c.b16 %v6162, %v6154
    %v6339 = vpack.c.b16 %v6163, %v6155
    %v6340 = vpack.c.b16 %v6164, %v6156
    %v6341 = vpack.c.b16 %v6165, %v6157
    %v6342 = vpack.c.b16 %v6166, %v6158
    %v6343 = vpack.c.b16 %v6167, %v6159
    %v6344 = vpack.c.b16 %v6168, %v6160
    %v6345 = vpack.c.b16 %v6169, %v6161
    %v6346 = vpack.c.b16 %v6178, %v6170
    %v6347 = vpack.c.b16 %v6179, %v6171
    %v6348 = vpack.c.b16 %v6180, %v6172
    %v6349 = vpack.c.b16 %v6181, %v6173
    %v6350 = vpack.c.b16 %v6182, %v6174
    %v6351 = vpack.c.b16 %v6183, %v6175
    %v6352 = vpack.c.b16 %v6184, %v6176
    %v6353 = vpack.c.b16 %v6185, %v6177
    %v6354 = vpack.c.b16 %v6194, %v6186
    %v6355 = vpack.c.b16 %v6195, %v6187
    %v6356 = vpack.c.b16 %v6196, %v6188
    %v6357 = vpack.c.b16 %v6197, %v6189
    %v6358 = vpack.c.b16 %v6198, %v6190
    %v6359 = vpack.c.b16 %v6199, %v6191
    %v6360 = vpack.c.b16 %v6200, %v6192
    %v6361 = vpack.c.b16 %v6201, %v6193
    %v6362 = vpack.c.b16 %v6210, %v6202
    %v6363 = vpack.c.b16 %v6211, %v6203
    %v6364 = vpack.c.b16 %v6212, %v6204
    %v6365 = vpack.c.b16 %v6213, %v6205
    %v6366 = vpack.c.b16 %v6214, %v6206
    %v6367 = vpack.c.b16 %v6215, %v6207
    %v6368 = vpack.c.b16 %v6216, %v6208
    %v6369 = vpack.c.b16 %v6217, %v6209
    %v6370 = vpack.c.b16 %v6226, %v6218
    %v6371 = vpack.c.b16 %v6227, %v6219
    %v6372 = vpack.c.b16 %v6228, %v6220
    %v6373 = vpack.c.b16 %v6229, %v6221
    %v6374 = vpack.c.b16 %v6230, %v6222
    %v6375 = vpack.c.b16 %v6231, %v6223
    %v6376 = vpack.c.b16 %v6232, %v6224
    %v6377 = vpack.c.b16 %v6233, %v6225
    %v6378 = vpack.c.b16 %v6242, %v6234
    %v6379 = vpack.c.b16 %v6243, %v6235
    %v6380 = vpack.c.b16 %v6244, %v6236
    %v6381 = vpack.c.b16 %v6245, %v6237
    %v6382 = vpack.c.b16 %v6246, %v6238
    %v6383 = vpack.c.b16 %v6247, %v6239
    %v6384 = vpack.c.b16 %v6248, %v6240
    %v6385 = vpack.c.b16 %v6249, %v6241
    %v6386 = vpack.c.b16 %v6258, %v6250
    %v6387 = vpack.c.b16 %v6259, %v6251
    %v6388 = vpack.c.b16 %v6260, %v6252
    %v6389 = vpack.c.b16 %v6261, %v6253
    %v6390 = vpack.c.b16 %v6262, %v6254
    %v6391 = vpack.c.b16 %v6263, %v6255
    %v6392 = vpack.c.b16 %v6264, %v6256
    %v6393 = vpack.c.b16 %v6265, %v6257
    %6522 = vmatprep.subr.bf16.mxu0 %v6267
    %6523 = vmatpush1.bf16.msra.mxu0 %v6266
    %6524 = vmatprep.subr.bf16.mxu0 %v6275
    %6525 = vmatpush1.bf16.msra.mxu0 %v6274
    %6526 = vmatprep.subr.bf16.mxu0 %v6283
    %6527 = vmatpush1.bf16.msra.mxu0 %v6282
    %6528 = vmatprep.subr.bf16.mxu0 %v6291
    %6529 = vmatpush1.bf16.msra.mxu0 %v6290
    %6530 = vmatprep.subr.bf16.mxu0 %v6299
    %6531 = vmatpush1.bf16.msra.mxu0 %v6298
    %6532 = vmatprep.subr.bf16.mxu0 %v6307
    %6533 = vmatpush1.bf16.msra.mxu0 %v6306
    %6534 = vmatprep.subr.bf16.mxu0 %v6315
    %6535 = vmatpush1.bf16.msra.mxu0 %v6314
    %6536 = vmatprep.subr.bf16.mxu0 %v6323
    %6537 = vmatpush1.bf16.msra.mxu0 %v6322
    %6538 = vmatprep.subr.bf16.mxu0 %v6331
    %6539 = vmatpush1.bf16.msra.mxu0 %v6330
    %6540 = vmatprep.subr.bf16.mxu0 %v6339
    %6541 = vmatpush1.bf16.msra.mxu0 %v6338
    %6542 = vmatprep.subr.bf16.mxu0 %v6347
    %6543 = vmatpush1.bf16.msra.mxu0 %v6346
    %6544 = vmatprep.subr.bf16.mxu0 %v6355
    %6545 = vmatpush1.bf16.msra.mxu0 %v6354
    %6546 = vmatprep.subr.bf16.mxu0 %v6363
    %6547 = vmatpush1.bf16.msra.mxu0 %v6362
    %6548 = vmatprep.subr.bf16.mxu0 %v6371
    %6549 = vmatpush1.bf16.msra.mxu0 %v6370
    %6550 = vmatprep.subr.bf16.mxu0 %v6379
    %6551 = vmatpush1.bf16.msra.mxu0 %v6378
    %6552 = vmatprep.subr.bf16.mxu0 %v6387
    %6553 = vmatpush1.bf16.msra.mxu0 %v6386
    %6554 = vmatprep.mubr.bf16.mxu0 %v5743
    %6555 = vmatmul.mubr.bf16.gmra.mrb[0].mxu0 %v5742
    %v6556 = vpop.f32.mrb[0].mxu0
    %v6557 = vadd.f32 0.0, %v6556
    %v6558 = vpop.f32.mrb[0].mxu0
    %v6559 = vadd.f32 0.0, %v6558
    %v6560 = vpop.f32.mrb[0].mxu0
    %v6561 = vpop.f32.mrb[0].mxu0
    %6562 = vdwg.mxu0
    %6563 = vmatprep.subr.bf16.mxu0 %v6269
    %6564 = vmatpush1.bf16.msra.mxu0 %v6268
    %6565 = vmatprep.subr.bf16.mxu0 %v6277
    %6566 = vmatpush1.bf16.msra.mxu0 %v6276
    %6567 = vmatprep.subr.bf16.mxu0 %v6285
    %6568 = vmatpush1.bf16.msra.mxu0 %v6284
    %6569 = vmatprep.subr.bf16.mxu0 %v6293
    %6570 = vmatpush1.bf16.msra.mxu0 %v6292
    %6571 = vmatprep.subr.bf16.mxu0 %v6301
    %6572 = vmatpush1.bf16.msra.mxu0 %v6300
    %6573 = vmatprep.subr.bf16.mxu0 %v6309
    %6574 = vmatpush1.bf16.msra.mxu0 %v6308
    %6575 = vmatprep.subr.bf16.mxu0 %v6317
    %6576 = vmatpush1.bf16.msra.mxu0 %v6316
    %6577 = vmatprep.subr.bf16.mxu0 %v6325
    %6578 = vmatpush1.bf16.msra.mxu0 %v6324
    %6579 = vmatprep.subr.bf16.mxu0 %v6333
    %6580 = vmatpush1.bf16.msra.mxu0 %v6332
    %6581 = vmatprep.subr.bf16.mxu0 %v6341
    %6582 = vmatpush1.bf16.msra.mxu0 %v6340
    %6583 = vmatprep.subr.bf16.mxu0 %v6349
    %6584 = vmatpush1.bf16.msra.mxu0 %v6348
    %6585 = vmatprep.subr.bf16.mxu0 %v6357
    %6586 = vmatpush1.bf16.msra.mxu0 %v6356
    %6587 = vmatprep.subr.bf16.mxu0 %v6365
    %6588 = vmatpush1.bf16.msra.mxu0 %v6364
    %6589 = vmatprep.subr.bf16.mxu0 %v6373
    %6590 = vmatpush1.bf16.msra.mxu0 %v6372
    %6591 = vmatprep.subr.bf16.mxu0 %v6381
    %6592 = vmatpush1.bf16.msra.mxu0 %v6380
    %6593 = vmatprep.subr.bf16.mxu0 %v6389
    %6594 = vmatpush1.bf16.msra.mxu0 %v6388
    %6595 = vmatprep.mubr.bf16.mxu0 %v5743
    %6596 = vmatmul.mubr.bf16.gmra.mrb[0].mxu0 %v5742
    %v6597 = vpop.f32.mrb[0].mxu0
    %v6598 = vadd.f32 0.0, %v6597
    %v6599 = vpop.f32.mrb[0].mxu0
    %v6600 = vadd.f32 0.0, %v6599
    %v6601 = vpop.f32.mrb[0].mxu0
    %v6602 = vpop.f32.mrb[0].mxu0
    %6603 = vdwg.mxu0
    %6604 = vmatprep.subr.bf16.mxu0 %v6271
    %6605 = vmatpush1.bf16.msra.mxu0 %v6270
    %6606 = vmatprep.subr.bf16.mxu0 %v6279
    %6607 = vmatpush1.bf16.msra.mxu0 %v6278
    %6608 = vmatprep.subr.bf16.mxu0 %v6287
    %6609 = vmatpush1.bf16.msra.mxu0 %v6286
    %6610 = vmatprep.subr.bf16.mxu0 %v6295
    %6611 = vmatpush1.bf16.msra.mxu0 %v6294
    %6612 = vmatprep.subr.bf16.mxu0 %v6303
    %6613 = vmatpush1.bf16.msra.mxu0 %v6302
    %6614 = vmatprep.subr.bf16.mxu0 %v6311
    %6615 = vmatpush1.bf16.msra.mxu0 %v6310
    %6616 = vmatprep.subr.bf16.mxu0 %v6319
    %6617 = vmatpush1.bf16.msra.mxu0 %v6318
    %6618 = vmatprep.subr.bf16.mxu0 %v6327
    %6619 = vmatpush1.bf16.msra.mxu0 %v6326
    %6620 = vmatprep.subr.bf16.mxu0 %v6335
    %6621 = vmatpush1.bf16.msra.mxu0 %v6334
    %6622 = vmatprep.subr.bf16.mxu0 %v6343
    %6623 = vmatpush1.bf16.msra.mxu0 %v6342
    %6624 = vmatprep.subr.bf16.mxu0 %v6351
    %6625 = vmatpush1.bf16.msra.mxu0 %v6350
    %6626 = vmatprep.subr.bf16.mxu0 %v6359
    %6627 = vmatpush1.bf16.msra.mxu0 %v6358
    %6628 = vmatprep.subr.bf16.mxu0 %v6367
    %6629 = vmatpush1.bf16.msra.mxu0 %v6366
    %6630 = vmatprep.subr.bf16.mxu0 %v6375
    %6631 = vmatpush1.bf16.msra.mxu0 %v6374
    %6632 = vmatprep.subr.bf16.mxu0 %v6383
    %6633 = vmatpush1.bf16.msra.mxu0 %v6382
    %6634 = vmatprep.subr.bf16.mxu0 %v6391
    %6635 = vmatpush1.bf16.msra.mxu0 %v6390
    %6636 = vmatprep.mubr.bf16.mxu0 %v5743
    %6637 = vmatmul.mubr.bf16.gmra.mrb[0].mxu0 %v5742
    %v6638 = vpop.f32.mrb[0].mxu0
    %v6639 = vadd.f32 0.0, %v6638
    %v6640 = vpop.f32.mrb[0].mxu0
    %v6641 = vadd.f32 0.0, %v6640
    %v6642 = vpop.f32.mrb[0].mxu0
    %v6643 = vpop.f32.mrb[0].mxu0
    %6644 = vdwg.mxu0
    %6645 = vmatprep.subr.bf16.mxu0 %v6273
    %6646 = vmatpush1.bf16.msra.mxu0 %v6272
    %6647 = vmatprep.subr.bf16.mxu0 %v6281
    %6648 = vmatpush1.bf16.msra.mxu0 %v6280
    %6649 = vmatprep.subr.bf16.mxu0 %v6289
    %6650 = vmatpush1.bf16.msra.mxu0 %v6288
    %6651 = vmatprep.subr.bf16.mxu0 %v6297
    %6652 = vmatpush1.bf16.msra.mxu0 %v6296
    %6653 = vmatprep.subr.bf16.mxu0 %v6305
    %6654 = vmatpush1.bf16.msra.mxu0 %v6304
    %6655 = vmatprep.subr.bf16.mxu0 %v6313
    %6656 = vmatpush1.bf16.msra.mxu0 %v6312
    %6657 = vmatprep.subr.bf16.mxu0 %v6321
    %6658 = vmatpush1.bf16.msra.mxu0 %v6320
    %6659 = vmatprep.subr.bf16.mxu0 %v6329
    %6660 = vmatpush1.bf16.msra.mxu0 %v6328
    %6661 = vmatprep.subr.bf16.mxu0 %v6337
    %6662 = vmatpush1.bf16.msra.mxu0 %v6336
    %6663 = vmatprep.subr.bf16.mxu0 %v6345
    %6664 = vmatpush1.bf16.msra.mxu0 %v6344
    %6665 = vmatprep.subr.bf16.mxu0 %v6353
    %6666 = vmatpush1.bf16.msra.mxu0 %v6352
    %6667 = vmatprep.subr.bf16.mxu0 %v6361
    %6668 = vmatpush1.bf16.msra.mxu0 %v6360
    %6669 = vmatprep.subr.bf16.mxu0 %v6369
    %6670 = vmatpush1.bf16.msra.mxu0 %v6368
    %6671 = vmatprep.subr.bf16.mxu0 %v6377
    %6672 = vmatpush1.bf16.msra.mxu0 %v6376
    %6673 = vmatprep.subr.bf16.mxu0 %v6385
    %6674 = vmatpush1.bf16.msra.mxu0 %v6384
    %6675 = vmatprep.subr.bf16.mxu0 %v6393
    %6676 = vmatpush1.bf16.msra.mxu0 %v6392
    %6677 = vmatprep.mubr.bf16.mxu0 %v5743
    %6678 = vmatmul.mubr.bf16.gmra.mrb[0].mxu0 %v5742
    %v6679 = vpop.f32.mrb[0].mxu0
    %v6680 = vadd.f32 0.0, %v6679
    %v6681 = vpop.f32.mrb[0].mxu0
    %v6682 = vadd.f32 0.0, %v6681
    %v6683 = vpop.f32.mrb[0].mxu0
    %v6684 = vpop.f32.mrb[0].mxu0
    %6685 = vdwg.mxu0
    %v6686 = vadd.f32 %v5746, %v6557
    %v6687 = vadd.f32 %v5747, %v6559
    %v6688 = vadd.f32 %v5748, %v6598
    %v6689 = vadd.f32 %v5749, %v6600
    %v6690 = vadd.f32 %v5750, %v6639
    %v6691 = vadd.f32 %v5751, %v6641
    %v6692 = vadd.f32 %v5752, %v6680
    %v6693 = vadd.f32 %v5753, %v6682
    %v6694 = vxor.u32 %v6686, 2147483648
    %v6695 = vxor.u32 %v6687, 2147483648
    %v6696 = vmul.f32 %v6694, 1.442695
    %v6697 = vpow.pop %v6696
    %v6698 = vmul.f32 %v6695, 1.442695
    %v6699 = vpow.pop %v6698
    %v6700 = vadd.f32 %v6697, 1.0
    %v6701 = vadd.f32 %v6699, 1.0
    %v6702 = vrcp.pop %v6700
    %v6703 = vmul.f32 1.0, %v6702
    %v6704 = vrcp.pop %v6701
    %v6705 = vmul.f32 1.0, %v6704
    %v6706 = vxor.u32 %v6688, 2147483648
    %v6707 = vxor.u32 %v6689, 2147483648
    %v6708 = vmul.f32 %v6706, 1.442695
    %v6709 = vpow.pop %v6708
    %v6710 = vmul.f32 %v6707, 1.442695
    %v6711 = vpow.pop %v6710
    %v6712 = vadd.f32 %v6709, 1.0
    %v6713 = vadd.f32 %v6711, 1.0
    %v6714 = vrcp.pop %v6712
    %v6715 = vmul.f32 1.0, %v6714
    %v6716 = vrcp.pop %v6713
    %v6717 = vmul.f32 1.0, %v6716
    %v6718 = vtanh.pop %v6690
    %v6719 = vtanh.pop %v6691
    %v6720 = vxor.u32 %v6692, 2147483648
    %v6721 = vxor.u32 %v6693, 2147483648
    %v6722 = vmul.f32 %v6720, 1.442695
    %v6723 = vpow.pop %v6722
    %v6724 = vmul.f32 %v6721, 1.442695
    %v6725 = vpow.pop %v6724
    %v6726 = vadd.f32 %v6723, 1.0
    %v6727 = vadd.f32 %v6725, 1.0
    %v6728 = vrcp.pop %v6726
    %v6729 = vmul.f32 1.0, %v6728
    %v6730 = vrcp.pop %v6727
    %v6731 = vmul.f32 1.0, %v6730
    %v6732 = vmul.f32 %v6715, %v5736
    %v6733 = vmul.f32 %v6717, %v5737
    %v6734 = vmul.f32 %v6703, %v6718
    %v6735 = vmul.f32 %v6705, %v6719
    %v6736 = vadd.f32 %v6732, %v6734
    %v6737 = vadd.f32 %v6733, %v6735
    %v6738 = vtanh.pop %v6736
    %v6739 = vtanh.pop %v6737
    %v6740 = vmul.f32 %v6729, %v6738
    %v6741 = vmul.f32 %v6731, %v6739
    %v6742 = vpack.c.bf16 %v6740, %v6740
    %v6743 = vpack.c.bf16 %v6741, %v6741
    %v6746 = vrot.slane %v6742, 4
    %v6747 = vrot.slane %v6743, 4
    %6750 = vst [vmem:[#allocation3 + $0x20] sm:$0xf0] %v6746
    %6751 = vst [vmem:[#allocation3 + $0x28] sm:$0xf0] %v6747
    %v6752 = vld [vmem:[%s646] sm:$0xff]
    %v6753 = vld [vmem:[%s646 + $0x8] sm:$0xff]
    %v6754 = vld [vmem:[%s646 + $0x10] sm:$0xff]
    %v6755 = vld [vmem:[%s646 + $0x18] sm:$0xff]
    %v6756 = vld [vmem:[%s646 + $0x20] sm:$0xff]
    %v6757 = vld [vmem:[%s646 + $0x28] sm:$0xff]
    %v6758 = vld [vmem:[%s646 + $0x30] sm:$0xff]
    %v6759 = vld [vmem:[%s646 + $0x38] sm:$0xff]
    %v6760 = vld [vmem:[#allocation9] sm:$0xff]
    %v6761 = vld [vmem:[#allocation9 + $0x8] sm:$0xff]
    %v6762 = vld [vmem:[#allocation9 + $0x10] sm:$0xff]
    %v6763 = vld [vmem:[#allocation9 + $0x18] sm:$0xff]
    %v6764 = vld [vmem:[#allocation9 + $0x20] sm:$0xff]
    %v6765 = vld [vmem:[#allocation9 + $0x28] sm:$0xff]
    %v6766 = vld [vmem:[#allocation9 + $0x30] sm:$0xff]
    %v6767 = vld [vmem:[#allocation9 + $0x38] sm:$0xff]
    %v6768 = vld [vmem:[#allocation9 + $0x40] sm:$0xff]
    %v6769 = vld [vmem:[#allocation9 + $0x48] sm:$0xff]
    %v6770 = vld [vmem:[#allocation9 + $0x50] sm:$0xff]
    %v6771 = vld [vmem:[#allocation9 + $0x58] sm:$0xff]
    %v6772 = vld [vmem:[#allocation9 + $0x60] sm:$0xff]
    %v6773 = vld [vmem:[#allocation9 + $0x68] sm:$0xff]
    %v6774 = vld [vmem:[#allocation9 + $0x70] sm:$0xff]
    %v6775 = vld [vmem:[#allocation9 + $0x78] sm:$0xff]
    %v6776 = vld [vmem:[#allocation9 + $0x80] sm:$0xff]
    %v6777 = vld [vmem:[#allocation9 + $0x88] sm:$0xff]
    %v6778 = vld [vmem:[#allocation9 + $0x90] sm:$0xff]
    %v6779 = vld [vmem:[#allocation9 + $0x98] sm:$0xff]
    %v6780 = vld [vmem:[#allocation9 + $0xa0] sm:$0xff]
    %v6781 = vld [vmem:[#allocation9 + $0xa8] sm:$0xff]
    %v6782 = vld [vmem:[#allocation9 + $0xb0] sm:$0xff]
    %v6783 = vld [vmem:[#allocation9 + $0xb8] sm:$0xff]
    %v6784 = vld [vmem:[#allocation9 + $0xc0] sm:$0xff]
    %v6785 = vld [vmem:[#allocation9 + $0xc8] sm:$0xff]
    %v6786 = vld [vmem:[#allocation9 + $0xd0] sm:$0xff]
    %v6787 = vld [vmem:[#allocation9 + $0xd8] sm:$0xff]
    %v6788 = vld [vmem:[#allocation9 + $0xe0] sm:$0xff]
    %v6789 = vld [vmem:[#allocation9 + $0xe8] sm:$0xff]
    %v6790 = vld [vmem:[#allocation9 + $0xf0] sm:$0xff]
    %v6791 = vld [vmem:[#allocation9 + $0xf8] sm:$0xff]
    %v6792 = vld [vmem:[#allocation9 + $0x100] sm:$0xff]
    %v6793 = vld [vmem:[#allocation9 + $0x108] sm:$0xff]
    %v6794 = vld [vmem:[#allocation9 + $0x110] sm:$0xff]
    %v6795 = vld [vmem:[#allocation9 + $0x118] sm:$0xff]
    %v6796 = vld [vmem:[#allocation9 + $0x120] sm:$0xff]
    %v6797 = vld [vmem:[#allocation9 + $0x128] sm:$0xff]
    %v6798 = vld [vmem:[#allocation9 + $0x130] sm:$0xff]
    %v6799 = vld [vmem:[#allocation9 + $0x138] sm:$0xff]
    %v6800 = vld [vmem:[#allocation9 + $0x140] sm:$0xff]
    %v6801 = vld [vmem:[#allocation9 + $0x148] sm:$0xff]
    %v6802 = vld [vmem:[#allocation9 + $0x150] sm:$0xff]
    %v6803 = vld [vmem:[#allocation9 + $0x158] sm:$0xff]
    %v6804 = vld [vmem:[#allocation9 + $0x160] sm:$0xff]
    %v6805 = vld [vmem:[#allocation9 + $0x168] sm:$0xff]
    %v6806 = vld [vmem:[#allocation9 + $0x170] sm:$0xff]
    %v6807 = vld [vmem:[#allocation9 + $0x178] sm:$0xff]
    %v6808 = vld [vmem:[#allocation9 + $0x180] sm:$0xff]
    %v6809 = vld [vmem:[#allocation9 + $0x188] sm:$0xff]
    %v6810 = vld [vmem:[#allocation9 + $0x190] sm:$0xff]
    %v6811 = vld [vmem:[#allocation9 + $0x198] sm:$0xff]
    %v6812 = vld [vmem:[#allocation9 + $0x1a0] sm:$0xff]
    %v6813 = vld [vmem:[#allocation9 + $0x1a8] sm:$0xff]
    %v6814 = vld [vmem:[#allocation9 + $0x1b0] sm:$0xff]
    %v6815 = vld [vmem:[#allocation9 + $0x1b8] sm:$0xff]
    %v6816 = vld [vmem:[#allocation9 + $0x1c0] sm:$0xff]
    %v6817 = vld [vmem:[#allocation9 + $0x1c8] sm:$0xff]
    %v6818 = vld [vmem:[#allocation9 + $0x1d0] sm:$0xff]
    %v6819 = vld [vmem:[#allocation9 + $0x1d8] sm:$0xff]
    %v6820 = vld [vmem:[#allocation9 + $0x1e0] sm:$0xff]
    %v6821 = vld [vmem:[#allocation9 + $0x1e8] sm:$0xff]
    %v6822 = vld [vmem:[#allocation9 + $0x1f0] sm:$0xff]
    %v6823 = vld [vmem:[#allocation9 + $0x1f8] sm:$0xff]
    %v6824 = vld [vmem:[#allocation9 + $0x200] sm:$0xff]
    %v6825 = vld [vmem:[#allocation9 + $0x208] sm:$0xff]
    %v6826 = vld [vmem:[#allocation9 + $0x210] sm:$0xff]
    %v6827 = vld [vmem:[#allocation9 + $0x218] sm:$0xff]
    %v6828 = vld [vmem:[#allocation9 + $0x220] sm:$0xff]
    %v6829 = vld [vmem:[#allocation9 + $0x228] sm:$0xff]
    %v6830 = vld [vmem:[#allocation9 + $0x230] sm:$0xff]
    %v6831 = vld [vmem:[#allocation9 + $0x238] sm:$0xff]
    %v6832 = vld [vmem:[#allocation9 + $0x240] sm:$0xff]
    %v6833 = vld [vmem:[#allocation9 + $0x248] sm:$0xff]
    %v6834 = vld [vmem:[#allocation9 + $0x250] sm:$0xff]
    %v6835 = vld [vmem:[#allocation9 + $0x258] sm:$0xff]
    %v6836 = vld [vmem:[#allocation9 + $0x260] sm:$0xff]
    %v6837 = vld [vmem:[#allocation9 + $0x268] sm:$0xff]
    %v6838 = vld [vmem:[#allocation9 + $0x270] sm:$0xff]
    %v6839 = vld [vmem:[#allocation9 + $0x278] sm:$0xff]
    %v6840 = vld [vmem:[#allocation9 + $0x280] sm:$0xff]
    %v6841 = vld [vmem:[#allocation9 + $0x288] sm:$0xff]
    %v6842 = vld [vmem:[#allocation9 + $0x290] sm:$0xff]
    %v6843 = vld [vmem:[#allocation9 + $0x298] sm:$0xff]
    %v6844 = vld [vmem:[#allocation9 + $0x2a0] sm:$0xff]
    %v6845 = vld [vmem:[#allocation9 + $0x2a8] sm:$0xff]
    %v6846 = vld [vmem:[#allocation9 + $0x2b0] sm:$0xff]
    %v6847 = vld [vmem:[#allocation9 + $0x2b8] sm:$0xff]
    %v6848 = vld [vmem:[#allocation9 + $0x2c0] sm:$0xff]
    %v6849 = vld [vmem:[#allocation9 + $0x2c8] sm:$0xff]
    %v6850 = vld [vmem:[#allocation9 + $0x2d0] sm:$0xff]
    %v6851 = vld [vmem:[#allocation9 + $0x2d8] sm:$0xff]
    %v6852 = vld [vmem:[#allocation9 + $0x2e0] sm:$0xff]
    %v6853 = vld [vmem:[#allocation9 + $0x2e8] sm:$0xff]
    %v6854 = vld [vmem:[#allocation9 + $0x2f0] sm:$0xff]
    %v6855 = vld [vmem:[#allocation9 + $0x2f8] sm:$0xff]
    %v6856 = vld [vmem:[#allocation9 + $0x300] sm:$0xff]
    %v6857 = vld [vmem:[#allocation9 + $0x308] sm:$0xff]
    %v6858 = vld [vmem:[#allocation9 + $0x310] sm:$0xff]
    %v6859 = vld [vmem:[#allocation9 + $0x318] sm:$0xff]
    %v6860 = vld [vmem:[#allocation9 + $0x320] sm:$0xff]
    %v6861 = vld [vmem:[#allocation9 + $0x328] sm:$0xff]
    %v6862 = vld [vmem:[#allocation9 + $0x330] sm:$0xff]
    %v6863 = vld [vmem:[#allocation9 + $0x338] sm:$0xff]
    %v6864 = vld [vmem:[#allocation9 + $0x340] sm:$0xff]
    %v6865 = vld [vmem:[#allocation9 + $0x348] sm:$0xff]
    %v6866 = vld [vmem:[#allocation9 + $0x350] sm:$0xff]
    %v6867 = vld [vmem:[#allocation9 + $0x358] sm:$0xff]
    %v6868 = vld [vmem:[#allocation9 + $0x360] sm:$0xff]
    %v6869 = vld [vmem:[#allocation9 + $0x368] sm:$0xff]
    %v6870 = vld [vmem:[#allocation9 + $0x370] sm:$0xff]
    %v6871 = vld [vmem:[#allocation9 + $0x378] sm:$0xff]
    %v6872 = vld [vmem:[#allocation9 + $0x380] sm:$0xff]
    %v6873 = vld [vmem:[#allocation9 + $0x388] sm:$0xff]
    %v6874 = vld [vmem:[#allocation9 + $0x390] sm:$0xff]
    %v6875 = vld [vmem:[#allocation9 + $0x398] sm:$0xff]
    %v6876 = vld [vmem:[#allocation9 + $0x3a0] sm:$0xff]
    %v6877 = vld [vmem:[#allocation9 + $0x3a8] sm:$0xff]
    %v6878 = vld [vmem:[#allocation9 + $0x3b0] sm:$0xff]
    %v6879 = vld [vmem:[#allocation9 + $0x3b8] sm:$0xff]
    %v6880 = vld [vmem:[#allocation9 + $0x3c0] sm:$0xff]
    %v6881 = vld [vmem:[#allocation9 + $0x3c8] sm:$0xff]
    %v6882 = vld [vmem:[#allocation9 + $0x3d0] sm:$0xff]
    %v6883 = vld [vmem:[#allocation9 + $0x3d8] sm:$0xff]
    %v6884 = vld [vmem:[#allocation9 + $0x3e0] sm:$0xff]
    %v6885 = vld [vmem:[#allocation9 + $0x3e8] sm:$0xff]
    %v6886 = vld [vmem:[#allocation9 + $0x3f0] sm:$0xff]
    %v6887 = vld [vmem:[#allocation9 + $0x3f8] sm:$0xff]
    %v7016 = vunpack.c.l.b16 %v6760
    %v7017 = vunpack.c.h.b16 %v6760
    %v7018 = vunpack.c.l.b16 %v6761
    %v7019 = vunpack.c.h.b16 %v6761
    %v7020 = vunpack.c.l.b16 %v6762
    %v7021 = vunpack.c.h.b16 %v6762
    %v7022 = vunpack.c.l.b16 %v6763
    %v7023 = vunpack.c.h.b16 %v6763
    %v7024 = vunpack.c.l.b16 %v6764
    %v7025 = vunpack.c.h.b16 %v6764
    %v7026 = vunpack.c.l.b16 %v6765
    %v7027 = vunpack.c.h.b16 %v6765
    %v7028 = vunpack.c.l.b16 %v6766
    %v7029 = vunpack.c.h.b16 %v6766
    %v7030 = vunpack.c.l.b16 %v6767
    %v7031 = vunpack.c.h.b16 %v6767
    %v7032 = vunpack.c.l.b16 %v6768
    %v7033 = vunpack.c.h.b16 %v6768
    %v7034 = vunpack.c.l.b16 %v6769
    %v7035 = vunpack.c.h.b16 %v6769
    %v7036 = vunpack.c.l.b16 %v6770
    %v7037 = vunpack.c.h.b16 %v6770
    %v7038 = vunpack.c.l.b16 %v6771
    %v7039 = vunpack.c.h.b16 %v6771
    %v7040 = vunpack.c.l.b16 %v6772
    %v7041 = vunpack.c.h.b16 %v6772
    %v7042 = vunpack.c.l.b16 %v6773
    %v7043 = vunpack.c.h.b16 %v6773
    %v7044 = vunpack.c.l.b16 %v6774
    %v7045 = vunpack.c.h.b16 %v6774
    %v7046 = vunpack.c.l.b16 %v6775
    %v7047 = vunpack.c.h.b16 %v6775
    %v7048 = vunpack.c.l.b16 %v6776
    %v7049 = vunpack.c.h.b16 %v6776
    %v7050 = vunpack.c.l.b16 %v6777
    %v7051 = vunpack.c.h.b16 %v6777
    %v7052 = vunpack.c.l.b16 %v6778
    %v7053 = vunpack.c.h.b16 %v6778
    %v7054 = vunpack.c.l.b16 %v6779
    %v7055 = vunpack.c.h.b16 %v6779
    %v7056 = vunpack.c.l.b16 %v6780
    %v7057 = vunpack.c.h.b16 %v6780
    %v7058 = vunpack.c.l.b16 %v6781
    %v7059 = vunpack.c.h.b16 %v6781
    %v7060 = vunpack.c.l.b16 %v6782
    %v7061 = vunpack.c.h.b16 %v6782
    %v7062 = vunpack.c.l.b16 %v6783
    %v7063 = vunpack.c.h.b16 %v6783
    %v7064 = vunpack.c.l.b16 %v6784
    %v7065 = vunpack.c.h.b16 %v6784
    %v7066 = vunpack.c.l.b16 %v6785
    %v7067 = vunpack.c.h.b16 %v6785
    %v7068 = vunpack.c.l.b16 %v6786
    %v7069 = vunpack.c.h.b16 %v6786
    %v7070 = vunpack.c.l.b16 %v6787
    %v7071 = vunpack.c.h.b16 %v6787
    %v7072 = vunpack.c.l.b16 %v6788
    %v7073 = vunpack.c.h.b16 %v6788
    %v7074 = vunpack.c.l.b16 %v6789
    %v7075 = vunpack.c.h.b16 %v6789
    %v7076 = vunpack.c.l.b16 %v6790
    %v7077 = vunpack.c.h.b16 %v6790
    %v7078 = vunpack.c.l.b16 %v6791
    %v7079 = vunpack.c.h.b16 %v6791
    %v7080 = vunpack.c.l.b16 %v6792
    %v7081 = vunpack.c.h.b16 %v6792
    %v7082 = vunpack.c.l.b16 %v6793
    %v7083 = vunpack.c.h.b16 %v6793
    %v7084 = vunpack.c.l.b16 %v6794
    %v7085 = vunpack.c.h.b16 %v6794
    %v7086 = vunpack.c.l.b16 %v6795
    %v7087 = vunpack.c.h.b16 %v6795
    %v7088 = vunpack.c.l.b16 %v6796
    %v7089 = vunpack.c.h.b16 %v6796
    %v7090 = vunpack.c.l.b16 %v6797
    %v7091 = vunpack.c.h.b16 %v6797
    %v7092 = vunpack.c.l.b16 %v6798
    %v7093 = vunpack.c.h.b16 %v6798
    %v7094 = vunpack.c.l.b16 %v6799
    %v7095 = vunpack.c.h.b16 %v6799
    %v7096 = vunpack.c.l.b16 %v6800
    %v7097 = vunpack.c.h.b16 %v6800
    %v7098 = vunpack.c.l.b16 %v6801
    %v7099 = vunpack.c.h.b16 %v6801
    %v7100 = vunpack.c.l.b16 %v6802
    %v7101 = vunpack.c.h.b16 %v6802
    %v7102 = vunpack.c.l.b16 %v6803
    %v7103 = vunpack.c.h.b16 %v6803
    %v7104 = vunpack.c.l.b16 %v6804
    %v7105 = vunpack.c.h.b16 %v6804
    %v7106 = vunpack.c.l.b16 %v6805
    %v7107 = vunpack.c.h.b16 %v6805
    %v7108 = vunpack.c.l.b16 %v6806
    %v7109 = vunpack.c.h.b16 %v6806
    %v7110 = vunpack.c.l.b16 %v6807
    %v7111 = vunpack.c.h.b16 %v6807
    %v7112 = vunpack.c.l.b16 %v6808
    %v7113 = vunpack.c.h.b16 %v6808
    %v7114 = vunpack.c.l.b16 %v6809
    %v7115 = vunpack.c.h.b16 %v6809
    %v7116 = vunpack.c.l.b16 %v6810
    %v7117 = vunpack.c.h.b16 %v6810
    %v7118 = vunpack.c.l.b16 %v6811
    %v7119 = vunpack.c.h.b16 %v6811
    %v7120 = vunpack.c.l.b16 %v6812
    %v7121 = vunpack.c.h.b16 %v6812
    %v7122 = vunpack.c.l.b16 %v6813
    %v7123 = vunpack.c.h.b16 %v6813
    %v7124 = vunpack.c.l.b16 %v6814
    %v7125 = vunpack.c.h.b16 %v6814
    %v7126 = vunpack.c.l.b16 %v6815
    %v7127 = vunpack.c.h.b16 %v6815
    %v7128 = vunpack.c.l.b16 %v6816
    %v7129 = vunpack.c.h.b16 %v6816
    %v7130 = vunpack.c.l.b16 %v6817
    %v7131 = vunpack.c.h.b16 %v6817
    %v7132 = vunpack.c.l.b16 %v6818
    %v7133 = vunpack.c.h.b16 %v6818
    %v7134 = vunpack.c.l.b16 %v6819
    %v7135 = vunpack.c.h.b16 %v6819
    %v7136 = vunpack.c.l.b16 %v6820
    %v7137 = vunpack.c.h.b16 %v6820
    %v7138 = vunpack.c.l.b16 %v6821
    %v7139 = vunpack.c.h.b16 %v6821
    %v7140 = vunpack.c.l.b16 %v6822
    %v7141 = vunpack.c.h.b16 %v6822
    %v7142 = vunpack.c.l.b16 %v6823
    %v7143 = vunpack.c.h.b16 %v6823
    %v7144 = vunpack.c.l.b16 %v6824
    %v7145 = vunpack.c.h.b16 %v6824
    %v7146 = vunpack.c.l.b16 %v6825
    %v7147 = vunpack.c.h.b16 %v6825
    %v7148 = vunpack.c.l.b16 %v6826
    %v7149 = vunpack.c.h.b16 %v6826
    %v7150 = vunpack.c.l.b16 %v6827
    %v7151 = vunpack.c.h.b16 %v6827
    %v7152 = vunpack.c.l.b16 %v6828
    %v7153 = vunpack.c.h.b16 %v6828
    %v7154 = vunpack.c.l.b16 %v6829
    %v7155 = vunpack.c.h.b16 %v6829
    %v7156 = vunpack.c.l.b16 %v6830
    %v7157 = vunpack.c.h.b16 %v6830
    %v7158 = vunpack.c.l.b16 %v6831
    %v7159 = vunpack.c.h.b16 %v6831
    %v7160 = vunpack.c.l.b16 %v6832
    %v7161 = vunpack.c.h.b16 %v6832
    %v7162 = vunpack.c.l.b16 %v6833
    %v7163 = vunpack.c.h.b16 %v6833
    %v7164 = vunpack.c.l.b16 %v6834
    %v7165 = vunpack.c.h.b16 %v6834
    %v7166 = vunpack.c.l.b16 %v6835
    %v7167 = vunpack.c.h.b16 %v6835
    %v7168 = vunpack.c.l.b16 %v6836
    %v7169 = vunpack.c.h.b16 %v6836
    %v7170 = vunpack.c.l.b16 %v6837
    %v7171 = vunpack.c.h.b16 %v6837
    %v7172 = vunpack.c.l.b16 %v6838
    %v7173 = vunpack.c.h.b16 %v6838
    %v7174 = vunpack.c.l.b16 %v6839
    %v7175 = vunpack.c.h.b16 %v6839
    %v7176 = vunpack.c.l.b16 %v6840
    %v7177 = vunpack.c.h.b16 %v6840
    %v7178 = vunpack.c.l.b16 %v6841
    %v7179 = vunpack.c.h.b16 %v6841
    %v7180 = vunpack.c.l.b16 %v6842
    %v7181 = vunpack.c.h.b16 %v6842
    %v7182 = vunpack.c.l.b16 %v6843
    %v7183 = vunpack.c.h.b16 %v6843
    %v7184 = vunpack.c.l.b16 %v6844
    %v7185 = vunpack.c.h.b16 %v6844
    %v7186 = vunpack.c.l.b16 %v6845
    %v7187 = vunpack.c.h.b16 %v6845
    %v7188 = vunpack.c.l.b16 %v6846
    %v7189 = vunpack.c.h.b16 %v6846
    %v7190 = vunpack.c.l.b16 %v6847
    %v7191 = vunpack.c.h.b16 %v6847
    %v7192 = vunpack.c.l.b16 %v6848
    %v7193 = vunpack.c.h.b16 %v6848
    %v7194 = vunpack.c.l.b16 %v6849
    %v7195 = vunpack.c.h.b16 %v6849
    %v7196 = vunpack.c.l.b16 %v6850
    %v7197 = vunpack.c.h.b16 %v6850
    %v7198 = vunpack.c.l.b16 %v6851
    %v7199 = vunpack.c.h.b16 %v6851
    %v7200 = vunpack.c.l.b16 %v6852
    %v7201 = vunpack.c.h.b16 %v6852
    %v7202 = vunpack.c.l.b16 %v6853
    %v7203 = vunpack.c.h.b16 %v6853
    %v7204 = vunpack.c.l.b16 %v6854
    %v7205 = vunpack.c.h.b16 %v6854
    %v7206 = vunpack.c.l.b16 %v6855
    %v7207 = vunpack.c.h.b16 %v6855
    %v7208 = vunpack.c.l.b16 %v6856
    %v7209 = vunpack.c.h.b16 %v6856
    %v7210 = vunpack.c.l.b16 %v6857
    %v7211 = vunpack.c.h.b16 %v6857
    %v7212 = vunpack.c.l.b16 %v6858
    %v7213 = vunpack.c.h.b16 %v6858
    %v7214 = vunpack.c.l.b16 %v6859
    %v7215 = vunpack.c.h.b16 %v6859
    %v7216 = vunpack.c.l.b16 %v6860
    %v7217 = vunpack.c.h.b16 %v6860
    %v7218 = vunpack.c.l.b16 %v6861
    %v7219 = vunpack.c.h.b16 %v6861
    %v7220 = vunpack.c.l.b16 %v6862
    %v7221 = vunpack.c.h.b16 %v6862
    %v7222 = vunpack.c.l.b16 %v6863
    %v7223 = vunpack.c.h.b16 %v6863
    %v7224 = vunpack.c.l.b16 %v6864
    %v7225 = vunpack.c.h.b16 %v6864
    %v7226 = vunpack.c.l.b16 %v6865
    %v7227 = vunpack.c.h.b16 %v6865
    %v7228 = vunpack.c.l.b16 %v6866
    %v7229 = vunpack.c.h.b16 %v6866
    %v7230 = vunpack.c.l.b16 %v6867
    %v7231 = vunpack.c.h.b16 %v6867
    %v7232 = vunpack.c.l.b16 %v6868
    %v7233 = vunpack.c.h.b16 %v6868
    %v7234 = vunpack.c.l.b16 %v6869
    %v7235 = vunpack.c.h.b16 %v6869
    %v7236 = vunpack.c.l.b16 %v6870
    %v7237 = vunpack.c.h.b16 %v6870
    %v7238 = vunpack.c.l.b16 %v6871
    %v7239 = vunpack.c.h.b16 %v6871
    %v7240 = vunpack.c.l.b16 %v6872
    %v7241 = vunpack.c.h.b16 %v6872
    %v7242 = vunpack.c.l.b16 %v6873
    %v7243 = vunpack.c.h.b16 %v6873
    %v7244 = vunpack.c.l.b16 %v6874
    %v7245 = vunpack.c.h.b16 %v6874
    %v7246 = vunpack.c.l.b16 %v6875
    %v7247 = vunpack.c.h.b16 %v6875
    %v7248 = vunpack.c.l.b16 %v6876
    %v7249 = vunpack.c.h.b16 %v6876
    %v7250 = vunpack.c.l.b16 %v6877
    %v7251 = vunpack.c.h.b16 %v6877
    %v7252 = vunpack.c.l.b16 %v6878
    %v7253 = vunpack.c.h.b16 %v6878
    %v7254 = vunpack.c.l.b16 %v6879
    %v7255 = vunpack.c.h.b16 %v6879
    %v7256 = vunpack.c.l.b16 %v6880
    %v7257 = vunpack.c.h.b16 %v6880
    %v7258 = vunpack.c.l.b16 %v6881
    %v7259 = vunpack.c.h.b16 %v6881
    %v7260 = vunpack.c.l.b16 %v6882
    %v7261 = vunpack.c.h.b16 %v6882
    %v7262 = vunpack.c.l.b16 %v6883
    %v7263 = vunpack.c.h.b16 %v6883
    %v7264 = vunpack.c.l.b16 %v6884
    %v7265 = vunpack.c.h.b16 %v6884
    %v7266 = vunpack.c.l.b16 %v6885
    %v7267 = vunpack.c.h.b16 %v6885
    %v7268 = vunpack.c.l.b16 %v6886
    %v7269 = vunpack.c.h.b16 %v6886
    %v7270 = vunpack.c.l.b16 %v6887
    %v7271 = vunpack.c.h.b16 %v6887
    %v7272 = vpack.c.b16 %v7024, %v7016
    %v7273 = vpack.c.b16 %v7025, %v7017
    %v7274 = vpack.c.b16 %v7026, %v7018
    %v7275 = vpack.c.b16 %v7027, %v7019
    %v7276 = vpack.c.b16 %v7028, %v7020
    %v7277 = vpack.c.b16 %v7029, %v7021
    %v7278 = vpack.c.b16 %v7030, %v7022
    %v7279 = vpack.c.b16 %v7031, %v7023
    %v7280 = vpack.c.b16 %v7040, %v7032
    %v7281 = vpack.c.b16 %v7041, %v7033
    %v7282 = vpack.c.b16 %v7042, %v7034
    %v7283 = vpack.c.b16 %v7043, %v7035
    %v7284 = vpack.c.b16 %v7044, %v7036
    %v7285 = vpack.c.b16 %v7045, %v7037
    %v7286 = vpack.c.b16 %v7046, %v7038
    %v7287 = vpack.c.b16 %v7047, %v7039
    %v7288 = vpack.c.b16 %v7056, %v7048
    %v7289 = vpack.c.b16 %v7057, %v7049
    %v7290 = vpack.c.b16 %v7058, %v7050
    %v7291 = vpack.c.b16 %v7059, %v7051
    %v7292 = vpack.c.b16 %v7060, %v7052
    %v7293 = vpack.c.b16 %v7061, %v7053
    %v7294 = vpack.c.b16 %v7062, %v7054
    %v7295 = vpack.c.b16 %v7063, %v7055
    %v7296 = vpack.c.b16 %v7072, %v7064
    %v7297 = vpack.c.b16 %v7073, %v7065
    %v7298 = vpack.c.b16 %v7074, %v7066
    %v7299 = vpack.c.b16 %v7075, %v7067
    %v7300 = vpack.c.b16 %v7076, %v7068
    %v7301 = vpack.c.b16 %v7077, %v7069
    %v7302 = vpack.c.b16 %v7078, %v7070
    %v7303 = vpack.c.b16 %v7079, %v7071
    %v7304 = vpack.c.b16 %v7088, %v7080
    %v7305 = vpack.c.b16 %v7089, %v7081
    %v7306 = vpack.c.b16 %v7090, %v7082
    %v7307 = vpack.c.b16 %v7091, %v7083
    %v7308 = vpack.c.b16 %v7092, %v7084
    %v7309 = vpack.c.b16 %v7093, %v7085
    %v7310 = vpack.c.b16 %v7094, %v7086
    %v7311 = vpack.c.b16 %v7095, %v7087
    %v7312 = vpack.c.b16 %v7104, %v7096
    %v7313 = vpack.c.b16 %v7105, %v7097
    %v7314 = vpack.c.b16 %v7106, %v7098
    %v7315 = vpack.c.b16 %v7107, %v7099
    %v7316 = vpack.c.b16 %v7108, %v7100
    %v7317 = vpack.c.b16 %v7109, %v7101
    %v7318 = vpack.c.b16 %v7110, %v7102
    %v7319 = vpack.c.b16 %v7111, %v7103
    %v7320 = vpack.c.b16 %v7120, %v7112
    %v7321 = vpack.c.b16 %v7121, %v7113
    %v7322 = vpack.c.b16 %v7122, %v7114
    %v7323 = vpack.c.b16 %v7123, %v7115
    %v7324 = vpack.c.b16 %v7124, %v7116
    %v7325 = vpack.c.b16 %v7125, %v7117
    %v7326 = vpack.c.b16 %v7126, %v7118
    %v7327 = vpack.c.b16 %v7127, %v7119
    %v7328 = vpack.c.b16 %v7136, %v7128
    %v7329 = vpack.c.b16 %v7137, %v7129
    %v7330 = vpack.c.b16 %v7138, %v7130
    %v7331 = vpack.c.b16 %v7139, %v7131
    %v7332 = vpack.c.b16 %v7140, %v7132
    %v7333 = vpack.c.b16 %v7141, %v7133
    %v7334 = vpack.c.b16 %v7142, %v7134
    %v7335 = vpack.c.b16 %v7143, %v7135
    %v7336 = vpack.c.b16 %v7152, %v7144
    %v7337 = vpack.c.b16 %v7153, %v7145
    %v7338 = vpack.c.b16 %v7154, %v7146
    %v7339 = vpack.c.b16 %v7155, %v7147
    %v7340 = vpack.c.b16 %v7156, %v7148
    %v7341 = vpack.c.b16 %v7157, %v7149
    %v7342 = vpack.c.b16 %v7158, %v7150
    %v7343 = vpack.c.b16 %v7159, %v7151
    %v7344 = vpack.c.b16 %v7168, %v7160
    %v7345 = vpack.c.b16 %v7169, %v7161
    %v7346 = vpack.c.b16 %v7170, %v7162
    %v7347 = vpack.c.b16 %v7171, %v7163
    %v7348 = vpack.c.b16 %v7172, %v7164
    %v7349 = vpack.c.b16 %v7173, %v7165
    %v7350 = vpack.c.b16 %v7174, %v7166
    %v7351 = vpack.c.b16 %v7175, %v7167
    %v7352 = vpack.c.b16 %v7184, %v7176
    %v7353 = vpack.c.b16 %v7185, %v7177
    %v7354 = vpack.c.b16 %v7186, %v7178
    %v7355 = vpack.c.b16 %v7187, %v7179
    %v7356 = vpack.c.b16 %v7188, %v7180
    %v7357 = vpack.c.b16 %v7189, %v7181
    %v7358 = vpack.c.b16 %v7190, %v7182
    %v7359 = vpack.c.b16 %v7191, %v7183
    %v7360 = vpack.c.b16 %v7200, %v7192
    %v7361 = vpack.c.b16 %v7201, %v7193
    %v7362 = vpack.c.b16 %v7202, %v7194
    %v7363 = vpack.c.b16 %v7203, %v7195
    %v7364 = vpack.c.b16 %v7204, %v7196
    %v7365 = vpack.c.b16 %v7205, %v7197
    %v7366 = vpack.c.b16 %v7206, %v7198
    %v7367 = vpack.c.b16 %v7207, %v7199
    %v7368 = vpack.c.b16 %v7216, %v7208
    %v7369 = vpack.c.b16 %v7217, %v7209
    %v7370 = vpack.c.b16 %v7218, %v7210
    %v7371 = vpack.c.b16 %v7219, %v7211
    %v7372 = vpack.c.b16 %v7220, %v7212
    %v7373 = vpack.c.b16 %v7221, %v7213
    %v7374 = vpack.c.b16 %v7222, %v7214
    %v7375 = vpack.c.b16 %v7223, %v7215
    %v7376 = vpack.c.b16 %v7232, %v7224
    %v7377 = vpack.c.b16 %v7233, %v7225
    %v7378 = vpack.c.b16 %v7234, %v7226
    %v7379 = vpack.c.b16 %v7235, %v7227
    %v7380 = vpack.c.b16 %v7236, %v7228
    %v7381 = vpack.c.b16 %v7237, %v7229
    %v7382 = vpack.c.b16 %v7238, %v7230
    %v7383 = vpack.c.b16 %v7239, %v7231
    %v7384 = vpack.c.b16 %v7248, %v7240
    %v7385 = vpack.c.b16 %v7249, %v7241
    %v7386 = vpack.c.b16 %v7250, %v7242
    %v7387 = vpack.c.b16 %v7251, %v7243
    %v7388 = vpack.c.b16 %v7252, %v7244
    %v7389 = vpack.c.b16 %v7253, %v7245
    %v7390 = vpack.c.b16 %v7254, %v7246
    %v7391 = vpack.c.b16 %v7255, %v7247
    %v7392 = vpack.c.b16 %v7264, %v7256
    %v7393 = vpack.c.b16 %v7265, %v7257
    %v7394 = vpack.c.b16 %v7266, %v7258
    %v7395 = vpack.c.b16 %v7267, %v7259
    %v7396 = vpack.c.b16 %v7268, %v7260
    %v7397 = vpack.c.b16 %v7269, %v7261
    %v7398 = vpack.c.b16 %v7270, %v7262
    %v7399 = vpack.c.b16 %v7271, %v7263
    %7528 = vmatprep.subr.bf16.mxu0 %v7273
    %7529 = vmatpush1.bf16.msra.mxu0 %v7272
    %7530 = vmatprep.subr.bf16.mxu0 %v7281
    %7531 = vmatpush1.bf16.msra.mxu0 %v7280
    %7532 = vmatprep.subr.bf16.mxu0 %v7289
    %7533 = vmatpush1.bf16.msra.mxu0 %v7288
    %7534 = vmatprep.subr.bf16.mxu0 %v7297
    %7535 = vmatpush1.bf16.msra.mxu0 %v7296
    %7536 = vmatprep.subr.bf16.mxu0 %v7305
    %7537 = vmatpush1.bf16.msra.mxu0 %v7304
    %7538 = vmatprep.subr.bf16.mxu0 %v7313
    %7539 = vmatpush1.bf16.msra.mxu0 %v7312
    %7540 = vmatprep.subr.bf16.mxu0 %v7321
    %7541 = vmatpush1.bf16.msra.mxu0 %v7320
    %7542 = vmatprep.subr.bf16.mxu0 %v7329
    %7543 = vmatpush1.bf16.msra.mxu0 %v7328
    %7544 = vmatprep.subr.bf16.mxu0 %v7337
    %7545 = vmatpush1.bf16.msra.mxu0 %v7336
    %7546 = vmatprep.subr.bf16.mxu0 %v7345
    %7547 = vmatpush1.bf16.msra.mxu0 %v7344
    %7548 = vmatprep.subr.bf16.mxu0 %v7353
    %7549 = vmatpush1.bf16.msra.mxu0 %v7352
    %7550 = vmatprep.subr.bf16.mxu0 %v7361
    %7551 = vmatpush1.bf16.msra.mxu0 %v7360
    %7552 = vmatprep.subr.bf16.mxu0 %v7369
    %7553 = vmatpush1.bf16.msra.mxu0 %v7368
    %7554 = vmatprep.subr.bf16.mxu0 %v7377
    %7555 = vmatpush1.bf16.msra.mxu0 %v7376
    %7556 = vmatprep.subr.bf16.mxu0 %v7385
    %7557 = vmatpush1.bf16.msra.mxu0 %v7384
    %7558 = vmatprep.subr.bf16.mxu0 %v7393
    %7559 = vmatpush1.bf16.msra.mxu0 %v7392
    %7560 = vmatprep.mubr.bf16.mxu0 %v6743
    %7561 = vmatmul.mubr.bf16.gmra.mrb[0].mxu0 %v6742
    %v7562 = vpop.f32.mrb[0].mxu0
    %v7563 = vadd.f32 0.0, %v7562
    %v7564 = vpop.f32.mrb[0].mxu0
    %v7565 = vadd.f32 0.0, %v7564
    %v7566 = vpop.f32.mrb[0].mxu0
    %v7567 = vpop.f32.mrb[0].mxu0
    %7568 = vdwg.mxu0
    %7569 = vmatprep.subr.bf16.mxu0 %v7275
    %7570 = vmatpush1.bf16.msra.mxu0 %v7274
    %7571 = vmatprep.subr.bf16.mxu0 %v7283
    %7572 = vmatpush1.bf16.msra.mxu0 %v7282
    %7573 = vmatprep.subr.bf16.mxu0 %v7291
    %7574 = vmatpush1.bf16.msra.mxu0 %v7290
    %7575 = vmatprep.subr.bf16.mxu0 %v7299
    %7576 = vmatpush1.bf16.msra.mxu0 %v7298
    %7577 = vmatprep.subr.bf16.mxu0 %v7307
    %7578 = vmatpush1.bf16.msra.mxu0 %v7306
    %7579 = vmatprep.subr.bf16.mxu0 %v7315
    %7580 = vmatpush1.bf16.msra.mxu0 %v7314
    %7581 = vmatprep.subr.bf16.mxu0 %v7323
    %7582 = vmatpush1.bf16.msra.mxu0 %v7322
    %7583 = vmatprep.subr.bf16.mxu0 %v7331
    %7584 = vmatpush1.bf16.msra.mxu0 %v7330
    %7585 = vmatprep.subr.bf16.mxu0 %v7339
    %7586 = vmatpush1.bf16.msra.mxu0 %v7338
    %7587 = vmatprep.subr.bf16.mxu0 %v7347
    %7588 = vmatpush1.bf16.msra.mxu0 %v7346
    %7589 = vmatprep.subr.bf16.mxu0 %v7355
    %7590 = vmatpush1.bf16.msra.mxu0 %v7354
    %7591 = vmatprep.subr.bf16.mxu0 %v7363
    %7592 = vmatpush1.bf16.msra.mxu0 %v7362
    %7593 = vmatprep.subr.bf16.mxu0 %v7371
    %7594 = vmatpush1.bf16.msra.mxu0 %v7370
    %7595 = vmatprep.subr.bf16.mxu0 %v7379
    %7596 = vmatpush1.bf16.msra.mxu0 %v7378
    %7597 = vmatprep.subr.bf16.mxu0 %v7387
    %7598 = vmatpush1.bf16.msra.mxu0 %v7386
    %7599 = vmatprep.subr.bf16.mxu0 %v7395
    %7600 = vmatpush1.bf16.msra.mxu0 %v7394
    %7601 = vmatprep.mubr.bf16.mxu0 %v6743
    %7602 = vmatmul.mubr.bf16.gmra.mrb[0].mxu0 %v6742
    %v7603 = vpop.f32.mrb[0].mxu0
    %v7604 = vadd.f32 0.0, %v7603
    %v7605 = vpop.f32.mrb[0].mxu0
    %v7606 = vadd.f32 0.0, %v7605
    %v7607 = vpop.f32.mrb[0].mxu0
    %v7608 = vpop.f32.mrb[0].mxu0
    %7609 = vdwg.mxu0
    %7610 = vmatprep.subr.bf16.mxu0 %v7277
    %7611 = vmatpush1.bf16.msra.mxu0 %v7276
    %7612 = vmatprep.subr.bf16.mxu0 %v7285
    %7613 = vmatpush1.bf16.msra.mxu0 %v7284
    %7614 = vmatprep.subr.bf16.mxu0 %v7293
    %7615 = vmatpush1.bf16.msra.mxu0 %v7292
    %7616 = vmatprep.subr.bf16.mxu0 %v7301
    %7617 = vmatpush1.bf16.msra.mxu0 %v7300
    %7618 = vmatprep.subr.bf16.mxu0 %v7309
    %7619 = vmatpush1.bf16.msra.mxu0 %v7308
    %7620 = vmatprep.subr.bf16.mxu0 %v7317
    %7621 = vmatpush1.bf16.msra.mxu0 %v7316
    %7622 = vmatprep.subr.bf16.mxu0 %v7325
    %7623 = vmatpush1.bf16.msra.mxu0 %v7324
    %7624 = vmatprep.subr.bf16.mxu0 %v7333
    %7625 = vmatpush1.bf16.msra.mxu0 %v7332
    %7626 = vmatprep.subr.bf16.mxu0 %v7341
    %7627 = vmatpush1.bf16.msra.mxu0 %v7340
    %7628 = vmatprep.subr.bf16.mxu0 %v7349
    %7629 = vmatpush1.bf16.msra.mxu0 %v7348
    %7630 = vmatprep.subr.bf16.mxu0 %v7357
    %7631 = vmatpush1.bf16.msra.mxu0 %v7356
    %7632 = vmatprep.subr.bf16.mxu0 %v7365
    %7633 = vmatpush1.bf16.msra.mxu0 %v7364
    %7634 = vmatprep.subr.bf16.mxu0 %v7373
    %7635 = vmatpush1.bf16.msra.mxu0 %v7372
    %7636 = vmatprep.subr.bf16.mxu0 %v7381
    %7637 = vmatpush1.bf16.msra.mxu0 %v7380
    %7638 = vmatprep.subr.bf16.mxu0 %v7389
    %7639 = vmatpush1.bf16.msra.mxu0 %v7388
    %7640 = vmatprep.subr.bf16.mxu0 %v7397
    %7641 = vmatpush1.bf16.msra.mxu0 %v7396
    %7642 = vmatprep.mubr.bf16.mxu0 %v6743
    %7643 = vmatmul.mubr.bf16.gmra.mrb[0].mxu0 %v6742
    %v7644 = vpop.f32.mrb[0].mxu0
    %v7645 = vadd.f32 0.0, %v7644
    %v7646 = vpop.f32.mrb[0].mxu0
    %v7647 = vadd.f32 0.0, %v7646
    %v7648 = vpop.f32.mrb[0].mxu0
    %v7649 = vpop.f32.mrb[0].mxu0
    %7650 = vdwg.mxu0
    %7651 = vmatprep.subr.bf16.mxu0 %v7279
    %7652 = vmatpush1.bf16.msra.mxu0 %v7278
    %7653 = vmatprep.subr.bf16.mxu0 %v7287
    %7654 = vmatpush1.bf16.msra.mxu0 %v7286
    %7655 = vmatprep.subr.bf16.mxu0 %v7295
    %7656 = vmatpush1.bf16.msra.mxu0 %v7294
    %7657 = vmatprep.subr.bf16.mxu0 %v7303
    %7658 = vmatpush1.bf16.msra.mxu0 %v7302
    %7659 = vmatprep.subr.bf16.mxu0 %v7311
    %7660 = vmatpush1.bf16.msra.mxu0 %v7310
    %7661 = vmatprep.subr.bf16.mxu0 %v7319
    %7662 = vmatpush1.bf16.msra.mxu0 %v7318
    %7663 = vmatprep.subr.bf16.mxu0 %v7327
    %7664 = vmatpush1.bf16.msra.mxu0 %v7326
    %7665 = vmatprep.subr.bf16.mxu0 %v7335
    %7666 = vmatpush1.bf16.msra.mxu0 %v7334
    %7667 = vmatprep.subr.bf16.mxu0 %v7343
    %7668 = vmatpush1.bf16.msra.mxu0 %v7342
    %7669 = vmatprep.subr.bf16.mxu0 %v7351
    %7670 = vmatpush1.bf16.msra.mxu0 %v7350
    %7671 = vmatprep.subr.bf16.mxu0 %v7359
    %7672 = vmatpush1.bf16.msra.mxu0 %v7358
    %7673 = vmatprep.subr.bf16.mxu0 %v7367
    %7674 = vmatpush1.bf16.msra.mxu0 %v7366
    %7675 = vmatprep.subr.bf16.mxu0 %v7375
    %7676 = vmatpush1.bf16.msra.mxu0 %v7374
    %7677 = vmatprep.subr.bf16.mxu0 %v7383
    %7678 = vmatpush1.bf16.msra.mxu0 %v7382
    %7679 = vmatprep.subr.bf16.mxu0 %v7391
    %7680 = vmatpush1.bf16.msra.mxu0 %v7390
    %7681 = vmatprep.subr.bf16.mxu0 %v7399
    %7682 = vmatpush1.bf16.msra.mxu0 %v7398
    %7683 = vmatprep.mubr.bf16.mxu0 %v6743
    %7684 = vmatmul.mubr.bf16.gmra.mrb[0].mxu0 %v6742
    %v7685 = vpop.f32.mrb[0].mxu0
    %v7686 = vadd.f32 0.0, %v7685
    %v7687 = vpop.f32.mrb[0].mxu0
    %v7688 = vadd.f32 0.0, %v7687
    %v7689 = vpop.f32.mrb[0].mxu0
    %v7690 = vpop.f32.mrb[0].mxu0
    %7691 = vdwg.mxu0
    %v7692 = vadd.f32 %v6752, %v7563
    %v7693 = vadd.f32 %v6753, %v7565
    %v7694 = vadd.f32 %v6754, %v7604
    %v7695 = vadd.f32 %v6755, %v7606
    %v7696 = vadd.f32 %v6756, %v7645
    %v7697 = vadd.f32 %v6757, %v7647
    %v7698 = vadd.f32 %v6758, %v7686
    %v7699 = vadd.f32 %v6759, %v7688
    %v7700 = vxor.u32 %v7692, 2147483648
    %v7701 = vxor.u32 %v7693, 2147483648
    %v7702 = vmul.f32 %v7700, 1.442695
    %v7703 = vpow.pop %v7702
    %v7704 = vmul.f32 %v7701, 1.442695
    %v7705 = vpow.pop %v7704
    %v7706 = vadd.f32 %v7703, 1.0
    %v7707 = vadd.f32 %v7705, 1.0
    %v7708 = vrcp.pop %v7706
    %v7709 = vmul.f32 1.0, %v7708
    %v7710 = vrcp.pop %v7707
    %v7711 = vmul.f32 1.0, %v7710
    %v7712 = vxor.u32 %v7694, 2147483648
    %v7713 = vxor.u32 %v7695, 2147483648
    %v7714 = vmul.f32 %v7712, 1.442695
    %v7715 = vpow.pop %v7714
    %v7716 = vmul.f32 %v7713, 1.442695
    %v7717 = vpow.pop %v7716
    %v7718 = vadd.f32 %v7715, 1.0
    %v7719 = vadd.f32 %v7717, 1.0
    %v7720 = vrcp.pop %v7718
    %v7721 = vmul.f32 1.0, %v7720
    %v7722 = vrcp.pop %v7719
    %v7723 = vmul.f32 1.0, %v7722
    %v7724 = vtanh.pop %v7696
    %v7725 = vtanh.pop %v7697
    %v7726 = vxor.u32 %v7698, 2147483648
    %v7727 = vxor.u32 %v7699, 2147483648
    %v7728 = vmul.f32 %v7726, 1.442695
    %v7729 = vpow.pop %v7728
    %v7730 = vmul.f32 %v7727, 1.442695
    %v7731 = vpow.pop %v7730
    %v7732 = vadd.f32 %v7729, 1.0
    %v7733 = vadd.f32 %v7731, 1.0
    %v7734 = vrcp.pop %v7732
    %v7735 = vmul.f32 1.0, %v7734
    %v7736 = vrcp.pop %v7733
    %v7737 = vmul.f32 1.0, %v7736
    %v7738 = vmul.f32 %v7721, %v6736
    %v7739 = vmul.f32 %v7723, %v6737
    %v7740 = vmul.f32 %v7709, %v7724
    %v7741 = vmul.f32 %v7711, %v7725
    %v7742 = vadd.f32 %v7738, %v7740
    %v7743 = vadd.f32 %v7739, %v7741
    %v7744 = vtanh.pop %v7742
    %v7745 = vtanh.pop %v7743
    %v7746 = vmul.f32 %v7735, %v7744
    %v7747 = vmul.f32 %v7737, %v7745
    %v7748 = vpack.c.bf16 %v7746, %v7746
    %v7749 = vpack.c.bf16 %v7747, %v7747
    %7750 = vst [vmem:[#allocation3 + $0x30] sm:$0xf] %v7748
    %7751 = vst [vmem:[#allocation3 + $0x38] sm:$0xf] %v7749
    %v7752 = vld [vmem:[%s699] sm:$0xff]
    %v7753 = vld [vmem:[%s699 + $0x8] sm:$0xff]
    %v7754 = vld [vmem:[%s699 + $0x10] sm:$0xff]
    %v7755 = vld [vmem:[%s699 + $0x18] sm:$0xff]
    %v7756 = vld [vmem:[%s699 + $0x20] sm:$0xff]
    %v7757 = vld [vmem:[%s699 + $0x28] sm:$0xff]
    %v7758 = vld [vmem:[%s699 + $0x30] sm:$0xff]
    %v7759 = vld [vmem:[%s699 + $0x38] sm:$0xff]
    %v7760 = vld [vmem:[#allocation9] sm:$0xff]
    %v7761 = vld [vmem:[#allocation9 + $0x8] sm:$0xff]
    %v7762 = vld [vmem:[#allocation9 + $0x10] sm:$0xff]
    %v7763 = vld [vmem:[#allocation9 + $0x18] sm:$0xff]
    %v7764 = vld [vmem:[#allocation9 + $0x20] sm:$0xff]
    %v7765 = vld [vmem:[#allocation9 + $0x28] sm:$0xff]
    %v7766 = vld [vmem:[#allocation9 + $0x30] sm:$0xff]
    %v7767 = vld [vmem:[#allocation9 + $0x38] sm:$0xff]
    %v7768 = vld [vmem:[#allocation9 + $0x40] sm:$0xff]
    %v7769 = vld [vmem:[#allocation9 + $0x48] sm:$0xff]
    %v7770 = vld [vmem:[#allocation9 + $0x50] sm:$0xff]
    %v7771 = vld [vmem:[#allocation9 + $0x58] sm:$0xff]
    %v7772 = vld [vmem:[#allocation9 + $0x60] sm:$0xff]
    %v7773 = vld [vmem:[#allocation9 + $0x68] sm:$0xff]
    %v7774 = vld [vmem:[#allocation9 + $0x70] sm:$0xff]
    %v7775 = vld [vmem:[#allocation9 + $0x78] sm:$0xff]
    %v7776 = vld [vmem:[#allocation9 + $0x80] sm:$0xff]
    %v7777 = vld [vmem:[#allocation9 + $0x88] sm:$0xff]
    %v7778 = vld [vmem:[#allocation9 + $0x90] sm:$0xff]
    %v7779 = vld [vmem:[#allocation9 + $0x98] sm:$0xff]
    %v7780 = vld [vmem:[#allocation9 + $0xa0] sm:$0xff]
    %v7781 = vld [vmem:[#allocation9 + $0xa8] sm:$0xff]
    %v7782 = vld [vmem:[#allocation9 + $0xb0] sm:$0xff]
    %v7783 = vld [vmem:[#allocation9 + $0xb8] sm:$0xff]
    %v7784 = vld [vmem:[#allocation9 + $0xc0] sm:$0xff]
    %v7785 = vld [vmem:[#allocation9 + $0xc8] sm:$0xff]
    %v7786 = vld [vmem:[#allocation9 + $0xd0] sm:$0xff]
    %v7787 = vld [vmem:[#allocation9 + $0xd8] sm:$0xff]
    %v7788 = vld [vmem:[#allocation9 + $0xe0] sm:$0xff]
    %v7789 = vld [vmem:[#allocation9 + $0xe8] sm:$0xff]
    %v7790 = vld [vmem:[#allocation9 + $0xf0] sm:$0xff]
    %v7791 = vld [vmem:[#allocation9 + $0xf8] sm:$0xff]
    %v7792 = vld [vmem:[#allocation9 + $0x100] sm:$0xff]
    %v7793 = vld [vmem:[#allocation9 + $0x108] sm:$0xff]
    %v7794 = vld [vmem:[#allocation9 + $0x110] sm:$0xff]
    %v7795 = vld [vmem:[#allocation9 + $0x118] sm:$0xff]
    %v7796 = vld [vmem:[#allocation9 + $0x120] sm:$0xff]
    %v7797 = vld [vmem:[#allocation9 + $0x128] sm:$0xff]
    %v7798 = vld [vmem:[#allocation9 + $0x130] sm:$0xff]
    %v7799 = vld [vmem:[#allocation9 + $0x138] sm:$0xff]
    %v7800 = vld [vmem:[#allocation9 + $0x140] sm:$0xff]
    %v7801 = vld [vmem:[#allocation9 + $0x148] sm:$0xff]
    %v7802 = vld [vmem:[#allocation9 + $0x150] sm:$0xff]
    %v7803 = vld [vmem:[#allocation9 + $0x158] sm:$0xff]
    %v7804 = vld [vmem:[#allocation9 + $0x160] sm:$0xff]
    %v7805 = vld [vmem:[#allocation9 + $0x168] sm:$0xff]
    %v7806 = vld [vmem:[#allocation9 + $0x170] sm:$0xff]
    %v7807 = vld [vmem:[#allocation9 + $0x178] sm:$0xff]
    %v7808 = vld [vmem:[#allocation9 + $0x180] sm:$0xff]
    %v7809 = vld [vmem:[#allocation9 + $0x188] sm:$0xff]
    %v7810 = vld [vmem:[#allocation9 + $0x190] sm:$0xff]
    %v7811 = vld [vmem:[#allocation9 + $0x198] sm:$0xff]
    %v7812 = vld [vmem:[#allocation9 + $0x1a0] sm:$0xff]
    %v7813 = vld [vmem:[#allocation9 + $0x1a8] sm:$0xff]
    %v7814 = vld [vmem:[#allocation9 + $0x1b0] sm:$0xff]
    %v7815 = vld [vmem:[#allocation9 + $0x1b8] sm:$0xff]
    %v7816 = vld [vmem:[#allocation9 + $0x1c0] sm:$0xff]
    %v7817 = vld [vmem:[#allocation9 + $0x1c8] sm:$0xff]
    %v7818 = vld [vmem:[#allocation9 + $0x1d0] sm:$0xff]
    %v7819 = vld [vmem:[#allocation9 + $0x1d8] sm:$0xff]
    %v7820 = vld [vmem:[#allocation9 + $0x1e0] sm:$0xff]
    %v7821 = vld [vmem:[#allocation9 + $0x1e8] sm:$0xff]
    %v7822 = vld [vmem:[#allocation9 + $0x1f0] sm:$0xff]
    %v7823 = vld [vmem:[#allocation9 + $0x1f8] sm:$0xff]
    %v7824 = vld [vmem:[#allocation9 + $0x200] sm:$0xff]
    %v7825 = vld [vmem:[#allocation9 + $0x208] sm:$0xff]
    %v7826 = vld [vmem:[#allocation9 + $0x210] sm:$0xff]
    %v7827 = vld [vmem:[#allocation9 + $0x218] sm:$0xff]
    %v7828 = vld [vmem:[#allocation9 + $0x220] sm:$0xff]
    %v7829 = vld [vmem:[#allocation9 + $0x228] sm:$0xff]
    %v7830 = vld [vmem:[#allocation9 + $0x230] sm:$0xff]
    %v7831 = vld [vmem:[#allocation9 + $0x238] sm:$0xff]
    %v7832 = vld [vmem:[#allocation9 + $0x240] sm:$0xff]
    %v7833 = vld [vmem:[#allocation9 + $0x248] sm:$0xff]
    %v7834 = vld [vmem:[#allocation9 + $0x250] sm:$0xff]
    %v7835 = vld [vmem:[#allocation9 + $0x258] sm:$0xff]
    %v7836 = vld [vmem:[#allocation9 + $0x260] sm:$0xff]
    %v7837 = vld [vmem:[#allocation9 + $0x268] sm:$0xff]
    %v7838 = vld [vmem:[#allocation9 + $0x270] sm:$0xff]
    %v7839 = vld [vmem:[#allocation9 + $0x278] sm:$0xff]
    %v7840 = vld [vmem:[#allocation9 + $0x280] sm:$0xff]
    %v7841 = vld [vmem:[#allocation9 + $0x288] sm:$0xff]
    %v7842 = vld [vmem:[#allocation9 + $0x290] sm:$0xff]
    %v7843 = vld [vmem:[#allocation9 + $0x298] sm:$0xff]
    %v7844 = vld [vmem:[#allocation9 + $0x2a0] sm:$0xff]
    %v7845 = vld [vmem:[#allocation9 + $0x2a8] sm:$0xff]
    %v7846 = vld [vmem:[#allocation9 + $0x2b0] sm:$0xff]
    %v7847 = vld [vmem:[#allocation9 + $0x2b8] sm:$0xff]
    %v7848 = vld [vmem:[#allocation9 + $0x2c0] sm:$0xff]
    %v7849 = vld [vmem:[#allocation9 + $0x2c8] sm:$0xff]
    %v7850 = vld [vmem:[#allocation9 + $0x2d0] sm:$0xff]
    %v7851 = vld [vmem:[#allocation9 + $0x2d8] sm:$0xff]
    %v7852 = vld [vmem:[#allocation9 + $0x2e0] sm:$0xff]
    %v7853 = vld [vmem:[#allocation9 + $0x2e8] sm:$0xff]
    %v7854 = vld [vmem:[#allocation9 + $0x2f0] sm:$0xff]
    %v7855 = vld [vmem:[#allocation9 + $0x2f8] sm:$0xff]
    %v7856 = vld [vmem:[#allocation9 + $0x300] sm:$0xff]
    %v7857 = vld [vmem:[#allocation9 + $0x308] sm:$0xff]
    %v7858 = vld [vmem:[#allocation9 + $0x310] sm:$0xff]
    %v7859 = vld [vmem:[#allocation9 + $0x318] sm:$0xff]
    %v7860 = vld [vmem:[#allocation9 + $0x320] sm:$0xff]
    %v7861 = vld [vmem:[#allocation9 + $0x328] sm:$0xff]
    %v7862 = vld [vmem:[#allocation9 + $0x330] sm:$0xff]
    %v7863 = vld [vmem:[#allocation9 + $0x338] sm:$0xff]
    %v7864 = vld [vmem:[#allocation9 + $0x340] sm:$0xff]
    %v7865 = vld [vmem:[#allocation9 + $0x348] sm:$0xff]
    %v7866 = vld [vmem:[#allocation9 + $0x350] sm:$0xff]
    %v7867 = vld [vmem:[#allocation9 + $0x358] sm:$0xff]
    %v7868 = vld [vmem:[#allocation9 + $0x360] sm:$0xff]
    %v7869 = vld [vmem:[#allocation9 + $0x368] sm:$0xff]
    %v7870 = vld [vmem:[#allocation9 + $0x370] sm:$0xff]
    %v7871 = vld [vmem:[#allocation9 + $0x378] sm:$0xff]
    %v7872 = vld [vmem:[#allocation9 + $0x380] sm:$0xff]
    %v7873 = vld [vmem:[#allocation9 + $0x388] sm:$0xff]
    %v7874 = vld [vmem:[#allocation9 + $0x390] sm:$0xff]
    %v7875 = vld [vmem:[#allocation9 + $0x398] sm:$0xff]
    %v7876 = vld [vmem:[#allocation9 + $0x3a0] sm:$0xff]
    %v7877 = vld [vmem:[#allocation9 + $0x3a8] sm:$0xff]
    %v7878 = vld [vmem:[#allocation9 + $0x3b0] sm:$0xff]
    %v7879 = vld [vmem:[#allocation9 + $0x3b8] sm:$0xff]
    %v7880 = vld [vmem:[#allocation9 + $0x3c0] sm:$0xff]
    %v7881 = vld [vmem:[#allocation9 + $0x3c8] sm:$0xff]
    %v7882 = vld [vmem:[#allocation9 + $0x3d0] sm:$0xff]
    %v7883 = vld [vmem:[#allocation9 + $0x3d8] sm:$0xff]
    %v7884 = vld [vmem:[#allocation9 + $0x3e0] sm:$0xff]
    %v7885 = vld [vmem:[#allocation9 + $0x3e8] sm:$0xff]
    %v7886 = vld [vmem:[#allocation9 + $0x3f0] sm:$0xff]
    %v7887 = vld [vmem:[#allocation9 + $0x3f8] sm:$0xff]
    %v8016 = vunpack.c.l.b16 %v7760
    %v8017 = vunpack.c.h.b16 %v7760
    %v8018 = vunpack.c.l.b16 %v7761
    %v8019 = vunpack.c.h.b16 %v7761
    %v8020 = vunpack.c.l.b16 %v7762
    %v8021 = vunpack.c.h.b16 %v7762
    %v8022 = vunpack.c.l.b16 %v7763
    %v8023 = vunpack.c.h.b16 %v7763
    %v8024 = vunpack.c.l.b16 %v7764
    %v8025 = vunpack.c.h.b16 %v7764
    %v8026 = vunpack.c.l.b16 %v7765
    %v8027 = vunpack.c.h.b16 %v7765
    %v8028 = vunpack.c.l.b16 %v7766
    %v8029 = vunpack.c.h.b16 %v7766
    %v8030 = vunpack.c.l.b16 %v7767
    %v8031 = vunpack.c.h.b16 %v7767
    %v8032 = vunpack.c.l.b16 %v7768
    %v8033 = vunpack.c.h.b16 %v7768
    %v8034 = vunpack.c.l.b16 %v7769
    %v8035 = vunpack.c.h.b16 %v7769
    %v8036 = vunpack.c.l.b16 %v7770
    %v8037 = vunpack.c.h.b16 %v7770
    %v8038 = vunpack.c.l.b16 %v7771
    %v8039 = vunpack.c.h.b16 %v7771
    %v8040 = vunpack.c.l.b16 %v7772
    %v8041 = vunpack.c.h.b16 %v7772
    %v8042 = vunpack.c.l.b16 %v7773
    %v8043 = vunpack.c.h.b16 %v7773
    %v8044 = vunpack.c.l.b16 %v7774
    %v8045 = vunpack.c.h.b16 %v7774
    %v8046 = vunpack.c.l.b16 %v7775
    %v8047 = vunpack.c.h.b16 %v7775
    %v8048 = vunpack.c.l.b16 %v7776
    %v8049 = vunpack.c.h.b16 %v7776
    %v8050 = vunpack.c.l.b16 %v7777
    %v8051 = vunpack.c.h.b16 %v7777
    %v8052 = vunpack.c.l.b16 %v7778
    %v8053 = vunpack.c.h.b16 %v7778
    %v8054 = vunpack.c.l.b16 %v7779
    %v8055 = vunpack.c.h.b16 %v7779
    %v8056 = vunpack.c.l.b16 %v7780
    %v8057 = vunpack.c.h.b16 %v7780
    %v8058 = vunpack.c.l.b16 %v7781
    %v8059 = vunpack.c.h.b16 %v7781
    %v8060 = vunpack.c.l.b16 %v7782
    %v8061 = vunpack.c.h.b16 %v7782
    %v8062 = vunpack.c.l.b16 %v7783
    %v8063 = vunpack.c.h.b16 %v7783
    %v8064 = vunpack.c.l.b16 %v7784
    %v8065 = vunpack.c.h.b16 %v7784
    %v8066 = vunpack.c.l.b16 %v7785
    %v8067 = vunpack.c.h.b16 %v7785
    %v8068 = vunpack.c.l.b16 %v7786
    %v8069 = vunpack.c.h.b16 %v7786
    %v8070 = vunpack.c.l.b16 %v7787
    %v8071 = vunpack.c.h.b16 %v7787
    %v8072 = vunpack.c.l.b16 %v7788
    %v8073 = vunpack.c.h.b16 %v7788
    %v8074 = vunpack.c.l.b16 %v7789
    %v8075 = vunpack.c.h.b16 %v7789
    %v8076 = vunpack.c.l.b16 %v7790
    %v8077 = vunpack.c.h.b16 %v7790
    %v8078 = vunpack.c.l.b16 %v7791
    %v8079 = vunpack.c.h.b16 %v7791
    %v8080 = vunpack.c.l.b16 %v7792
    %v8081 = vunpack.c.h.b16 %v7792
    %v8082 = vunpack.c.l.b16 %v7793
    %v8083 = vunpack.c.h.b16 %v7793
    %v8084 = vunpack.c.l.b16 %v7794
    %v8085 = vunpack.c.h.b16 %v7794
    %v8086 = vunpack.c.l.b16 %v7795
    %v8087 = vunpack.c.h.b16 %v7795
    %v8088 = vunpack.c.l.b16 %v7796
    %v8089 = vunpack.c.h.b16 %v7796
    %v8090 = vunpack.c.l.b16 %v7797
    %v8091 = vunpack.c.h.b16 %v7797
    %v8092 = vunpack.c.l.b16 %v7798
    %v8093 = vunpack.c.h.b16 %v7798
    %v8094 = vunpack.c.l.b16 %v7799
    %v8095 = vunpack.c.h.b16 %v7799
    %v8096 = vunpack.c.l.b16 %v7800
    %v8097 = vunpack.c.h.b16 %v7800
    %v8098 = vunpack.c.l.b16 %v7801
    %v8099 = vunpack.c.h.b16 %v7801
    %v8100 = vunpack.c.l.b16 %v7802
    %v8101 = vunpack.c.h.b16 %v7802
    %v8102 = vunpack.c.l.b16 %v7803
    %v8103 = vunpack.c.h.b16 %v7803
    %v8104 = vunpack.c.l.b16 %v7804
    %v8105 = vunpack.c.h.b16 %v7804
    %v8106 = vunpack.c.l.b16 %v7805
    %v8107 = vunpack.c.h.b16 %v7805
    %v8108 = vunpack.c.l.b16 %v7806
    %v8109 = vunpack.c.h.b16 %v7806
    %v8110 = vunpack.c.l.b16 %v7807
    %v8111 = vunpack.c.h.b16 %v7807
    %v8112 = vunpack.c.l.b16 %v7808
    %v8113 = vunpack.c.h.b16 %v7808
    %v8114 = vunpack.c.l.b16 %v7809
    %v8115 = vunpack.c.h.b16 %v7809
    %v8116 = vunpack.c.l.b16 %v7810
    %v8117 = vunpack.c.h.b16 %v7810
    %v8118 = vunpack.c.l.b16 %v7811
    %v8119 = vunpack.c.h.b16 %v7811
    %v8120 = vunpack.c.l.b16 %v7812
    %v8121 = vunpack.c.h.b16 %v7812
    %v8122 = vunpack.c.l.b16 %v7813
    %v8123 = vunpack.c.h.b16 %v7813
    %v8124 = vunpack.c.l.b16 %v7814
    %v8125 = vunpack.c.h.b16 %v7814
    %v8126 = vunpack.c.l.b16 %v7815
    %v8127 = vunpack.c.h.b16 %v7815
    %v8128 = vunpack.c.l.b16 %v7816
    %v8129 = vunpack.c.h.b16 %v7816
    %v8130 = vunpack.c.l.b16 %v7817
    %v8131 = vunpack.c.h.b16 %v7817
    %v8132 = vunpack.c.l.b16 %v7818
    %v8133 = vunpack.c.h.b16 %v7818
    %v8134 = vunpack.c.l.b16 %v7819
    %v8135 = vunpack.c.h.b16 %v7819
    %v8136 = vunpack.c.l.b16 %v7820
    %v8137 = vunpack.c.h.b16 %v7820
    %v8138 = vunpack.c.l.b16 %v7821
    %v8139 = vunpack.c.h.b16 %v7821
    %v8140 = vunpack.c.l.b16 %v7822
    %v8141 = vunpack.c.h.b16 %v7822
    %v8142 = vunpack.c.l.b16 %v7823
    %v8143 = vunpack.c.h.b16 %v7823
    %v8144 = vunpack.c.l.b16 %v7824
    %v8145 = vunpack.c.h.b16 %v7824
    %v8146 = vunpack.c.l.b16 %v7825
    %v8147 = vunpack.c.h.b16 %v7825
    %v8148 = vunpack.c.l.b16 %v7826
    %v8149 = vunpack.c.h.b16 %v7826
    %v8150 = vunpack.c.l.b16 %v7827
    %v8151 = vunpack.c.h.b16 %v7827
    %v8152 = vunpack.c.l.b16 %v7828
    %v8153 = vunpack.c.h.b16 %v7828
    %v8154 = vunpack.c.l.b16 %v7829
    %v8155 = vunpack.c.h.b16 %v7829
    %v8156 = vunpack.c.l.b16 %v7830
    %v8157 = vunpack.c.h.b16 %v7830
    %v8158 = vunpack.c.l.b16 %v7831
    %v8159 = vunpack.c.h.b16 %v7831
    %v8160 = vunpack.c.l.b16 %v7832
    %v8161 = vunpack.c.h.b16 %v7832
    %v8162 = vunpack.c.l.b16 %v7833
    %v8163 = vunpack.c.h.b16 %v7833
    %v8164 = vunpack.c.l.b16 %v7834
    %v8165 = vunpack.c.h.b16 %v7834
    %v8166 = vunpack.c.l.b16 %v7835
    %v8167 = vunpack.c.h.b16 %v7835
    %v8168 = vunpack.c.l.b16 %v7836
    %v8169 = vunpack.c.h.b16 %v7836
    %v8170 = vunpack.c.l.b16 %v7837
    %v8171 = vunpack.c.h.b16 %v7837
    %v8172 = vunpack.c.l.b16 %v7838
    %v8173 = vunpack.c.h.b16 %v7838
    %v8174 = vunpack.c.l.b16 %v7839
    %v8175 = vunpack.c.h.b16 %v7839
    %v8176 = vunpack.c.l.b16 %v7840
    %v8177 = vunpack.c.h.b16 %v7840
    %v8178 = vunpack.c.l.b16 %v7841
    %v8179 = vunpack.c.h.b16 %v7841
    %v8180 = vunpack.c.l.b16 %v7842
    %v8181 = vunpack.c.h.b16 %v7842
    %v8182 = vunpack.c.l.b16 %v7843
    %v8183 = vunpack.c.h.b16 %v7843
    %v8184 = vunpack.c.l.b16 %v7844
    %v8185 = vunpack.c.h.b16 %v7844
    %v8186 = vunpack.c.l.b16 %v7845
    %v8187 = vunpack.c.h.b16 %v7845
    %v8188 = vunpack.c.l.b16 %v7846
    %v8189 = vunpack.c.h.b16 %v7846
    %v8190 = vunpack.c.l.b16 %v7847
    %v8191 = vunpack.c.h.b16 %v7847
    %v8192 = vunpack.c.l.b16 %v7848
    %v8193 = vunpack.c.h.b16 %v7848
    %v8194 = vunpack.c.l.b16 %v7849
    %v8195 = vunpack.c.h.b16 %v7849
    %v8196 = vunpack.c.l.b16 %v7850
    %v8197 = vunpack.c.h.b16 %v7850
    %v8198 = vunpack.c.l.b16 %v7851
    %v8199 = vunpack.c.h.b16 %v7851
    %v8200 = vunpack.c.l.b16 %v7852
    %v8201 = vunpack.c.h.b16 %v7852
    %v8202 = vunpack.c.l.b16 %v7853
    %v8203 = vunpack.c.h.b16 %v7853
    %v8204 = vunpack.c.l.b16 %v7854
    %v8205 = vunpack.c.h.b16 %v7854
    %v8206 = vunpack.c.l.b16 %v7855
    %v8207 = vunpack.c.h.b16 %v7855
    %v8208 = vunpack.c.l.b16 %v7856
    %v8209 = vunpack.c.h.b16 %v7856
    %v8210 = vunpack.c.l.b16 %v7857
    %v8211 = vunpack.c.h.b16 %v7857
    %v8212 = vunpack.c.l.b16 %v7858
    %v8213 = vunpack.c.h.b16 %v7858
    %v8214 = vunpack.c.l.b16 %v7859
    %v8215 = vunpack.c.h.b16 %v7859
    %v8216 = vunpack.c.l.b16 %v7860
    %v8217 = vunpack.c.h.b16 %v7860
    %v8218 = vunpack.c.l.b16 %v7861
    %v8219 = vunpack.c.h.b16 %v7861
    %v8220 = vunpack.c.l.b16 %v7862
    %v8221 = vunpack.c.h.b16 %v7862
    %v8222 = vunpack.c.l.b16 %v7863
    %v8223 = vunpack.c.h.b16 %v7863
    %v8224 = vunpack.c.l.b16 %v7864
    %v8225 = vunpack.c.h.b16 %v7864
    %v8226 = vunpack.c.l.b16 %v7865
    %v8227 = vunpack.c.h.b16 %v7865
    %v8228 = vunpack.c.l.b16 %v7866
    %v8229 = vunpack.c.h.b16 %v7866
    %v8230 = vunpack.c.l.b16 %v7867
    %v8231 = vunpack.c.h.b16 %v7867
    %v8232 = vunpack.c.l.b16 %v7868
    %v8233 = vunpack.c.h.b16 %v7868
    %v8234 = vunpack.c.l.b16 %v7869
    %v8235 = vunpack.c.h.b16 %v7869
    %v8236 = vunpack.c.l.b16 %v7870
    %v8237 = vunpack.c.h.b16 %v7870
    %v8238 = vunpack.c.l.b16 %v7871
    %v8239 = vunpack.c.h.b16 %v7871
    %v8240 = vunpack.c.l.b16 %v7872
    %v8241 = vunpack.c.h.b16 %v7872
    %v8242 = vunpack.c.l.b16 %v7873
    %v8243 = vunpack.c.h.b16 %v7873
    %v8244 = vunpack.c.l.b16 %v7874
    %v8245 = vunpack.c.h.b16 %v7874
    %v8246 = vunpack.c.l.b16 %v7875
    %v8247 = vunpack.c.h.b16 %v7875
    %v8248 = vunpack.c.l.b16 %v7876
    %v8249 = vunpack.c.h.b16 %v7876
    %v8250 = vunpack.c.l.b16 %v7877
    %v8251 = vunpack.c.h.b16 %v7877
    %v8252 = vunpack.c.l.b16 %v7878
    %v8253 = vunpack.c.h.b16 %v7878
    %v8254 = vunpack.c.l.b16 %v7879
    %v8255 = vunpack.c.h.b16 %v7879
    %v8256 = vunpack.c.l.b16 %v7880
    %v8257 = vunpack.c.h.b16 %v7880
    %v8258 = vunpack.c.l.b16 %v7881
    %v8259 = vunpack.c.h.b16 %v7881
    %v8260 = vunpack.c.l.b16 %v7882
    %v8261 = vunpack.c.h.b16 %v7882
    %v8262 = vunpack.c.l.b16 %v7883
    %v8263 = vunpack.c.h.b16 %v7883
    %v8264 = vunpack.c.l.b16 %v7884
    %v8265 = vunpack.c.h.b16 %v7884
    %v8266 = vunpack.c.l.b16 %v7885
    %v8267 = vunpack.c.h.b16 %v7885
    %v8268 = vunpack.c.l.b16 %v7886
    %v8269 = vunpack.c.h.b16 %v7886
    %v8270 = vunpack.c.l.b16 %v7887
    %v8271 = vunpack.c.h.b16 %v7887
    %v8272 = vpack.c.b16 %v8024, %v8016
    %v8273 = vpack.c.b16 %v8025, %v8017
    %v8274 = vpack.c.b16 %v8026, %v8018
    %v8275 = vpack.c.b16 %v8027, %v8019
    %v8276 = vpack.c.b16 %v8028, %v8020
    %v8277 = vpack.c.b16 %v8029, %v8021
    %v8278 = vpack.c.b16 %v8030, %v8022
    %v8279 = vpack.c.b16 %v8031, %v8023
    %v8280 = vpack.c.b16 %v8040, %v8032
    %v8281 = vpack.c.b16 %v8041, %v8033
    %v8282 = vpack.c.b16 %v8042, %v8034
    %v8283 = vpack.c.b16 %v8043, %v8035
    %v8284 = vpack.c.b16 %v8044, %v8036
    %v8285 = vpack.c.b16 %v8045, %v8037
    %v8286 = vpack.c.b16 %v8046, %v8038
    %v8287 = vpack.c.b16 %v8047, %v8039
    %v8288 = vpack.c.b16 %v8056, %v8048
    %v8289 = vpack.c.b16 %v8057, %v8049
    %v8290 = vpack.c.b16 %v8058, %v8050
    %v8291 = vpack.c.b16 %v8059, %v8051
    %v8292 = vpack.c.b16 %v8060, %v8052
    %v8293 = vpack.c.b16 %v8061, %v8053
    %v8294 = vpack.c.b16 %v8062, %v8054
    %v8295 = vpack.c.b16 %v8063, %v8055
    %v8296 = vpack.c.b16 %v8072, %v8064
    %v8297 = vpack.c.b16 %v8073, %v8065
    %v8298 = vpack.c.b16 %v8074, %v8066
    %v8299 = vpack.c.b16 %v8075, %v8067
    %v8300 = vpack.c.b16 %v8076, %v8068
    %v8301 = vpack.c.b16 %v8077, %v8069
    %v8302 = vpack.c.b16 %v8078, %v8070
    %v8303 = vpack.c.b16 %v8079, %v8071
    %v8304 = vpack.c.b16 %v8088, %v8080
    %v8305 = vpack.c.b16 %v8089, %v8081
    %v8306 = vpack.c.b16 %v8090, %v8082
    %v8307 = vpack.c.b16 %v8091, %v8083
    %v8308 = vpack.c.b16 %v8092, %v8084
    %v8309 = vpack.c.b16 %v8093, %v8085
    %v8310 = vpack.c.b16 %v8094, %v8086
    %v8311 = vpack.c.b16 %v8095, %v8087
    %v8312 = vpack.c.b16 %v8104, %v8096
    %v8313 = vpack.c.b16 %v8105, %v8097
    %v8314 = vpack.c.b16 %v8106, %v8098
    %v8315 = vpack.c.b16 %v8107, %v8099
    %v8316 = vpack.c.b16 %v8108, %v8100
    %v8317 = vpack.c.b16 %v8109, %v8101
    %v8318 = vpack.c.b16 %v8110, %v8102
    %v8319 = vpack.c.b16 %v8111, %v8103
    %v8320 = vpack.c.b16 %v8120, %v8112
    %v8321 = vpack.c.b16 %v8121, %v8113
    %v8322 = vpack.c.b16 %v8122, %v8114
    %v8323 = vpack.c.b16 %v8123, %v8115
    %v8324 = vpack.c.b16 %v8124, %v8116
    %v8325 = vpack.c.b16 %v8125, %v8117
    %v8326 = vpack.c.b16 %v8126, %v8118
    %v8327 = vpack.c.b16 %v8127, %v8119
    %v8328 = vpack.c.b16 %v8136, %v8128
    %v8329 = vpack.c.b16 %v8137, %v8129
    %v8330 = vpack.c.b16 %v8138, %v8130
    %v8331 = vpack.c.b16 %v8139, %v8131
    %v8332 = vpack.c.b16 %v8140, %v8132
    %v8333 = vpack.c.b16 %v8141, %v8133
    %v8334 = vpack.c.b16 %v8142, %v8134
    %v8335 = vpack.c.b16 %v8143, %v8135
    %v8336 = vpack.c.b16 %v8152, %v8144
    %v8337 = vpack.c.b16 %v8153, %v8145
    %v8338 = vpack.c.b16 %v8154, %v8146
    %v8339 = vpack.c.b16 %v8155, %v8147
    %v8340 = vpack.c.b16 %v8156, %v8148
    %v8341 = vpack.c.b16 %v8157, %v8149
    %v8342 = vpack.c.b16 %v8158, %v8150
    %v8343 = vpack.c.b16 %v8159, %v8151
    %v8344 = vpack.c.b16 %v8168, %v8160
    %v8345 = vpack.c.b16 %v8169, %v8161
    %v8346 = vpack.c.b16 %v8170, %v8162
    %v8347 = vpack.c.b16 %v8171, %v8163
    %v8348 = vpack.c.b16 %v8172, %v8164
    %v8349 = vpack.c.b16 %v8173, %v8165
    %v8350 = vpack.c.b16 %v8174, %v8166
    %v8351 = vpack.c.b16 %v8175, %v8167
    %v8352 = vpack.c.b16 %v8184, %v8176
    %v8353 = vpack.c.b16 %v8185, %v8177
    %v8354 = vpack.c.b16 %v8186, %v8178
    %v8355 = vpack.c.b16 %v8187, %v8179
    %v8356 = vpack.c.b16 %v8188, %v8180
    %v8357 = vpack.c.b16 %v8189, %v8181
    %v8358 = vpack.c.b16 %v8190, %v8182
    %v8359 = vpack.c.b16 %v8191, %v8183
    %v8360 = vpack.c.b16 %v8200, %v8192
    %v8361 = vpack.c.b16 %v8201, %v8193
    %v8362 = vpack.c.b16 %v8202, %v8194
    %v8363 = vpack.c.b16 %v8203, %v8195
    %v8364 = vpack.c.b16 %v8204, %v8196
    %v8365 = vpack.c.b16 %v8205, %v8197
    %v8366 = vpack.c.b16 %v8206, %v8198
    %v8367 = vpack.c.b16 %v8207, %v8199
    %v8368 = vpack.c.b16 %v8216, %v8208
    %v8369 = vpack.c.b16 %v8217, %v8209
    %v8370 = vpack.c.b16 %v8218, %v8210
    %v8371 = vpack.c.b16 %v8219, %v8211
    %v8372 = vpack.c.b16 %v8220, %v8212
    %v8373 = vpack.c.b16 %v8221, %v8213
    %v8374 = vpack.c.b16 %v8222, %v8214
    %v8375 = vpack.c.b16 %v8223, %v8215
    %v8376 = vpack.c.b16 %v8232, %v8224
    %v8377 = vpack.c.b16 %v8233, %v8225
    %v8378 = vpack.c.b16 %v8234, %v8226
    %v8379 = vpack.c.b16 %v8235, %v8227
    %v8380 = vpack.c.b16 %v8236, %v8228
    %v8381 = vpack.c.b16 %v8237, %v8229
    %v8382 = vpack.c.b16 %v8238, %v8230
    %v8383 = vpack.c.b16 %v8239, %v8231
    %v8384 = vpack.c.b16 %v8248, %v8240
    %v8385 = vpack.c.b16 %v8249, %v8241
    %v8386 = vpack.c.b16 %v8250, %v8242
    %v8387 = vpack.c.b16 %v8251, %v8243
    %v8388 = vpack.c.b16 %v8252, %v8244
    %v8389 = vpack.c.b16 %v8253, %v8245
    %v8390 = vpack.c.b16 %v8254, %v8246
    %v8391 = vpack.c.b16 %v8255, %v8247
    %v8392 = vpack.c.b16 %v8264, %v8256
    %v8393 = vpack.c.b16 %v8265, %v8257
    %v8394 = vpack.c.b16 %v8266, %v8258
    %v8395 = vpack.c.b16 %v8267, %v8259
    %v8396 = vpack.c.b16 %v8268, %v8260
    %v8397 = vpack.c.b16 %v8269, %v8261
    %v8398 = vpack.c.b16 %v8270, %v8262
    %v8399 = vpack.c.b16 %v8271, %v8263
    %8528 = vmatprep.subr.bf16.mxu0 %v8273
    %8529 = vmatpush1.bf16.msra.mxu0 %v8272
    %8530 = vmatprep.subr.bf16.mxu0 %v8281
    %8531 = vmatpush1.bf16.msra.mxu0 %v8280
    %8532 = vmatprep.subr.bf16.mxu0 %v8289
    %8533 = vmatpush1.bf16.msra.mxu0 %v8288
    %8534 = vmatprep.subr.bf16.mxu0 %v8297
    %8535 = vmatpush1.bf16.msra.mxu0 %v8296
    %8536 = vmatprep.subr.bf16.mxu0 %v8305
    %8537 = vmatpush1.bf16.msra.mxu0 %v8304
    %8538 = vmatprep.subr.bf16.mxu0 %v8313
    %8539 = vmatpush1.bf16.msra.mxu0 %v8312
    %8540 = vmatprep.subr.bf16.mxu0 %v8321
    %8541 = vmatpush1.bf16.msra.mxu0 %v8320
    %8542 = vmatprep.subr.bf16.mxu0 %v8329
    %8543 = vmatpush1.bf16.msra.mxu0 %v8328
    %8544 = vmatprep.subr.bf16.mxu0 %v8337
    %8545 = vmatpush1.bf16.msra.mxu0 %v8336
    %8546 = vmatprep.subr.bf16.mxu0 %v8345
    %8547 = vmatpush1.bf16.msra.mxu0 %v8344
    %8548 = vmatprep.subr.bf16.mxu0 %v8353
    %8549 = vmatpush1.bf16.msra.mxu0 %v8352
    %8550 = vmatprep.subr.bf16.mxu0 %v8361
    %8551 = vmatpush1.bf16.msra.mxu0 %v8360
    %8552 = vmatprep.subr.bf16.mxu0 %v8369
    %8553 = vmatpush1.bf16.msra.mxu0 %v8368
    %8554 = vmatprep.subr.bf16.mxu0 %v8377
    %8555 = vmatpush1.bf16.msra.mxu0 %v8376
    %8556 = vmatprep.subr.bf16.mxu0 %v8385
    %8557 = vmatpush1.bf16.msra.mxu0 %v8384
    %8558 = vmatprep.subr.bf16.mxu0 %v8393
    %8559 = vmatpush1.bf16.msra.mxu0 %v8392
    %8560 = vmatprep.mubr.bf16.mxu0 %v7749
    %8561 = vmatmul.mubr.bf16.gmra.mrb[0].mxu0 %v7748
    %v8562 = vpop.f32.mrb[0].mxu0
    %v8563 = vadd.f32 0.0, %v8562
    %v8564 = vpop.f32.mrb[0].mxu0
    %v8565 = vadd.f32 0.0, %v8564
    %v8566 = vpop.f32.mrb[0].mxu0
    %v8567 = vpop.f32.mrb[0].mxu0
    %8568 = vdwg.mxu0
    %8569 = vmatprep.subr.bf16.mxu0 %v8275
    %8570 = vmatpush1.bf16.msra.mxu0 %v8274
    %8571 = vmatprep.subr.bf16.mxu0 %v8283
    %8572 = vmatpush1.bf16.msra.mxu0 %v8282
    %8573 = vmatprep.subr.bf16.mxu0 %v8291
    %8574 = vmatpush1.bf16.msra.mxu0 %v8290
    %8575 = vmatprep.subr.bf16.mxu0 %v8299
    %8576 = vmatpush1.bf16.msra.mxu0 %v8298
    %8577 = vmatprep.subr.bf16.mxu0 %v8307
    %8578 = vmatpush1.bf16.msra.mxu0 %v8306
    %8579 = vmatprep.subr.bf16.mxu0 %v8315
    %8580 = vmatpush1.bf16.msra.mxu0 %v8314
    %8581 = vmatprep.subr.bf16.mxu0 %v8323
    %8582 = vmatpush1.bf16.msra.mxu0 %v8322
    %8583 = vmatprep.subr.bf16.mxu0 %v8331
    %8584 = vmatpush1.bf16.msra.mxu0 %v8330
    %8585 = vmatprep.subr.bf16.mxu0 %v8339
    %8586 = vmatpush1.bf16.msra.mxu0 %v8338
    %8587 = vmatprep.subr.bf16.mxu0 %v8347
    %8588 = vmatpush1.bf16.msra.mxu0 %v8346
    %8589 = vmatprep.subr.bf16.mxu0 %v8355
    %8590 = vmatpush1.bf16.msra.mxu0 %v8354
    %8591 = vmatprep.subr.bf16.mxu0 %v8363
    %8592 = vmatpush1.bf16.msra.mxu0 %v8362
    %8593 = vmatprep.subr.bf16.mxu0 %v8371
    %8594 = vmatpush1.bf16.msra.mxu0 %v8370
    %8595 = vmatprep.subr.bf16.mxu0 %v8379
    %8596 = vmatpush1.bf16.msra.mxu0 %v8378
    %8597 = vmatprep.subr.bf16.mxu0 %v8387
    %8598 = vmatpush1.bf16.msra.mxu0 %v8386
    %8599 = vmatprep.subr.bf16.mxu0 %v8395
    %8600 = vmatpush1.bf16.msra.mxu0 %v8394
    %8601 = vmatprep.mubr.bf16.mxu0 %v7749
    %8602 = vmatmul.mubr.bf16.gmra.mrb[0].mxu0 %v7748
    %v8603 = vpop.f32.mrb[0].mxu0
    %v8604 = vadd.f32 0.0, %v8603
    %v8605 = vpop.f32.mrb[0].mxu0
    %v8606 = vadd.f32 0.0, %v8605
    %v8607 = vpop.f32.mrb[0].mxu0
    %v8608 = vpop.f32.mrb[0].mxu0
    %8609 = vdwg.mxu0
    %8610 = vmatprep.subr.bf16.mxu0 %v8277
    %8611 = vmatpush1.bf16.msra.mxu0 %v8276
    %8612 = vmatprep.subr.bf16.mxu0 %v8285
    %8613 = vmatpush1.bf16.msra.mxu0 %v8284
    %8614 = vmatprep.subr.bf16.mxu0 %v8293
    %8615 = vmatpush1.bf16.msra.mxu0 %v8292
    %8616 = vmatprep.subr.bf16.mxu0 %v8301
    %8617 = vmatpush1.bf16.msra.mxu0 %v8300
    %8618 = vmatprep.subr.bf16.mxu0 %v8309
    %8619 = vmatpush1.bf16.msra.mxu0 %v8308
    %8620 = vmatprep.subr.bf16.mxu0 %v8317
    %8621 = vmatpush1.bf16.msra.mxu0 %v8316
    %8622 = vmatprep.subr.bf16.mxu0 %v8325
    %8623 = vmatpush1.bf16.msra.mxu0 %v8324
    %8624 = vmatprep.subr.bf16.mxu0 %v8333
    %8625 = vmatpush1.bf16.msra.mxu0 %v8332
    %8626 = vmatprep.subr.bf16.mxu0 %v8341
    %8627 = vmatpush1.bf16.msra.mxu0 %v8340
    %8628 = vmatprep.subr.bf16.mxu0 %v8349
    %8629 = vmatpush1.bf16.msra.mxu0 %v8348
    %8630 = vmatprep.subr.bf16.mxu0 %v8357
    %8631 = vmatpush1.bf16.msra.mxu0 %v8356
    %8632 = vmatprep.subr.bf16.mxu0 %v8365
    %8633 = vmatpush1.bf16.msra.mxu0 %v8364
    %8634 = vmatprep.subr.bf16.mxu0 %v8373
    %8635 = vmatpush1.bf16.msra.mxu0 %v8372
    %8636 = vmatprep.subr.bf16.mxu0 %v8381
    %8637 = vmatpush1.bf16.msra.mxu0 %v8380
    %8638 = vmatprep.subr.bf16.mxu0 %v8389
    %8639 = vmatpush1.bf16.msra.mxu0 %v8388
    %8640 = vmatprep.subr.bf16.mxu0 %v8397
    %8641 = vmatpush1.bf16.msra.mxu0 %v8396
    %8642 = vmatprep.mubr.bf16.mxu0 %v7749
    %8643 = vmatmul.mubr.bf16.gmra.mrb[0].mxu0 %v7748
    %v8644 = vpop.f32.mrb[0].mxu0
    %v8645 = vadd.f32 0.0, %v8644
    %v8646 = vpop.f32.mrb[0].mxu0
    %v8647 = vadd.f32 0.0, %v8646
    %v8648 = vpop.f32.mrb[0].mxu0
    %v8649 = vpop.f32.mrb[0].mxu0
    %8650 = vdwg.mxu0
    %8651 = vmatprep.subr.bf16.mxu0 %v8279
    %8652 = vmatpush1.bf16.msra.mxu0 %v8278
    %8653 = vmatprep.subr.bf16.mxu0 %v8287
    %8654 = vmatpush1.bf16.msra.mxu0 %v8286
    %8655 = vmatprep.subr.bf16.mxu0 %v8295
    %8656 = vmatpush1.bf16.msra.mxu0 %v8294
    %8657 = vmatprep.subr.bf16.mxu0 %v8303
    %8658 = vmatpush1.bf16.msra.mxu0 %v8302
    %8659 = vmatprep.subr.bf16.mxu0 %v8311
    %8660 = vmatpush1.bf16.msra.mxu0 %v8310
    %8661 = vmatprep.subr.bf16.mxu0 %v8319
    %8662 = vmatpush1.bf16.msra.mxu0 %v8318
    %8663 = vmatprep.subr.bf16.mxu0 %v8327
    %8664 = vmatpush1.bf16.msra.mxu0 %v8326
    %8665 = vmatprep.subr.bf16.mxu0 %v8335
    %8666 = vmatpush1.bf16.msra.mxu0 %v8334
    %8667 = vmatprep.subr.bf16.mxu0 %v8343
    %8668 = vmatpush1.bf16.msra.mxu0 %v8342
    %8669 = vmatprep.subr.bf16.mxu0 %v8351
    %8670 = vmatpush1.bf16.msra.mxu0 %v8350
    %8671 = vmatprep.subr.bf16.mxu0 %v8359
    %8672 = vmatpush1.bf16.msra.mxu0 %v8358
    %8673 = vmatprep.subr.bf16.mxu0 %v8367
    %8674 = vmatpush1.bf16.msra.mxu0 %v8366
    %8675 = vmatprep.subr.bf16.mxu0 %v8375
    %8676 = vmatpush1.bf16.msra.mxu0 %v8374
    %8677 = vmatprep.subr.bf16.mxu0 %v8383
    %8678 = vmatpush1.bf16.msra.mxu0 %v8382
    %8679 = vmatprep.subr.bf16.mxu0 %v8391
    %8680 = vmatpush1.bf16.msra.mxu0 %v8390
    %8681 = vmatprep.subr.bf16.mxu0 %v8399
    %8682 = vmatpush1.bf16.msra.mxu0 %v8398
    %8683 = vmatprep.mubr.bf16.mxu0 %v7749
    %8684 = vmatmul.mubr.bf16.gmra.mrb[0].mxu0 %v7748
    %v8685 = vpop.f32.mrb[0].mxu0
    %v8686 = vadd.f32 0.0, %v8685
    %v8687 = vpop.f32.mrb[0].mxu0
    %v8688 = vadd.f32 0.0, %v8687
    %v8689 = vpop.f32.mrb[0].mxu0
    %v8690 = vpop.f32.mrb[0].mxu0
    %8691 = vdwg.mxu0
    %v8692 = vadd.f32 %v7752, %v8563
    %v8693 = vadd.f32 %v7753, %v8565
    %v8694 = vadd.f32 %v7754, %v8604
    %v8695 = vadd.f32 %v7755, %v8606
    %v8696 = vadd.f32 %v7756, %v8645
    %v8697 = vadd.f32 %v7757, %v8647
    %v8698 = vadd.f32 %v7758, %v8686
    %v8699 = vadd.f32 %v7759, %v8688
    %v8700 = vxor.u32 %v8692, 2147483648
    %v8701 = vxor.u32 %v8693, 2147483648
    %v8702 = vmul.f32 %v8700, 1.442695
    %v8703 = vpow.pop %v8702
    %v8704 = vmul.f32 %v8701, 1.442695
    %v8705 = vpow.pop %v8704
    %v8706 = vadd.f32 %v8703, 1.0
    %v8707 = vadd.f32 %v8705, 1.0
    %v8708 = vrcp.pop %v8706
    %v8709 = vmul.f32 1.0, %v8708
    %v8710 = vrcp.pop %v8707
    %v8711 = vmul.f32 1.0, %v8710
    %v8712 = vxor.u32 %v8694, 2147483648
    %v8713 = vxor.u32 %v8695, 2147483648
    %v8714 = vmul.f32 %v8712, 1.442695
    %v8715 = vpow.pop %v8714
    %v8716 = vmul.f32 %v8713, 1.442695
    %v8717 = vpow.pop %v8716
    %v8718 = vadd.f32 %v8715, 1.0
    %v8719 = vadd.f32 %v8717, 1.0
    %v8720 = vrcp.pop %v8718
    %v8721 = vmul.f32 1.0, %v8720
    %v8722 = vrcp.pop %v8719
    %v8723 = vmul.f32 1.0, %v8722
    %v8724 = vtanh.pop %v8696
    %v8725 = vtanh.pop %v8697
    %v8726 = vxor.u32 %v8698, 2147483648
    %v8727 = vxor.u32 %v8699, 2147483648
    %v8728 = vmul.f32 %v8726, 1.442695
    %v8729 = vpow.pop %v8728
    %v8730 = vmul.f32 %v8727, 1.442695
    %v8731 = vpow.pop %v8730
    %v8732 = vadd.f32 %v8729, 1.0
    %v8733 = vadd.f32 %v8731, 1.0
    %v8734 = vrcp.pop %v8732
    %v8735 = vmul.f32 1.0, %v8734
    %v8736 = vrcp.pop %v8733
    %v8737 = vmul.f32 1.0, %v8736
    %v8738 = vmul.f32 %v8721, %v7742
    %v8739 = vmul.f32 %v8723, %v7743
    %v8740 = vmul.f32 %v8709, %v8724
    %v8741 = vmul.f32 %v8711, %v8725
    %v8742 = vadd.f32 %v8738, %v8740
    %v8743 = vadd.f32 %v8739, %v8741
    %v8744 = vtanh.pop %v8742
    %v8745 = vtanh.pop %v8743
    %v8746 = vmul.f32 %v8735, %v8744
    %v8747 = vmul.f32 %v8737, %v8745
    %v8748 = vpack.c.bf16 %v8746, %v8746
    %v8749 = vpack.c.bf16 %v8747, %v8747
    %v8752 = vrot.slane %v8748, 4
    %v8753 = vrot.slane %v8749, 4
    %8756 = vst [vmem:[#allocation3 + $0x30] sm:$0xf0] %v8752
    %8757 = vst [vmem:[#allocation3 + $0x38] sm:$0xf0] %v8753
    %v8758 = vld [vmem:[#allocation3] sm:$0xff]
    %v8759 = vld [vmem:[#allocation3 + $0x8] sm:$0xff]
    %v8760 = vld [vmem:[#allocation3 + $0x10] sm:$0xff]
    %v8761 = vld [vmem:[#allocation3 + $0x18] sm:$0xff]
    %v8762 = vld [vmem:[#allocation3 + $0x20] sm:$0xff]
    %v8763 = vld [vmem:[#allocation3 + $0x28] sm:$0xff]
    %v8764 = vld [vmem:[#allocation3 + $0x30] sm:$0xff]
    %v8765 = vld [vmem:[#allocation3 + $0x38] sm:$0xff]
    %v8766 = vld [vmem:[#allocation13] sm:$0xf]
    %v8767 = vld [vmem:[#allocation13 + $0x4] sm:$0xf]
    %v8768 = vld [vmem:[#allocation13 + $0x8] sm:$0xf]
    %v8769 = vld [vmem:[#allocation13 + $0xc] sm:$0xf]
    %v8770 = vld [vmem:[#allocation13 + $0x10] sm:$0xf]
    %v8771 = vld [vmem:[#allocation13 + $0x14] sm:$0xf]
    %v8772 = vld [vmem:[#allocation13 + $0x18] sm:$0xf]
    %v8773 = vld [vmem:[#allocation13 + $0x1c] sm:$0xf]
    %v8774 = vld [vmem:[#allocation13 + $0x20] sm:$0xf]
    %v8775 = vld [vmem:[#allocation13 + $0x24] sm:$0xf]
    %v8776 = vld [vmem:[#allocation13 + $0x28] sm:$0xf]
    %v8777 = vld [vmem:[#allocation13 + $0x2c] sm:$0xf]
    %v8778 = vld [vmem:[#allocation13 + $0x30] sm:$0xf]
    %v8779 = vld [vmem:[#allocation13 + $0x34] sm:$0xf]
    %v8780 = vld [vmem:[#allocation13 + $0x38] sm:$0xf]
    %v8781 = vld [vmem:[#allocation13 + $0x3c] sm:$0xf]
    %v8782 = vld [vmem:[#allocation13 + $0x40] sm:$0xf]
    %v8783 = vld [vmem:[#allocation13 + $0x44] sm:$0xf]
    %v8784 = vld [vmem:[#allocation13 + $0x48] sm:$0xf]
    %v8785 = vld [vmem:[#allocation13 + $0x4c] sm:$0xf]
    %v8786 = vld [vmem:[#allocation13 + $0x50] sm:$0xf]
    %v8787 = vld [vmem:[#allocation13 + $0x54] sm:$0xf]
    %v8788 = vld [vmem:[#allocation13 + $0x58] sm:$0xf]
    %v8789 = vld [vmem:[#allocation13 + $0x5c] sm:$0xf]
    %v8790 = vld [vmem:[#allocation13 + $0x60] sm:$0xf]
    %v8791 = vld [vmem:[#allocation13 + $0x64] sm:$0xf]
    %v8792 = vld [vmem:[#allocation13 + $0x68] sm:$0xf]
    %v8793 = vld [vmem:[#allocation13 + $0x6c] sm:$0xf]
    %v8794 = vld [vmem:[#allocation13 + $0x70] sm:$0xf]
    %v8795 = vld [vmem:[#allocation13 + $0x74] sm:$0xf]
    %v8796 = vld [vmem:[#allocation13 + $0x78] sm:$0xf]
    %v8797 = vld [vmem:[#allocation13 + $0x7c] sm:$0xf]
    %v8798 = vld [vmem:[#allocation15] sm:$0x1]
    %v8800 = vlaneseq
    %v8801 = vshrl.u32 %v8800, 7
    %v8802 = vsub.s32 0, %v8801
    %v8803 = vrot.slane %v8798, %v8802
    %v8837 = vunpack.c.l.b16 %v8766
    %v8838 = vunpack.c.l.b16 %v8767
    %v8839 = vunpack.c.l.b16 %v8768
    %v8840 = vunpack.c.l.b16 %v8769
    %v8841 = vunpack.c.l.b16 %v8770
    %v8842 = vunpack.c.l.b16 %v8771
    %v8843 = vunpack.c.l.b16 %v8772
    %v8844 = vunpack.c.l.b16 %v8773
    %v8845 = vunpack.c.l.b16 %v8774
    %v8846 = vunpack.c.l.b16 %v8775
    %v8847 = vunpack.c.l.b16 %v8776
    %v8848 = vunpack.c.l.b16 %v8777
    %v8849 = vunpack.c.l.b16 %v8778
    %v8850 = vunpack.c.l.b16 %v8779
    %v8851 = vunpack.c.l.b16 %v8780
    %v8852 = vunpack.c.l.b16 %v8781
    %v8853 = vunpack.c.l.b16 %v8782
    %v8854 = vunpack.c.l.b16 %v8783
    %v8855 = vunpack.c.l.b16 %v8784
    %v8856 = vunpack.c.l.b16 %v8785
    %v8857 = vunpack.c.l.b16 %v8786
    %v8858 = vunpack.c.l.b16 %v8787
    %v8859 = vunpack.c.l.b16 %v8788
    %v8860 = vunpack.c.l.b16 %v8789
    %v8861 = vunpack.c.l.b16 %v8790
    %v8862 = vunpack.c.l.b16 %v8791
    %v8863 = vunpack.c.l.b16 %v8792
    %v8864 = vunpack.c.l.b16 %v8793
    %v8865 = vunpack.c.l.b16 %v8794
    %v8866 = vunpack.c.l.b16 %v8795
    %v8867 = vunpack.c.l.b16 %v8796
    %v8868 = vunpack.c.l.b16 %v8797
    %v8869 = vpack.c.b16 %v8838, %v8837
    %v8870 = vpack.c.b16 %v8840, %v8839
    %v8871 = vpack.c.b16 %v8842, %v8841
    %v8872 = vpack.c.b16 %v8844, %v8843
    %v8873 = vpack.c.b16 %v8846, %v8845
    %v8874 = vpack.c.b16 %v8848, %v8847
    %v8875 = vpack.c.b16 %v8850, %v8849
    %v8876 = vpack.c.b16 %v8852, %v8851
    %v8877 = vpack.c.b16 %v8854, %v8853
    %v8878 = vpack.c.b16 %v8856, %v8855
    %v8879 = vpack.c.b16 %v8858, %v8857
    %v8880 = vpack.c.b16 %v8860, %v8859
    %v8881 = vpack.c.b16 %v8862, %v8861
    %v8882 = vpack.c.b16 %v8864, %v8863
    %v8883 = vpack.c.b16 %v8866, %v8865
    %v8884 = vpack.c.b16 %v8868, %v8867
    %8901 = vmatprep.subr.bf16.mxu0 0
    %8902 = vmatpush1.bf16.msra.mxu0 %v8869
    %8903 = vmatprep.subr.bf16.mxu0 0
    %8904 = vmatpush1.bf16.msra.mxu0 %v8870
    %8905 = vmatprep.subr.bf16.mxu0 0
    %8906 = vmatpush1.bf16.msra.mxu0 %v8871
    %8907 = vmatprep.subr.bf16.mxu0 0
    %8908 = vmatpush1.bf16.msra.mxu0 %v8872
    %8909 = vmatprep.subr.bf16.mxu0 0
    %8910 = vmatpush1.bf16.msra.mxu0 %v8873
    %8911 = vmatprep.subr.bf16.mxu0 0
    %8912 = vmatpush1.bf16.msra.mxu0 %v8874
    %8913 = vmatprep.subr.bf16.mxu0 0
    %8914 = vmatpush1.bf16.msra.mxu0 %v8875
    %8915 = vmatprep.subr.bf16.mxu0 0
    %8916 = vmatpush1.bf16.msra.mxu0 %v8876
    %8917 = vmatprep.subr.bf16.mxu0 0
    %8918 = vmatpush1.bf16.msra.mxu0 %v8877
    %8919 = vmatprep.subr.bf16.mxu0 0
    %8920 = vmatpush1.bf16.msra.mxu0 %v8878
    %8921 = vmatprep.subr.bf16.mxu0 0
    %8922 = vmatpush1.bf16.msra.mxu0 %v8879
    %8923 = vmatprep.subr.bf16.mxu0 0
    %8924 = vmatpush1.bf16.msra.mxu0 %v8880
    %8925 = vmatprep.subr.bf16.mxu0 0
    %8926 = vmatpush1.bf16.msra.mxu0 %v8881
    %8927 = vmatprep.subr.bf16.mxu0 0
    %8928 = vmatpush1.bf16.msra.mxu0 %v8882
    %8929 = vmatprep.subr.bf16.mxu0 0
    %8930 = vmatpush1.bf16.msra.mxu0 %v8883
    %8931 = vmatprep.subr.bf16.mxu0 0
    %8932 = vmatpush1.bf16.msra.mxu0 %v8884
    %8933 = vmatprep.mubr.bf16.mxu0 %v8759
    %8934 = vmatmul.mubr.bf16.gmra.mrb[0].mxu0 %v8758
    %v8935 = vpop.f32.mrb[0].mxu0
    %v8936 = vadd.f32 %v8803, %v8935
    %v8937 = vpop.f32.mrb[0].mxu0
    %v8938 = vpop.f32.mrb[0].mxu0
    %v8939 = vadd.f32 %v8803, %v8938
    %v8940 = vpop.f32.mrb[0].mxu0
    %8941 = vmatprep.mubr.bf16.mxu0 %v8761
    %8942 = vmatmul.mubr.bf16.gmra.mrb[0].mxu0 %v8760
    %v8943 = vpop.f32.mrb[0].mxu0
    %v8944 = vadd.f32 %v8803, %v8943
    %v8945 = vpop.f32.mrb[0].mxu0
    %v8946 = vpop.f32.mrb[0].mxu0
    %v8947 = vadd.f32 %v8803, %v8946
    %v8948 = vpop.f32.mrb[0].mxu0
    %8949 = vmatprep.mubr.bf16.mxu0 %v8763
    %8950 = vmatmul.mubr.bf16.gmra.mrb[0].mxu0 %v8762
    %v8951 = vpop.f32.mrb[0].mxu0
    %v8952 = vadd.f32 %v8803, %v8951
    %v8953 = vpop.f32.mrb[0].mxu0
    %v8954 = vpop.f32.mrb[0].mxu0
    %v8955 = vadd.f32 %v8803, %v8954
    %v8956 = vpop.f32.mrb[0].mxu0
    %8957 = vmatprep.mubr.bf16.mxu0 %v8765
    %8958 = vmatmul.mubr.bf16.gmra.mrb[0].mxu0 %v8764
    %v8959 = vpop.f32.mrb[0].mxu0
    %v8960 = vadd.f32 %v8803, %v8959
    %v8961 = vpop.f32.mrb[0].mxu0
    %v8962 = vpop.f32.mrb[0].mxu0
    %v8963 = vadd.f32 %v8803, %v8962
    %v8964 = vpop.f32.mrb[0].mxu0
    %8965 = vdwg.mxu0
    %8966 = vst [vmem:[#allocation16] sm:$0xff] %v8936
    %8967 = vst [vmem:[#allocation16 + $0x8] sm:$0xff] %v8939
    %8968 = vst [vmem:[#allocation16 + $0x10] sm:$0xff] %v8944
    %8969 = vst [vmem:[#allocation16 + $0x18] sm:$0xff] %v8947
    %8970 = vst [vmem:[#allocation16 + $0x20] sm:$0xff] %v8952
    %8971 = vst [vmem:[#allocation16 + $0x28] sm:$0xff] %v8955
    %8972 = vst [vmem:[#allocation16 + $0x30] sm:$0xff] %v8960
    %8973 = vst [vmem:[#allocation16 + $0x38] sm:$0xff] %v8963
    // Predicated region
    $region58: #{tpu_custom_call.1} parent=1 // pred_check
      _
    $region59: #{tpu_custom_call.1} parent=1 // pred_check_branch
      %8975 = sbr.rel (0) target = $region61
    $region60: #{tpu_custom_call.1} parent=1 // pred_region
      %s8977 = ssub.s32 1024, 1024
      %8978 = vsyncadd [#allocation6], %s8977
      %s8979 = sshll.u32 [#allocation16], 4
      %s8980 = int_to_ptr.vmem [resolvable:$true] %s8979
      %8985 = dma.vmem_to_hbm [thread:$0]  %s8980, 1024, %s7, [#allocation6], 128, 128, 8
    $region61: #{tpu_custom_call.1} parent=1 // pred_fallthru
      _
    // Predicated region
    $region62: #{tpu_custom_call.1} parent=1 // pred_check
      _
    $region63: #{tpu_custom_call.1} parent=1 // pred_check_branch
      %8987 = sbr.rel (0) target = $region65
    $region64: #{tpu_custom_call.1} parent=1 // pred_region
      %8988 = dma.done [#allocation6], 1024
    $region65: #{tpu_custom_call.1} parent=1 // pred_fallthru
      _
    %8989 = vsyncpa [#allocation5], 1
    %8990 = vsyncpa [#allocation8], 1
    %8991 = vsyncpa [#allocation11], 1
    %8992 = vsyncpa [#allocation14], 1
    %8993 = vsyncpa [#allocation6], 1

</llo_original>
